<compile_context>
chip_gen: v7x
topology: tpu7x:2x2x1
jax: 0.10.0
libtpu: 0.0.40
codegen_flags: <defaults>
</compile_context>

<pallas_src>
import functools

import jax
import jax.numpy as jnp
from jax.experimental import pallas as pl
from jax.experimental.pallas import tpu as pltpu

EPS = 1e-5
CP = 128                       # padded channel count == TPU lane width
MATMUL_DTYPE = jnp.float32     # jnp.bfloat16 on v6e/v7x (loosen check tolerance)
VMEM_LIMIT = 32 * 1024 * 1024  # safe scoped-VMEM limit on v5e/v6e/v7x


def _conv_stats_kernel(x_ref, w_ref, scale_ref, bias_ref, y_ref, stats_ref,
                       xpad_ref, cols_ref, *, apply_input_act):
    """Per-sample fused [optional BN-apply+ReLU] -> 3x3 conv -> raw out + stats.

    x_ref:     (1, H, W, CP)   input sample (block input, or previous module's
                               raw conv output when apply_input_act=True)
    w_ref:     (9*CP, CP)      im2col weight matrix (HWIO, channel-padded)
    scale_ref: (1, CP)         previous module's folded BN scale (or dummy)
    bias_ref:  (1, CP)         previous module's folded BN bias  (or dummy)
    y_ref:     (1, H, W, CP)   raw conv output (pre-BN)
    stats_ref: (1, 8, CP)      row 0: per-channel sum, row 1: sum of squares
    xpad_ref:  (H+2, W+2, CP)  VMEM scratch: zero-padded sample
    cols_ref:  (H*W, 9*CP)     VMEM scratch: im2col matrix
    """
    H = y_ref.shape[1]
    W = y_ref.shape[2]

    x = x_ref[0]                                           # (H, W, CP), f32
    if apply_input_act:
        # BN scale/shift + ReLU of the PREVIOUS ConvModule, fused here so the
        # intermediate activation never round-trips HBM.
        scale = scale_ref[...].reshape(1, 1, CP)
        bias = bias_ref[...].reshape(1, 1, CP)
        x = jnp.maximum(x * scale + bias, 0.0)

    # In-kernel 'same' padding: zero the scratch, then write the interior.
    xpad_ref[...] = jnp.zeros_like(xpad_ref)
    xpad_ref[1:H + 1, 1:W + 1, :] = x.astype(xpad_ref.dtype)

    # im2col: pack the 9 shifted views into one (H*W, 9*CP) matrix.
    for kh in range(3):
        for kw in range(3):
            t = kh * 3 + kw
            cols_ref[:, t * CP:(t + 1) * CP] = (
                xpad_ref[kh:kh + H, kw:kw + W, :].reshape(H * W, CP))

    # Single lane-dense MXU matmul, K = 9*CP, f32 accumulation.
    acc = jnp.dot(cols_ref[...], w_ref[...],
                  preferred_element_type=jnp.float32)      # (H*W, CP)

    y_ref[0] = acc.reshape(H, W, CP).astype(y_ref.dtype)

    # Per-sample BN partial statistics, computed from the f32 accumulator.
    s = jnp.sum(acc, axis=0, keepdims=True)                # (1, CP)
    ss = jnp.sum(acc * acc, axis=0, keepdims=True)         # (1, CP)
    row = jax.lax.broadcasted_iota(jnp.int32, (8, CP), 0)
    stats_ref[0] = jnp.where(row == 0, s, 0.0) + jnp.where(row == 1, ss, 0.0)


def _bn_act_kernel(y_ref, scale_ref, bias_ref, o_ref):
    """Final folded-BN scale/shift + ReLU (for the last ConvModule)."""
    scale = scale_ref[...].reshape(1, 1, 1, CP)
    bias = bias_ref[...].reshape(1, 1, 1, CP)
    o_ref[...] = jnp.maximum(y_ref[...] * scale + bias, 0.0).astype(o_ref.dtype)


def _conv_stats_call(x, w_mat, scale, bias, *, apply_input_act):
    N, H, W, _ = x.shape
    if scale is None:   # first module: no preceding BN/ReLU to apply
        scale = jnp.zeros((1, CP), jnp.float32)
        bias = jnp.zeros((1, CP), jnp.float32)
    kernel = functools.partial(_conv_stats_kernel,
                               apply_input_act=apply_input_act)
    flops = 2 * N * H * W * (9 * CP) * CP
    bytes_accessed = 4 * (x.size + w_mat.size + N * H * W * CP + N * 8 * CP)
    grid_spec = pltpu.PrefetchScalarGridSpec(
        num_scalar_prefetch=0,
        grid=(N,),
        in_specs=[
            pl.BlockSpec((1, H, W, CP), lambda n: (n, 0, 0, 0)),
            pl.BlockSpec((9 * CP, CP), lambda n: (0, 0)),
            pl.BlockSpec((1, CP), lambda n: (0, 0)),
            pl.BlockSpec((1, CP), lambda n: (0, 0)),
        ],
        out_specs=[
            pl.BlockSpec((1, H, W, CP), lambda n: (n, 0, 0, 0)),
            pl.BlockSpec((1, 8, CP), lambda n: (n, 0, 0)),
        ],
        scratch_shapes=[
            pltpu.VMEM((H + 2, W + 2, CP), MATMUL_DTYPE),
            pltpu.VMEM((H * W, 9 * CP), MATMUL_DTYPE),
        ],
    )
    y, stats = pl.pallas_call(
        kernel,
        out_shape=(jax.ShapeDtypeStruct((N, H, W, CP), jnp.float32),
                   jax.ShapeDtypeStruct((N, 8, CP), jnp.float32)),
        grid_spec=grid_spec,
        compiler_params=pltpu.CompilerParams(
            dimension_semantics=("parallel",),
            vmem_limit_bytes=VMEM_LIMIT),
        cost_estimate=pl.CostEstimate(
            flops=flops, transcendentals=0, bytes_accessed=bytes_accessed),
    )(x, w_mat, scale, bias)
    return y, stats


def _bn_act_call(y, scale, bias):
    N, H, W, _ = y.shape
    grid_spec = pltpu.PrefetchScalarGridSpec(
        num_scalar_prefetch=0,
        grid=(N,),
        in_specs=[
            pl.BlockSpec((1, H, W, CP), lambda n: (n, 0, 0, 0)),
            pl.BlockSpec((1, CP), lambda n: (0, 0)),
            pl.BlockSpec((1, CP), lambda n: (0, 0)),
        ],
        out_specs=pl.BlockSpec((1, H, W, CP), lambda n: (n, 0, 0, 0)),
    )
    return pl.pallas_call(
        _bn_act_kernel,
        out_shape=jax.ShapeDtypeStruct((N, H, W, CP), jnp.float32),
        grid_spec=grid_spec,
        compiler_params=pltpu.CompilerParams(
            dimension_semantics=("parallel",),
            vmem_limit_bytes=VMEM_LIMIT),
    )(y, scale, bias)


@functools.partial(jax.jit, static_argnames=("out_channels",))
def basic_conv_block(x_nchw, kparams, out_channels):
    """BasicConvBlock forward. x: NCHW (PyTorch convention)."""
    N, cin, H, W = x_nchw.shape
    x = jnp.transpose(x_nchw, (0, 2, 3, 1))                   # NCHW -> NHWC
    x = jnp.pad(x, ((0, 0), (0, 0), (0, 0), (0, CP - cin)))   # lane-dense channels
    count = N * H * W
    y, scale, bias = x, None, None
    for i, (w_mat, gamma_p, beta_p) in enumerate(kparams):
        y, stats = _conv_stats_call(y, w_mat, scale, bias,
                                    apply_input_act=(i > 0))
        ssum = jnp.sum(stats[:, 0, :], axis=0)                # (CP,)
        ssq = jnp.sum(stats[:, 1, :], axis=0)                 # (CP,)
        mean = ssum / count
        var = ssq / count - mean * mean      # biased variance (training-mode BN)
        inv = jax.lax.rsqrt(var + EPS)
        scale = (gamma_p * inv).reshape(1, CP)
        bias = (beta_p - mean * gamma_p * inv).reshape(1, CP)
    out = _bn_act_call(y, scale, bias)       # last module's BN + ReLU
    out = out[..., :out_channels]
    return jnp.transpose(out, (0, 3, 1, 2))                   # NHWC -> NCHW


def make_params(key, in_channels, out_channels, num_convs=2):
    """PyTorch-layout parameters (Conv2d OIHW weight bias=False, BN defaults)."""
    params = []
    for i in range(num_convs):
        cin = in_channels if i == 0 else out_channels
        key, sub = jax.random.split(key)
        w_oihw = jax.random.normal(sub, (out_channels, cin, 3, 3),
                                   jnp.float32) * 0.1
        gamma = jnp.ones((out_channels,), jnp.float32)
        beta = jnp.zeros((out_channels,), jnp.float32)
        params.append((w_oihw, gamma, beta))
    return params


def prepare_kernel_params(params):
    """OIHW -> channel-padded (9*CP, CP) im2col matrices + padded BN affine."""
    kparams = []
    for (w_oihw, gamma, beta) in params:
        cout, cin = w_oihw.shape[0], w_oihw.shape[1]
        w_hwio = jnp.transpose(w_oihw, (2, 3, 1, 0))          # (3,3,cin,cout)
        w_pad = jnp.zeros((3, 3, CP, CP), jnp.float32)
        w_pad = w_pad.at[:, :, :cin, :cout].set(w_hwio)
        w_mat = w_pad.reshape(9 * CP, CP).astype(MATMUL_DTYPE)
        gamma_p = jnp.zeros((CP,), jnp.float32).at[:cout].set(gamma)
        beta_p = jnp.zeros((CP,), jnp.float32).at[:cout].set(beta)
        kparams.append((w_mat, gamma_p, beta_p))
    return tuple(kparams)


def _reference(x_nchw, params):
    """Pure-JAX reference (lax conv + batch-stat BN + ReLU), NCHW."""
    x = x_nchw
    for (w_oihw, gamma, beta) in params:
        y = jax.lax.conv_general_dilated(
            x, w_oihw, window_strides=(1, 1), padding=((1, 1), (1, 1)),
            dimension_numbers=("NCHW", "OIHW", "NCHW"))
        mean = jnp.mean(y, axis=(0, 2, 3), keepdims=True)
        var = jnp.mean((y - mean) ** 2, axis=(0, 2, 3), keepdims=True)
        y = (y - mean) * jax.lax.rsqrt(var + EPS)
        y = y * gamma[None, :, None, None] + beta[None, :, None, None]
        x = jnp.maximum(y, 0.0)
    return x


if __name__ == "__main__":
    key = jax.random.PRNGKey(0)
    kx, kp = jax.random.split(key)

    N, Cin, Cout, H, W = 2, 4, 8, 16, 16
    x = jax.random.normal(kx, (N, Cin, H, W), jnp.float32)
    params = make_params(kp, Cin, Cout, num_convs=2)
    kparams = prepare_kernel_params(params)

    out = basic_conv_block(x, kparams, out_channels=Cout)
    out = jax.block_until_ready(out)

    ref = _reference(x, params)
    assert out.shape == (N, Cout, H, W)
    max_err = float(jnp.max(jnp.abs(out - ref)))
    assert jnp.allclose(out, ref, atol=1e-4, rtol=1e-4), max_err

    print("KERNEL_OK")
</pallas_src>

<mosaic_0001>
module attributes {stable_mosaic.version = 11 : i64} {
  func.func @_conv_stats_kernel(%arg0: i32, %arg1: memref<1x16x16x128xf32, #tpu.memory_space<vmem>>, %arg2: memref<1152x128xf32, #tpu.memory_space<vmem>>, %arg3: memref<1x128xf32, #tpu.memory_space<vmem>>, %arg4: memref<1x128xf32, #tpu.memory_space<vmem>>, %arg5: memref<1x16x16x128xf32, #tpu.memory_space<vmem>>, %arg6: memref<1x8x128xf32, #tpu.memory_space<vmem>>, %arg7: memref<18x18x128xf32, #tpu.memory_space<vmem>>, %arg8: memref<256x1152xf32, #tpu.memory_space<vmem>>) attributes {dimension_semantics = [#tpu.dimension_semantics<parallel>], iteration_bounds = array<i64: 2>, scalar_prefetch = 0 : i64, scratch_operands = 2 : i64, tpu.core_type = #tpu.core_type<tc>, window_params = [{transform_indices = @transform_0, window_bounds = array<i64: 1, 16, 16, 128>}, {pipeline_mode = #tpu.pipeline_mode<synchronous>, transform_indices = @transform_1, window_bounds = array<i64: 1152, 128>}, {pipeline_mode = #tpu.pipeline_mode<synchronous>, transform_indices = @transform_2, window_bounds = array<i64: 1, 128>}, {pipeline_mode = #tpu.pipeline_mode<synchronous>, transform_indices = @transform_3, window_bounds = array<i64: 1, 128>}, {transform_indices = @transform_4, window_bounds = array<i64: 1, 16, 16, 128>}, {transform_indices = @transform_5, window_bounds = array<i64: 1, 8, 128>}]} {
    %c0 = arith.constant 0 : index
    %c0_0 = arith.constant 0 : index
    %c0_1 = arith.constant 0 : index
    %c0_2 = arith.constant 0 : index
    %0 = vector.load %arg1[%c0, %c0_0, %c0_1, %c0_2] : memref<1x16x16x128xf32, #tpu.memory_space<vmem>>, vector<1x16x16x128xf32>
    %1 = vector.shape_cast %0 : vector<1x16x16x128xf32> to vector<16x16x128xf32>
    %cst = arith.constant 0.000000e+00 : f32
    %2 = vector.broadcast %cst : f32 to vector<18x18x128xf32>
    %c0_3 = arith.constant 0 : index
    %c0_4 = arith.constant 0 : index
    %c0_5 = arith.constant 0 : index
    %3 = vector.load %arg7[%c0_3, %c0_4, %c0_5] : memref<18x18x128xf32, #tpu.memory_space<vmem>>, vector<18x18x128xf32>
    tpu.vector_store %arg7[%c0_3, %c0_4, %c0_5], %2 {strides = array<i32>} : memref<18x18x128xf32, #tpu.memory_space<vmem>>, vector<18x18x128xf32>,
    %c1 = arith.constant 1 : index
    %c1_6 = arith.constant 1 : index
    %c0_7 = arith.constant 0 : index
    %4 = vector.load %arg7[%c1, %c1_6, %c0_7] : memref<18x18x128xf32, #tpu.memory_space<vmem>>, vector<16x16x128xf32>
    tpu.vector_store %arg7[%c1, %c1_6, %c0_7], %1 {strides = array<i32>} : memref<18x18x128xf32, #tpu.memory_space<vmem>>, vector<16x16x128xf32>,
    %c0_8 = arith.constant 0 : index
    %c0_9 = arith.constant 0 : index
    %c0_10 = arith.constant 0 : index
    %5 = vector.load %arg7[%c0_8, %c0_9, %c0_10] : memref<18x18x128xf32, #tpu.memory_space<vmem>>, vector<16x16x128xf32>
    %6 = vector.shape_cast %5 : vector<16x16x128xf32> to vector<256x128xf32>
    %c0_11 = arith.constant 0 : index
    %c0_12 = arith.constant 0 : index
    %7 = vector.load %arg8[%c0_11, %c0_12] : memref<256x1152xf32, #tpu.memory_space<vmem>>, vector<256x128xf32>
    tpu.vector_store %arg8[%c0_11, %c0_12], %6 {strides = array<i32>} : memref<256x1152xf32, #tpu.memory_space<vmem>>, vector<256x128xf32>,
    %c0_13 = arith.constant 0 : index
    %c1_14 = arith.constant 1 : index
    %c0_15 = arith.constant 0 : index
    %8 = vector.load %arg7[%c0_13, %c1_14, %c0_15] : memref<18x18x128xf32, #tpu.memory_space<vmem>>, vector<16x16x128xf32>
    %9 = vector.shape_cast %8 : vector<16x16x128xf32> to vector<256x128xf32>
    %c0_16 = arith.constant 0 : index
    %c128 = arith.constant 128 : index
    %10 = vector.load %arg8[%c0_16, %c128] : memref<256x1152xf32, #tpu.memory_space<vmem>>, vector<256x128xf32>
    tpu.vector_store %arg8[%c0_16, %c128], %9 {strides = array<i32>} : memref<256x1152xf32, #tpu.memory_space<vmem>>, vector<256x128xf32>,
    %c0_17 = arith.constant 0 : index
    %c2 = arith.constant 2 : index
    %c0_18 = arith.constant 0 : index
    %11 = vector.load %arg7[%c0_17, %c2, %c0_18] : memref<18x18x128xf32, #tpu.memory_space<vmem>>, vector<16x16x128xf32>
    %12 = vector.shape_cast %11 : vector<16x16x128xf32> to vector<256x128xf32>
    %c0_19 = arith.constant 0 : index
    %c256 = arith.constant 256 : index
    %13 = vector.load %arg8[%c0_19, %c256] : memref<256x1152xf32, #tpu.memory_space<vmem>>, vector<256x128xf32>
    tpu.vector_store %arg8[%c0_19, %c256], %12 {strides = array<i32>} : memref<256x1152xf32, #tpu.memory_space<vmem>>, vector<256x128xf32>,
    %c1_20 = arith.constant 1 : index
    %c0_21 = arith.constant 0 : index
    %c0_22 = arith.constant 0 : index
    %14 = vector.load %arg7[%c1_20, %c0_21, %c0_22] : memref<18x18x128xf32, #tpu.memory_space<vmem>>, vector<16x16x128xf32>
    %15 = vector.shape_cast %14 : vector<16x16x128xf32> to vector<256x128xf32>
    %c0_23 = arith.constant 0 : index
    %c384 = arith.constant 384 : index
    %16 = vector.load %arg8[%c0_23, %c384] : memref<256x1152xf32, #tpu.memory_space<vmem>>, vector<256x128xf32>
    tpu.vector_store %arg8[%c0_23, %c384], %15 {strides = array<i32>} : memref<256x1152xf32, #tpu.memory_space<vmem>>, vector<256x128xf32>,
    %c1_24 = arith.constant 1 : index
    %c1_25 = arith.constant 1 : index
    %c0_26 = arith.constant 0 : index
    %17 = vector.load %arg7[%c1_24, %c1_25, %c0_26] : memref<18x18x128xf32, #tpu.memory_space<vmem>>, vector<16x16x128xf32>
    %18 = vector.shape_cast %17 : vector<16x16x128xf32> to vector<256x128xf32>
    %c0_27 = arith.constant 0 : index
    %c512 = arith.constant 512 : index
    %19 = vector.load %arg8[%c0_27, %c512] : memref<256x1152xf32, #tpu.memory_space<vmem>>, vector<256x128xf32>
    tpu.vector_store %arg8[%c0_27, %c512], %18 {strides = array<i32>} : memref<256x1152xf32, #tpu.memory_space<vmem>>, vector<256x128xf32>,
    %c1_28 = arith.constant 1 : index
    %c2_29 = arith.constant 2 : index
    %c0_30 = arith.constant 0 : index
    %20 = vector.load %arg7[%c1_28, %c2_29, %c0_30] : memref<18x18x128xf32, #tpu.memory_space<vmem>>, vector<16x16x128xf32>
    %21 = vector.shape_cast %20 : vector<16x16x128xf32> to vector<256x128xf32>
    %c0_31 = arith.constant 0 : index
    %c640 = arith.constant 640 : index
    %22 = vector.load %arg8[%c0_31, %c640] : memref<256x1152xf32, #tpu.memory_space<vmem>>, vector<256x128xf32>
    tpu.vector_store %arg8[%c0_31, %c640], %21 {strides = array<i32>} : memref<256x1152xf32, #tpu.memory_space<vmem>>, vector<256x128xf32>,
    %c2_32 = arith.constant 2 : index
    %c0_33 = arith.constant 0 : index
    %c0_34 = arith.constant 0 : index
    %23 = vector.load %arg7[%c2_32, %c0_33, %c0_34] : memref<18x18x128xf32, #tpu.memory_space<vmem>>, vector<16x16x128xf32>
    %24 = vector.shape_cast %23 : vector<16x16x128xf32> to vector<256x128xf32>
    %c0_35 = arith.constant 0 : index
    %c768 = arith.constant 768 : index
    %25 = vector.load %arg8[%c0_35, %c768] : memref<256x1152xf32, #tpu.memory_space<vmem>>, vector<256x128xf32>
    tpu.vector_store %arg8[%c0_35, %c768], %24 {strides = array<i32>} : memref<256x1152xf32, #tpu.memory_space<vmem>>, vector<256x128xf32>,
    %c2_36 = arith.constant 2 : index
    %c1_37 = arith.constant 1 : index
    %c0_38 = arith.constant 0 : index
    %26 = vector.load %arg7[%c2_36, %c1_37, %c0_38] : memref<18x18x128xf32, #tpu.memory_space<vmem>>, vector<16x16x128xf32>
    %27 = vector.shape_cast %26 : vector<16x16x128xf32> to vector<256x128xf32>
    %c0_39 = arith.constant 0 : index
    %c896 = arith.constant 896 : index
    %28 = vector.load %arg8[%c0_39, %c896] : memref<256x1152xf32, #tpu.memory_space<vmem>>, vector<256x128xf32>
    tpu.vector_store %arg8[%c0_39, %c896], %27 {strides = array<i32>} : memref<256x1152xf32, #tpu.memory_space<vmem>>, vector<256x128xf32>,
    %c2_40 = arith.constant 2 : index
    %c2_41 = arith.constant 2 : index
    %c0_42 = arith.constant 0 : index
    %29 = vector.load %arg7[%c2_40, %c2_41, %c0_42] : memref<18x18x128xf32, #tpu.memory_space<vmem>>, vector<16x16x128xf32>
    %30 = vector.shape_cast %29 : vector<16x16x128xf32> to vector<256x128xf32>
    %c0_43 = arith.constant 0 : index
    %c1024 = arith.constant 1024 : index
    %31 = vector.load %arg8[%c0_43, %c1024] : memref<256x1152xf32, #tpu.memory_space<vmem>>, vector<256x128xf32>
    tpu.vector_store %arg8[%c0_43, %c1024], %30 {strides = array<i32>} : memref<256x1152xf32, #tpu.memory_space<vmem>>, vector<256x128xf32>,
    %c0_44 = arith.constant 0 : index
    %c0_45 = arith.constant 0 : index
    %32 = vector.load %arg8[%c0_44, %c0_45] : memref<256x1152xf32, #tpu.memory_space<vmem>>, vector<256x1152xf32>
    %c0_46 = arith.constant 0 : index
    %c0_47 = arith.constant 0 : index
    %33 = vector.load %arg2[%c0_46, %c0_47] : memref<1152x128xf32, #tpu.memory_space<vmem>>, vector<1152x128xf32>
    %cst_48 = arith.constant dense<0.000000e+00> : vector<256x128xf32>
    %34 = tpu.matmul %32, %33, %cst_48 {dimension_numbers = #tpu.dot_dimension_numbers<[1], [0], [0], [1], [0, 0, 1, 1], [], []>} : vector<256x1152xf32>, vector<1152x128xf32>, vector<256x128xf32> -> vector<256x128xf32>
    %35 = vector.shape_cast %34 : vector<256x128xf32> to vector<16x16x128xf32>
    %c0_49 = arith.constant 0 : index
    %c0_50 = arith.constant 0 : index
    %c0_51 = arith.constant 0 : index
    %c0_52 = arith.constant 0 : index
    %36 = vector.load %arg5[%c0_49, %c0_50, %c0_51, %c0_52] : memref<1x16x16x128xf32, #tpu.memory_space<vmem>>, vector<1x16x16x128xf32>
    %37 = vector.shape_cast %36 : vector<1x16x16x128xf32> to vector<16x16x128xf32>
    %38 = vector.shape_cast %35 : vector<16x16x128xf32> to vector<1x16x16x128xf32>
    tpu.vector_store %arg5[%c0_49, %c0_50, %c0_51, %c0_52], %38 {strides = array<i32>} : memref<1x16x16x128xf32, #tpu.memory_space<vmem>>, vector<1x16x16x128xf32>,
    %cst_53 = arith.constant dense<0.000000e+00> : vector<128xf32>
    %39 = vector.multi_reduction <add>, %34, %cst_53 [0] : vector<256x128xf32> to vector<128xf32>
    %40 = vector.shape_cast %39 : vector<128xf32> to vector<1x128xf32>
    %41 = arith.mulf %34, %34 : vector<256x128xf32>
    %cst_54 = arith.constant dense<0.000000e+00> : vector<128xf32>
    %42 = vector.multi_reduction <add>, %41, %cst_54 [0] : vector<256x128xf32> to vector<128xf32>
    %43 = vector.shape_cast %42 : vector<128xf32> to vector<1x128xf32>
    %44 = tpu.iota {dimensions = array<i32: 0>} : vector<8x128xi32>
    %c0_i32 = arith.constant 0 : i32
    %45 = vector.broadcast %c0_i32 : i32 to vector<8x128xi32>
    %46 = arith.cmpi eq, %44, %45 : vector<8x128xi32>
    %cst_55 = arith.constant 0.000000e+00 : f32
    %47 = vector.shape_cast %40 : vector<1x128xf32> to vector<1x128xf32>
    %48 = vector.broadcast %47 : vector<1x128xf32> to vector<8x128xf32>
    %49 = vector.broadcast %cst_55 : f32 to vector<8x128xf32>
    %50 = arith.select %46, %48, %49 : vector<8x128xi1>, vector<8x128xf32>
    %c1_i32 = arith.constant 1 : i32
    %51 = vector.broadcast %c1_i32 : i32 to vector<8x128xi32>
    %52 = arith.cmpi eq, %44, %51 : vector<8x128xi32>
    %cst_56 = arith.constant 0.000000e+00 : f32
    %53 = vector.shape_cast %43 : vector<1x128xf32> to vector<1x128xf32>
    %54 = vector.broadcast %53 : vector<1x128xf32> to vector<8x128xf32>
    %55 = vector.broadcast %cst_56 : f32 to vector<8x128xf32>
    %56 = arith.select %52, %54, %55 : vector<8x128xi1>, vector<8x128xf32>
    %57 = arith.addf %50, %56 : vector<8x128xf32>
    %c0_57 = arith.constant 0 : index
    %c0_58 = arith.constant 0 : index
    %c0_59 = arith.constant 0 : index
    %58 = vector.load %arg6[%c0_57, %c0_58, %c0_59] : memref<1x8x128xf32, #tpu.memory_space<vmem>>, vector<1x8x128xf32>
    %59 = vector.shape_cast %58 : vector<1x8x128xf32> to vector<8x128xf32>
    %60 = vector.shape_cast %57 : vector<8x128xf32> to vector<1x8x128xf32>
    tpu.vector_store %arg6[%c0_57, %c0_58, %c0_59], %60 {strides = array<i32>} : memref<1x8x128xf32, #tpu.memory_space<vmem>>, vector<1x8x128xf32>,
    return
  }
  func.func @transform_0(%arg0: i32) -> (i32, i32, i32, i32) {
    %c0_i32 = arith.constant 0 : i32
    %c0_i32_0 = arith.constant 0 : i32
    %c0_i32_1 = arith.constant 0 : i32
    %c0_i32_2 = arith.constant 0 : i32
    return %arg0, %c0_i32, %c0_i32_0, %c0_i32_1 : i32, i32, i32, i32
  }
  func.func @transform_1(%arg0: i32) -> (i32, i32) {
    %c0_i32 = arith.constant 0 : i32
    %c0_i32_0 = arith.constant 0 : i32
    %c0_i32_1 = arith.constant 0 : i32
    return %c0_i32, %c0_i32_0 : i32, i32
  }
  func.func @transform_2(%arg0: i32) -> (i32, i32) {
    %c0_i32 = arith.constant 0 : i32
    %c0_i32_0 = arith.constant 0 : i32
    %c0_i32_1 = arith.constant 0 : i32
    return %c0_i32, %c0_i32_0 : i32, i32
  }
  func.func @transform_3(%arg0: i32) -> (i32, i32) {
    %c0_i32 = arith.constant 0 : i32
    %c0_i32_0 = arith.constant 0 : i32
    %c0_i32_1 = arith.constant 0 : i32
    return %c0_i32, %c0_i32_0 : i32, i32
  }
  func.func @transform_4(%arg0: i32) -> (i32, i32, i32, i32) {
    %c0_i32 = arith.constant 0 : i32
    %c0_i32_0 = arith.constant 0 : i32
    %c0_i32_1 = arith.constant 0 : i32
    %c0_i32_2 = arith.constant 0 : i32
    return %arg0, %c0_i32, %c0_i32_0, %c0_i32_1 : i32, i32, i32, i32
  }
  func.func @transform_5(%arg0: i32) -> (i32, i32, i32) {
    %c0_i32 = arith.constant 0 : i32
    %c0_i32_0 = arith.constant 0 : i32
    %c0_i32_1 = arith.constant 0 : i32
    return %arg0, %c0_i32, %c0_i32_0 : i32, i32, i32
  }
}

module attributes {stable_mosaic.version = 11 : i64} {
  func.func @_bn_act_kernel(%arg0: i32, %arg1: memref<1x16x16x128xf32, #tpu.memory_space<vmem>>, %arg2: memref<1x128xf32, #tpu.memory_space<vmem>>, %arg3: memref<1x128xf32, #tpu.memory_space<vmem>>, %arg4: memref<1x16x16x128xf32, #tpu.memory_space<vmem>>) attributes {dimension_semantics = [#tpu.dimension_semantics<parallel>], iteration_bounds = array<i64: 2>, scalar_prefetch = 0 : i64, scratch_operands = 0 : i64, tpu.core_type = #tpu.core_type<tc>, window_params = [{transform_indices = @transform_0, window_bounds = array<i64: 1, 16, 16, 128>}, {pipeline_mode = #tpu.pipeline_mode<synchronous>, transform_indices = @transform_1, window_bounds = array<i64: 1, 128>}, {pipeline_mode = #tpu.pipeline_mode<synchronous>, transform_indices = @transform_2, window_bounds = array<i64: 1, 128>}, {transform_indices = @transform_3, window_bounds = array<i64: 1, 16, 16, 128>}]} {
    %c0 = arith.constant 0 : index
    %c0_0 = arith.constant 0 : index
    %0 = vector.load %arg2[%c0, %c0_0] : memref<1x128xf32, #tpu.memory_space<vmem>>, vector<1x128xf32>
    %1 = vector.shape_cast %0 : vector<1x128xf32> to vector<1x1x1x128xf32>
    %c0_1 = arith.constant 0 : index
    %c0_2 = arith.constant 0 : index
    %2 = vector.load %arg3[%c0_1, %c0_2] : memref<1x128xf32, #tpu.memory_space<vmem>>, vector<1x128xf32>
    %3 = vector.shape_cast %2 : vector<1x128xf32> to vector<1x1x1x128xf32>
    %c0_3 = arith.constant 0 : index
    %c0_4 = arith.constant 0 : index
    %c0_5 = arith.constant 0 : index
    %c0_6 = arith.constant 0 : index
    %4 = vector.load %arg1[%c0_3, %c0_4, %c0_5, %c0_6] : memref<1x16x16x128xf32, #tpu.memory_space<vmem>>, vector<1x16x16x128xf32>
    %5 = vector.broadcast %1 : vector<1x1x1x128xf32> to vector<1x16x16x128xf32>
    %6 = arith.mulf %4, %5 : vector<1x16x16x128xf32>
    %7 = vector.broadcast %3 : vector<1x1x1x128xf32> to vector<1x16x16x128xf32>
    %8 = arith.addf %6, %7 : vector<1x16x16x128xf32>
    %cst = arith.constant 0.000000e+00 : f32
    %9 = vector.broadcast %cst : f32 to vector<1x16x16x128xf32>
    %10 = arith.maximumf %8, %9 : vector<1x16x16x128xf32>
    %c0_7 = arith.constant 0 : index
    %c0_8 = arith.constant 0 : index
    %c0_9 = arith.constant 0 : index
    %c0_10 = arith.constant 0 : index
    %11 = vector.load %arg4[%c0_7, %c0_8, %c0_9, %c0_10] : memref<1x16x16x128xf32, #tpu.memory_space<vmem>>, vector<1x16x16x128xf32>
    tpu.vector_store %arg4[%c0_7, %c0_8, %c0_9, %c0_10], %10 {strides = array<i32>} : memref<1x16x16x128xf32, #tpu.memory_space<vmem>>, vector<1x16x16x128xf32>,
    return
  }
  func.func @transform_0(%arg0: i32) -> (i32, i32, i32, i32) {
    %c0_i32 = arith.constant 0 : i32
    %c0_i32_0 = arith.constant 0 : i32
    %c0_i32_1 = arith.constant 0 : i32
    %c0_i32_2 = arith.constant 0 : i32
    return %arg0, %c0_i32, %c0_i32_0, %c0_i32_1 : i32, i32, i32, i32
  }
  func.func @transform_1(%arg0: i32) -> (i32, i32) {
    %c0_i32 = arith.constant 0 : i32
    %c0_i32_0 = arith.constant 0 : i32
    %c0_i32_1 = arith.constant 0 : i32
    return %c0_i32, %c0_i32_0 : i32, i32
  }
  func.func @transform_2(%arg0: i32) -> (i32, i32) {
    %c0_i32 = arith.constant 0 : i32
    %c0_i32_0 = arith.constant 0 : i32
    %c0_i32_1 = arith.constant 0 : i32
    return %c0_i32, %c0_i32_0 : i32, i32
  }
  func.func @transform_3(%arg0: i32) -> (i32, i32, i32, i32) {
    %c0_i32 = arith.constant 0 : i32
    %c0_i32_0 = arith.constant 0 : i32
    %c0_i32_1 = arith.constant 0 : i32
    %c0_i32_2 = arith.constant 0 : i32
    return %arg0, %c0_i32, %c0_i32_0, %c0_i32_1 : i32, i32, i32, i32
  }
}

module attributes {stable_mosaic.version = 11 : i64} {
  func.func @_conv_stats_kernel(%arg0: i32, %arg1: memref<1x16x16x128xf32, #tpu.memory_space<vmem>>, %arg2: memref<1152x128xf32, #tpu.memory_space<vmem>>, %arg3: memref<1x128xf32, #tpu.memory_space<vmem>>, %arg4: memref<1x128xf32, #tpu.memory_space<vmem>>, %arg5: memref<1x16x16x128xf32, #tpu.memory_space<vmem>>, %arg6: memref<1x8x128xf32, #tpu.memory_space<vmem>>, %arg7: memref<18x18x128xf32, #tpu.memory_space<vmem>>, %arg8: memref<256x1152xf32, #tpu.memory_space<vmem>>) attributes {dimension_semantics = [#tpu.dimension_semantics<parallel>], iteration_bounds = array<i64: 2>, scalar_prefetch = 0 : i64, scratch_operands = 2 : i64, tpu.core_type = #tpu.core_type<tc>, window_params = [{transform_indices = @transform_0, window_bounds = array<i64: 1, 16, 16, 128>}, {pipeline_mode = #tpu.pipeline_mode<synchronous>, transform_indices = @transform_1, window_bounds = array<i64: 1152, 128>}, {pipeline_mode = #tpu.pipeline_mode<synchronous>, transform_indices = @transform_2, window_bounds = array<i64: 1, 128>}, {pipeline_mode = #tpu.pipeline_mode<synchronous>, transform_indices = @transform_3, window_bounds = array<i64: 1, 128>}, {transform_indices = @transform_4, window_bounds = array<i64: 1, 16, 16, 128>}, {transform_indices = @transform_5, window_bounds = array<i64: 1, 8, 128>}]} {
    %c0 = arith.constant 0 : index
    %c0_0 = arith.constant 0 : index
    %c0_1 = arith.constant 0 : index
    %c0_2 = arith.constant 0 : index
    %0 = vector.load %arg1[%c0, %c0_0, %c0_1, %c0_2] : memref<1x16x16x128xf32, #tpu.memory_space<vmem>>, vector<1x16x16x128xf32>
    %1 = vector.shape_cast %0 : vector<1x16x16x128xf32> to vector<16x16x128xf32>
    %c0_3 = arith.constant 0 : index
    %c0_4 = arith.constant 0 : index
    %2 = vector.load %arg3[%c0_3, %c0_4] : memref<1x128xf32, #tpu.memory_space<vmem>>, vector<1x128xf32>
    %3 = vector.shape_cast %2 : vector<1x128xf32> to vector<1x1x128xf32>
    %c0_5 = arith.constant 0 : index
    %c0_6 = arith.constant 0 : index
    %4 = vector.load %arg4[%c0_5, %c0_6] : memref<1x128xf32, #tpu.memory_space<vmem>>, vector<1x128xf32>
    %5 = vector.shape_cast %4 : vector<1x128xf32> to vector<1x1x128xf32>
    %6 = vector.broadcast %3 : vector<1x1x128xf32> to vector<16x16x128xf32>
    %7 = arith.mulf %1, %6 : vector<16x16x128xf32>
    %8 = vector.broadcast %5 : vector<1x1x128xf32> to vector<16x16x128xf32>
    %9 = arith.addf %7, %8 : vector<16x16x128xf32>
    %cst = arith.constant 0.000000e+00 : f32
    %10 = vector.broadcast %cst : f32 to vector<16x16x128xf32>
    %11 = arith.maximumf %9, %10 : vector<16x16x128xf32>
    %cst_7 = arith.constant 0.000000e+00 : f32
    %12 = vector.broadcast %cst_7 : f32 to vector<18x18x128xf32>
    %c0_8 = arith.constant 0 : index
    %c0_9 = arith.constant 0 : index
    %c0_10 = arith.constant 0 : index
    %13 = vector.load %arg7[%c0_8, %c0_9, %c0_10] : memref<18x18x128xf32, #tpu.memory_space<vmem>>, vector<18x18x128xf32>
    tpu.vector_store %arg7[%c0_8, %c0_9, %c0_10], %12 {strides = array<i32>} : memref<18x18x128xf32, #tpu.memory_space<vmem>>, vector<18x18x128xf32>,
    %c1 = arith.constant 1 : index
    %c1_11 = arith.constant 1 : index
    %c0_12 = arith.constant 0 : index
    %14 = vector.load %arg7[%c1, %c1_11, %c0_12] : memref<18x18x128xf32, #tpu.memory_space<vmem>>, vector<16x16x128xf32>
    tpu.vector_store %arg7[%c1, %c1_11, %c0_12], %11 {strides = array<i32>} : memref<18x18x128xf32, #tpu.memory_space<vmem>>, vector<16x16x128xf32>,
    %c0_13 = arith.constant 0 : index
    %c0_14 = arith.constant 0 : index
    %c0_15 = arith.constant 0 : index
    %15 = vector.load %arg7[%c0_13, %c0_14, %c0_15] : memref<18x18x128xf32, #tpu.memory_space<vmem>>, vector<16x16x128xf32>
    %16 = vector.shape_cast %15 : vector<16x16x128xf32> to vector<256x128xf32>
    %c0_16 = arith.constant 0 : index
    %c0_17 = arith.constant 0 : index
    %17 = vector.load %arg8[%c0_16, %c0_17] : memref<256x1152xf32, #tpu.memory_space<vmem>>, vector<256x128xf32>
    tpu.vector_store %arg8[%c0_16, %c0_17], %16 {strides = array<i32>} : memref<256x1152xf32, #tpu.memory_space<vmem>>, vector<256x128xf32>,
    %c0_18 = arith.constant 0 : index
    %c1_19 = arith.constant 1 : index
    %c0_20 = arith.constant 0 : index
    %18 = vector.load %arg7[%c0_18, %c1_19, %c0_20] : memref<18x18x128xf32, #tpu.memory_space<vmem>>, vector<16x16x128xf32>
    %19 = vector.shape_cast %18 : vector<16x16x128xf32> to vector<256x128xf32>
    %c0_21 = arith.constant 0 : index
    %c128 = arith.constant 128 : index
    %20 = vector.load %arg8[%c0_21, %c128] : memref<256x1152xf32, #tpu.memory_space<vmem>>, vector<256x128xf32>
    tpu.vector_store %arg8[%c0_21, %c128], %19 {strides = array<i32>} : memref<256x1152xf32, #tpu.memory_space<vmem>>, vector<256x128xf32>,
    %c0_22 = arith.constant 0 : index
    %c2 = arith.constant 2 : index
    %c0_23 = arith.constant 0 : index
    %21 = vector.load %arg7[%c0_22, %c2, %c0_23] : memref<18x18x128xf32, #tpu.memory_space<vmem>>, vector<16x16x128xf32>
    %22 = vector.shape_cast %21 : vector<16x16x128xf32> to vector<256x128xf32>
    %c0_24 = arith.constant 0 : index
    %c256 = arith.constant 256 : index
    %23 = vector.load %arg8[%c0_24, %c256] : memref<256x1152xf32, #tpu.memory_space<vmem>>, vector<256x128xf32>
    tpu.vector_store %arg8[%c0_24, %c256], %22 {strides = array<i32>} : memref<256x1152xf32, #tpu.memory_space<vmem>>, vector<256x128xf32>,
    %c1_25 = arith.constant 1 : index
    %c0_26 = arith.constant 0 : index
    %c0_27 = arith.constant 0 : index
    %24 = vector.load %arg7[%c1_25, %c0_26, %c0_27] : memref<18x18x128xf32, #tpu.memory_space<vmem>>, vector<16x16x128xf32>
    %25 = vector.shape_cast %24 : vector<16x16x128xf32> to vector<256x128xf32>
    %c0_28 = arith.constant 0 : index
    %c384 = arith.constant 384 : index
    %26 = vector.load %arg8[%c0_28, %c384] : memref<256x1152xf32, #tpu.memory_space<vmem>>, vector<256x128xf32>
    tpu.vector_store %arg8[%c0_28, %c384], %25 {strides = array<i32>} : memref<256x1152xf32, #tpu.memory_space<vmem>>, vector<256x128xf32>,
    %c1_29 = arith.constant 1 : index
    %c1_30 = arith.constant 1 : index
    %c0_31 = arith.constant 0 : index
    %27 = vector.load %arg7[%c1_29, %c1_30, %c0_31] : memref<18x18x128xf32, #tpu.memory_space<vmem>>, vector<16x16x128xf32>
    %28 = vector.shape_cast %27 : vector<16x16x128xf32> to vector<256x128xf32>
    %c0_32 = arith.constant 0 : index
    %c512 = arith.constant 512 : index
    %29 = vector.load %arg8[%c0_32, %c512] : memref<256x1152xf32, #tpu.memory_space<vmem>>, vector<256x128xf32>
    tpu.vector_store %arg8[%c0_32, %c512], %28 {strides = array<i32>} : memref<256x1152xf32, #tpu.memory_space<vmem>>, vector<256x128xf32>,
    %c1_33 = arith.constant 1 : index
    %c2_34 = arith.constant 2 : index
    %c0_35 = arith.constant 0 : index
    %30 = vector.load %arg7[%c1_33, %c2_34, %c0_35] : memref<18x18x128xf32, #tpu.memory_space<vmem>>, vector<16x16x128xf32>
    %31 = vector.shape_cast %30 : vector<16x16x128xf32> to vector<256x128xf32>
    %c0_36 = arith.constant 0 : index
    %c640 = arith.constant 640 : index
    %32 = vector.load %arg8[%c0_36, %c640] : memref<256x1152xf32, #tpu.memory_space<vmem>>, vector<256x128xf32>
    tpu.vector_store %arg8[%c0_36, %c640], %31 {strides = array<i32>} : memref<256x1152xf32, #tpu.memory_space<vmem>>, vector<256x128xf32>,
    %c2_37 = arith.constant 2 : index
    %c0_38 = arith.constant 0 : index
    %c0_39 = arith.constant 0 : index
    %33 = vector.load %arg7[%c2_37, %c0_38, %c0_39] : memref<18x18x128xf32, #tpu.memory_space<vmem>>, vector<16x16x128xf32>
    %34 = vector.shape_cast %33 : vector<16x16x128xf32> to vector<256x128xf32>
    %c0_40 = arith.constant 0 : index
    %c768 = arith.constant 768 : index
    %35 = vector.load %arg8[%c0_40, %c768] : memref<256x1152xf32, #tpu.memory_space<vmem>>, vector<256x128xf32>
    tpu.vector_store %arg8[%c0_40, %c768], %34 {strides = array<i32>} : memref<256x1152xf32, #tpu.memory_space<vmem>>, vector<256x128xf32>,
    %c2_41 = arith.constant 2 : index
    %c1_42 = arith.constant 1 : index
    %c0_43 = arith.constant 0 : index
    %36 = vector.load %arg7[%c2_41, %c1_42, %c0_43] : memref<18x18x128xf32, #tpu.memory_space<vmem>>, vector<16x16x128xf32>
    %37 = vector.shape_cast %36 : vector<16x16x128xf32> to vector<256x128xf32>
    %c0_44 = arith.constant 0 : index
    %c896 = arith.constant 896 : index
    %38 = vector.load %arg8[%c0_44, %c896] : memref<256x1152xf32, #tpu.memory_space<vmem>>, vector<256x128xf32>
    tpu.vector_store %arg8[%c0_44, %c896], %37 {strides = array<i32>} : memref<256x1152xf32, #tpu.memory_space<vmem>>, vector<256x128xf32>,
    %c2_45 = arith.constant 2 : index
    %c2_46 = arith.constant 2 : index
    %c0_47 = arith.constant 0 : index
    %39 = vector.load %arg7[%c2_45, %c2_46, %c0_47] : memref<18x18x128xf32, #tpu.memory_space<vmem>>, vector<16x16x128xf32>
    %40 = vector.shape_cast %39 : vector<16x16x128xf32> to vector<256x128xf32>
    %c0_48 = arith.constant 0 : index
    %c1024 = arith.constant 1024 : index
    %41 = vector.load %arg8[%c0_48, %c1024] : memref<256x1152xf32, #tpu.memory_space<vmem>>, vector<256x128xf32>
    tpu.vector_store %arg8[%c0_48, %c1024], %40 {strides = array<i32>} : memref<256x1152xf32, #tpu.memory_space<vmem>>, vector<256x128xf32>,
    %c0_49 = arith.constant 0 : index
    %c0_50 = arith.constant 0 : index
    %42 = vector.load %arg8[%c0_49, %c0_50] : memref<256x1152xf32, #tpu.memory_space<vmem>>, vector<256x1152xf32>
    %c0_51 = arith.constant 0 : index
    %c0_52 = arith.constant 0 : index
    %43 = vector.load %arg2[%c0_51, %c0_52] : memref<1152x128xf32, #tpu.memory_space<vmem>>, vector<1152x128xf32>
    %cst_53 = arith.constant dense<0.000000e+00> : vector<256x128xf32>
    %44 = tpu.matmul %42, %43, %cst_53 {dimension_numbers = #tpu.dot_dimension_numbers<[1], [0], [0], [1], [0, 0, 1, 1], [], []>} : vector<256x1152xf32>, vector<1152x128xf32>, vector<256x128xf32> -> vector<256x128xf32>
    %45 = vector.shape_cast %44 : vector<256x128xf32> to vector<16x16x128xf32>
    %c0_54 = arith.constant 0 : index
    %c0_55 = arith.constant 0 : index
    %c0_56 = arith.constant 0 : index
    %c0_57 = arith.constant 0 : index
    %46 = vector.load %arg5[%c0_54, %c0_55, %c0_56, %c0_57] : memref<1x16x16x128xf32, #tpu.memory_space<vmem>>, vector<1x16x16x128xf32>
    %47 = vector.shape_cast %46 : vector<1x16x16x128xf32> to vector<16x16x128xf32>
    %48 = vector.shape_cast %45 : vector<16x16x128xf32> to vector<1x16x16x128xf32>
    tpu.vector_store %arg5[%c0_54, %c0_55, %c0_56, %c0_57], %48 {strides = array<i32>} : memref<1x16x16x128xf32, #tpu.memory_space<vmem>>, vector<1x16x16x128xf32>,
    %cst_58 = arith.constant dense<0.000000e+00> : vector<128xf32>
    %49 = vector.multi_reduction <add>, %44, %cst_58 [0] : vector<256x128xf32> to vector<128xf32>
    %50 = vector.shape_cast %49 : vector<128xf32> to vector<1x128xf32>
    %51 = arith.mulf %44, %44 : vector<256x128xf32>
    %cst_59 = arith.constant dense<0.000000e+00> : vector<128xf32>
    %52 = vector.multi_reduction <add>, %51, %cst_59 [0] : vector<256x128xf32> to vector<128xf32>
    %53 = vector.shape_cast %52 : vector<128xf32> to vector<1x128xf32>
    %54 = tpu.iota {dimensions = array<i32: 0>} : vector<8x128xi32>
    %c0_i32 = arith.constant 0 : i32
    %55 = vector.broadcast %c0_i32 : i32 to vector<8x128xi32>
    %56 = arith.cmpi eq, %54, %55 : vector<8x128xi32>
    %cst_60 = arith.constant 0.000000e+00 : f32
    %57 = vector.shape_cast %50 : vector<1x128xf32> to vector<1x128xf32>
    %58 = vector.broadcast %57 : vector<1x128xf32> to vector<8x128xf32>
    %59 = vector.broadcast %cst_60 : f32 to vector<8x128xf32>
    %60 = arith.select %56, %58, %59 : vector<8x128xi1>, vector<8x128xf32>
    %c1_i32 = arith.constant 1 : i32
    %61 = vector.broadcast %c1_i32 : i32 to vector<8x128xi32>
    %62 = arith.cmpi eq, %54, %61 : vector<8x128xi32>
    %cst_61 = arith.constant 0.000000e+00 : f32
    %63 = vector.shape_cast %53 : vector<1x128xf32> to vector<1x128xf32>
    %64 = vector.broadcast %63 : vector<1x128xf32> to vector<8x128xf32>
    %65 = vector.broadcast %cst_61 : f32 to vector<8x128xf32>
    %66 = arith.select %62, %64, %65 : vector<8x128xi1>, vector<8x128xf32>
    %67 = arith.addf %60, %66 : vector<8x128xf32>
    %c0_62 = arith.constant 0 : index
    %c0_63 = arith.constant 0 : index
    %c0_64 = arith.constant 0 : index
    %68 = vector.load %arg6[%c0_62, %c0_63, %c0_64] : memref<1x8x128xf32, #tpu.memory_space<vmem>>, vector<1x8x128xf32>
    %69 = vector.shape_cast %68 : vector<1x8x128xf32> to vector<8x128xf32>
    %70 = vector.shape_cast %67 : vector<8x128xf32> to vector<1x8x128xf32>
    tpu.vector_store %arg6[%c0_62, %c0_63, %c0_64], %70 {strides = array<i32>} : memref<1x8x128xf32, #tpu.memory_space<vmem>>, vector<1x8x128xf32>,
    return
  }
  func.func @transform_0(%arg0: i32) -> (i32, i32, i32, i32) {
    %c0_i32 = arith.constant 0 : i32
    %c0_i32_0 = arith.constant 0 : i32
    %c0_i32_1 = arith.constant 0 : i32
    %c0_i32_2 = arith.constant 0 : i32
    return %arg0, %c0_i32, %c0_i32_0, %c0_i32_1 : i32, i32, i32, i32
  }
  func.func @transform_1(%arg0: i32) -> (i32, i32) {
    %c0_i32 = arith.constant 0 : i32
    %c0_i32_0 = arith.constant 0 : i32
    %c0_i32_1 = arith.constant 0 : i32
    return %c0_i32, %c0_i32_0 : i32, i32
  }
  func.func @transform_2(%arg0: i32) -> (i32, i32) {
    %c0_i32 = arith.constant 0 : i32
    %c0_i32_0 = arith.constant 0 : i32
    %c0_i32_1 = arith.constant 0 : i32
    return %c0_i32, %c0_i32_0 : i32, i32
  }
  func.func @transform_3(%arg0: i32) -> (i32, i32) {
    %c0_i32 = arith.constant 0 : i32
    %c0_i32_0 = arith.constant 0 : i32
    %c0_i32_1 = arith.constant 0 : i32
    return %c0_i32, %c0_i32_0 : i32, i32
  }
  func.func @transform_4(%arg0: i32) -> (i32, i32, i32, i32) {
    %c0_i32 = arith.constant 0 : i32
    %c0_i32_0 = arith.constant 0 : i32
    %c0_i32_1 = arith.constant 0 : i32
    %c0_i32_2 = arith.constant 0 : i32
    return %arg0, %c0_i32, %c0_i32_0, %c0_i32_1 : i32, i32, i32, i32
  }
  func.func @transform_5(%arg0: i32) -> (i32, i32, i32) {
    %c0_i32 = arith.constant 0 : i32
    %c0_i32_0 = arith.constant 0 : i32
    %c0_i32_1 = arith.constant 0 : i32
    return %arg0, %c0_i32, %c0_i32_0 : i32, i32, i32
  }
}

</mosaic_0001>

<llo_original>
// kernel: basic_conv_block.5
$region0: #{basic_conv_block.5}
  #allocation0 [shape = 'u32[]', space=smem, size = 0x4, offset = 0x4, fixed_abs, tag = 'smem constant byte address 0x4 - core index']
  #allocation1 [shape = 'u32[144,128]{1,0:T(1,128)}', space=vmem, size = 0x12000, scoped, tag = 'internal scratch']
  %s0 = inlined_call_operand.vmem [shape: f32[2,16,16,128], index: 0, kind: input, shape index: {}]
  %s1 = inlined_call_operand.vmem [shape: f32[1,128], index: 1, kind: input, shape index: {}]
  %s2 = inlined_call_operand.vmem [shape: f32[1,128], index: 2, kind: input, shape index: {}]
  %s3 = inlined_call_operand.vmem [shape: f32[2,16,16,128], index: 3, kind: output, shape index: {}]
  %s4 = sld [smem:[#allocation0]]
  $region45: #{basic_conv_block.5} parent=0
    _
  %s6 = ssub.s32 1, %s4
  %s7 = scalar_select 0, %s6, %s4
  loop: start=0, step=1, limit=4
  $region2: #{basic_conv_block.5} parent=0 // loop_pre_header
    _
  $region3: #{basic_conv_block.5} parent=0 // loop_header
    %s9 = sphi 0, %s13
    %p10 = scmp.ge.s32.totalorder %s9, 4
    %s19 = sphi 0, %s21
    %s22 = sphi 0, %s19
    %s23 = sphi 0, %s22
    %s39 = sphi 0, %s23
    %s43 = sphi 0, %s43
    %s45 = sphi 0, %s43
    %s46 = sphi 0, %s45
    %s60 = sphi 0, %s46
    %s64 = sphi 0, %s64
    %s66 = sphi 0, %s64
    %s67 = sphi 0, %s66
    %s81 = sphi 0, %s67
    %s87 = sphi 0, %s89
    %s90 = sphi 0, %s87
    %s91 = sphi 0, %s90
    %s107 = sphi 0, %s91
  $region4: #{basic_conv_block.5} parent=0 // loop_header_branch
    %12 = sbr.rel (%p10) target = $region8
  $region5: #{basic_conv_block.5} parent=0 // loop_body
    %s14 = ssub.s32 %s9, 1
    %s15 = ssub.s32 %s9, 2
    %s16 = sadd.s32 %s9, 1
    %s17 = ssub.s32 %s9, %s16
    %p18 = scmp.eq.s32.totalorder %s17, 0
    %s20 = sadd.s32 %s19, 1
    %s21 = scalar_select %p18, %s19, %s20
    %p24 = pneg %p18
    %p25 = scmp.eq.s32.totalorder %s9, 1
    %p26 = por %p24, %p25
    %p27 = scmp.ne.s32.totalorder %s19, %s22
    %p28 = scmp.eq.s32.totalorder %s9, 0
    %p29 = por %p27, %p28
    %p30 = scmp.ne.s32.totalorder %s19, %s22
    %p31 = scmp.eq.s32.totalorder %s14, 1
    %p32 = por %p30, %p31
    %p33 = scmp.ne.s32.totalorder %s22, %s23
    %p34 = scmp.eq.s32.totalorder %s14, 0
    %p35 = por %p33, %p34
    %p36 = scmp.ne.s32.totalorder %s22, %s23
    %p37 = scmp.eq.s32.totalorder %s15, 1
    %p38 = por %p36, %p37
    %p40 = scmp.ne.s32.totalorder %s23, %s39
    %p41 = scmp.eq.s32.totalorder %s15, 0
    %p42 = por %p40, %p41
    %s44 = sadd.s32 %s43, 1
    %p47 = scmp.eq.s32.totalorder %s9, 1
    %p48 = scmp.ne.s32.totalorder %s43, %s45
    %p49 = scmp.eq.s32.totalorder %s9, 0
    %p50 = por %p48, %p49
    %p51 = scmp.ne.s32.totalorder %s43, %s45
    %p52 = scmp.eq.s32.totalorder %s14, 1
    %p53 = por %p51, %p52
    %p54 = scmp.ne.s32.totalorder %s45, %s46
    %p55 = scmp.eq.s32.totalorder %s14, 0
    %p56 = por %p54, %p55
    %p57 = scmp.ne.s32.totalorder %s45, %s46
    %p58 = scmp.eq.s32.totalorder %s15, 1
    %p59 = por %p57, %p58
    %p61 = scmp.ne.s32.totalorder %s46, %s60
    %p62 = scmp.eq.s32.totalorder %s15, 0
    %p63 = por %p61, %p62
    %s65 = sadd.s32 %s64, 1
    %p68 = scmp.eq.s32.totalorder %s9, 1
    %p69 = scmp.ne.s32.totalorder %s64, %s66
    %p70 = scmp.eq.s32.totalorder %s9, 0
    %p71 = por %p69, %p70
    %p72 = scmp.ne.s32.totalorder %s64, %s66
    %p73 = scmp.eq.s32.totalorder %s14, 1
    %p74 = por %p72, %p73
    %p75 = scmp.ne.s32.totalorder %s66, %s67
    %p76 = scmp.eq.s32.totalorder %s14, 0
    %p77 = por %p75, %p76
    %p78 = scmp.ne.s32.totalorder %s66, %s67
    %p79 = scmp.eq.s32.totalorder %s15, 1
    %p80 = por %p78, %p79
    %p82 = scmp.ne.s32.totalorder %s67, %s81
    %p83 = scmp.eq.s32.totalorder %s15, 0
    %p84 = por %p82, %p83
    %s85 = ssub.s32 %s9, %s16
    %p86 = scmp.eq.s32.totalorder %s85, 0
    %s88 = sadd.s32 %s87, 1
    %s89 = scalar_select %p86, %s87, %s88
    %p92 = pneg %p86
    %p93 = scmp.eq.s32.totalorder %s9, 1
    %p94 = por %p92, %p93
    %p95 = scmp.ne.s32.totalorder %s87, %s90
    %p96 = scmp.eq.s32.totalorder %s9, 0
    %p97 = por %p95, %p96
    %p98 = scmp.ne.s32.totalorder %s87, %s90
    %p99 = scmp.eq.s32.totalorder %s14, 1
    %p100 = por %p98, %p99
    %p101 = scmp.ne.s32.totalorder %s90, %s91
    %p102 = scmp.eq.s32.totalorder %s14, 0
    %p103 = por %p101, %p102
    %p104 = scmp.ne.s32.totalorder %s90, %s91
    %p105 = scmp.eq.s32.totalorder %s15, 1
    %p106 = por %p104, %p105
    %p108 = scmp.ne.s32.totalorder %s91, %s107
    %p109 = scmp.eq.s32.totalorder %s15, 0
    %p110 = por %p108, %p109
    %p111 = scmp.le.s32.totalorder 1, %s9
    %p112 = scmp.lt.s32.totalorder %s9, 3
    %p113 = pnand %p111, %p112
    %p114 = pneg %p113
    // Predicated region
    $region9: #{basic_conv_block.5} parent=5 // pred_check
      _
    $region10: #{basic_conv_block.5} parent=5 // pred_check_branch
      %116 = sbr.rel (%p113) target = $region12
    $region11: #{basic_conv_block.5} parent=5 // pred_region
      %s117 = ssub.s32 %s9, 1
      // Predicated region
      $region13: #{basic_conv_block.5} parent=11 // pred_check
        %p118 = pneg %p56
      $region14: #{basic_conv_block.5} parent=11 // pred_check_branch
        %120 = sbr.rel (%p118) target = $region16
      $region15: #{basic_conv_block.5} parent=11 // pred_region
        _
      $region16: #{basic_conv_block.5} parent=11 // pred_fallthru
        _
      // Predicated region
      $region17: #{basic_conv_block.5} parent=11 // pred_check
        %p121 = pneg %p77
      $region18: #{basic_conv_block.5} parent=11 // pred_check_branch
        %123 = sbr.rel (%p121) target = $region20
      $region19: #{basic_conv_block.5} parent=11 // pred_region
        _
      $region20: #{basic_conv_block.5} parent=11 // pred_fallthru
        _
    $region12: #{basic_conv_block.5} parent=5 // pred_fallthru
      _
    %p124 = scmp.lt.s32.totalorder %s9, 2
    // Predicated region
    $region21: #{basic_conv_block.5} parent=5 // pred_check
      %p125 = pneg %p124
    $region22: #{basic_conv_block.5} parent=5 // pred_check_branch
      %127 = sbr.rel (%p125) target = $region24
    $region23: #{basic_conv_block.5} parent=5 // pred_region
      // Predicated region
      $region25: #{basic_conv_block.5} parent=23 // pred_check
        %p128 = pneg %p29
      $region26: #{basic_conv_block.5} parent=23 // pred_check_branch
        %130 = sbr.rel (%p128) target = $region28
      $region27: #{basic_conv_block.5} parent=23 // pred_region
        %p131 = scmp.lt.s32.totalorder %s9, 1
        %s132 = scalar_select %p131, %s9, 1
        %s133 = smul.addr %s132, 32
        %s134 = smul.addr %s133, 8
        %s135 = scalar_lea.vmem %s0, %s134
      $region28: #{basic_conv_block.5} parent=23 // pred_fallthru
        _
    $region24: #{basic_conv_block.5} parent=5 // pred_fallthru
      _
    %p136 = scmp.le.s32.totalorder 1, %s9
    %p137 = scmp.lt.s32.totalorder %s9, 3
    %p138 = pnand %p136, %p137
    %p139 = pneg %p138
    // Predicated region
    $region29: #{basic_conv_block.5} parent=5 // pred_check
      _
    $region30: #{basic_conv_block.5} parent=5 // pred_check_branch
      %141 = sbr.rel (%p138) target = $region32
    $region31: #{basic_conv_block.5} parent=5 // pred_region
      %s142 = ssub.s32 %s9, 1
      %p143 = scmp.lt.s32.totalorder %s14, 1
      %s144 = scalar_select %p143, %s14, 1
      %s145 = smul.addr %s144, 32
      %s146 = smul.addr %s145, 8
      %s147 = scalar_lea.vmem %s0, %s146
      %p148 = pneg %p35
      %p149 = pneg %p32
      %p150 = pneg %p56
      %p151 = pneg %p53
      %p152 = pneg %p77
      %p153 = pneg %p74
      %p154 = pneg %p103
      %p155 = pneg %p100
      %p156 = scmp.lt.s32.totalorder %s14, 1
      %s157 = scalar_select %p156, %s14, 1
      %s158 = smul.addr %s157, 32
      %s159 = smul.addr %s158, 8
      %s160 = scalar_lea.vmem %s3, %s159
      %p161 = scmp.lt.s32.totalorder %s14, 1
      %s162 = scalar_select %p161, %s14, 1
      %s163 = smul.addr %s162, 32
      %s164 = smul.addr %s163, 8
      %s165 = scalar_lea.vmem %s0, %s164
      %p166 = scmp.lt.s32.totalorder %s14, 1
      %s167 = scalar_select %p166, %s14, 1
      %s168 = smul.addr %s167, 32
      %s169 = smul.addr %s168, 8
      %s170 = scalar_lea.vmem %s3, %s169
      %v171 = vld [vmem:[%s1] sm:$0x1]
      %v172 = vld [vmem:[%s2] sm:$0x1]
      %v173 = vld [vmem:[%s165] sm:$0xff]
      %v174 = vld [vmem:[%s165 + $0x8] sm:$0xff]
      %v175 = vld [vmem:[%s165 + $0x10] sm:$0xff]
      %v176 = vld [vmem:[%s165 + $0x18] sm:$0xff]
      %v177 = vld [vmem:[%s165 + $0x20] sm:$0xff]
      %v178 = vld [vmem:[%s165 + $0x28] sm:$0xff]
      %v179 = vld [vmem:[%s165 + $0x30] sm:$0xff]
      %v180 = vld [vmem:[%s165 + $0x38] sm:$0xff]
      %v181 = vld [vmem:[%s165 + $0x40] sm:$0xff]
      %v182 = vld [vmem:[%s165 + $0x48] sm:$0xff]
      %v183 = vld [vmem:[%s165 + $0x50] sm:$0xff]
      %v184 = vld [vmem:[%s165 + $0x58] sm:$0xff]
      %v185 = vld [vmem:[%s165 + $0x60] sm:$0xff]
      %v186 = vld [vmem:[%s165 + $0x68] sm:$0xff]
      %v187 = vld [vmem:[%s165 + $0x70] sm:$0xff]
      %v188 = vld [vmem:[%s165 + $0x78] sm:$0xff]
      %v189 = vld [vmem:[%s165 + $0x80] sm:$0xff]
      %v190 = vld [vmem:[%s165 + $0x88] sm:$0xff]
      %v191 = vld [vmem:[%s165 + $0x90] sm:$0xff]
      %v192 = vld [vmem:[%s165 + $0x98] sm:$0xff]
      %v193 = vld [vmem:[%s165 + $0xa0] sm:$0xff]
      %v194 = vld [vmem:[%s165 + $0xa8] sm:$0xff]
      %v195 = vld [vmem:[%s165 + $0xb0] sm:$0xff]
      %v196 = vld [vmem:[%s165 + $0xb8] sm:$0xff]
      %v197 = vld [vmem:[%s165 + $0xc0] sm:$0xff]
      %v198 = vld [vmem:[%s165 + $0xc8] sm:$0xff]
      %v199 = vld [vmem:[%s165 + $0xd0] sm:$0xff]
      %v200 = vld [vmem:[%s165 + $0xd8] sm:$0xff]
      %v201 = vld [vmem:[%s165 + $0xe0] sm:$0xff]
      %v202 = vld [vmem:[%s165 + $0xe8] sm:$0xff]
      %v203 = vld [vmem:[%s165 + $0xf0] sm:$0xff]
      %v204 = vld [vmem:[%s165 + $0xf8] sm:$0xff]
      %v206 = vlaneseq
      %v207 = vshrl.u32 %v206, 7
      %v208 = vsub.s32 0, %v207
      %v209 = vrot.slane %v171, %v208
      %v211 = vmul.f32 %v173, %v209
      %v212 = vmul.f32 %v174, %v209
      %v213 = vmul.f32 %v175, %v209
      %v214 = vmul.f32 %v176, %v209
      %v215 = vmul.f32 %v177, %v209
      %v216 = vmul.f32 %v178, %v209
      %v217 = vmul.f32 %v179, %v209
      %v218 = vmul.f32 %v180, %v209
      %v219 = vmul.f32 %v181, %v209
      %v220 = vmul.f32 %v182, %v209
      %v221 = vmul.f32 %v183, %v209
      %v222 = vmul.f32 %v184, %v209
      %v223 = vmul.f32 %v185, %v209
      %v224 = vmul.f32 %v186, %v209
      %v225 = vmul.f32 %v187, %v209
      %v226 = vmul.f32 %v188, %v209
      %v227 = vmul.f32 %v189, %v209
      %v228 = vmul.f32 %v190, %v209
      %v229 = vmul.f32 %v191, %v209
      %v230 = vmul.f32 %v192, %v209
      %v231 = vmul.f32 %v193, %v209
      %v232 = vmul.f32 %v194, %v209
      %v233 = vmul.f32 %v195, %v209
      %v234 = vmul.f32 %v196, %v209
      %v235 = vmul.f32 %v197, %v209
      %v236 = vmul.f32 %v198, %v209
      %v237 = vmul.f32 %v199, %v209
      %v238 = vmul.f32 %v200, %v209
      %v239 = vmul.f32 %v201, %v209
      %v240 = vmul.f32 %v202, %v209
      %v241 = vmul.f32 %v203, %v209
      %v242 = vmul.f32 %v204, %v209
      %v244 = vlaneseq
      %v245 = vshrl.u32 %v244, 7
      %v246 = vsub.s32 0, %v245
      %v247 = vrot.slane %v172, %v246
      %v249 = vadd.f32 %v211, %v247
      %v250 = vadd.f32 %v212, %v247
      %v251 = vadd.f32 %v213, %v247
      %v252 = vadd.f32 %v214, %v247
      %v253 = vadd.f32 %v215, %v247
      %v254 = vadd.f32 %v216, %v247
      %v255 = vadd.f32 %v217, %v247
      %v256 = vadd.f32 %v218, %v247
      %v257 = vadd.f32 %v219, %v247
      %v258 = vadd.f32 %v220, %v247
      %v259 = vadd.f32 %v221, %v247
      %v260 = vadd.f32 %v222, %v247
      %v261 = vadd.f32 %v223, %v247
      %v262 = vadd.f32 %v224, %v247
      %v263 = vadd.f32 %v225, %v247
      %v264 = vadd.f32 %v226, %v247
      %v265 = vadd.f32 %v227, %v247
      %v266 = vadd.f32 %v228, %v247
      %v267 = vadd.f32 %v229, %v247
      %v268 = vadd.f32 %v230, %v247
      %v269 = vadd.f32 %v231, %v247
      %v270 = vadd.f32 %v232, %v247
      %v271 = vadd.f32 %v233, %v247
      %v272 = vadd.f32 %v234, %v247
      %v273 = vadd.f32 %v235, %v247
      %v274 = vadd.f32 %v236, %v247
      %v275 = vadd.f32 %v237, %v247
      %v276 = vadd.f32 %v238, %v247
      %v277 = vadd.f32 %v239, %v247
      %v278 = vadd.f32 %v240, %v247
      %v279 = vadd.f32 %v241, %v247
      %v280 = vadd.f32 %v242, %v247
      %v281 = vmax.f32 %v249, 0.0
      %v282 = vmax.f32 %v250, 0.0
      %v283 = vmax.f32 %v251, 0.0
      %v284 = vmax.f32 %v252, 0.0
      %v285 = vmax.f32 %v253, 0.0
      %v286 = vmax.f32 %v254, 0.0
      %v287 = vmax.f32 %v255, 0.0
      %v288 = vmax.f32 %v256, 0.0
      %v289 = vmax.f32 %v257, 0.0
      %v290 = vmax.f32 %v258, 0.0
      %v291 = vmax.f32 %v259, 0.0
      %v292 = vmax.f32 %v260, 0.0
      %v293 = vmax.f32 %v261, 0.0
      %v294 = vmax.f32 %v262, 0.0
      %v295 = vmax.f32 %v263, 0.0
      %v296 = vmax.f32 %v264, 0.0
      %v297 = vmax.f32 %v265, 0.0
      %v298 = vmax.f32 %v266, 0.0
      %v299 = vmax.f32 %v267, 0.0
      %v300 = vmax.f32 %v268, 0.0
      %v301 = vmax.f32 %v269, 0.0
      %v302 = vmax.f32 %v270, 0.0
      %v303 = vmax.f32 %v271, 0.0
      %v304 = vmax.f32 %v272, 0.0
      %v305 = vmax.f32 %v273, 0.0
      %v306 = vmax.f32 %v274, 0.0
      %v307 = vmax.f32 %v275, 0.0
      %v308 = vmax.f32 %v276, 0.0
      %v309 = vmax.f32 %v277, 0.0
      %v310 = vmax.f32 %v278, 0.0
      %v311 = vmax.f32 %v279, 0.0
      %v312 = vmax.f32 %v280, 0.0
      %313 = vst [vmem:[%s170] sm:$0xff] %v281
      %314 = vst [vmem:[%s170 + $0x8] sm:$0xff] %v282
      %315 = vst [vmem:[%s170 + $0x10] sm:$0xff] %v283
      %316 = vst [vmem:[%s170 + $0x18] sm:$0xff] %v284
      %317 = vst [vmem:[%s170 + $0x20] sm:$0xff] %v285
      %318 = vst [vmem:[%s170 + $0x28] sm:$0xff] %v286
      %319 = vst [vmem:[%s170 + $0x30] sm:$0xff] %v287
      %320 = vst [vmem:[%s170 + $0x38] sm:$0xff] %v288
      %321 = vst [vmem:[%s170 + $0x40] sm:$0xff] %v289
      %322 = vst [vmem:[%s170 + $0x48] sm:$0xff] %v290
      %323 = vst [vmem:[%s170 + $0x50] sm:$0xff] %v291
      %324 = vst [vmem:[%s170 + $0x58] sm:$0xff] %v292
      %325 = vst [vmem:[%s170 + $0x60] sm:$0xff] %v293
      %326 = vst [vmem:[%s170 + $0x68] sm:$0xff] %v294
      %327 = vst [vmem:[%s170 + $0x70] sm:$0xff] %v295
      %328 = vst [vmem:[%s170 + $0x78] sm:$0xff] %v296
      %329 = vst [vmem:[%s170 + $0x80] sm:$0xff] %v297
      %330 = vst [vmem:[%s170 + $0x88] sm:$0xff] %v298
      %331 = vst [vmem:[%s170 + $0x90] sm:$0xff] %v299
      %332 = vst [vmem:[%s170 + $0x98] sm:$0xff] %v300
      %333 = vst [vmem:[%s170 + $0xa0] sm:$0xff] %v301
      %334 = vst [vmem:[%s170 + $0xa8] sm:$0xff] %v302
      %335 = vst [vmem:[%s170 + $0xb0] sm:$0xff] %v303
      %336 = vst [vmem:[%s170 + $0xb8] sm:$0xff] %v304
      %337 = vst [vmem:[%s170 + $0xc0] sm:$0xff] %v305
      %338 = vst [vmem:[%s170 + $0xc8] sm:$0xff] %v306
      %339 = vst [vmem:[%s170 + $0xd0] sm:$0xff] %v307
      %340 = vst [vmem:[%s170 + $0xd8] sm:$0xff] %v308
      %341 = vst [vmem:[%s170 + $0xe0] sm:$0xff] %v309
      %342 = vst [vmem:[%s170 + $0xe8] sm:$0xff] %v310
      %343 = vst [vmem:[%s170 + $0xf0] sm:$0xff] %v311
      %344 = vst [vmem:[%s170 + $0xf8] sm:$0xff] %v312
      %p345 = scmp.lt.s32.totalorder %s14, 1
      %s346 = scalar_select %p345, %s14, 1
      %s347 = smul.addr %s346, 32
      %s348 = smul.addr %s347, 8
      %s349 = scalar_lea.vmem %s3, %s348
      // Predicated region
      $region33: #{basic_conv_block.5} parent=31 // pred_check
        %p350 = pneg %p100
      $region34: #{basic_conv_block.5} parent=31 // pred_check_branch
        %352 = sbr.rel (%p350) target = $region36
      $region35: #{basic_conv_block.5} parent=31 // pred_region
        _
      $region36: #{basic_conv_block.5} parent=31 // pred_fallthru
        _
    $region32: #{basic_conv_block.5} parent=5 // pred_fallthru
      _
    %p353 = scmp.le.s32.totalorder 2, %s9
    // Predicated region
    $region37: #{basic_conv_block.5} parent=5 // pred_check
      %p354 = pneg %p353
    $region38: #{basic_conv_block.5} parent=5 // pred_check_branch
      %356 = sbr.rel (%p354) target = $region40
    $region39: #{basic_conv_block.5} parent=5 // pred_region
      %s357 = ssub.s32 %s9, 2
      // Predicated region
      $region41: #{basic_conv_block.5} parent=39 // pred_check
        %p358 = pneg %p106
      $region42: #{basic_conv_block.5} parent=39 // pred_check_branch
        %360 = sbr.rel (%p358) target = $region44
      $region43: #{basic_conv_block.5} parent=39 // pred_region
        %p361 = scmp.lt.s32.totalorder %s15, 1
        %s362 = scalar_select %p361, %s15, 1
        %s363 = smul.addr %s362, 32
        %s364 = smul.addr %s363, 8
        %s365 = scalar_lea.vmem %s3, %s364
      $region44: #{basic_conv_block.5} parent=39 // pred_fallthru
        _
    $region40: #{basic_conv_block.5} parent=5 // pred_fallthru
      _
  $region6: #{basic_conv_block.5} parent=0 // loop_footer
    %s13 = sadd.s32 1, %s9
  $region7: #{basic_conv_block.5} parent=0 // loop_footer_branch
    %8 = sbr.rel target = $region3
  $region8: #{basic_conv_block.5} parent=0 // loop_exit
    _

// kernel: basic_conv_block.3
$region0: #{basic_conv_block.3}
  #allocation0 [shape = 'u32[]', space=smem, size = 0x4, offset = 0x4, fixed_abs, tag = 'smem constant byte address 0x4 - core index']
  #allocation1 [shape = 'u32[144,128]{1,0:T(1,128)}', space=vmem, size = 0x12000, scoped, tag = 'internal scratch']
  #allocation2 [shape = 'f32[18,18,128]{2,1,0:T(8,128)}', space=vmem, size = 0x36000, scoped, tag = 'scratch operand']
  #allocation3 [shape = 'f32[256,1152]{1,0:T(8,128)}', space=vmem, size = 0x120000, scoped, tag = 'scratch operand']
  %s0 = inlined_call_operand.vmem [shape: f32[2,16,16,128], index: 0, kind: input, shape index: {}]
  %s1 = inlined_call_operand.vmem [shape: f32[1152,128], index: 1, kind: input, shape index: {}]
  %s2 = inlined_call_operand.vmem [shape: f32[1,128], index: 2, kind: input, shape index: {}, may-alias: {2,3}]
  %s3 = inlined_call_operand.vmem [shape: f32[1,128], index: 3, kind: input, shape index: {}, may-alias: {2,3}]
  %s4 = inlined_call_operand.vmem [shape: f32[2,16,16,128], index: 4, kind: output, shape index: {0}]
  %s5 = inlined_call_operand.vmem [shape: f32[2,8,128], index: 5, kind: output, shape index: {1}]
  %6 = xla_tuple %s4, %s5
  %s7 = sld [smem:[#allocation0]]
  $region57: #{basic_conv_block.3} parent=0
    _
  %s9 = ssub.s32 1, %s7
  %s10 = scalar_select 0, %s9, %s7
  loop: start=0, step=1, limit=4
  $region2: #{basic_conv_block.3} parent=0 // loop_pre_header
    _
  $region3: #{basic_conv_block.3} parent=0 // loop_header
    %s12 = sphi 0, %s16
    %p13 = scmp.ge.s32.totalorder %s12, 4
    %s22 = sphi 0, %s24
    %s25 = sphi 0, %s22
    %s26 = sphi 0, %s25
    %s42 = sphi 0, %s26
    %s46 = sphi 0, %s46
    %s48 = sphi 0, %s46
    %s49 = sphi 0, %s48
    %s63 = sphi 0, %s49
    %s67 = sphi 0, %s67
    %s69 = sphi 0, %s67
    %s70 = sphi 0, %s69
    %s84 = sphi 0, %s70
    %s88 = sphi 0, %s88
    %s90 = sphi 0, %s88
    %s91 = sphi 0, %s90
    %s105 = sphi 0, %s91
    %s111 = sphi 0, %s113
    %s114 = sphi 0, %s111
    %s115 = sphi 0, %s114
    %s131 = sphi 0, %s115
    %s137 = sphi 0, %s139
    %s140 = sphi 0, %s137
    %s141 = sphi 0, %s140
    %s157 = sphi 0, %s141
  $region4: #{basic_conv_block.3} parent=0 // loop_header_branch
    %15 = sbr.rel (%p13) target = $region8
  $region5: #{basic_conv_block.3} parent=0 // loop_body
    %s17 = ssub.s32 %s12, 1
    %s18 = ssub.s32 %s12, 2
    %s19 = sadd.s32 %s12, 1
    %s20 = ssub.s32 %s12, %s19
    %p21 = scmp.eq.s32.totalorder %s20, 0
    %s23 = sadd.s32 %s22, 1
    %s24 = scalar_select %p21, %s22, %s23
    %p27 = pneg %p21
    %p28 = scmp.eq.s32.totalorder %s12, 1
    %p29 = por %p27, %p28
    %p30 = scmp.ne.s32.totalorder %s22, %s25
    %p31 = scmp.eq.s32.totalorder %s12, 0
    %p32 = por %p30, %p31
    %p33 = scmp.ne.s32.totalorder %s22, %s25
    %p34 = scmp.eq.s32.totalorder %s17, 1
    %p35 = por %p33, %p34
    %p36 = scmp.ne.s32.totalorder %s25, %s26
    %p37 = scmp.eq.s32.totalorder %s17, 0
    %p38 = por %p36, %p37
    %p39 = scmp.ne.s32.totalorder %s25, %s26
    %p40 = scmp.eq.s32.totalorder %s18, 1
    %p41 = por %p39, %p40
    %p43 = scmp.ne.s32.totalorder %s26, %s42
    %p44 = scmp.eq.s32.totalorder %s18, 0
    %p45 = por %p43, %p44
    %s47 = sadd.s32 %s46, 1
    %p50 = scmp.eq.s32.totalorder %s12, 1
    %p51 = scmp.ne.s32.totalorder %s46, %s48
    %p52 = scmp.eq.s32.totalorder %s12, 0
    %p53 = por %p51, %p52
    %p54 = scmp.ne.s32.totalorder %s46, %s48
    %p55 = scmp.eq.s32.totalorder %s17, 1
    %p56 = por %p54, %p55
    %p57 = scmp.ne.s32.totalorder %s48, %s49
    %p58 = scmp.eq.s32.totalorder %s17, 0
    %p59 = por %p57, %p58
    %p60 = scmp.ne.s32.totalorder %s48, %s49
    %p61 = scmp.eq.s32.totalorder %s18, 1
    %p62 = por %p60, %p61
    %p64 = scmp.ne.s32.totalorder %s49, %s63
    %p65 = scmp.eq.s32.totalorder %s18, 0
    %p66 = por %p64, %p65
    %s68 = sadd.s32 %s67, 1
    %p71 = scmp.eq.s32.totalorder %s12, 1
    %p72 = scmp.ne.s32.totalorder %s67, %s69
    %p73 = scmp.eq.s32.totalorder %s12, 0
    %p74 = por %p72, %p73
    %p75 = scmp.ne.s32.totalorder %s67, %s69
    %p76 = scmp.eq.s32.totalorder %s17, 1
    %p77 = por %p75, %p76
    %p78 = scmp.ne.s32.totalorder %s69, %s70
    %p79 = scmp.eq.s32.totalorder %s17, 0
    %p80 = por %p78, %p79
    %p81 = scmp.ne.s32.totalorder %s69, %s70
    %p82 = scmp.eq.s32.totalorder %s18, 1
    %p83 = por %p81, %p82
    %p85 = scmp.ne.s32.totalorder %s70, %s84
    %p86 = scmp.eq.s32.totalorder %s18, 0
    %p87 = por %p85, %p86
    %s89 = sadd.s32 %s88, 1
    %p92 = scmp.eq.s32.totalorder %s12, 1
    %p93 = scmp.ne.s32.totalorder %s88, %s90
    %p94 = scmp.eq.s32.totalorder %s12, 0
    %p95 = por %p93, %p94
    %p96 = scmp.ne.s32.totalorder %s88, %s90
    %p97 = scmp.eq.s32.totalorder %s17, 1
    %p98 = por %p96, %p97
    %p99 = scmp.ne.s32.totalorder %s90, %s91
    %p100 = scmp.eq.s32.totalorder %s17, 0
    %p101 = por %p99, %p100
    %p102 = scmp.ne.s32.totalorder %s90, %s91
    %p103 = scmp.eq.s32.totalorder %s18, 1
    %p104 = por %p102, %p103
    %p106 = scmp.ne.s32.totalorder %s91, %s105
    %p107 = scmp.eq.s32.totalorder %s18, 0
    %p108 = por %p106, %p107
    %s109 = ssub.s32 %s12, %s19
    %p110 = scmp.eq.s32.totalorder %s109, 0
    %s112 = sadd.s32 %s111, 1
    %s113 = scalar_select %p110, %s111, %s112
    %p116 = pneg %p110
    %p117 = scmp.eq.s32.totalorder %s12, 1
    %p118 = por %p116, %p117
    %p119 = scmp.ne.s32.totalorder %s111, %s114
    %p120 = scmp.eq.s32.totalorder %s12, 0
    %p121 = por %p119, %p120
    %p122 = scmp.ne.s32.totalorder %s111, %s114
    %p123 = scmp.eq.s32.totalorder %s17, 1
    %p124 = por %p122, %p123
    %p125 = scmp.ne.s32.totalorder %s114, %s115
    %p126 = scmp.eq.s32.totalorder %s17, 0
    %p127 = por %p125, %p126
    %p128 = scmp.ne.s32.totalorder %s114, %s115
    %p129 = scmp.eq.s32.totalorder %s18, 1
    %p130 = por %p128, %p129
    %p132 = scmp.ne.s32.totalorder %s115, %s131
    %p133 = scmp.eq.s32.totalorder %s18, 0
    %p134 = por %p132, %p133
    %s135 = ssub.s32 %s12, %s19
    %p136 = scmp.eq.s32.totalorder %s135, 0
    %s138 = sadd.s32 %s137, 1
    %s139 = scalar_select %p136, %s137, %s138
    %p142 = pneg %p136
    %p143 = scmp.eq.s32.totalorder %s12, 1
    %p144 = por %p142, %p143
    %p145 = scmp.ne.s32.totalorder %s137, %s140
    %p146 = scmp.eq.s32.totalorder %s12, 0
    %p147 = por %p145, %p146
    %p148 = scmp.ne.s32.totalorder %s137, %s140
    %p149 = scmp.eq.s32.totalorder %s17, 1
    %p150 = por %p148, %p149
    %p151 = scmp.ne.s32.totalorder %s140, %s141
    %p152 = scmp.eq.s32.totalorder %s17, 0
    %p153 = por %p151, %p152
    %p154 = scmp.ne.s32.totalorder %s140, %s141
    %p155 = scmp.eq.s32.totalorder %s18, 1
    %p156 = por %p154, %p155
    %p158 = scmp.ne.s32.totalorder %s141, %s157
    %p159 = scmp.eq.s32.totalorder %s18, 0
    %p160 = por %p158, %p159
    %p161 = scmp.le.s32.totalorder 1, %s12
    %p162 = scmp.lt.s32.totalorder %s12, 3
    %p163 = pnand %p161, %p162
    %p164 = pneg %p163
    // Predicated region
    $region9: #{basic_conv_block.3} parent=5 // pred_check
      _
    $region10: #{basic_conv_block.3} parent=5 // pred_check_branch
      %166 = sbr.rel (%p163) target = $region12
    $region11: #{basic_conv_block.3} parent=5 // pred_region
      %s167 = ssub.s32 %s12, 1
      // Predicated region
      $region13: #{basic_conv_block.3} parent=11 // pred_check
        %p168 = pneg %p59
      $region14: #{basic_conv_block.3} parent=11 // pred_check_branch
        %170 = sbr.rel (%p168) target = $region16
      $region15: #{basic_conv_block.3} parent=11 // pred_region
        _
      $region16: #{basic_conv_block.3} parent=11 // pred_fallthru
        _
      // Predicated region
      $region17: #{basic_conv_block.3} parent=11 // pred_check
        %p171 = pneg %p80
      $region18: #{basic_conv_block.3} parent=11 // pred_check_branch
        %173 = sbr.rel (%p171) target = $region20
      $region19: #{basic_conv_block.3} parent=11 // pred_region
        _
      $region20: #{basic_conv_block.3} parent=11 // pred_fallthru
        _
      // Predicated region
      $region21: #{basic_conv_block.3} parent=11 // pred_check
        %p174 = pneg %p101
      $region22: #{basic_conv_block.3} parent=11 // pred_check_branch
        %176 = sbr.rel (%p174) target = $region24
      $region23: #{basic_conv_block.3} parent=11 // pred_region
        _
      $region24: #{basic_conv_block.3} parent=11 // pred_fallthru
        _
    $region12: #{basic_conv_block.3} parent=5 // pred_fallthru
      _
    %p177 = scmp.lt.s32.totalorder %s12, 2
    // Predicated region
    $region25: #{basic_conv_block.3} parent=5 // pred_check
      %p178 = pneg %p177
    $region26: #{basic_conv_block.3} parent=5 // pred_check_branch
      %180 = sbr.rel (%p178) target = $region28
    $region27: #{basic_conv_block.3} parent=5 // pred_region
      // Predicated region
      $region29: #{basic_conv_block.3} parent=27 // pred_check
        %p181 = pneg %p32
      $region30: #{basic_conv_block.3} parent=27 // pred_check_branch
        %183 = sbr.rel (%p181) target = $region32
      $region31: #{basic_conv_block.3} parent=27 // pred_region
        %p184 = scmp.lt.s32.totalorder %s12, 1
        %s185 = scalar_select %p184, %s12, 1
        %s186 = smul.addr %s185, 32
        %s187 = smul.addr %s186, 8
        %s188 = scalar_lea.vmem %s0, %s187
      $region32: #{basic_conv_block.3} parent=27 // pred_fallthru
        _
    $region28: #{basic_conv_block.3} parent=5 // pred_fallthru
      _
    %p189 = scmp.le.s32.totalorder 1, %s12
    %p190 = scmp.lt.s32.totalorder %s12, 3
    %p191 = pnand %p189, %p190
    %p192 = pneg %p191
    // Predicated region
    $region33: #{basic_conv_block.3} parent=5 // pred_check
      _
    $region34: #{basic_conv_block.3} parent=5 // pred_check_branch
      %194 = sbr.rel (%p191) target = $region36
    $region35: #{basic_conv_block.3} parent=5 // pred_region
      %s195 = ssub.s32 %s12, 1
      %p196 = scmp.lt.s32.totalorder %s17, 1
      %s197 = scalar_select %p196, %s17, 1
      %s198 = smul.addr %s197, 32
      %s199 = smul.addr %s198, 8
      %s200 = scalar_lea.vmem %s0, %s199
      %p201 = pneg %p38
      %p202 = pneg %p35
      %p203 = pneg %p59
      %p204 = pneg %p56
      %p205 = pneg %p80
      %p206 = pneg %p77
      %p207 = pneg %p101
      %p208 = pneg %p98
      %p209 = pneg %p127
      %p210 = pneg %p124
      %p211 = scmp.lt.s32.totalorder %s17, 1
      %s212 = scalar_select %p211, %s17, 1
      %s213 = smul.addr %s212, 32
      %s214 = smul.addr %s213, 8
      %s215 = scalar_lea.vmem %s4, %s214
      %p216 = pneg %p153
      %p217 = pneg %p150
      %p218 = scmp.lt.s32.totalorder %s17, 1
      %s219 = scalar_select %p218, %s17, 1
      %s220 = smul.addr %s219, 8
      %s221 = scalar_lea.vmem %s5, %s220
      %p222 = scmp.lt.s32.totalorder %s17, 1
      %s223 = scalar_select %p222, %s17, 1
      %s224 = smul.addr %s223, 32
      %s225 = smul.addr %s224, 8
      %s226 = scalar_lea.vmem %s0, %s225
      %p227 = scmp.lt.s32.totalorder %s17, 1
      %s228 = scalar_select %p227, %s17, 1
      %s229 = smul.addr %s228, 32
      %s230 = smul.addr %s229, 8
      %s231 = scalar_lea.vmem %s4, %s230
      %p232 = scmp.lt.s32.totalorder %s17, 1
      %s233 = scalar_select %p232, %s17, 1
      %s234 = smul.addr %s233, 8
      %s235 = scalar_lea.vmem %s5, %s234
      %v236 = vld [vmem:[%s226] sm:$0xff]
      %v237 = vld [vmem:[%s226 + $0x8] sm:$0xff]
      %v238 = vld [vmem:[%s226 + $0x10] sm:$0xff]
      %v239 = vld [vmem:[%s226 + $0x18] sm:$0xff]
      %v240 = vld [vmem:[%s226 + $0x20] sm:$0xff]
      %v241 = vld [vmem:[%s226 + $0x28] sm:$0xff]
      %v242 = vld [vmem:[%s226 + $0x30] sm:$0xff]
      %v243 = vld [vmem:[%s226 + $0x38] sm:$0xff]
      %v244 = vld [vmem:[%s226 + $0x40] sm:$0xff]
      %v245 = vld [vmem:[%s226 + $0x48] sm:$0xff]
      %v246 = vld [vmem:[%s226 + $0x50] sm:$0xff]
      %v247 = vld [vmem:[%s226 + $0x58] sm:$0xff]
      %v248 = vld [vmem:[%s226 + $0x60] sm:$0xff]
      %v249 = vld [vmem:[%s226 + $0x68] sm:$0xff]
      %v250 = vld [vmem:[%s226 + $0x70] sm:$0xff]
      %v251 = vld [vmem:[%s226 + $0x78] sm:$0xff]
      %v252 = vld [vmem:[%s226 + $0x80] sm:$0xff]
      %v253 = vld [vmem:[%s226 + $0x88] sm:$0xff]
      %v254 = vld [vmem:[%s226 + $0x90] sm:$0xff]
      %v255 = vld [vmem:[%s226 + $0x98] sm:$0xff]
      %v256 = vld [vmem:[%s226 + $0xa0] sm:$0xff]
      %v257 = vld [vmem:[%s226 + $0xa8] sm:$0xff]
      %v258 = vld [vmem:[%s226 + $0xb0] sm:$0xff]
      %v259 = vld [vmem:[%s226 + $0xb8] sm:$0xff]
      %v260 = vld [vmem:[%s226 + $0xc0] sm:$0xff]
      %v261 = vld [vmem:[%s226 + $0xc8] sm:$0xff]
      %v262 = vld [vmem:[%s226 + $0xd0] sm:$0xff]
      %v263 = vld [vmem:[%s226 + $0xd8] sm:$0xff]
      %v264 = vld [vmem:[%s226 + $0xe0] sm:$0xff]
      %v265 = vld [vmem:[%s226 + $0xe8] sm:$0xff]
      %v266 = vld [vmem:[%s226 + $0xf0] sm:$0xff]
      %v267 = vld [vmem:[%s226 + $0xf8] sm:$0xff]
      %268 = vst [vmem:[#allocation2] sm:$0xff] 0.0
      %269 = vst [vmem:[#allocation2 + $0x8] sm:$0xff] 0.0
      %270 = vst [vmem:[#allocation2 + $0x10] sm:$0x3] 0.0
      %271 = vst [vmem:[#allocation2 + $0x18] sm:$0xff] 0.0
      %272 = vst [vmem:[#allocation2 + $0x20] sm:$0xff] 0.0
      %273 = vst [vmem:[#allocation2 + $0x28] sm:$0x3] 0.0
      %274 = vst [vmem:[#allocation2 + $0x30] sm:$0xff] 0.0
      %275 = vst [vmem:[#allocation2 + $0x38] sm:$0xff] 0.0
      %276 = vst [vmem:[#allocation2 + $0x40] sm:$0x3] 0.0
      %277 = vst [vmem:[#allocation2 + $0x48] sm:$0xff] 0.0
      %278 = vst [vmem:[#allocation2 + $0x50] sm:$0xff] 0.0
      %279 = vst [vmem:[#allocation2 + $0x58] sm:$0x3] 0.0
      %280 = vst [vmem:[#allocation2 + $0x60] sm:$0xff] 0.0
      %281 = vst [vmem:[#allocation2 + $0x68] sm:$0xff] 0.0
      %282 = vst [vmem:[#allocation2 + $0x70] sm:$0x3] 0.0
      %283 = vst [vmem:[#allocation2 + $0x78] sm:$0xff] 0.0
      %284 = vst [vmem:[#allocation2 + $0x80] sm:$0xff] 0.0
      %285 = vst [vmem:[#allocation2 + $0x88] sm:$0x3] 0.0
      %286 = vst [vmem:[#allocation2 + $0x90] sm:$0xff] 0.0
      %287 = vst [vmem:[#allocation2 + $0x98] sm:$0xff] 0.0
      %288 = vst [vmem:[#allocation2 + $0xa0] sm:$0x3] 0.0
      %289 = vst [vmem:[#allocation2 + $0xa8] sm:$0xff] 0.0
      %290 = vst [vmem:[#allocation2 + $0xb0] sm:$0xff] 0.0
      %291 = vst [vmem:[#allocation2 + $0xb8] sm:$0x3] 0.0
      %292 = vst [vmem:[#allocation2 + $0xc0] sm:$0xff] 0.0
      %293 = vst [vmem:[#allocation2 + $0xc8] sm:$0xff] 0.0
      %294 = vst [vmem:[#allocation2 + $0xd0] sm:$0x3] 0.0
      %295 = vst [vmem:[#allocation2 + $0xd8] sm:$0xff] 0.0
      %296 = vst [vmem:[#allocation2 + $0xe0] sm:$0xff] 0.0
      %297 = vst [vmem:[#allocation2 + $0xe8] sm:$0x3] 0.0
      %298 = vst [vmem:[#allocation2 + $0xf0] sm:$0xff] 0.0
      %299 = vst [vmem:[#allocation2 + $0xf8] sm:$0xff] 0.0
      %300 = vst [vmem:[#allocation2 + $0x100] sm:$0x3] 0.0
      %301 = vst [vmem:[#allocation2 + $0x108] sm:$0xff] 0.0
      %302 = vst [vmem:[#allocation2 + $0x110] sm:$0xff] 0.0
      %303 = vst [vmem:[#allocation2 + $0x118] sm:$0x3] 0.0
      %304 = vst [vmem:[#allocation2 + $0x120] sm:$0xff] 0.0
      %305 = vst [vmem:[#allocation2 + $0x128] sm:$0xff] 0.0
      %306 = vst [vmem:[#allocation2 + $0x130] sm:$0x3] 0.0
      %307 = vst [vmem:[#allocation2 + $0x138] sm:$0xff] 0.0
      %308 = vst [vmem:[#allocation2 + $0x140] sm:$0xff] 0.0
      %309 = vst [vmem:[#allocation2 + $0x148] sm:$0x3] 0.0
      %310 = vst [vmem:[#allocation2 + $0x150] sm:$0xff] 0.0
      %311 = vst [vmem:[#allocation2 + $0x158] sm:$0xff] 0.0
      %312 = vst [vmem:[#allocation2 + $0x160] sm:$0x3] 0.0
      %313 = vst [vmem:[#allocation2 + $0x168] sm:$0xff] 0.0
      %314 = vst [vmem:[#allocation2 + $0x170] sm:$0xff] 0.0
      %315 = vst [vmem:[#allocation2 + $0x178] sm:$0x3] 0.0
      %316 = vst [vmem:[#allocation2 + $0x180] sm:$0xff] 0.0
      %317 = vst [vmem:[#allocation2 + $0x188] sm:$0xff] 0.0
      %318 = vst [vmem:[#allocation2 + $0x190] sm:$0x3] 0.0
      %319 = vst [vmem:[#allocation2 + $0x198] sm:$0xff] 0.0
      %320 = vst [vmem:[#allocation2 + $0x1a0] sm:$0xff] 0.0
      %321 = vst [vmem:[#allocation2 + $0x1a8] sm:$0x3] 0.0
      %s322 = scalar_lea.vmem [#allocation2], 24
      %323 = vst [vmem:[%s322 + $0x1] sm:$0xff] %v236
      %324 = vst [vmem:[%s322 + $0x9] sm:$0xff] %v237
      %325 = vst [vmem:[%s322 + $0x19] sm:$0xff] %v238
      %326 = vst [vmem:[%s322 + $0x21] sm:$0xff] %v239
      %327 = vst [vmem:[%s322 + $0x31] sm:$0xff] %v240
      %328 = vst [vmem:[%s322 + $0x39] sm:$0xff] %v241
      %329 = vst [vmem:[%s322 + $0x49] sm:$0xff] %v242
      %330 = vst [vmem:[%s322 + $0x51] sm:$0xff] %v243
      %331 = vst [vmem:[%s322 + $0x61] sm:$0xff] %v244
      %332 = vst [vmem:[%s322 + $0x69] sm:$0xff] %v245
      %333 = vst [vmem:[%s322 + $0x79] sm:$0xff] %v246
      %334 = vst [vmem:[%s322 + $0x81] sm:$0xff] %v247
      %335 = vst [vmem:[%s322 + $0x91] sm:$0xff] %v248
      %336 = vst [vmem:[%s322 + $0x99] sm:$0xff] %v249
      %337 = vst [vmem:[%s322 + $0xa9] sm:$0xff] %v250
      %338 = vst [vmem:[%s322 + $0xb1] sm:$0xff] %v251
      %339 = vst [vmem:[%s322 + $0xc1] sm:$0xff] %v252
      %340 = vst [vmem:[%s322 + $0xc9] sm:$0xff] %v253
      %341 = vst [vmem:[%s322 + $0xd9] sm:$0xff] %v254
      %342 = vst [vmem:[%s322 + $0xe1] sm:$0xff] %v255
      %343 = vst [vmem:[%s322 + $0xf1] sm:$0xff] %v256
      %344 = vst [vmem:[%s322 + $0xf9] sm:$0xff] %v257
      %345 = vst [vmem:[%s322 + $0x109] sm:$0xff] %v258
      %346 = vst [vmem:[%s322 + $0x111] sm:$0xff] %v259
      %347 = vst [vmem:[%s322 + $0x121] sm:$0xff] %v260
      %348 = vst [vmem:[%s322 + $0x129] sm:$0xff] %v261
      %349 = vst [vmem:[%s322 + $0x139] sm:$0xff] %v262
      %350 = vst [vmem:[%s322 + $0x141] sm:$0xff] %v263
      %351 = vst [vmem:[%s322 + $0x151] sm:$0xff] %v264
      %352 = vst [vmem:[%s322 + $0x159] sm:$0xff] %v265
      %353 = vst [vmem:[%s322 + $0x169] sm:$0xff] %v266
      %354 = vst [vmem:[%s322 + $0x171] sm:$0xff] %v267
      %v355 = vld [vmem:[#allocation2] sm:$0xff]
      %v356 = vld [vmem:[#allocation2 + $0x8] sm:$0xff]
      %v357 = vld [vmem:[#allocation2 + $0x18] sm:$0xff]
      %v358 = vld [vmem:[#allocation2 + $0x20] sm:$0xff]
      %v359 = vld [vmem:[#allocation2 + $0x30] sm:$0xff]
      %v360 = vld [vmem:[#allocation2 + $0x38] sm:$0xff]
      %v361 = vld [vmem:[#allocation2 + $0x48] sm:$0xff]
      %v362 = vld [vmem:[#allocation2 + $0x50] sm:$0xff]
      %v363 = vld [vmem:[#allocation2 + $0x60] sm:$0xff]
      %v364 = vld [vmem:[#allocation2 + $0x68] sm:$0xff]
      %v365 = vld [vmem:[#allocation2 + $0x78] sm:$0xff]
      %v366 = vld [vmem:[#allocation2 + $0x80] sm:$0xff]
      %v367 = vld [vmem:[#allocation2 + $0x90] sm:$0xff]
      %v368 = vld [vmem:[#allocation2 + $0x98] sm:$0xff]
      %v369 = vld [vmem:[#allocation2 + $0xa8] sm:$0xff]
      %v370 = vld [vmem:[#allocation2 + $0xb0] sm:$0xff]
      %v371 = vld [vmem:[#allocation2 + $0xc0] sm:$0xff]
      %v372 = vld [vmem:[#allocation2 + $0xc8] sm:$0xff]
      %v373 = vld [vmem:[#allocation2 + $0xd8] sm:$0xff]
      %v374 = vld [vmem:[#allocation2 + $0xe0] sm:$0xff]
      %v375 = vld [vmem:[#allocation2 + $0xf0] sm:$0xff]
      %v376 = vld [vmem:[#allocation2 + $0xf8] sm:$0xff]
      %v377 = vld [vmem:[#allocation2 + $0x108] sm:$0xff]
      %v378 = vld [vmem:[#allocation2 + $0x110] sm:$0xff]
      %v379 = vld [vmem:[#allocation2 + $0x120] sm:$0xff]
      %v380 = vld [vmem:[#allocation2 + $0x128] sm:$0xff]
      %v381 = vld [vmem:[#allocation2 + $0x138] sm:$0xff]
      %v382 = vld [vmem:[#allocation2 + $0x140] sm:$0xff]
      %v383 = vld [vmem:[#allocation2 + $0x150] sm:$0xff]
      %v384 = vld [vmem:[#allocation2 + $0x158] sm:$0xff]
      %v385 = vld [vmem:[#allocation2 + $0x168] sm:$0xff]
      %v386 = vld [vmem:[#allocation2 + $0x170] sm:$0xff]
      %387 = vst [vmem:[#allocation3] sm:$0xff] %v355
      %388 = vst [vmem:[#allocation3 + $0x48] sm:$0xff] %v356
      %389 = vst [vmem:[#allocation3 + $0x90] sm:$0xff] %v357
      %390 = vst [vmem:[#allocation3 + $0xd8] sm:$0xff] %v358
      %391 = vst [vmem:[#allocation3 + $0x120] sm:$0xff] %v359
      %392 = vst [vmem:[#allocation3 + $0x168] sm:$0xff] %v360
      %393 = vst [vmem:[#allocation3 + $0x1b0] sm:$0xff] %v361
      %394 = vst [vmem:[#allocation3 + $0x1f8] sm:$0xff] %v362
      %395 = vst [vmem:[#allocation3 + $0x240] sm:$0xff] %v363
      %396 = vst [vmem:[#allocation3 + $0x288] sm:$0xff] %v364
      %397 = vst [vmem:[#allocation3 + $0x2d0] sm:$0xff] %v365
      %398 = vst [vmem:[#allocation3 + $0x318] sm:$0xff] %v366
      %399 = vst [vmem:[#allocation3 + $0x360] sm:$0xff] %v367
      %400 = vst [vmem:[#allocation3 + $0x3a8] sm:$0xff] %v368
      %401 = vst [vmem:[#allocation3 + $0x3f0] sm:$0xff] %v369
      %402 = vst [vmem:[#allocation3 + $0x438] sm:$0xff] %v370
      %403 = vst [vmem:[#allocation3 + $0x480] sm:$0xff] %v371
      %404 = vst [vmem:[#allocation3 + $0x4c8] sm:$0xff] %v372
      %405 = vst [vmem:[#allocation3 + $0x510] sm:$0xff] %v373
      %406 = vst [vmem:[#allocation3 + $0x558] sm:$0xff] %v374
      %407 = vst [vmem:[#allocation3 + $0x5a0] sm:$0xff] %v375
      %408 = vst [vmem:[#allocation3 + $0x5e8] sm:$0xff] %v376
      %409 = vst [vmem:[#allocation3 + $0x630] sm:$0xff] %v377
      %410 = vst [vmem:[#allocation3 + $0x678] sm:$0xff] %v378
      %411 = vst [vmem:[#allocation3 + $0x6c0] sm:$0xff] %v379
      %412 = vst [vmem:[#allocation3 + $0x708] sm:$0xff] %v380
      %413 = vst [vmem:[#allocation3 + $0x750] sm:$0xff] %v381
      %414 = vst [vmem:[#allocation3 + $0x798] sm:$0xff] %v382
      %415 = vst [vmem:[#allocation3 + $0x7e0] sm:$0xff] %v383
      %416 = vst [vmem:[#allocation3 + $0x828] sm:$0xff] %v384
      %417 = vst [vmem:[#allocation3 + $0x870] sm:$0xff] %v385
      %418 = vst [vmem:[#allocation3 + $0x8b8] sm:$0xff] %v386
      %v419 = vld [vmem:[#allocation2 + $0x1] sm:$0xff]
      %v420 = vld [vmem:[#allocation2 + $0x9] sm:$0xff]
      %v421 = vld [vmem:[#allocation2 + $0x19] sm:$0xff]
      %v422 = vld [vmem:[#allocation2 + $0x21] sm:$0xff]
      %v423 = vld [vmem:[#allocation2 + $0x31] sm:$0xff]
      %v424 = vld [vmem:[#allocation2 + $0x39] sm:$0xff]
      %v425 = vld [vmem:[#allocation2 + $0x49] sm:$0xff]
      %v426 = vld [vmem:[#allocation2 + $0x51] sm:$0xff]
      %v427 = vld [vmem:[#allocation2 + $0x61] sm:$0xff]
      %v428 = vld [vmem:[#allocation2 + $0x69] sm:$0xff]
      %v429 = vld [vmem:[#allocation2 + $0x79] sm:$0xff]
      %v430 = vld [vmem:[#allocation2 + $0x81] sm:$0xff]
      %v431 = vld [vmem:[#allocation2 + $0x91] sm:$0xff]
      %v432 = vld [vmem:[#allocation2 + $0x99] sm:$0xff]
      %v433 = vld [vmem:[#allocation2 + $0xa9] sm:$0xff]
      %v434 = vld [vmem:[#allocation2 + $0xb1] sm:$0xff]
      %v435 = vld [vmem:[#allocation2 + $0xc1] sm:$0xff]
      %v436 = vld [vmem:[#allocation2 + $0xc9] sm:$0xff]
      %v437 = vld [vmem:[#allocation2 + $0xd9] sm:$0xff]
      %v438 = vld [vmem:[#allocation2 + $0xe1] sm:$0xff]
      %v439 = vld [vmem:[#allocation2 + $0xf1] sm:$0xff]
      %v440 = vld [vmem:[#allocation2 + $0xf9] sm:$0xff]
      %v441 = vld [vmem:[#allocation2 + $0x109] sm:$0xff]
      %v442 = vld [vmem:[#allocation2 + $0x111] sm:$0xff]
      %v443 = vld [vmem:[#allocation2 + $0x121] sm:$0xff]
      %v444 = vld [vmem:[#allocation2 + $0x129] sm:$0xff]
      %v445 = vld [vmem:[#allocation2 + $0x139] sm:$0xff]
      %v446 = vld [vmem:[#allocation2 + $0x141] sm:$0xff]
      %v447 = vld [vmem:[#allocation2 + $0x151] sm:$0xff]
      %v448 = vld [vmem:[#allocation2 + $0x159] sm:$0xff]
      %v449 = vld [vmem:[#allocation2 + $0x169] sm:$0xff]
      %v450 = vld [vmem:[#allocation2 + $0x171] sm:$0xff]
      %451 = vst [vmem:[#allocation3 + $0x8] sm:$0xff] %v419
      %452 = vst [vmem:[#allocation3 + $0x50] sm:$0xff] %v420
      %453 = vst [vmem:[#allocation3 + $0x98] sm:$0xff] %v421
      %454 = vst [vmem:[#allocation3 + $0xe0] sm:$0xff] %v422
      %455 = vst [vmem:[#allocation3 + $0x128] sm:$0xff] %v423
      %456 = vst [vmem:[#allocation3 + $0x170] sm:$0xff] %v424
      %457 = vst [vmem:[#allocation3 + $0x1b8] sm:$0xff] %v425
      %458 = vst [vmem:[#allocation3 + $0x200] sm:$0xff] %v426
      %459 = vst [vmem:[#allocation3 + $0x248] sm:$0xff] %v427
      %460 = vst [vmem:[#allocation3 + $0x290] sm:$0xff] %v428
      %461 = vst [vmem:[#allocation3 + $0x2d8] sm:$0xff] %v429
      %462 = vst [vmem:[#allocation3 + $0x320] sm:$0xff] %v430
      %463 = vst [vmem:[#allocation3 + $0x368] sm:$0xff] %v431
      %464 = vst [vmem:[#allocation3 + $0x3b0] sm:$0xff] %v432
      %465 = vst [vmem:[#allocation3 + $0x3f8] sm:$0xff] %v433
      %466 = vst [vmem:[#allocation3 + $0x440] sm:$0xff] %v434
      %467 = vst [vmem:[#allocation3 + $0x488] sm:$0xff] %v435
      %468 = vst [vmem:[#allocation3 + $0x4d0] sm:$0xff] %v436
      %469 = vst [vmem:[#allocation3 + $0x518] sm:$0xff] %v437
      %470 = vst [vmem:[#allocation3 + $0x560] sm:$0xff] %v438
      %471 = vst [vmem:[#allocation3 + $0x5a8] sm:$0xff] %v439
      %472 = vst [vmem:[#allocation3 + $0x5f0] sm:$0xff] %v440
      %473 = vst [vmem:[#allocation3 + $0x638] sm:$0xff] %v441
      %474 = vst [vmem:[#allocation3 + $0x680] sm:$0xff] %v442
      %475 = vst [vmem:[#allocation3 + $0x6c8] sm:$0xff] %v443
      %476 = vst [vmem:[#allocation3 + $0x710] sm:$0xff] %v444
      %477 = vst [vmem:[#allocation3 + $0x758] sm:$0xff] %v445
      %478 = vst [vmem:[#allocation3 + $0x7a0] sm:$0xff] %v446
      %479 = vst [vmem:[#allocation3 + $0x7e8] sm:$0xff] %v447
      %480 = vst [vmem:[#allocation3 + $0x830] sm:$0xff] %v448
      %481 = vst [vmem:[#allocation3 + $0x878] sm:$0xff] %v449
      %482 = vst [vmem:[#allocation3 + $0x8c0] sm:$0xff] %v450
      %v483 = vld [vmem:[#allocation2 + $0x2] sm:$0xff]
      %v484 = vld [vmem:[#allocation2 + $0xa] sm:$0xff]
      %v485 = vld [vmem:[#allocation2 + $0x1a] sm:$0xff]
      %v486 = vld [vmem:[#allocation2 + $0x22] sm:$0xff]
      %v487 = vld [vmem:[#allocation2 + $0x32] sm:$0xff]
      %v488 = vld [vmem:[#allocation2 + $0x3a] sm:$0xff]
      %v489 = vld [vmem:[#allocation2 + $0x4a] sm:$0xff]
      %v490 = vld [vmem:[#allocation2 + $0x52] sm:$0xff]
      %v491 = vld [vmem:[#allocation2 + $0x62] sm:$0xff]
      %v492 = vld [vmem:[#allocation2 + $0x6a] sm:$0xff]
      %v493 = vld [vmem:[#allocation2 + $0x7a] sm:$0xff]
      %v494 = vld [vmem:[#allocation2 + $0x82] sm:$0xff]
      %v495 = vld [vmem:[#allocation2 + $0x92] sm:$0xff]
      %v496 = vld [vmem:[#allocation2 + $0x9a] sm:$0xff]
      %v497 = vld [vmem:[#allocation2 + $0xaa] sm:$0xff]
      %v498 = vld [vmem:[#allocation2 + $0xb2] sm:$0xff]
      %v499 = vld [vmem:[#allocation2 + $0xc2] sm:$0xff]
      %v500 = vld [vmem:[#allocation2 + $0xca] sm:$0xff]
      %v501 = vld [vmem:[#allocation2 + $0xda] sm:$0xff]
      %v502 = vld [vmem:[#allocation2 + $0xe2] sm:$0xff]
      %v503 = vld [vmem:[#allocation2 + $0xf2] sm:$0xff]
      %v504 = vld [vmem:[#allocation2 + $0xfa] sm:$0xff]
      %v505 = vld [vmem:[#allocation2 + $0x10a] sm:$0xff]
      %v506 = vld [vmem:[#allocation2 + $0x112] sm:$0xff]
      %v507 = vld [vmem:[#allocation2 + $0x122] sm:$0xff]
      %v508 = vld [vmem:[#allocation2 + $0x12a] sm:$0xff]
      %v509 = vld [vmem:[#allocation2 + $0x13a] sm:$0xff]
      %v510 = vld [vmem:[#allocation2 + $0x142] sm:$0xff]
      %v511 = vld [vmem:[#allocation2 + $0x152] sm:$0xff]
      %v512 = vld [vmem:[#allocation2 + $0x15a] sm:$0xff]
      %v513 = vld [vmem:[#allocation2 + $0x16a] sm:$0xff]
      %v514 = vld [vmem:[#allocation2 + $0x172] sm:$0xff]
      %515 = vst [vmem:[#allocation3 + $0x10] sm:$0xff] %v483
      %516 = vst [vmem:[#allocation3 + $0x58] sm:$0xff] %v484
      %517 = vst [vmem:[#allocation3 + $0xa0] sm:$0xff] %v485
      %518 = vst [vmem:[#allocation3 + $0xe8] sm:$0xff] %v486
      %519 = vst [vmem:[#allocation3 + $0x130] sm:$0xff] %v487
      %520 = vst [vmem:[#allocation3 + $0x178] sm:$0xff] %v488
      %521 = vst [vmem:[#allocation3 + $0x1c0] sm:$0xff] %v489
      %522 = vst [vmem:[#allocation3 + $0x208] sm:$0xff] %v490
      %523 = vst [vmem:[#allocation3 + $0x250] sm:$0xff] %v491
      %524 = vst [vmem:[#allocation3 + $0x298] sm:$0xff] %v492
      %525 = vst [vmem:[#allocation3 + $0x2e0] sm:$0xff] %v493
      %526 = vst [vmem:[#allocation3 + $0x328] sm:$0xff] %v494
      %527 = vst [vmem:[#allocation3 + $0x370] sm:$0xff] %v495
      %528 = vst [vmem:[#allocation3 + $0x3b8] sm:$0xff] %v496
      %529 = vst [vmem:[#allocation3 + $0x400] sm:$0xff] %v497
      %530 = vst [vmem:[#allocation3 + $0x448] sm:$0xff] %v498
      %531 = vst [vmem:[#allocation3 + $0x490] sm:$0xff] %v499
      %532 = vst [vmem:[#allocation3 + $0x4d8] sm:$0xff] %v500
      %533 = vst [vmem:[#allocation3 + $0x520] sm:$0xff] %v501
      %534 = vst [vmem:[#allocation3 + $0x568] sm:$0xff] %v502
      %535 = vst [vmem:[#allocation3 + $0x5b0] sm:$0xff] %v503
      %536 = vst [vmem:[#allocation3 + $0x5f8] sm:$0xff] %v504
      %537 = vst [vmem:[#allocation3 + $0x640] sm:$0xff] %v505
      %538 = vst [vmem:[#allocation3 + $0x688] sm:$0xff] %v506
      %539 = vst [vmem:[#allocation3 + $0x6d0] sm:$0xff] %v507
      %540 = vst [vmem:[#allocation3 + $0x718] sm:$0xff] %v508
      %541 = vst [vmem:[#allocation3 + $0x760] sm:$0xff] %v509
      %542 = vst [vmem:[#allocation3 + $0x7a8] sm:$0xff] %v510
      %543 = vst [vmem:[#allocation3 + $0x7f0] sm:$0xff] %v511
      %544 = vst [vmem:[#allocation3 + $0x838] sm:$0xff] %v512
      %545 = vst [vmem:[#allocation3 + $0x880] sm:$0xff] %v513
      %546 = vst [vmem:[#allocation3 + $0x8c8] sm:$0xff] %v514
      %v547 = vld [vmem:[%s322] sm:$0xff]
      %v548 = vld [vmem:[%s322 + $0x8] sm:$0xff]
      %v549 = vld [vmem:[%s322 + $0x18] sm:$0xff]
      %v550 = vld [vmem:[%s322 + $0x20] sm:$0xff]
      %v551 = vld [vmem:[%s322 + $0x30] sm:$0xff]
      %v552 = vld [vmem:[%s322 + $0x38] sm:$0xff]
      %v553 = vld [vmem:[%s322 + $0x48] sm:$0xff]
      %v554 = vld [vmem:[%s322 + $0x50] sm:$0xff]
      %v555 = vld [vmem:[%s322 + $0x60] sm:$0xff]
      %v556 = vld [vmem:[%s322 + $0x68] sm:$0xff]
      %v557 = vld [vmem:[%s322 + $0x78] sm:$0xff]
      %v558 = vld [vmem:[%s322 + $0x80] sm:$0xff]
      %v559 = vld [vmem:[%s322 + $0x90] sm:$0xff]
      %v560 = vld [vmem:[%s322 + $0x98] sm:$0xff]
      %v561 = vld [vmem:[%s322 + $0xa8] sm:$0xff]
      %v562 = vld [vmem:[%s322 + $0xb0] sm:$0xff]
      %v563 = vld [vmem:[%s322 + $0xc0] sm:$0xff]
      %v564 = vld [vmem:[%s322 + $0xc8] sm:$0xff]
      %v565 = vld [vmem:[%s322 + $0xd8] sm:$0xff]
      %v566 = vld [vmem:[%s322 + $0xe0] sm:$0xff]
      %v567 = vld [vmem:[%s322 + $0xf0] sm:$0xff]
      %v568 = vld [vmem:[%s322 + $0xf8] sm:$0xff]
      %v569 = vld [vmem:[%s322 + $0x108] sm:$0xff]
      %v570 = vld [vmem:[%s322 + $0x110] sm:$0xff]
      %v571 = vld [vmem:[%s322 + $0x120] sm:$0xff]
      %v572 = vld [vmem:[%s322 + $0x128] sm:$0xff]
      %v573 = vld [vmem:[%s322 + $0x138] sm:$0xff]
      %v574 = vld [vmem:[%s322 + $0x140] sm:$0xff]
      %v575 = vld [vmem:[%s322 + $0x150] sm:$0xff]
      %v576 = vld [vmem:[%s322 + $0x158] sm:$0xff]
      %v577 = vld [vmem:[%s322 + $0x168] sm:$0xff]
      %v578 = vld [vmem:[%s322 + $0x170] sm:$0xff]
      %579 = vst [vmem:[#allocation3 + $0x18] sm:$0xff] %v547
      %580 = vst [vmem:[#allocation3 + $0x60] sm:$0xff] %v548
      %581 = vst [vmem:[#allocation3 + $0xa8] sm:$0xff] %v549
      %582 = vst [vmem:[#allocation3 + $0xf0] sm:$0xff] %v550
      %583 = vst [vmem:[#allocation3 + $0x138] sm:$0xff] %v551
      %584 = vst [vmem:[#allocation3 + $0x180] sm:$0xff] %v552
      %585 = vst [vmem:[#allocation3 + $0x1c8] sm:$0xff] %v553
      %586 = vst [vmem:[#allocation3 + $0x210] sm:$0xff] %v554
      %587 = vst [vmem:[#allocation3 + $0x258] sm:$0xff] %v555
      %588 = vst [vmem:[#allocation3 + $0x2a0] sm:$0xff] %v556
      %589 = vst [vmem:[#allocation3 + $0x2e8] sm:$0xff] %v557
      %590 = vst [vmem:[#allocation3 + $0x330] sm:$0xff] %v558
      %591 = vst [vmem:[#allocation3 + $0x378] sm:$0xff] %v559
      %592 = vst [vmem:[#allocation3 + $0x3c0] sm:$0xff] %v560
      %593 = vst [vmem:[#allocation3 + $0x408] sm:$0xff] %v561
      %594 = vst [vmem:[#allocation3 + $0x450] sm:$0xff] %v562
      %595 = vst [vmem:[#allocation3 + $0x498] sm:$0xff] %v563
      %596 = vst [vmem:[#allocation3 + $0x4e0] sm:$0xff] %v564
      %597 = vst [vmem:[#allocation3 + $0x528] sm:$0xff] %v565
      %598 = vst [vmem:[#allocation3 + $0x570] sm:$0xff] %v566
      %599 = vst [vmem:[#allocation3 + $0x5b8] sm:$0xff] %v567
      %600 = vst [vmem:[#allocation3 + $0x600] sm:$0xff] %v568
      %601 = vst [vmem:[#allocation3 + $0x648] sm:$0xff] %v569
      %602 = vst [vmem:[#allocation3 + $0x690] sm:$0xff] %v570
      %603 = vst [vmem:[#allocation3 + $0x6d8] sm:$0xff] %v571
      %604 = vst [vmem:[#allocation3 + $0x720] sm:$0xff] %v572
      %605 = vst [vmem:[#allocation3 + $0x768] sm:$0xff] %v573
      %606 = vst [vmem:[#allocation3 + $0x7b0] sm:$0xff] %v574
      %607 = vst [vmem:[#allocation3 + $0x7f8] sm:$0xff] %v575
      %608 = vst [vmem:[#allocation3 + $0x840] sm:$0xff] %v576
      %609 = vst [vmem:[#allocation3 + $0x888] sm:$0xff] %v577
      %610 = vst [vmem:[#allocation3 + $0x8d0] sm:$0xff] %v578
      %v611 = vld [vmem:[%s322 + $0x1] sm:$0xff]
      %v612 = vld [vmem:[%s322 + $0x9] sm:$0xff]
      %v613 = vld [vmem:[%s322 + $0x19] sm:$0xff]
      %v614 = vld [vmem:[%s322 + $0x21] sm:$0xff]
      %v615 = vld [vmem:[%s322 + $0x31] sm:$0xff]
      %v616 = vld [vmem:[%s322 + $0x39] sm:$0xff]
      %v617 = vld [vmem:[%s322 + $0x49] sm:$0xff]
      %v618 = vld [vmem:[%s322 + $0x51] sm:$0xff]
      %v619 = vld [vmem:[%s322 + $0x61] sm:$0xff]
      %v620 = vld [vmem:[%s322 + $0x69] sm:$0xff]
      %v621 = vld [vmem:[%s322 + $0x79] sm:$0xff]
      %v622 = vld [vmem:[%s322 + $0x81] sm:$0xff]
      %v623 = vld [vmem:[%s322 + $0x91] sm:$0xff]
      %v624 = vld [vmem:[%s322 + $0x99] sm:$0xff]
      %v625 = vld [vmem:[%s322 + $0xa9] sm:$0xff]
      %v626 = vld [vmem:[%s322 + $0xb1] sm:$0xff]
      %v627 = vld [vmem:[%s322 + $0xc1] sm:$0xff]
      %v628 = vld [vmem:[%s322 + $0xc9] sm:$0xff]
      %v629 = vld [vmem:[%s322 + $0xd9] sm:$0xff]
      %v630 = vld [vmem:[%s322 + $0xe1] sm:$0xff]
      %v631 = vld [vmem:[%s322 + $0xf1] sm:$0xff]
      %v632 = vld [vmem:[%s322 + $0xf9] sm:$0xff]
      %v633 = vld [vmem:[%s322 + $0x109] sm:$0xff]
      %v634 = vld [vmem:[%s322 + $0x111] sm:$0xff]
      %v635 = vld [vmem:[%s322 + $0x121] sm:$0xff]
      %v636 = vld [vmem:[%s322 + $0x129] sm:$0xff]
      %v637 = vld [vmem:[%s322 + $0x139] sm:$0xff]
      %v638 = vld [vmem:[%s322 + $0x141] sm:$0xff]
      %v639 = vld [vmem:[%s322 + $0x151] sm:$0xff]
      %v640 = vld [vmem:[%s322 + $0x159] sm:$0xff]
      %v641 = vld [vmem:[%s322 + $0x169] sm:$0xff]
      %v642 = vld [vmem:[%s322 + $0x171] sm:$0xff]
      %643 = vst [vmem:[#allocation3 + $0x20] sm:$0xff] %v611
      %644 = vst [vmem:[#allocation3 + $0x68] sm:$0xff] %v612
      %645 = vst [vmem:[#allocation3 + $0xb0] sm:$0xff] %v613
      %646 = vst [vmem:[#allocation3 + $0xf8] sm:$0xff] %v614
      %647 = vst [vmem:[#allocation3 + $0x140] sm:$0xff] %v615
      %648 = vst [vmem:[#allocation3 + $0x188] sm:$0xff] %v616
      %649 = vst [vmem:[#allocation3 + $0x1d0] sm:$0xff] %v617
      %650 = vst [vmem:[#allocation3 + $0x218] sm:$0xff] %v618
      %651 = vst [vmem:[#allocation3 + $0x260] sm:$0xff] %v619
      %652 = vst [vmem:[#allocation3 + $0x2a8] sm:$0xff] %v620
      %653 = vst [vmem:[#allocation3 + $0x2f0] sm:$0xff] %v621
      %654 = vst [vmem:[#allocation3 + $0x338] sm:$0xff] %v622
      %655 = vst [vmem:[#allocation3 + $0x380] sm:$0xff] %v623
      %656 = vst [vmem:[#allocation3 + $0x3c8] sm:$0xff] %v624
      %657 = vst [vmem:[#allocation3 + $0x410] sm:$0xff] %v625
      %658 = vst [vmem:[#allocation3 + $0x458] sm:$0xff] %v626
      %659 = vst [vmem:[#allocation3 + $0x4a0] sm:$0xff] %v627
      %660 = vst [vmem:[#allocation3 + $0x4e8] sm:$0xff] %v628
      %661 = vst [vmem:[#allocation3 + $0x530] sm:$0xff] %v629
      %662 = vst [vmem:[#allocation3 + $0x578] sm:$0xff] %v630
      %663 = vst [vmem:[#allocation3 + $0x5c0] sm:$0xff] %v631
      %664 = vst [vmem:[#allocation3 + $0x608] sm:$0xff] %v632
      %665 = vst [vmem:[#allocation3 + $0x650] sm:$0xff] %v633
      %666 = vst [vmem:[#allocation3 + $0x698] sm:$0xff] %v634
      %667 = vst [vmem:[#allocation3 + $0x6e0] sm:$0xff] %v635
      %668 = vst [vmem:[#allocation3 + $0x728] sm:$0xff] %v636
      %669 = vst [vmem:[#allocation3 + $0x770] sm:$0xff] %v637
      %670 = vst [vmem:[#allocation3 + $0x7b8] sm:$0xff] %v638
      %671 = vst [vmem:[#allocation3 + $0x800] sm:$0xff] %v639
      %672 = vst [vmem:[#allocation3 + $0x848] sm:$0xff] %v640
      %673 = vst [vmem:[#allocation3 + $0x890] sm:$0xff] %v641
      %674 = vst [vmem:[#allocation3 + $0x8d8] sm:$0xff] %v642
      %v675 = vld [vmem:[%s322 + $0x2] sm:$0xff]
      %v676 = vld [vmem:[%s322 + $0xa] sm:$0xff]
      %v677 = vld [vmem:[%s322 + $0x1a] sm:$0xff]
      %v678 = vld [vmem:[%s322 + $0x22] sm:$0xff]
      %v679 = vld [vmem:[%s322 + $0x32] sm:$0xff]
      %v680 = vld [vmem:[%s322 + $0x3a] sm:$0xff]
      %v681 = vld [vmem:[%s322 + $0x4a] sm:$0xff]
      %v682 = vld [vmem:[%s322 + $0x52] sm:$0xff]
      %v683 = vld [vmem:[%s322 + $0x62] sm:$0xff]
      %v684 = vld [vmem:[%s322 + $0x6a] sm:$0xff]
      %v685 = vld [vmem:[%s322 + $0x7a] sm:$0xff]
      %v686 = vld [vmem:[%s322 + $0x82] sm:$0xff]
      %v687 = vld [vmem:[%s322 + $0x92] sm:$0xff]
      %v688 = vld [vmem:[%s322 + $0x9a] sm:$0xff]
      %v689 = vld [vmem:[%s322 + $0xaa] sm:$0xff]
      %v690 = vld [vmem:[%s322 + $0xb2] sm:$0xff]
      %v691 = vld [vmem:[%s322 + $0xc2] sm:$0xff]
      %v692 = vld [vmem:[%s322 + $0xca] sm:$0xff]
      %v693 = vld [vmem:[%s322 + $0xda] sm:$0xff]
      %v694 = vld [vmem:[%s322 + $0xe2] sm:$0xff]
      %v695 = vld [vmem:[%s322 + $0xf2] sm:$0xff]
      %v696 = vld [vmem:[%s322 + $0xfa] sm:$0xff]
      %v697 = vld [vmem:[%s322 + $0x10a] sm:$0xff]
      %v698 = vld [vmem:[%s322 + $0x112] sm:$0xff]
      %v699 = vld [vmem:[%s322 + $0x122] sm:$0xff]
      %v700 = vld [vmem:[%s322 + $0x12a] sm:$0xff]
      %v701 = vld [vmem:[%s322 + $0x13a] sm:$0xff]
      %v702 = vld [vmem:[%s322 + $0x142] sm:$0xff]
      %v703 = vld [vmem:[%s322 + $0x152] sm:$0xff]
      %v704 = vld [vmem:[%s322 + $0x15a] sm:$0xff]
      %v705 = vld [vmem:[%s322 + $0x16a] sm:$0xff]
      %v706 = vld [vmem:[%s322 + $0x172] sm:$0xff]
      %707 = vst [vmem:[#allocation3 + $0x28] sm:$0xff] %v675
      %708 = vst [vmem:[#allocation3 + $0x70] sm:$0xff] %v676
      %709 = vst [vmem:[#allocation3 + $0xb8] sm:$0xff] %v677
      %710 = vst [vmem:[#allocation3 + $0x100] sm:$0xff] %v678
      %711 = vst [vmem:[#allocation3 + $0x148] sm:$0xff] %v679
      %712 = vst [vmem:[#allocation3 + $0x190] sm:$0xff] %v680
      %713 = vst [vmem:[#allocation3 + $0x1d8] sm:$0xff] %v681
      %714 = vst [vmem:[#allocation3 + $0x220] sm:$0xff] %v682
      %715 = vst [vmem:[#allocation3 + $0x268] sm:$0xff] %v683
      %716 = vst [vmem:[#allocation3 + $0x2b0] sm:$0xff] %v684
      %717 = vst [vmem:[#allocation3 + $0x2f8] sm:$0xff] %v685
      %718 = vst [vmem:[#allocation3 + $0x340] sm:$0xff] %v686
      %719 = vst [vmem:[#allocation3 + $0x388] sm:$0xff] %v687
      %720 = vst [vmem:[#allocation3 + $0x3d0] sm:$0xff] %v688
      %721 = vst [vmem:[#allocation3 + $0x418] sm:$0xff] %v689
      %722 = vst [vmem:[#allocation3 + $0x460] sm:$0xff] %v690
      %723 = vst [vmem:[#allocation3 + $0x4a8] sm:$0xff] %v691
      %724 = vst [vmem:[#allocation3 + $0x4f0] sm:$0xff] %v692
      %725 = vst [vmem:[#allocation3 + $0x538] sm:$0xff] %v693
      %726 = vst [vmem:[#allocation3 + $0x580] sm:$0xff] %v694
      %727 = vst [vmem:[#allocation3 + $0x5c8] sm:$0xff] %v695
      %728 = vst [vmem:[#allocation3 + $0x610] sm:$0xff] %v696
      %729 = vst [vmem:[#allocation3 + $0x658] sm:$0xff] %v697
      %730 = vst [vmem:[#allocation3 + $0x6a0] sm:$0xff] %v698
      %731 = vst [vmem:[#allocation3 + $0x6e8] sm:$0xff] %v699
      %732 = vst [vmem:[#allocation3 + $0x730] sm:$0xff] %v700
      %733 = vst [vmem:[#allocation3 + $0x778] sm:$0xff] %v701
      %734 = vst [vmem:[#allocation3 + $0x7c0] sm:$0xff] %v702
      %735 = vst [vmem:[#allocation3 + $0x808] sm:$0xff] %v703
      %736 = vst [vmem:[#allocation3 + $0x850] sm:$0xff] %v704
      %737 = vst [vmem:[#allocation3 + $0x898] sm:$0xff] %v705
      %738 = vst [vmem:[#allocation3 + $0x8e0] sm:$0xff] %v706
      %s739 = scalar_lea.vmem [#allocation2], 48
      %v740 = vld [vmem:[%s739] sm:$0xff]
      %v741 = vld [vmem:[%s739 + $0x8] sm:$0xff]
      %v742 = vld [vmem:[%s739 + $0x18] sm:$0xff]
      %v743 = vld [vmem:[%s739 + $0x20] sm:$0xff]
      %v744 = vld [vmem:[%s739 + $0x30] sm:$0xff]
      %v745 = vld [vmem:[%s739 + $0x38] sm:$0xff]
      %v746 = vld [vmem:[%s739 + $0x48] sm:$0xff]
      %v747 = vld [vmem:[%s739 + $0x50] sm:$0xff]
      %v748 = vld [vmem:[%s739 + $0x60] sm:$0xff]
      %v749 = vld [vmem:[%s739 + $0x68] sm:$0xff]
      %v750 = vld [vmem:[%s739 + $0x78] sm:$0xff]
      %v751 = vld [vmem:[%s739 + $0x80] sm:$0xff]
      %v752 = vld [vmem:[%s739 + $0x90] sm:$0xff]
      %v753 = vld [vmem:[%s739 + $0x98] sm:$0xff]
      %v754 = vld [vmem:[%s739 + $0xa8] sm:$0xff]
      %v755 = vld [vmem:[%s739 + $0xb0] sm:$0xff]
      %v756 = vld [vmem:[%s739 + $0xc0] sm:$0xff]
      %v757 = vld [vmem:[%s739 + $0xc8] sm:$0xff]
      %v758 = vld [vmem:[%s739 + $0xd8] sm:$0xff]
      %v759 = vld [vmem:[%s739 + $0xe0] sm:$0xff]
      %v760 = vld [vmem:[%s739 + $0xf0] sm:$0xff]
      %v761 = vld [vmem:[%s739 + $0xf8] sm:$0xff]
      %v762 = vld [vmem:[%s739 + $0x108] sm:$0xff]
      %v763 = vld [vmem:[%s739 + $0x110] sm:$0xff]
      %v764 = vld [vmem:[%s739 + $0x120] sm:$0xff]
      %v765 = vld [vmem:[%s739 + $0x128] sm:$0xff]
      %v766 = vld [vmem:[%s739 + $0x138] sm:$0xff]
      %v767 = vld [vmem:[%s739 + $0x140] sm:$0xff]
      %v768 = vld [vmem:[%s739 + $0x150] sm:$0xff]
      %v769 = vld [vmem:[%s739 + $0x158] sm:$0xff]
      %v770 = vld [vmem:[%s739 + $0x168] sm:$0xff]
      %v771 = vld [vmem:[%s739 + $0x170] sm:$0xff]
      %772 = vst [vmem:[#allocation3 + $0x30] sm:$0xff] %v740
      %773 = vst [vmem:[#allocation3 + $0x78] sm:$0xff] %v741
      %774 = vst [vmem:[#allocation3 + $0xc0] sm:$0xff] %v742
      %775 = vst [vmem:[#allocation3 + $0x108] sm:$0xff] %v743
      %776 = vst [vmem:[#allocation3 + $0x150] sm:$0xff] %v744
      %777 = vst [vmem:[#allocation3 + $0x198] sm:$0xff] %v745
      %778 = vst [vmem:[#allocation3 + $0x1e0] sm:$0xff] %v746
      %779 = vst [vmem:[#allocation3 + $0x228] sm:$0xff] %v747
      %780 = vst [vmem:[#allocation3 + $0x270] sm:$0xff] %v748
      %781 = vst [vmem:[#allocation3 + $0x2b8] sm:$0xff] %v749
      %782 = vst [vmem:[#allocation3 + $0x300] sm:$0xff] %v750
      %783 = vst [vmem:[#allocation3 + $0x348] sm:$0xff] %v751
      %784 = vst [vmem:[#allocation3 + $0x390] sm:$0xff] %v752
      %785 = vst [vmem:[#allocation3 + $0x3d8] sm:$0xff] %v753
      %786 = vst [vmem:[#allocation3 + $0x420] sm:$0xff] %v754
      %787 = vst [vmem:[#allocation3 + $0x468] sm:$0xff] %v755
      %788 = vst [vmem:[#allocation3 + $0x4b0] sm:$0xff] %v756
      %789 = vst [vmem:[#allocation3 + $0x4f8] sm:$0xff] %v757
      %790 = vst [vmem:[#allocation3 + $0x540] sm:$0xff] %v758
      %791 = vst [vmem:[#allocation3 + $0x588] sm:$0xff] %v759
      %792 = vst [vmem:[#allocation3 + $0x5d0] sm:$0xff] %v760
      %793 = vst [vmem:[#allocation3 + $0x618] sm:$0xff] %v761
      %794 = vst [vmem:[#allocation3 + $0x660] sm:$0xff] %v762
      %795 = vst [vmem:[#allocation3 + $0x6a8] sm:$0xff] %v763
      %796 = vst [vmem:[#allocation3 + $0x6f0] sm:$0xff] %v764
      %797 = vst [vmem:[#allocation3 + $0x738] sm:$0xff] %v765
      %798 = vst [vmem:[#allocation3 + $0x780] sm:$0xff] %v766
      %799 = vst [vmem:[#allocation3 + $0x7c8] sm:$0xff] %v767
      %800 = vst [vmem:[#allocation3 + $0x810] sm:$0xff] %v768
      %801 = vst [vmem:[#allocation3 + $0x858] sm:$0xff] %v769
      %802 = vst [vmem:[#allocation3 + $0x8a0] sm:$0xff] %v770
      %803 = vst [vmem:[#allocation3 + $0x8e8] sm:$0xff] %v771
      %v804 = vld [vmem:[%s739 + $0x1] sm:$0xff]
      %v805 = vld [vmem:[%s739 + $0x9] sm:$0xff]
      %v806 = vld [vmem:[%s739 + $0x19] sm:$0xff]
      %v807 = vld [vmem:[%s739 + $0x21] sm:$0xff]
      %v808 = vld [vmem:[%s739 + $0x31] sm:$0xff]
      %v809 = vld [vmem:[%s739 + $0x39] sm:$0xff]
      %v810 = vld [vmem:[%s739 + $0x49] sm:$0xff]
      %v811 = vld [vmem:[%s739 + $0x51] sm:$0xff]
      %v812 = vld [vmem:[%s739 + $0x61] sm:$0xff]
      %v813 = vld [vmem:[%s739 + $0x69] sm:$0xff]
      %v814 = vld [vmem:[%s739 + $0x79] sm:$0xff]
      %v815 = vld [vmem:[%s739 + $0x81] sm:$0xff]
      %v816 = vld [vmem:[%s739 + $0x91] sm:$0xff]
      %v817 = vld [vmem:[%s739 + $0x99] sm:$0xff]
      %v818 = vld [vmem:[%s739 + $0xa9] sm:$0xff]
      %v819 = vld [vmem:[%s739 + $0xb1] sm:$0xff]
      %v820 = vld [vmem:[%s739 + $0xc1] sm:$0xff]
      %v821 = vld [vmem:[%s739 + $0xc9] sm:$0xff]
      %v822 = vld [vmem:[%s739 + $0xd9] sm:$0xff]
      %v823 = vld [vmem:[%s739 + $0xe1] sm:$0xff]
      %v824 = vld [vmem:[%s739 + $0xf1] sm:$0xff]
      %v825 = vld [vmem:[%s739 + $0xf9] sm:$0xff]
      %v826 = vld [vmem:[%s739 + $0x109] sm:$0xff]
      %v827 = vld [vmem:[%s739 + $0x111] sm:$0xff]
      %v828 = vld [vmem:[%s739 + $0x121] sm:$0xff]
      %v829 = vld [vmem:[%s739 + $0x129] sm:$0xff]
      %v830 = vld [vmem:[%s739 + $0x139] sm:$0xff]
      %v831 = vld [vmem:[%s739 + $0x141] sm:$0xff]
      %v832 = vld [vmem:[%s739 + $0x151] sm:$0xff]
      %v833 = vld [vmem:[%s739 + $0x159] sm:$0xff]
      %v834 = vld [vmem:[%s739 + $0x169] sm:$0xff]
      %v835 = vld [vmem:[%s739 + $0x171] sm:$0xff]
      %836 = vst [vmem:[#allocation3 + $0x38] sm:$0xff] %v804
      %837 = vst [vmem:[#allocation3 + $0x80] sm:$0xff] %v805
      %838 = vst [vmem:[#allocation3 + $0xc8] sm:$0xff] %v806
      %839 = vst [vmem:[#allocation3 + $0x110] sm:$0xff] %v807
      %840 = vst [vmem:[#allocation3 + $0x158] sm:$0xff] %v808
      %841 = vst [vmem:[#allocation3 + $0x1a0] sm:$0xff] %v809
      %842 = vst [vmem:[#allocation3 + $0x1e8] sm:$0xff] %v810
      %843 = vst [vmem:[#allocation3 + $0x230] sm:$0xff] %v811
      %844 = vst [vmem:[#allocation3 + $0x278] sm:$0xff] %v812
      %845 = vst [vmem:[#allocation3 + $0x2c0] sm:$0xff] %v813
      %846 = vst [vmem:[#allocation3 + $0x308] sm:$0xff] %v814
      %847 = vst [vmem:[#allocation3 + $0x350] sm:$0xff] %v815
      %848 = vst [vmem:[#allocation3 + $0x398] sm:$0xff] %v816
      %849 = vst [vmem:[#allocation3 + $0x3e0] sm:$0xff] %v817
      %850 = vst [vmem:[#allocation3 + $0x428] sm:$0xff] %v818
      %851 = vst [vmem:[#allocation3 + $0x470] sm:$0xff] %v819
      %852 = vst [vmem:[#allocation3 + $0x4b8] sm:$0xff] %v820
      %853 = vst [vmem:[#allocation3 + $0x500] sm:$0xff] %v821
      %854 = vst [vmem:[#allocation3 + $0x548] sm:$0xff] %v822
      %855 = vst [vmem:[#allocation3 + $0x590] sm:$0xff] %v823
      %856 = vst [vmem:[#allocation3 + $0x5d8] sm:$0xff] %v824
      %857 = vst [vmem:[#allocation3 + $0x620] sm:$0xff] %v825
      %858 = vst [vmem:[#allocation3 + $0x668] sm:$0xff] %v826
      %859 = vst [vmem:[#allocation3 + $0x6b0] sm:$0xff] %v827
      %860 = vst [vmem:[#allocation3 + $0x6f8] sm:$0xff] %v828
      %861 = vst [vmem:[#allocation3 + $0x740] sm:$0xff] %v829
      %862 = vst [vmem:[#allocation3 + $0x788] sm:$0xff] %v830
      %863 = vst [vmem:[#allocation3 + $0x7d0] sm:$0xff] %v831
      %864 = vst [vmem:[#allocation3 + $0x818] sm:$0xff] %v832
      %865 = vst [vmem:[#allocation3 + $0x860] sm:$0xff] %v833
      %866 = vst [vmem:[#allocation3 + $0x8a8] sm:$0xff] %v834
      %867 = vst [vmem:[#allocation3 + $0x8f0] sm:$0xff] %v835
      %v868 = vld [vmem:[%s739 + $0x2] sm:$0xff]
      %v869 = vld [vmem:[%s739 + $0xa] sm:$0xff]
      %v870 = vld [vmem:[%s739 + $0x1a] sm:$0xff]
      %v871 = vld [vmem:[%s739 + $0x22] sm:$0xff]
      %v872 = vld [vmem:[%s739 + $0x32] sm:$0xff]
      %v873 = vld [vmem:[%s739 + $0x3a] sm:$0xff]
      %v874 = vld [vmem:[%s739 + $0x4a] sm:$0xff]
      %v875 = vld [vmem:[%s739 + $0x52] sm:$0xff]
      %v876 = vld [vmem:[%s739 + $0x62] sm:$0xff]
      %v877 = vld [vmem:[%s739 + $0x6a] sm:$0xff]
      %v878 = vld [vmem:[%s739 + $0x7a] sm:$0xff]
      %v879 = vld [vmem:[%s739 + $0x82] sm:$0xff]
      %v880 = vld [vmem:[%s739 + $0x92] sm:$0xff]
      %v881 = vld [vmem:[%s739 + $0x9a] sm:$0xff]
      %v882 = vld [vmem:[%s739 + $0xaa] sm:$0xff]
      %v883 = vld [vmem:[%s739 + $0xb2] sm:$0xff]
      %v884 = vld [vmem:[%s739 + $0xc2] sm:$0xff]
      %v885 = vld [vmem:[%s739 + $0xca] sm:$0xff]
      %v886 = vld [vmem:[%s739 + $0xda] sm:$0xff]
      %v887 = vld [vmem:[%s739 + $0xe2] sm:$0xff]
      %v888 = vld [vmem:[%s739 + $0xf2] sm:$0xff]
      %v889 = vld [vmem:[%s739 + $0xfa] sm:$0xff]
      %v890 = vld [vmem:[%s739 + $0x10a] sm:$0xff]
      %v891 = vld [vmem:[%s739 + $0x112] sm:$0xff]
      %v892 = vld [vmem:[%s739 + $0x122] sm:$0xff]
      %v893 = vld [vmem:[%s739 + $0x12a] sm:$0xff]
      %v894 = vld [vmem:[%s739 + $0x13a] sm:$0xff]
      %v895 = vld [vmem:[%s739 + $0x142] sm:$0xff]
      %v896 = vld [vmem:[%s739 + $0x152] sm:$0xff]
      %v897 = vld [vmem:[%s739 + $0x15a] sm:$0xff]
      %v898 = vld [vmem:[%s739 + $0x16a] sm:$0xff]
      %v899 = vld [vmem:[%s739 + $0x172] sm:$0xff]
      %900 = vst [vmem:[#allocation3 + $0x40] sm:$0xff] %v868
      %901 = vst [vmem:[#allocation3 + $0x88] sm:$0xff] %v869
      %902 = vst [vmem:[#allocation3 + $0xd0] sm:$0xff] %v870
      %903 = vst [vmem:[#allocation3 + $0x118] sm:$0xff] %v871
      %904 = vst [vmem:[#allocation3 + $0x160] sm:$0xff] %v872
      %905 = vst [vmem:[#allocation3 + $0x1a8] sm:$0xff] %v873
      %906 = vst [vmem:[#allocation3 + $0x1f0] sm:$0xff] %v874
      %907 = vst [vmem:[#allocation3 + $0x238] sm:$0xff] %v875
      %908 = vst [vmem:[#allocation3 + $0x280] sm:$0xff] %v876
      %909 = vst [vmem:[#allocation3 + $0x2c8] sm:$0xff] %v877
      %910 = vst [vmem:[#allocation3 + $0x310] sm:$0xff] %v878
      %911 = vst [vmem:[#allocation3 + $0x358] sm:$0xff] %v879
      %912 = vst [vmem:[#allocation3 + $0x3a0] sm:$0xff] %v880
      %913 = vst [vmem:[#allocation3 + $0x3e8] sm:$0xff] %v881
      %914 = vst [vmem:[#allocation3 + $0x430] sm:$0xff] %v882
      %915 = vst [vmem:[#allocation3 + $0x478] sm:$0xff] %v883
      %916 = vst [vmem:[#allocation3 + $0x4c0] sm:$0xff] %v884
      %917 = vst [vmem:[#allocation3 + $0x508] sm:$0xff] %v885
      %918 = vst [vmem:[#allocation3 + $0x550] sm:$0xff] %v886
      %919 = vst [vmem:[#allocation3 + $0x598] sm:$0xff] %v887
      %920 = vst [vmem:[#allocation3 + $0x5e0] sm:$0xff] %v888
      %921 = vst [vmem:[#allocation3 + $0x628] sm:$0xff] %v889
      %922 = vst [vmem:[#allocation3 + $0x670] sm:$0xff] %v890
      %923 = vst [vmem:[#allocation3 + $0x6b8] sm:$0xff] %v891
      %924 = vst [vmem:[#allocation3 + $0x700] sm:$0xff] %v892
      %925 = vst [vmem:[#allocation3 + $0x748] sm:$0xff] %v893
      %926 = vst [vmem:[#allocation3 + $0x790] sm:$0xff] %v894
      %927 = vst [vmem:[#allocation3 + $0x7d8] sm:$0xff] %v895
      %928 = vst [vmem:[#allocation3 + $0x820] sm:$0xff] %v896
      %929 = vst [vmem:[#allocation3 + $0x868] sm:$0xff] %v897
      %930 = vst [vmem:[#allocation3 + $0x8b0] sm:$0xff] %v898
      %931 = vst [vmem:[#allocation3 + $0x8f8] sm:$0xff] %v899
      %v932 = vld [vmem:[#allocation3] sm:$0xff]
      %v933 = vld [vmem:[#allocation3 + $0x8] sm:$0xff]
      %v934 = vld [vmem:[#allocation3 + $0x10] sm:$0xff]
      %v935 = vld [vmem:[#allocation3 + $0x18] sm:$0xff]
      %v936 = vld [vmem:[#allocation3 + $0x20] sm:$0xff]
      %v937 = vld [vmem:[#allocation3 + $0x28] sm:$0xff]
      %v938 = vld [vmem:[#allocation3 + $0x30] sm:$0xff]
      %v939 = vld [vmem:[#allocation3 + $0x38] sm:$0xff]
      %v940 = vld [vmem:[#allocation3 + $0x40] sm:$0xff]
      %v941 = vld [vmem:[#allocation3 + $0x48] sm:$0xff]
      %v942 = vld [vmem:[#allocation3 + $0x50] sm:$0xff]
      %v943 = vld [vmem:[#allocation3 + $0x58] sm:$0xff]
      %v944 = vld [vmem:[#allocation3 + $0x60] sm:$0xff]
      %v945 = vld [vmem:[#allocation3 + $0x68] sm:$0xff]
      %v946 = vld [vmem:[#allocation3 + $0x70] sm:$0xff]
      %v947 = vld [vmem:[#allocation3 + $0x78] sm:$0xff]
      %v948 = vld [vmem:[#allocation3 + $0x80] sm:$0xff]
      %v949 = vld [vmem:[#allocation3 + $0x88] sm:$0xff]
      %v950 = vld [vmem:[#allocation3 + $0x90] sm:$0xff]
      %v951 = vld [vmem:[#allocation3 + $0x98] sm:$0xff]
      %v952 = vld [vmem:[#allocation3 + $0xa0] sm:$0xff]
      %v953 = vld [vmem:[#allocation3 + $0xa8] sm:$0xff]
      %v954 = vld [vmem:[#allocation3 + $0xb0] sm:$0xff]
      %v955 = vld [vmem:[#allocation3 + $0xb8] sm:$0xff]
      %v956 = vld [vmem:[#allocation3 + $0xc0] sm:$0xff]
      %v957 = vld [vmem:[#allocation3 + $0xc8] sm:$0xff]
      %v958 = vld [vmem:[#allocation3 + $0xd0] sm:$0xff]
      %v959 = vld [vmem:[#allocation3 + $0xd8] sm:$0xff]
      %v960 = vld [vmem:[#allocation3 + $0xe0] sm:$0xff]
      %v961 = vld [vmem:[#allocation3 + $0xe8] sm:$0xff]
      %v962 = vld [vmem:[#allocation3 + $0xf0] sm:$0xff]
      %v963 = vld [vmem:[#allocation3 + $0xf8] sm:$0xff]
      %v964 = vld [vmem:[#allocation3 + $0x100] sm:$0xff]
      %v965 = vld [vmem:[#allocation3 + $0x108] sm:$0xff]
      %v966 = vld [vmem:[#allocation3 + $0x110] sm:$0xff]
      %v967 = vld [vmem:[#allocation3 + $0x118] sm:$0xff]
      %v968 = vld [vmem:[#allocation3 + $0x120] sm:$0xff]
      %v969 = vld [vmem:[#allocation3 + $0x128] sm:$0xff]
      %v970 = vld [vmem:[#allocation3 + $0x130] sm:$0xff]
      %v971 = vld [vmem:[#allocation3 + $0x138] sm:$0xff]
      %v972 = vld [vmem:[#allocation3 + $0x140] sm:$0xff]
      %v973 = vld [vmem:[#allocation3 + $0x148] sm:$0xff]
      %v974 = vld [vmem:[#allocation3 + $0x150] sm:$0xff]
      %v975 = vld [vmem:[#allocation3 + $0x158] sm:$0xff]
      %v976 = vld [vmem:[#allocation3 + $0x160] sm:$0xff]
      %v977 = vld [vmem:[#allocation3 + $0x168] sm:$0xff]
      %v978 = vld [vmem:[#allocation3 + $0x170] sm:$0xff]
      %v979 = vld [vmem:[#allocation3 + $0x178] sm:$0xff]
      %v980 = vld [vmem:[#allocation3 + $0x180] sm:$0xff]
      %v981 = vld [vmem:[#allocation3 + $0x188] sm:$0xff]
      %v982 = vld [vmem:[#allocation3 + $0x190] sm:$0xff]
      %v983 = vld [vmem:[#allocation3 + $0x198] sm:$0xff]
      %v984 = vld [vmem:[#allocation3 + $0x1a0] sm:$0xff]
      %v985 = vld [vmem:[#allocation3 + $0x1a8] sm:$0xff]
      %v986 = vld [vmem:[#allocation3 + $0x1b0] sm:$0xff]
      %v987 = vld [vmem:[#allocation3 + $0x1b8] sm:$0xff]
      %v988 = vld [vmem:[#allocation3 + $0x1c0] sm:$0xff]
      %v989 = vld [vmem:[#allocation3 + $0x1c8] sm:$0xff]
      %v990 = vld [vmem:[#allocation3 + $0x1d0] sm:$0xff]
      %v991 = vld [vmem:[#allocation3 + $0x1d8] sm:$0xff]
      %v992 = vld [vmem:[#allocation3 + $0x1e0] sm:$0xff]
      %v993 = vld [vmem:[#allocation3 + $0x1e8] sm:$0xff]
      %v994 = vld [vmem:[#allocation3 + $0x1f0] sm:$0xff]
      %v995 = vld [vmem:[#allocation3 + $0x1f8] sm:$0xff]
      %v996 = vld [vmem:[#allocation3 + $0x200] sm:$0xff]
      %v997 = vld [vmem:[#allocation3 + $0x208] sm:$0xff]
      %v998 = vld [vmem:[#allocation3 + $0x210] sm:$0xff]
      %v999 = vld [vmem:[#allocation3 + $0x218] sm:$0xff]
      %v1000 = vld [vmem:[#allocation3 + $0x220] sm:$0xff]
      %v1001 = vld [vmem:[#allocation3 + $0x228] sm:$0xff]
      %v1002 = vld [vmem:[#allocation3 + $0x230] sm:$0xff]
      %v1003 = vld [vmem:[#allocation3 + $0x238] sm:$0xff]
      %v1004 = vld [vmem:[#allocation3 + $0x240] sm:$0xff]
      %v1005 = vld [vmem:[#allocation3 + $0x248] sm:$0xff]
      %v1006 = vld [vmem:[#allocation3 + $0x250] sm:$0xff]
      %v1007 = vld [vmem:[#allocation3 + $0x258] sm:$0xff]
      %v1008 = vld [vmem:[#allocation3 + $0x260] sm:$0xff]
      %v1009 = vld [vmem:[#allocation3 + $0x268] sm:$0xff]
      %v1010 = vld [vmem:[#allocation3 + $0x270] sm:$0xff]
      %v1011 = vld [vmem:[#allocation3 + $0x278] sm:$0xff]
      %v1012 = vld [vmem:[#allocation3 + $0x280] sm:$0xff]
      %v1013 = vld [vmem:[#allocation3 + $0x288] sm:$0xff]
      %v1014 = vld [vmem:[#allocation3 + $0x290] sm:$0xff]
      %v1015 = vld [vmem:[#allocation3 + $0x298] sm:$0xff]
      %v1016 = vld [vmem:[#allocation3 + $0x2a0] sm:$0xff]
      %v1017 = vld [vmem:[#allocation3 + $0x2a8] sm:$0xff]
      %v1018 = vld [vmem:[#allocation3 + $0x2b0] sm:$0xff]
      %v1019 = vld [vmem:[#allocation3 + $0x2b8] sm:$0xff]
      %v1020 = vld [vmem:[#allocation3 + $0x2c0] sm:$0xff]
      %v1021 = vld [vmem:[#allocation3 + $0x2c8] sm:$0xff]
      %v1022 = vld [vmem:[#allocation3 + $0x2d0] sm:$0xff]
      %v1023 = vld [vmem:[#allocation3 + $0x2d8] sm:$0xff]
      %v1024 = vld [vmem:[#allocation3 + $0x2e0] sm:$0xff]
      %v1025 = vld [vmem:[#allocation3 + $0x2e8] sm:$0xff]
      %v1026 = vld [vmem:[#allocation3 + $0x2f0] sm:$0xff]
      %v1027 = vld [vmem:[#allocation3 + $0x2f8] sm:$0xff]
      %v1028 = vld [vmem:[#allocation3 + $0x300] sm:$0xff]
      %v1029 = vld [vmem:[#allocation3 + $0x308] sm:$0xff]
      %v1030 = vld [vmem:[#allocation3 + $0x310] sm:$0xff]
      %v1031 = vld [vmem:[#allocation3 + $0x318] sm:$0xff]
      %v1032 = vld [vmem:[#allocation3 + $0x320] sm:$0xff]
      %v1033 = vld [vmem:[#allocation3 + $0x328] sm:$0xff]
      %v1034 = vld [vmem:[#allocation3 + $0x330] sm:$0xff]
      %v1035 = vld [vmem:[#allocation3 + $0x338] sm:$0xff]
      %v1036 = vld [vmem:[#allocation3 + $0x340] sm:$0xff]
      %v1037 = vld [vmem:[#allocation3 + $0x348] sm:$0xff]
      %v1038 = vld [vmem:[#allocation3 + $0x350] sm:$0xff]
      %v1039 = vld [vmem:[#allocation3 + $0x358] sm:$0xff]
      %v1040 = vld [vmem:[#allocation3 + $0x360] sm:$0xff]
      %v1041 = vld [vmem:[#allocation3 + $0x368] sm:$0xff]
      %v1042 = vld [vmem:[#allocation3 + $0x370] sm:$0xff]
      %v1043 = vld [vmem:[#allocation3 + $0x378] sm:$0xff]
      %v1044 = vld [vmem:[#allocation3 + $0x380] sm:$0xff]
      %v1045 = vld [vmem:[#allocation3 + $0x388] sm:$0xff]
      %v1046 = vld [vmem:[#allocation3 + $0x390] sm:$0xff]
      %v1047 = vld [vmem:[#allocation3 + $0x398] sm:$0xff]
      %v1048 = vld [vmem:[#allocation3 + $0x3a0] sm:$0xff]
      %v1049 = vld [vmem:[#allocation3 + $0x3a8] sm:$0xff]
      %v1050 = vld [vmem:[#allocation3 + $0x3b0] sm:$0xff]
      %v1051 = vld [vmem:[#allocation3 + $0x3b8] sm:$0xff]
      %v1052 = vld [vmem:[#allocation3 + $0x3c0] sm:$0xff]
      %v1053 = vld [vmem:[#allocation3 + $0x3c8] sm:$0xff]
      %v1054 = vld [vmem:[#allocation3 + $0x3d0] sm:$0xff]
      %v1055 = vld [vmem:[#allocation3 + $0x3d8] sm:$0xff]
      %v1056 = vld [vmem:[#allocation3 + $0x3e0] sm:$0xff]
      %v1057 = vld [vmem:[#allocation3 + $0x3e8] sm:$0xff]
      %v1058 = vld [vmem:[#allocation3 + $0x3f0] sm:$0xff]
      %v1059 = vld [vmem:[#allocation3 + $0x3f8] sm:$0xff]
      %v1060 = vld [vmem:[#allocation3 + $0x400] sm:$0xff]
      %v1061 = vld [vmem:[#allocation3 + $0x408] sm:$0xff]
      %v1062 = vld [vmem:[#allocation3 + $0x410] sm:$0xff]
      %v1063 = vld [vmem:[#allocation3 + $0x418] sm:$0xff]
      %v1064 = vld [vmem:[#allocation3 + $0x420] sm:$0xff]
      %v1065 = vld [vmem:[#allocation3 + $0x428] sm:$0xff]
      %v1066 = vld [vmem:[#allocation3 + $0x430] sm:$0xff]
      %v1067 = vld [vmem:[#allocation3 + $0x438] sm:$0xff]
      %v1068 = vld [vmem:[#allocation3 + $0x440] sm:$0xff]
      %v1069 = vld [vmem:[#allocation3 + $0x448] sm:$0xff]
      %v1070 = vld [vmem:[#allocation3 + $0x450] sm:$0xff]
      %v1071 = vld [vmem:[#allocation3 + $0x458] sm:$0xff]
      %v1072 = vld [vmem:[#allocation3 + $0x460] sm:$0xff]
      %v1073 = vld [vmem:[#allocation3 + $0x468] sm:$0xff]
      %v1074 = vld [vmem:[#allocation3 + $0x470] sm:$0xff]
      %v1075 = vld [vmem:[#allocation3 + $0x478] sm:$0xff]
      %v1076 = vld [vmem:[#allocation3 + $0x480] sm:$0xff]
      %v1077 = vld [vmem:[#allocation3 + $0x488] sm:$0xff]
      %v1078 = vld [vmem:[#allocation3 + $0x490] sm:$0xff]
      %v1079 = vld [vmem:[#allocation3 + $0x498] sm:$0xff]
      %v1080 = vld [vmem:[#allocation3 + $0x4a0] sm:$0xff]
      %v1081 = vld [vmem:[#allocation3 + $0x4a8] sm:$0xff]
      %v1082 = vld [vmem:[#allocation3 + $0x4b0] sm:$0xff]
      %v1083 = vld [vmem:[#allocation3 + $0x4b8] sm:$0xff]
      %v1084 = vld [vmem:[#allocation3 + $0x4c0] sm:$0xff]
      %v1085 = vld [vmem:[#allocation3 + $0x4c8] sm:$0xff]
      %v1086 = vld [vmem:[#allocation3 + $0x4d0] sm:$0xff]
      %v1087 = vld [vmem:[#allocation3 + $0x4d8] sm:$0xff]
      %v1088 = vld [vmem:[#allocation3 + $0x4e0] sm:$0xff]
      %v1089 = vld [vmem:[#allocation3 + $0x4e8] sm:$0xff]
      %v1090 = vld [vmem:[#allocation3 + $0x4f0] sm:$0xff]
      %v1091 = vld [vmem:[#allocation3 + $0x4f8] sm:$0xff]
      %v1092 = vld [vmem:[#allocation3 + $0x500] sm:$0xff]
      %v1093 = vld [vmem:[#allocation3 + $0x508] sm:$0xff]
      %v1094 = vld [vmem:[#allocation3 + $0x510] sm:$0xff]
      %v1095 = vld [vmem:[#allocation3 + $0x518] sm:$0xff]
      %v1096 = vld [vmem:[#allocation3 + $0x520] sm:$0xff]
      %v1097 = vld [vmem:[#allocation3 + $0x528] sm:$0xff]
      %v1098 = vld [vmem:[#allocation3 + $0x530] sm:$0xff]
      %v1099 = vld [vmem:[#allocation3 + $0x538] sm:$0xff]
      %v1100 = vld [vmem:[#allocation3 + $0x540] sm:$0xff]
      %v1101 = vld [vmem:[#allocation3 + $0x548] sm:$0xff]
      %v1102 = vld [vmem:[#allocation3 + $0x550] sm:$0xff]
      %v1103 = vld [vmem:[#allocation3 + $0x558] sm:$0xff]
      %v1104 = vld [vmem:[#allocation3 + $0x560] sm:$0xff]
      %v1105 = vld [vmem:[#allocation3 + $0x568] sm:$0xff]
      %v1106 = vld [vmem:[#allocation3 + $0x570] sm:$0xff]
      %v1107 = vld [vmem:[#allocation3 + $0x578] sm:$0xff]
      %v1108 = vld [vmem:[#allocation3 + $0x580] sm:$0xff]
      %v1109 = vld [vmem:[#allocation3 + $0x588] sm:$0xff]
      %v1110 = vld [vmem:[#allocation3 + $0x590] sm:$0xff]
      %v1111 = vld [vmem:[#allocation3 + $0x598] sm:$0xff]
      %v1112 = vld [vmem:[#allocation3 + $0x5a0] sm:$0xff]
      %v1113 = vld [vmem:[#allocation3 + $0x5a8] sm:$0xff]
      %v1114 = vld [vmem:[#allocation3 + $0x5b0] sm:$0xff]
      %v1115 = vld [vmem:[#allocation3 + $0x5b8] sm:$0xff]
      %v1116 = vld [vmem:[#allocation3 + $0x5c0] sm:$0xff]
      %v1117 = vld [vmem:[#allocation3 + $0x5c8] sm:$0xff]
      %v1118 = vld [vmem:[#allocation3 + $0x5d0] sm:$0xff]
      %v1119 = vld [vmem:[#allocation3 + $0x5d8] sm:$0xff]
      %v1120 = vld [vmem:[#allocation3 + $0x5e0] sm:$0xff]
      %v1121 = vld [vmem:[#allocation3 + $0x5e8] sm:$0xff]
      %v1122 = vld [vmem:[#allocation3 + $0x5f0] sm:$0xff]
      %v1123 = vld [vmem:[#allocation3 + $0x5f8] sm:$0xff]
      %v1124 = vld [vmem:[#allocation3 + $0x600] sm:$0xff]
      %v1125 = vld [vmem:[#allocation3 + $0x608] sm:$0xff]
      %v1126 = vld [vmem:[#allocation3 + $0x610] sm:$0xff]
      %v1127 = vld [vmem:[#allocation3 + $0x618] sm:$0xff]
      %v1128 = vld [vmem:[#allocation3 + $0x620] sm:$0xff]
      %v1129 = vld [vmem:[#allocation3 + $0x628] sm:$0xff]
      %v1130 = vld [vmem:[#allocation3 + $0x630] sm:$0xff]
      %v1131 = vld [vmem:[#allocation3 + $0x638] sm:$0xff]
      %v1132 = vld [vmem:[#allocation3 + $0x640] sm:$0xff]
      %v1133 = vld [vmem:[#allocation3 + $0x648] sm:$0xff]
      %v1134 = vld [vmem:[#allocation3 + $0x650] sm:$0xff]
      %v1135 = vld [vmem:[#allocation3 + $0x658] sm:$0xff]
      %v1136 = vld [vmem:[#allocation3 + $0x660] sm:$0xff]
      %v1137 = vld [vmem:[#allocation3 + $0x668] sm:$0xff]
      %v1138 = vld [vmem:[#allocation3 + $0x670] sm:$0xff]
      %v1139 = vld [vmem:[#allocation3 + $0x678] sm:$0xff]
      %v1140 = vld [vmem:[#allocation3 + $0x680] sm:$0xff]
      %v1141 = vld [vmem:[#allocation3 + $0x688] sm:$0xff]
      %v1142 = vld [vmem:[#allocation3 + $0x690] sm:$0xff]
      %v1143 = vld [vmem:[#allocation3 + $0x698] sm:$0xff]
      %v1144 = vld [vmem:[#allocation3 + $0x6a0] sm:$0xff]
      %v1145 = vld [vmem:[#allocation3 + $0x6a8] sm:$0xff]
      %v1146 = vld [vmem:[#allocation3 + $0x6b0] sm:$0xff]
      %v1147 = vld [vmem:[#allocation3 + $0x6b8] sm:$0xff]
      %v1148 = vld [vmem:[#allocation3 + $0x6c0] sm:$0xff]
      %v1149 = vld [vmem:[#allocation3 + $0x6c8] sm:$0xff]
      %v1150 = vld [vmem:[#allocation3 + $0x6d0] sm:$0xff]
      %v1151 = vld [vmem:[#allocation3 + $0x6d8] sm:$0xff]
      %v1152 = vld [vmem:[#allocation3 + $0x6e0] sm:$0xff]
      %v1153 = vld [vmem:[#allocation3 + $0x6e8] sm:$0xff]
      %v1154 = vld [vmem:[#allocation3 + $0x6f0] sm:$0xff]
      %v1155 = vld [vmem:[#allocation3 + $0x6f8] sm:$0xff]
      %v1156 = vld [vmem:[#allocation3 + $0x700] sm:$0xff]
      %v1157 = vld [vmem:[#allocation3 + $0x708] sm:$0xff]
      %v1158 = vld [vmem:[#allocation3 + $0x710] sm:$0xff]
      %v1159 = vld [vmem:[#allocation3 + $0x718] sm:$0xff]
      %v1160 = vld [vmem:[#allocation3 + $0x720] sm:$0xff]
      %v1161 = vld [vmem:[#allocation3 + $0x728] sm:$0xff]
      %v1162 = vld [vmem:[#allocation3 + $0x730] sm:$0xff]
      %v1163 = vld [vmem:[#allocation3 + $0x738] sm:$0xff]
      %v1164 = vld [vmem:[#allocation3 + $0x740] sm:$0xff]
      %v1165 = vld [vmem:[#allocation3 + $0x748] sm:$0xff]
      %v1166 = vld [vmem:[#allocation3 + $0x750] sm:$0xff]
      %v1167 = vld [vmem:[#allocation3 + $0x758] sm:$0xff]
      %v1168 = vld [vmem:[#allocation3 + $0x760] sm:$0xff]
      %v1169 = vld [vmem:[#allocation3 + $0x768] sm:$0xff]
      %v1170 = vld [vmem:[#allocation3 + $0x770] sm:$0xff]
      %v1171 = vld [vmem:[#allocation3 + $0x778] sm:$0xff]
      %v1172 = vld [vmem:[#allocation3 + $0x780] sm:$0xff]
      %v1173 = vld [vmem:[#allocation3 + $0x788] sm:$0xff]
      %v1174 = vld [vmem:[#allocation3 + $0x790] sm:$0xff]
      %v1175 = vld [vmem:[#allocation3 + $0x798] sm:$0xff]
      %v1176 = vld [vmem:[#allocation3 + $0x7a0] sm:$0xff]
      %v1177 = vld [vmem:[#allocation3 + $0x7a8] sm:$0xff]
      %v1178 = vld [vmem:[#allocation3 + $0x7b0] sm:$0xff]
      %v1179 = vld [vmem:[#allocation3 + $0x7b8] sm:$0xff]
      %v1180 = vld [vmem:[#allocation3 + $0x7c0] sm:$0xff]
      %v1181 = vld [vmem:[#allocation3 + $0x7c8] sm:$0xff]
      %v1182 = vld [vmem:[#allocation3 + $0x7d0] sm:$0xff]
      %v1183 = vld [vmem:[#allocation3 + $0x7d8] sm:$0xff]
      %v1184 = vld [vmem:[#allocation3 + $0x7e0] sm:$0xff]
      %v1185 = vld [vmem:[#allocation3 + $0x7e8] sm:$0xff]
      %v1186 = vld [vmem:[#allocation3 + $0x7f0] sm:$0xff]
      %v1187 = vld [vmem:[#allocation3 + $0x7f8] sm:$0xff]
      %v1188 = vld [vmem:[#allocation3 + $0x800] sm:$0xff]
      %v1189 = vld [vmem:[#allocation3 + $0x808] sm:$0xff]
      %v1190 = vld [vmem:[#allocation3 + $0x810] sm:$0xff]
      %v1191 = vld [vmem:[#allocation3 + $0x818] sm:$0xff]
      %v1192 = vld [vmem:[#allocation3 + $0x820] sm:$0xff]
      %v1193 = vld [vmem:[#allocation3 + $0x828] sm:$0xff]
      %v1194 = vld [vmem:[#allocation3 + $0x830] sm:$0xff]
      %v1195 = vld [vmem:[#allocation3 + $0x838] sm:$0xff]
      %v1196 = vld [vmem:[#allocation3 + $0x840] sm:$0xff]
      %v1197 = vld [vmem:[#allocation3 + $0x848] sm:$0xff]
      %v1198 = vld [vmem:[#allocation3 + $0x850] sm:$0xff]
      %v1199 = vld [vmem:[#allocation3 + $0x858] sm:$0xff]
      %v1200 = vld [vmem:[#allocation3 + $0x860] sm:$0xff]
      %v1201 = vld [vmem:[#allocation3 + $0x868] sm:$0xff]
      %v1202 = vld [vmem:[#allocation3 + $0x870] sm:$0xff]
      %v1203 = vld [vmem:[#allocation3 + $0x878] sm:$0xff]
      %v1204 = vld [vmem:[#allocation3 + $0x880] sm:$0xff]
      %v1205 = vld [vmem:[#allocation3 + $0x888] sm:$0xff]
      %v1206 = vld [vmem:[#allocation3 + $0x890] sm:$0xff]
      %v1207 = vld [vmem:[#allocation3 + $0x898] sm:$0xff]
      %v1208 = vld [vmem:[#allocation3 + $0x8a0] sm:$0xff]
      %v1209 = vld [vmem:[#allocation3 + $0x8a8] sm:$0xff]
      %v1210 = vld [vmem:[#allocation3 + $0x8b0] sm:$0xff]
      %v1211 = vld [vmem:[#allocation3 + $0x8b8] sm:$0xff]
      %v1212 = vld [vmem:[#allocation3 + $0x8c0] sm:$0xff]
      %v1213 = vld [vmem:[#allocation3 + $0x8c8] sm:$0xff]
      %v1214 = vld [vmem:[#allocation3 + $0x8d0] sm:$0xff]
      %v1215 = vld [vmem:[#allocation3 + $0x8d8] sm:$0xff]
      %v1216 = vld [vmem:[#allocation3 + $0x8e0] sm:$0xff]
      %v1217 = vld [vmem:[#allocation3 + $0x8e8] sm:$0xff]
      %v1218 = vld [vmem:[#allocation3 + $0x8f0] sm:$0xff]
      %v1219 = vld [vmem:[#allocation3 + $0x8f8] sm:$0xff]
      %v1220 = vld [vmem:[%s1] sm:$0xff]
      %v1221 = vld [vmem:[%s1 + $0x8] sm:$0xff]
      %v1222 = vld [vmem:[%s1 + $0x10] sm:$0xff]
      %v1223 = vld [vmem:[%s1 + $0x18] sm:$0xff]
      %v1224 = vld [vmem:[%s1 + $0x20] sm:$0xff]
      %v1225 = vld [vmem:[%s1 + $0x28] sm:$0xff]
      %v1226 = vld [vmem:[%s1 + $0x30] sm:$0xff]
      %v1227 = vld [vmem:[%s1 + $0x38] sm:$0xff]
      %v1228 = vld [vmem:[%s1 + $0x40] sm:$0xff]
      %v1229 = vld [vmem:[%s1 + $0x48] sm:$0xff]
      %v1230 = vld [vmem:[%s1 + $0x50] sm:$0xff]
      %v1231 = vld [vmem:[%s1 + $0x58] sm:$0xff]
      %v1232 = vld [vmem:[%s1 + $0x60] sm:$0xff]
      %v1233 = vld [vmem:[%s1 + $0x68] sm:$0xff]
      %v1234 = vld [vmem:[%s1 + $0x70] sm:$0xff]
      %v1235 = vld [vmem:[%s1 + $0x78] sm:$0xff]
      %v1236 = vld [vmem:[%s1 + $0x80] sm:$0xff]
      %v1237 = vld [vmem:[%s1 + $0x88] sm:$0xff]
      %v1238 = vld [vmem:[%s1 + $0x90] sm:$0xff]
      %v1239 = vld [vmem:[%s1 + $0x98] sm:$0xff]
      %v1240 = vld [vmem:[%s1 + $0xa0] sm:$0xff]
      %v1241 = vld [vmem:[%s1 + $0xa8] sm:$0xff]
      %v1242 = vld [vmem:[%s1 + $0xb0] sm:$0xff]
      %v1243 = vld [vmem:[%s1 + $0xb8] sm:$0xff]
      %v1244 = vld [vmem:[%s1 + $0xc0] sm:$0xff]
      %v1245 = vld [vmem:[%s1 + $0xc8] sm:$0xff]
      %v1246 = vld [vmem:[%s1 + $0xd0] sm:$0xff]
      %v1247 = vld [vmem:[%s1 + $0xd8] sm:$0xff]
      %v1248 = vld [vmem:[%s1 + $0xe0] sm:$0xff]
      %v1249 = vld [vmem:[%s1 + $0xe8] sm:$0xff]
      %v1250 = vld [vmem:[%s1 + $0xf0] sm:$0xff]
      %v1251 = vld [vmem:[%s1 + $0xf8] sm:$0xff]
      %v1252 = vld [vmem:[%s1 + $0x100] sm:$0xff]
      %v1253 = vld [vmem:[%s1 + $0x108] sm:$0xff]
      %v1254 = vld [vmem:[%s1 + $0x110] sm:$0xff]
      %v1255 = vld [vmem:[%s1 + $0x118] sm:$0xff]
      %v1256 = vld [vmem:[%s1 + $0x120] sm:$0xff]
      %v1257 = vld [vmem:[%s1 + $0x128] sm:$0xff]
      %v1258 = vld [vmem:[%s1 + $0x130] sm:$0xff]
      %v1259 = vld [vmem:[%s1 + $0x138] sm:$0xff]
      %v1260 = vld [vmem:[%s1 + $0x140] sm:$0xff]
      %v1261 = vld [vmem:[%s1 + $0x148] sm:$0xff]
      %v1262 = vld [vmem:[%s1 + $0x150] sm:$0xff]
      %v1263 = vld [vmem:[%s1 + $0x158] sm:$0xff]
      %v1264 = vld [vmem:[%s1 + $0x160] sm:$0xff]
      %v1265 = vld [vmem:[%s1 + $0x168] sm:$0xff]
      %v1266 = vld [vmem:[%s1 + $0x170] sm:$0xff]
      %v1267 = vld [vmem:[%s1 + $0x178] sm:$0xff]
      %v1268 = vld [vmem:[%s1 + $0x180] sm:$0xff]
      %v1269 = vld [vmem:[%s1 + $0x188] sm:$0xff]
      %v1270 = vld [vmem:[%s1 + $0x190] sm:$0xff]
      %v1271 = vld [vmem:[%s1 + $0x198] sm:$0xff]
      %v1272 = vld [vmem:[%s1 + $0x1a0] sm:$0xff]
      %v1273 = vld [vmem:[%s1 + $0x1a8] sm:$0xff]
      %v1274 = vld [vmem:[%s1 + $0x1b0] sm:$0xff]
      %v1275 = vld [vmem:[%s1 + $0x1b8] sm:$0xff]
      %v1276 = vld [vmem:[%s1 + $0x1c0] sm:$0xff]
      %v1277 = vld [vmem:[%s1 + $0x1c8] sm:$0xff]
      %v1278 = vld [vmem:[%s1 + $0x1d0] sm:$0xff]
      %v1279 = vld [vmem:[%s1 + $0x1d8] sm:$0xff]
      %v1280 = vld [vmem:[%s1 + $0x1e0] sm:$0xff]
      %v1281 = vld [vmem:[%s1 + $0x1e8] sm:$0xff]
      %v1282 = vld [vmem:[%s1 + $0x1f0] sm:$0xff]
      %v1283 = vld [vmem:[%s1 + $0x1f8] sm:$0xff]
      %v1284 = vld [vmem:[%s1 + $0x200] sm:$0xff]
      %v1285 = vld [vmem:[%s1 + $0x208] sm:$0xff]
      %v1286 = vld [vmem:[%s1 + $0x210] sm:$0xff]
      %v1287 = vld [vmem:[%s1 + $0x218] sm:$0xff]
      %v1288 = vld [vmem:[%s1 + $0x220] sm:$0xff]
      %v1289 = vld [vmem:[%s1 + $0x228] sm:$0xff]
      %v1290 = vld [vmem:[%s1 + $0x230] sm:$0xff]
      %v1291 = vld [vmem:[%s1 + $0x238] sm:$0xff]
      %v1292 = vld [vmem:[%s1 + $0x240] sm:$0xff]
      %v1293 = vld [vmem:[%s1 + $0x248] sm:$0xff]
      %v1294 = vld [vmem:[%s1 + $0x250] sm:$0xff]
      %v1295 = vld [vmem:[%s1 + $0x258] sm:$0xff]
      %v1296 = vld [vmem:[%s1 + $0x260] sm:$0xff]
      %v1297 = vld [vmem:[%s1 + $0x268] sm:$0xff]
      %v1298 = vld [vmem:[%s1 + $0x270] sm:$0xff]
      %v1299 = vld [vmem:[%s1 + $0x278] sm:$0xff]
      %v1300 = vld [vmem:[%s1 + $0x280] sm:$0xff]
      %v1301 = vld [vmem:[%s1 + $0x288] sm:$0xff]
      %v1302 = vld [vmem:[%s1 + $0x290] sm:$0xff]
      %v1303 = vld [vmem:[%s1 + $0x298] sm:$0xff]
      %v1304 = vld [vmem:[%s1 + $0x2a0] sm:$0xff]
      %v1305 = vld [vmem:[%s1 + $0x2a8] sm:$0xff]
      %v1306 = vld [vmem:[%s1 + $0x2b0] sm:$0xff]
      %v1307 = vld [vmem:[%s1 + $0x2b8] sm:$0xff]
      %v1308 = vld [vmem:[%s1 + $0x2c0] sm:$0xff]
      %v1309 = vld [vmem:[%s1 + $0x2c8] sm:$0xff]
      %v1310 = vld [vmem:[%s1 + $0x2d0] sm:$0xff]
      %v1311 = vld [vmem:[%s1 + $0x2d8] sm:$0xff]
      %v1312 = vld [vmem:[%s1 + $0x2e0] sm:$0xff]
      %v1313 = vld [vmem:[%s1 + $0x2e8] sm:$0xff]
      %v1314 = vld [vmem:[%s1 + $0x2f0] sm:$0xff]
      %v1315 = vld [vmem:[%s1 + $0x2f8] sm:$0xff]
      %v1316 = vld [vmem:[%s1 + $0x300] sm:$0xff]
      %v1317 = vld [vmem:[%s1 + $0x308] sm:$0xff]
      %v1318 = vld [vmem:[%s1 + $0x310] sm:$0xff]
      %v1319 = vld [vmem:[%s1 + $0x318] sm:$0xff]
      %v1320 = vld [vmem:[%s1 + $0x320] sm:$0xff]
      %v1321 = vld [vmem:[%s1 + $0x328] sm:$0xff]
      %v1322 = vld [vmem:[%s1 + $0x330] sm:$0xff]
      %v1323 = vld [vmem:[%s1 + $0x338] sm:$0xff]
      %v1324 = vld [vmem:[%s1 + $0x340] sm:$0xff]
      %v1325 = vld [vmem:[%s1 + $0x348] sm:$0xff]
      %v1326 = vld [vmem:[%s1 + $0x350] sm:$0xff]
      %v1327 = vld [vmem:[%s1 + $0x358] sm:$0xff]
      %v1328 = vld [vmem:[%s1 + $0x360] sm:$0xff]
      %v1329 = vld [vmem:[%s1 + $0x368] sm:$0xff]
      %v1330 = vld [vmem:[%s1 + $0x370] sm:$0xff]
      %v1331 = vld [vmem:[%s1 + $0x378] sm:$0xff]
      %v1332 = vld [vmem:[%s1 + $0x380] sm:$0xff]
      %v1333 = vld [vmem:[%s1 + $0x388] sm:$0xff]
      %v1334 = vld [vmem:[%s1 + $0x390] sm:$0xff]
      %v1335 = vld [vmem:[%s1 + $0x398] sm:$0xff]
      %v1336 = vld [vmem:[%s1 + $0x3a0] sm:$0xff]
      %v1337 = vld [vmem:[%s1 + $0x3a8] sm:$0xff]
      %v1338 = vld [vmem:[%s1 + $0x3b0] sm:$0xff]
      %v1339 = vld [vmem:[%s1 + $0x3b8] sm:$0xff]
      %v1340 = vld [vmem:[%s1 + $0x3c0] sm:$0xff]
      %v1341 = vld [vmem:[%s1 + $0x3c8] sm:$0xff]
      %v1342 = vld [vmem:[%s1 + $0x3d0] sm:$0xff]
      %v1343 = vld [vmem:[%s1 + $0x3d8] sm:$0xff]
      %v1344 = vld [vmem:[%s1 + $0x3e0] sm:$0xff]
      %v1345 = vld [vmem:[%s1 + $0x3e8] sm:$0xff]
      %v1346 = vld [vmem:[%s1 + $0x3f0] sm:$0xff]
      %v1347 = vld [vmem:[%s1 + $0x3f8] sm:$0xff]
      %v1348 = vld [vmem:[%s1 + $0x400] sm:$0xff]
      %v1349 = vld [vmem:[%s1 + $0x408] sm:$0xff]
      %v1350 = vld [vmem:[%s1 + $0x410] sm:$0xff]
      %v1351 = vld [vmem:[%s1 + $0x418] sm:$0xff]
      %v1352 = vld [vmem:[%s1 + $0x420] sm:$0xff]
      %v1353 = vld [vmem:[%s1 + $0x428] sm:$0xff]
      %v1354 = vld [vmem:[%s1 + $0x430] sm:$0xff]
      %v1355 = vld [vmem:[%s1 + $0x438] sm:$0xff]
      %v1356 = vld [vmem:[%s1 + $0x440] sm:$0xff]
      %v1357 = vld [vmem:[%s1 + $0x448] sm:$0xff]
      %v1358 = vld [vmem:[%s1 + $0x450] sm:$0xff]
      %v1359 = vld [vmem:[%s1 + $0x458] sm:$0xff]
      %v1360 = vld [vmem:[%s1 + $0x460] sm:$0xff]
      %v1361 = vld [vmem:[%s1 + $0x468] sm:$0xff]
      %v1362 = vld [vmem:[%s1 + $0x470] sm:$0xff]
      %v1363 = vld [vmem:[%s1 + $0x478] sm:$0xff]
      %1364 = vmatprep.subr.mxu0 0.0
      %1365 = vmatpush1.msra.mxu0 %v1220
      %1366 = vmatprep.subr.mxu0 0.0
      %1367 = vmatpush1.msra.mxu0 %v1221
      %1368 = vmatprep.subr.mxu0 0.0
      %1369 = vmatpush1.msra.mxu0 %v1222
      %1370 = vmatprep.subr.mxu0 0.0
      %1371 = vmatpush1.msra.mxu0 %v1223
      %1372 = vmatprep.subr.mxu0 0.0
      %1373 = vmatpush1.msra.mxu0 %v1224
      %1374 = vmatprep.subr.mxu0 0.0
      %1375 = vmatpush1.msra.mxu0 %v1225
      %1376 = vmatprep.subr.mxu0 0.0
      %1377 = vmatpush1.msra.mxu0 %v1226
      %1378 = vmatprep.subr.mxu0 0.0
      %1379 = vmatpush1.msra.mxu0 %v1227
      %1380 = vmatprep.subr.mxu0 0.0
      %1381 = vmatpush1.msra.mxu0 %v1228
      %1382 = vmatprep.subr.mxu0 0.0
      %1383 = vmatpush1.msra.mxu0 %v1229
      %1384 = vmatprep.subr.mxu0 0.0
      %1385 = vmatpush1.msra.mxu0 %v1230
      %1386 = vmatprep.subr.mxu0 0.0
      %1387 = vmatpush1.msra.mxu0 %v1231
      %1388 = vmatprep.subr.mxu0 0.0
      %1389 = vmatpush1.msra.mxu0 %v1232
      %1390 = vmatprep.subr.mxu0 0.0
      %1391 = vmatpush1.msra.mxu0 %v1233
      %1392 = vmatprep.subr.mxu0 0.0
      %1393 = vmatpush1.msra.mxu0 %v1234
      %1394 = vmatprep.subr.mxu0 0.0
      %1395 = vmatpush1.msra.mxu0 %v1235
      %1396 = vmatprep.subr.mxu0 0.0
      %1397 = vmatpush1.msra.mxu0 %v1236
      %1398 = vmatprep.subr.mxu0 0.0
      %1399 = vmatpush1.msra.mxu0 %v1237
      %1400 = vmatprep.subr.mxu0 0.0
      %1401 = vmatpush1.msra.mxu0 %v1238
      %1402 = vmatprep.subr.mxu0 0.0
      %1403 = vmatpush1.msra.mxu0 %v1239
      %1404 = vmatprep.subr.mxu0 0.0
      %1405 = vmatpush1.msra.mxu0 %v1240
      %1406 = vmatprep.subr.mxu0 0.0
      %1407 = vmatpush1.msra.mxu0 %v1241
      %1408 = vmatprep.subr.mxu0 0.0
      %1409 = vmatpush1.msra.mxu0 %v1242
      %1410 = vmatprep.subr.mxu0 0.0
      %1411 = vmatpush1.msra.mxu0 %v1243
      %1412 = vmatprep.subr.mxu0 0.0
      %1413 = vmatpush1.msra.mxu0 %v1244
      %1414 = vmatprep.subr.mxu0 0.0
      %1415 = vmatpush1.msra.mxu0 %v1245
      %1416 = vmatprep.subr.mxu0 0.0
      %1417 = vmatpush1.msra.mxu0 %v1246
      %1418 = vmatprep.subr.mxu0 0.0
      %1419 = vmatpush1.msra.mxu0 %v1247
      %1420 = vmatprep.subr.mxu0 0.0
      %1421 = vmatpush1.msra.mxu0 %v1248
      %1422 = vmatprep.subr.mxu0 0.0
      %1423 = vmatpush1.msra.mxu0 %v1249
      %1424 = vmatprep.subr.mxu0 0.0
      %1425 = vmatpush1.msra.mxu0 %v1250
      %1426 = vmatprep.subr.mxu0 0.0
      %1427 = vmatpush1.msra.mxu0 %v1251
      %1428 = vmatprep.mubr.f32.mxu0 %v933
      %1429 = vmatmul.mubr.f32.gmra.mrb[0].mxu0 %v932
      %v1430 = vpop.f32.mrb[0].mxu0
      %v1431 = vadd.f32 0.0, %v1430
      %v1432 = vpop.f32.mrb[0].mxu0
      %1433 = vmatprep.mubr.f32.mxu0 %v942
      %1434 = vmatmul.mubr.f32.gmra.mrb[0].mxu0 %v941
      %v1435 = vpop.f32.mrb[0].mxu0
      %v1436 = vadd.f32 0.0, %v1435
      %v1437 = vpop.f32.mrb[0].mxu0
      %1438 = vmatprep.mubr.f32.mxu0 %v951
      %1439 = vmatmul.mubr.f32.gmra.mrb[0].mxu0 %v950
      %v1440 = vpop.f32.mrb[0].mxu0
      %v1441 = vadd.f32 0.0, %v1440
      %v1442 = vpop.f32.mrb[0].mxu0
      %1443 = vmatprep.mubr.f32.mxu0 %v960
      %1444 = vmatmul.mubr.f32.gmra.mrb[0].mxu0 %v959
      %v1445 = vpop.f32.mrb[0].mxu0
      %v1446 = vadd.f32 0.0, %v1445
      %v1447 = vpop.f32.mrb[0].mxu0
      %1448 = vmatprep.mubr.f32.mxu0 %v969
      %1449 = vmatmul.mubr.f32.gmra.mrb[0].mxu0 %v968
      %v1450 = vpop.f32.mrb[0].mxu0
      %v1451 = vadd.f32 0.0, %v1450
      %v1452 = vpop.f32.mrb[0].mxu0
      %1453 = vmatprep.mubr.f32.mxu0 %v978
      %1454 = vmatmul.mubr.f32.gmra.mrb[0].mxu0 %v977
      %v1455 = vpop.f32.mrb[0].mxu0
      %v1456 = vadd.f32 0.0, %v1455
      %v1457 = vpop.f32.mrb[0].mxu0
      %1458 = vmatprep.mubr.f32.mxu0 %v987
      %1459 = vmatmul.mubr.f32.gmra.mrb[0].mxu0 %v986
      %v1460 = vpop.f32.mrb[0].mxu0
      %v1461 = vadd.f32 0.0, %v1460
      %v1462 = vpop.f32.mrb[0].mxu0
      %1463 = vmatprep.mubr.f32.mxu0 %v996
      %1464 = vmatmul.mubr.f32.gmra.mrb[0].mxu0 %v995
      %v1465 = vpop.f32.mrb[0].mxu0
      %v1466 = vadd.f32 0.0, %v1465
      %v1467 = vpop.f32.mrb[0].mxu0
      %1468 = vmatprep.mubr.f32.mxu0 %v1005
      %1469 = vmatmul.mubr.f32.gmra.mrb[0].mxu0 %v1004
      %v1470 = vpop.f32.mrb[0].mxu0
      %v1471 = vadd.f32 0.0, %v1470
      %v1472 = vpop.f32.mrb[0].mxu0
      %1473 = vmatprep.mubr.f32.mxu0 %v1014
      %1474 = vmatmul.mubr.f32.gmra.mrb[0].mxu0 %v1013
      %v1475 = vpop.f32.mrb[0].mxu0
      %v1476 = vadd.f32 0.0, %v1475
      %v1477 = vpop.f32.mrb[0].mxu0
      %1478 = vmatprep.mubr.f32.mxu0 %v1023
      %1479 = vmatmul.mubr.f32.gmra.mrb[0].mxu0 %v1022
      %v1480 = vpop.f32.mrb[0].mxu0
      %v1481 = vadd.f32 0.0, %v1480
      %v1482 = vpop.f32.mrb[0].mxu0
      %1483 = vmatprep.mubr.f32.mxu0 %v1032
      %1484 = vmatmul.mubr.f32.gmra.mrb[0].mxu0 %v1031
      %v1485 = vpop.f32.mrb[0].mxu0
      %v1486 = vadd.f32 0.0, %v1485
      %v1487 = vpop.f32.mrb[0].mxu0
      %1488 = vmatprep.mubr.f32.mxu0 %v1041
      %1489 = vmatmul.mubr.f32.gmra.mrb[0].mxu0 %v1040
      %v1490 = vpop.f32.mrb[0].mxu0
      %v1491 = vadd.f32 0.0, %v1490
      %v1492 = vpop.f32.mrb[0].mxu0
      %1493 = vmatprep.mubr.f32.mxu0 %v1050
      %1494 = vmatmul.mubr.f32.gmra.mrb[0].mxu0 %v1049
      %v1495 = vpop.f32.mrb[0].mxu0
      %v1496 = vadd.f32 0.0, %v1495
      %v1497 = vpop.f32.mrb[0].mxu0
      %1498 = vmatprep.mubr.f32.mxu0 %v1059
      %1499 = vmatmul.mubr.f32.gmra.mrb[0].mxu0 %v1058
      %v1500 = vpop.f32.mrb[0].mxu0
      %v1501 = vadd.f32 0.0, %v1500
      %v1502 = vpop.f32.mrb[0].mxu0
      %1503 = vmatprep.mubr.f32.mxu0 %v1068
      %1504 = vmatmul.mubr.f32.gmra.mrb[0].mxu0 %v1067
      %v1505 = vpop.f32.mrb[0].mxu0
      %v1506 = vadd.f32 0.0, %v1505
      %v1507 = vpop.f32.mrb[0].mxu0
      %1508 = vmatprep.mubr.f32.mxu0 %v1077
      %1509 = vmatmul.mubr.f32.gmra.mrb[0].mxu0 %v1076
      %v1510 = vpop.f32.mrb[0].mxu0
      %v1511 = vadd.f32 0.0, %v1510
      %v1512 = vpop.f32.mrb[0].mxu0
      %1513 = vmatprep.mubr.f32.mxu0 %v1086
      %1514 = vmatmul.mubr.f32.gmra.mrb[0].mxu0 %v1085
      %v1515 = vpop.f32.mrb[0].mxu0
      %v1516 = vadd.f32 0.0, %v1515
      %v1517 = vpop.f32.mrb[0].mxu0
      %1518 = vmatprep.mubr.f32.mxu0 %v1095
      %1519 = vmatmul.mubr.f32.gmra.mrb[0].mxu0 %v1094
      %v1520 = vpop.f32.mrb[0].mxu0
      %v1521 = vadd.f32 0.0, %v1520
      %v1522 = vpop.f32.mrb[0].mxu0
      %1523 = vmatprep.mubr.f32.mxu0 %v1104
      %1524 = vmatmul.mubr.f32.gmra.mrb[0].mxu0 %v1103
      %v1525 = vpop.f32.mrb[0].mxu0
      %v1526 = vadd.f32 0.0, %v1525
      %v1527 = vpop.f32.mrb[0].mxu0
      %1528 = vmatprep.mubr.f32.mxu0 %v1113
      %1529 = vmatmul.mubr.f32.gmra.mrb[0].mxu0 %v1112
      %v1530 = vpop.f32.mrb[0].mxu0
      %v1531 = vadd.f32 0.0, %v1530
      %v1532 = vpop.f32.mrb[0].mxu0
      %1533 = vmatprep.mubr.f32.mxu0 %v1122
      %1534 = vmatmul.mubr.f32.gmra.mrb[0].mxu0 %v1121
      %v1535 = vpop.f32.mrb[0].mxu0
      %v1536 = vadd.f32 0.0, %v1535
      %v1537 = vpop.f32.mrb[0].mxu0
      %1538 = vmatprep.mubr.f32.mxu0 %v1131
      %1539 = vmatmul.mubr.f32.gmra.mrb[0].mxu0 %v1130
      %v1540 = vpop.f32.mrb[0].mxu0
      %v1541 = vadd.f32 0.0, %v1540
      %v1542 = vpop.f32.mrb[0].mxu0
      %1543 = vmatprep.mubr.f32.mxu0 %v1140
      %1544 = vmatmul.mubr.f32.gmra.mrb[0].mxu0 %v1139
      %v1545 = vpop.f32.mrb[0].mxu0
      %v1546 = vadd.f32 0.0, %v1545
      %v1547 = vpop.f32.mrb[0].mxu0
      %1548 = vmatprep.mubr.f32.mxu0 %v1149
      %1549 = vmatmul.mubr.f32.gmra.mrb[0].mxu0 %v1148
      %v1550 = vpop.f32.mrb[0].mxu0
      %v1551 = vadd.f32 0.0, %v1550
      %v1552 = vpop.f32.mrb[0].mxu0
      %1553 = vmatprep.mubr.f32.mxu0 %v1158
      %1554 = vmatmul.mubr.f32.gmra.mrb[0].mxu0 %v1157
      %v1555 = vpop.f32.mrb[0].mxu0
      %v1556 = vadd.f32 0.0, %v1555
      %v1557 = vpop.f32.mrb[0].mxu0
      %1558 = vmatprep.mubr.f32.mxu0 %v1167
      %1559 = vmatmul.mubr.f32.gmra.mrb[0].mxu0 %v1166
      %v1560 = vpop.f32.mrb[0].mxu0
      %v1561 = vadd.f32 0.0, %v1560
      %v1562 = vpop.f32.mrb[0].mxu0
      %1563 = vmatprep.mubr.f32.mxu0 %v1176
      %1564 = vmatmul.mubr.f32.gmra.mrb[0].mxu0 %v1175
      %v1565 = vpop.f32.mrb[0].mxu0
      %v1566 = vadd.f32 0.0, %v1565
      %v1567 = vpop.f32.mrb[0].mxu0
      %1568 = vmatprep.mubr.f32.mxu0 %v1185
      %1569 = vmatmul.mubr.f32.gmra.mrb[0].mxu0 %v1184
      %v1570 = vpop.f32.mrb[0].mxu0
      %v1571 = vadd.f32 0.0, %v1570
      %v1572 = vpop.f32.mrb[0].mxu0
      %1573 = vmatprep.mubr.f32.mxu0 %v1194
      %1574 = vmatmul.mubr.f32.gmra.mrb[0].mxu0 %v1193
      %v1575 = vpop.f32.mrb[0].mxu0
      %v1576 = vadd.f32 0.0, %v1575
      %v1577 = vpop.f32.mrb[0].mxu0
      %1578 = vmatprep.mubr.f32.mxu0 %v1203
      %1579 = vmatmul.mubr.f32.gmra.mrb[0].mxu0 %v1202
      %v1580 = vpop.f32.mrb[0].mxu0
      %v1581 = vadd.f32 0.0, %v1580
      %v1582 = vpop.f32.mrb[0].mxu0
      %1583 = vmatprep.mubr.f32.mxu0 %v1212
      %1584 = vmatmul.mubr.f32.gmra.mrb[0].mxu0 %v1211
      %v1585 = vpop.f32.mrb[0].mxu0
      %v1586 = vadd.f32 0.0, %v1585
      %v1587 = vpop.f32.mrb[0].mxu0
      %1588 = vdwg.mxu0
      %1589 = vmatprep.subr.mxu0 0.0
      %1590 = vmatpush1.msra.mxu0 %v1252
      %1591 = vmatprep.subr.mxu0 0.0
      %1592 = vmatpush1.msra.mxu0 %v1253
      %1593 = vmatprep.subr.mxu0 0.0
      %1594 = vmatpush1.msra.mxu0 %v1254
      %1595 = vmatprep.subr.mxu0 0.0
      %1596 = vmatpush1.msra.mxu0 %v1255
      %1597 = vmatprep.subr.mxu0 0.0
      %1598 = vmatpush1.msra.mxu0 %v1256
      %1599 = vmatprep.subr.mxu0 0.0
      %1600 = vmatpush1.msra.mxu0 %v1257
      %1601 = vmatprep.subr.mxu0 0.0
      %1602 = vmatpush1.msra.mxu0 %v1258
      %1603 = vmatprep.subr.mxu0 0.0
      %1604 = vmatpush1.msra.mxu0 %v1259
      %1605 = vmatprep.subr.mxu0 0.0
      %1606 = vmatpush1.msra.mxu0 %v1260
      %1607 = vmatprep.subr.mxu0 0.0
      %1608 = vmatpush1.msra.mxu0 %v1261
      %1609 = vmatprep.subr.mxu0 0.0
      %1610 = vmatpush1.msra.mxu0 %v1262
      %1611 = vmatprep.subr.mxu0 0.0
      %1612 = vmatpush1.msra.mxu0 %v1263
      %1613 = vmatprep.subr.mxu0 0.0
      %1614 = vmatpush1.msra.mxu0 %v1264
      %1615 = vmatprep.subr.mxu0 0.0
      %1616 = vmatpush1.msra.mxu0 %v1265
      %1617 = vmatprep.subr.mxu0 0.0
      %1618 = vmatpush1.msra.mxu0 %v1266
      %1619 = vmatprep.subr.mxu0 0.0
      %1620 = vmatpush1.msra.mxu0 %v1267
      %1621 = vmatprep.subr.mxu0 0.0
      %1622 = vmatpush1.msra.mxu0 %v1268
      %1623 = vmatprep.subr.mxu0 0.0
      %1624 = vmatpush1.msra.mxu0 %v1269
      %1625 = vmatprep.subr.mxu0 0.0
      %1626 = vmatpush1.msra.mxu0 %v1270
      %1627 = vmatprep.subr.mxu0 0.0
      %1628 = vmatpush1.msra.mxu0 %v1271
      %1629 = vmatprep.subr.mxu0 0.0
      %1630 = vmatpush1.msra.mxu0 %v1272
      %1631 = vmatprep.subr.mxu0 0.0
      %1632 = vmatpush1.msra.mxu0 %v1273
      %1633 = vmatprep.subr.mxu0 0.0
      %1634 = vmatpush1.msra.mxu0 %v1274
      %1635 = vmatprep.subr.mxu0 0.0
      %1636 = vmatpush1.msra.mxu0 %v1275
      %1637 = vmatprep.subr.mxu0 0.0
      %1638 = vmatpush1.msra.mxu0 %v1276
      %1639 = vmatprep.subr.mxu0 0.0
      %1640 = vmatpush1.msra.mxu0 %v1277
      %1641 = vmatprep.subr.mxu0 0.0
      %1642 = vmatpush1.msra.mxu0 %v1278
      %1643 = vmatprep.subr.mxu0 0.0
      %1644 = vmatpush1.msra.mxu0 %v1279
      %1645 = vmatprep.subr.mxu0 0.0
      %1646 = vmatpush1.msra.mxu0 %v1280
      %1647 = vmatprep.subr.mxu0 0.0
      %1648 = vmatpush1.msra.mxu0 %v1281
      %1649 = vmatprep.subr.mxu0 0.0
      %1650 = vmatpush1.msra.mxu0 %v1282
      %1651 = vmatprep.subr.mxu0 0.0
      %1652 = vmatpush1.msra.mxu0 %v1283
      %1653 = vmatprep.mubr.f32.mxu0 %v935
      %1654 = vmatmul.mubr.f32.gmra.mrb[0].mxu0 %v934
      %v1655 = vpop.f32.mrb[0].mxu0
      %v1656 = vadd.f32 %v1431, %v1655
      %v1657 = vpop.f32.mrb[0].mxu0
      %1658 = vmatprep.mubr.f32.mxu0 %v944
      %1659 = vmatmul.mubr.f32.gmra.mrb[0].mxu0 %v943
      %v1660 = vpop.f32.mrb[0].mxu0
      %v1661 = vadd.f32 %v1436, %v1660
      %v1662 = vpop.f32.mrb[0].mxu0
      %1663 = vmatprep.mubr.f32.mxu0 %v953
      %1664 = vmatmul.mubr.f32.gmra.mrb[0].mxu0 %v952
      %v1665 = vpop.f32.mrb[0].mxu0
      %v1666 = vadd.f32 %v1441, %v1665
      %v1667 = vpop.f32.mrb[0].mxu0
      %1668 = vmatprep.mubr.f32.mxu0 %v962
      %1669 = vmatmul.mubr.f32.gmra.mrb[0].mxu0 %v961
      %v1670 = vpop.f32.mrb[0].mxu0
      %v1671 = vadd.f32 %v1446, %v1670
      %v1672 = vpop.f32.mrb[0].mxu0
      %1673 = vmatprep.mubr.f32.mxu0 %v971
      %1674 = vmatmul.mubr.f32.gmra.mrb[0].mxu0 %v970
      %v1675 = vpop.f32.mrb[0].mxu0
      %v1676 = vadd.f32 %v1451, %v1675
      %v1677 = vpop.f32.mrb[0].mxu0
      %1678 = vmatprep.mubr.f32.mxu0 %v980
      %1679 = vmatmul.mubr.f32.gmra.mrb[0].mxu0 %v979
      %v1680 = vpop.f32.mrb[0].mxu0
      %v1681 = vadd.f32 %v1456, %v1680
      %v1682 = vpop.f32.mrb[0].mxu0
      %1683 = vmatprep.mubr.f32.mxu0 %v989
      %1684 = vmatmul.mubr.f32.gmra.mrb[0].mxu0 %v988
      %v1685 = vpop.f32.mrb[0].mxu0
      %v1686 = vadd.f32 %v1461, %v1685
      %v1687 = vpop.f32.mrb[0].mxu0
      %1688 = vmatprep.mubr.f32.mxu0 %v998
      %1689 = vmatmul.mubr.f32.gmra.mrb[0].mxu0 %v997
      %v1690 = vpop.f32.mrb[0].mxu0
      %v1691 = vadd.f32 %v1466, %v1690
      %v1692 = vpop.f32.mrb[0].mxu0
      %1693 = vmatprep.mubr.f32.mxu0 %v1007
      %1694 = vmatmul.mubr.f32.gmra.mrb[0].mxu0 %v1006
      %v1695 = vpop.f32.mrb[0].mxu0
      %v1696 = vadd.f32 %v1471, %v1695
      %v1697 = vpop.f32.mrb[0].mxu0
      %1698 = vmatprep.mubr.f32.mxu0 %v1016
      %1699 = vmatmul.mubr.f32.gmra.mrb[0].mxu0 %v1015
      %v1700 = vpop.f32.mrb[0].mxu0
      %v1701 = vadd.f32 %v1476, %v1700
      %v1702 = vpop.f32.mrb[0].mxu0
      %1703 = vmatprep.mubr.f32.mxu0 %v1025
      %1704 = vmatmul.mubr.f32.gmra.mrb[0].mxu0 %v1024
      %v1705 = vpop.f32.mrb[0].mxu0
      %v1706 = vadd.f32 %v1481, %v1705
      %v1707 = vpop.f32.mrb[0].mxu0
      %1708 = vmatprep.mubr.f32.mxu0 %v1034
      %1709 = vmatmul.mubr.f32.gmra.mrb[0].mxu0 %v1033
      %v1710 = vpop.f32.mrb[0].mxu0
      %v1711 = vadd.f32 %v1486, %v1710
      %v1712 = vpop.f32.mrb[0].mxu0
      %1713 = vmatprep.mubr.f32.mxu0 %v1043
      %1714 = vmatmul.mubr.f32.gmra.mrb[0].mxu0 %v1042
      %v1715 = vpop.f32.mrb[0].mxu0
      %v1716 = vadd.f32 %v1491, %v1715
      %v1717 = vpop.f32.mrb[0].mxu0
      %1718 = vmatprep.mubr.f32.mxu0 %v1052
      %1719 = vmatmul.mubr.f32.gmra.mrb[0].mxu0 %v1051
      %v1720 = vpop.f32.mrb[0].mxu0
      %v1721 = vadd.f32 %v1496, %v1720
      %v1722 = vpop.f32.mrb[0].mxu0
      %1723 = vmatprep.mubr.f32.mxu0 %v1061
      %1724 = vmatmul.mubr.f32.gmra.mrb[0].mxu0 %v1060
      %v1725 = vpop.f32.mrb[0].mxu0
      %v1726 = vadd.f32 %v1501, %v1725
      %v1727 = vpop.f32.mrb[0].mxu0
      %1728 = vmatprep.mubr.f32.mxu0 %v1070
      %1729 = vmatmul.mubr.f32.gmra.mrb[0].mxu0 %v1069
      %v1730 = vpop.f32.mrb[0].mxu0
      %v1731 = vadd.f32 %v1506, %v1730
      %v1732 = vpop.f32.mrb[0].mxu0
      %1733 = vmatprep.mubr.f32.mxu0 %v1079
      %1734 = vmatmul.mubr.f32.gmra.mrb[0].mxu0 %v1078
      %v1735 = vpop.f32.mrb[0].mxu0
      %v1736 = vadd.f32 %v1511, %v1735
      %v1737 = vpop.f32.mrb[0].mxu0
      %1738 = vmatprep.mubr.f32.mxu0 %v1088
      %1739 = vmatmul.mubr.f32.gmra.mrb[0].mxu0 %v1087
      %v1740 = vpop.f32.mrb[0].mxu0
      %v1741 = vadd.f32 %v1516, %v1740
      %v1742 = vpop.f32.mrb[0].mxu0
      %1743 = vmatprep.mubr.f32.mxu0 %v1097
      %1744 = vmatmul.mubr.f32.gmra.mrb[0].mxu0 %v1096
      %v1745 = vpop.f32.mrb[0].mxu0
      %v1746 = vadd.f32 %v1521, %v1745
      %v1747 = vpop.f32.mrb[0].mxu0
      %1748 = vmatprep.mubr.f32.mxu0 %v1106
      %1749 = vmatmul.mubr.f32.gmra.mrb[0].mxu0 %v1105
      %v1750 = vpop.f32.mrb[0].mxu0
      %v1751 = vadd.f32 %v1526, %v1750
      %v1752 = vpop.f32.mrb[0].mxu0
      %1753 = vmatprep.mubr.f32.mxu0 %v1115
      %1754 = vmatmul.mubr.f32.gmra.mrb[0].mxu0 %v1114
      %v1755 = vpop.f32.mrb[0].mxu0
      %v1756 = vadd.f32 %v1531, %v1755
      %v1757 = vpop.f32.mrb[0].mxu0
      %1758 = vmatprep.mubr.f32.mxu0 %v1124
      %1759 = vmatmul.mubr.f32.gmra.mrb[0].mxu0 %v1123
      %v1760 = vpop.f32.mrb[0].mxu0
      %v1761 = vadd.f32 %v1536, %v1760
      %v1762 = vpop.f32.mrb[0].mxu0
      %1763 = vmatprep.mubr.f32.mxu0 %v1133
      %1764 = vmatmul.mubr.f32.gmra.mrb[0].mxu0 %v1132
      %v1765 = vpop.f32.mrb[0].mxu0
      %v1766 = vadd.f32 %v1541, %v1765
      %v1767 = vpop.f32.mrb[0].mxu0
      %1768 = vmatprep.mubr.f32.mxu0 %v1142
      %1769 = vmatmul.mubr.f32.gmra.mrb[0].mxu0 %v1141
      %v1770 = vpop.f32.mrb[0].mxu0
      %v1771 = vadd.f32 %v1546, %v1770
      %v1772 = vpop.f32.mrb[0].mxu0
      %1773 = vmatprep.mubr.f32.mxu0 %v1151
      %1774 = vmatmul.mubr.f32.gmra.mrb[0].mxu0 %v1150
      %v1775 = vpop.f32.mrb[0].mxu0
      %v1776 = vadd.f32 %v1551, %v1775
      %v1777 = vpop.f32.mrb[0].mxu0
      %1778 = vmatprep.mubr.f32.mxu0 %v1160
      %1779 = vmatmul.mubr.f32.gmra.mrb[0].mxu0 %v1159
      %v1780 = vpop.f32.mrb[0].mxu0
      %v1781 = vadd.f32 %v1556, %v1780
      %v1782 = vpop.f32.mrb[0].mxu0
      %1783 = vmatprep.mubr.f32.mxu0 %v1169
      %1784 = vmatmul.mubr.f32.gmra.mrb[0].mxu0 %v1168
      %v1785 = vpop.f32.mrb[0].mxu0
      %v1786 = vadd.f32 %v1561, %v1785
      %v1787 = vpop.f32.mrb[0].mxu0
      %1788 = vmatprep.mubr.f32.mxu0 %v1178
      %1789 = vmatmul.mubr.f32.gmra.mrb[0].mxu0 %v1177
      %v1790 = vpop.f32.mrb[0].mxu0
      %v1791 = vadd.f32 %v1566, %v1790
      %v1792 = vpop.f32.mrb[0].mxu0
      %1793 = vmatprep.mubr.f32.mxu0 %v1187
      %1794 = vmatmul.mubr.f32.gmra.mrb[0].mxu0 %v1186
      %v1795 = vpop.f32.mrb[0].mxu0
      %v1796 = vadd.f32 %v1571, %v1795
      %v1797 = vpop.f32.mrb[0].mxu0
      %1798 = vmatprep.mubr.f32.mxu0 %v1196
      %1799 = vmatmul.mubr.f32.gmra.mrb[0].mxu0 %v1195
      %v1800 = vpop.f32.mrb[0].mxu0
      %v1801 = vadd.f32 %v1576, %v1800
      %v1802 = vpop.f32.mrb[0].mxu0
      %1803 = vmatprep.mubr.f32.mxu0 %v1205
      %1804 = vmatmul.mubr.f32.gmra.mrb[0].mxu0 %v1204
      %v1805 = vpop.f32.mrb[0].mxu0
      %v1806 = vadd.f32 %v1581, %v1805
      %v1807 = vpop.f32.mrb[0].mxu0
      %1808 = vmatprep.mubr.f32.mxu0 %v1214
      %1809 = vmatmul.mubr.f32.gmra.mrb[0].mxu0 %v1213
      %v1810 = vpop.f32.mrb[0].mxu0
      %v1811 = vadd.f32 %v1586, %v1810
      %v1812 = vpop.f32.mrb[0].mxu0
      %1813 = vdwg.mxu0
      %1814 = vmatprep.subr.mxu0 0.0
      %1815 = vmatpush1.msra.mxu0 %v1284
      %1816 = vmatprep.subr.mxu0 0.0
      %1817 = vmatpush1.msra.mxu0 %v1285
      %1818 = vmatprep.subr.mxu0 0.0
      %1819 = vmatpush1.msra.mxu0 %v1286
      %1820 = vmatprep.subr.mxu0 0.0
      %1821 = vmatpush1.msra.mxu0 %v1287
      %1822 = vmatprep.subr.mxu0 0.0
      %1823 = vmatpush1.msra.mxu0 %v1288
      %1824 = vmatprep.subr.mxu0 0.0
      %1825 = vmatpush1.msra.mxu0 %v1289
      %1826 = vmatprep.subr.mxu0 0.0
      %1827 = vmatpush1.msra.mxu0 %v1290
      %1828 = vmatprep.subr.mxu0 0.0
      %1829 = vmatpush1.msra.mxu0 %v1291
      %1830 = vmatprep.subr.mxu0 0.0
      %1831 = vmatpush1.msra.mxu0 %v1292
      %1832 = vmatprep.subr.mxu0 0.0
      %1833 = vmatpush1.msra.mxu0 %v1293
      %1834 = vmatprep.subr.mxu0 0.0
      %1835 = vmatpush1.msra.mxu0 %v1294
      %1836 = vmatprep.subr.mxu0 0.0
      %1837 = vmatpush1.msra.mxu0 %v1295
      %1838 = vmatprep.subr.mxu0 0.0
      %1839 = vmatpush1.msra.mxu0 %v1296
      %1840 = vmatprep.subr.mxu0 0.0
      %1841 = vmatpush1.msra.mxu0 %v1297
      %1842 = vmatprep.subr.mxu0 0.0
      %1843 = vmatpush1.msra.mxu0 %v1298
      %1844 = vmatprep.subr.mxu0 0.0
      %1845 = vmatpush1.msra.mxu0 %v1299
      %1846 = vmatprep.subr.mxu0 0.0
      %1847 = vmatpush1.msra.mxu0 %v1300
      %1848 = vmatprep.subr.mxu0 0.0
      %1849 = vmatpush1.msra.mxu0 %v1301
      %1850 = vmatprep.subr.mxu0 0.0
      %1851 = vmatpush1.msra.mxu0 %v1302
      %1852 = vmatprep.subr.mxu0 0.0
      %1853 = vmatpush1.msra.mxu0 %v1303
      %1854 = vmatprep.subr.mxu0 0.0
      %1855 = vmatpush1.msra.mxu0 %v1304
      %1856 = vmatprep.subr.mxu0 0.0
      %1857 = vmatpush1.msra.mxu0 %v1305
      %1858 = vmatprep.subr.mxu0 0.0
      %1859 = vmatpush1.msra.mxu0 %v1306
      %1860 = vmatprep.subr.mxu0 0.0
      %1861 = vmatpush1.msra.mxu0 %v1307
      %1862 = vmatprep.subr.mxu0 0.0
      %1863 = vmatpush1.msra.mxu0 %v1308
      %1864 = vmatprep.subr.mxu0 0.0
      %1865 = vmatpush1.msra.mxu0 %v1309
      %1866 = vmatprep.subr.mxu0 0.0
      %1867 = vmatpush1.msra.mxu0 %v1310
      %1868 = vmatprep.subr.mxu0 0.0
      %1869 = vmatpush1.msra.mxu0 %v1311
      %1870 = vmatprep.subr.mxu0 0.0
      %1871 = vmatpush1.msra.mxu0 %v1312
      %1872 = vmatprep.subr.mxu0 0.0
      %1873 = vmatpush1.msra.mxu0 %v1313
      %1874 = vmatprep.subr.mxu0 0.0
      %1875 = vmatpush1.msra.mxu0 %v1314
      %1876 = vmatprep.subr.mxu0 0.0
      %1877 = vmatpush1.msra.mxu0 %v1315
      %1878 = vmatprep.mubr.f32.mxu0 %v937
      %1879 = vmatmul.mubr.f32.gmra.mrb[0].mxu0 %v936
      %v1880 = vpop.f32.mrb[0].mxu0
      %v1881 = vadd.f32 %v1656, %v1880
      %v1882 = vpop.f32.mrb[0].mxu0
      %1883 = vmatprep.mubr.f32.mxu0 %v946
      %1884 = vmatmul.mubr.f32.gmra.mrb[0].mxu0 %v945
      %v1885 = vpop.f32.mrb[0].mxu0
      %v1886 = vadd.f32 %v1661, %v1885
      %v1887 = vpop.f32.mrb[0].mxu0
      %1888 = vmatprep.mubr.f32.mxu0 %v955
      %1889 = vmatmul.mubr.f32.gmra.mrb[0].mxu0 %v954
      %v1890 = vpop.f32.mrb[0].mxu0
      %v1891 = vadd.f32 %v1666, %v1890
      %v1892 = vpop.f32.mrb[0].mxu0
      %1893 = vmatprep.mubr.f32.mxu0 %v964
      %1894 = vmatmul.mubr.f32.gmra.mrb[0].mxu0 %v963
      %v1895 = vpop.f32.mrb[0].mxu0
      %v1896 = vadd.f32 %v1671, %v1895
      %v1897 = vpop.f32.mrb[0].mxu0
      %1898 = vmatprep.mubr.f32.mxu0 %v973
      %1899 = vmatmul.mubr.f32.gmra.mrb[0].mxu0 %v972
      %v1900 = vpop.f32.mrb[0].mxu0
      %v1901 = vadd.f32 %v1676, %v1900
      %v1902 = vpop.f32.mrb[0].mxu0
      %1903 = vmatprep.mubr.f32.mxu0 %v982
      %1904 = vmatmul.mubr.f32.gmra.mrb[0].mxu0 %v981
      %v1905 = vpop.f32.mrb[0].mxu0
      %v1906 = vadd.f32 %v1681, %v1905
      %v1907 = vpop.f32.mrb[0].mxu0
      %1908 = vmatprep.mubr.f32.mxu0 %v991
      %1909 = vmatmul.mubr.f32.gmra.mrb[0].mxu0 %v990
      %v1910 = vpop.f32.mrb[0].mxu0
      %v1911 = vadd.f32 %v1686, %v1910
      %v1912 = vpop.f32.mrb[0].mxu0
      %1913 = vmatprep.mubr.f32.mxu0 %v1000
      %1914 = vmatmul.mubr.f32.gmra.mrb[0].mxu0 %v999
      %v1915 = vpop.f32.mrb[0].mxu0
      %v1916 = vadd.f32 %v1691, %v1915
      %v1917 = vpop.f32.mrb[0].mxu0
      %1918 = vmatprep.mubr.f32.mxu0 %v1009
      %1919 = vmatmul.mubr.f32.gmra.mrb[0].mxu0 %v1008
      %v1920 = vpop.f32.mrb[0].mxu0
      %v1921 = vadd.f32 %v1696, %v1920
      %v1922 = vpop.f32.mrb[0].mxu0
      %1923 = vmatprep.mubr.f32.mxu0 %v1018
      %1924 = vmatmul.mubr.f32.gmra.mrb[0].mxu0 %v1017
      %v1925 = vpop.f32.mrb[0].mxu0
      %v1926 = vadd.f32 %v1701, %v1925
      %v1927 = vpop.f32.mrb[0].mxu0
      %1928 = vmatprep.mubr.f32.mxu0 %v1027
      %1929 = vmatmul.mubr.f32.gmra.mrb[0].mxu0 %v1026
      %v1930 = vpop.f32.mrb[0].mxu0
      %v1931 = vadd.f32 %v1706, %v1930
      %v1932 = vpop.f32.mrb[0].mxu0
      %1933 = vmatprep.mubr.f32.mxu0 %v1036
      %1934 = vmatmul.mubr.f32.gmra.mrb[0].mxu0 %v1035
      %v1935 = vpop.f32.mrb[0].mxu0
      %v1936 = vadd.f32 %v1711, %v1935
      %v1937 = vpop.f32.mrb[0].mxu0
      %1938 = vmatprep.mubr.f32.mxu0 %v1045
      %1939 = vmatmul.mubr.f32.gmra.mrb[0].mxu0 %v1044
      %v1940 = vpop.f32.mrb[0].mxu0
      %v1941 = vadd.f32 %v1716, %v1940
      %v1942 = vpop.f32.mrb[0].mxu0
      %1943 = vmatprep.mubr.f32.mxu0 %v1054
      %1944 = vmatmul.mubr.f32.gmra.mrb[0].mxu0 %v1053
      %v1945 = vpop.f32.mrb[0].mxu0
      %v1946 = vadd.f32 %v1721, %v1945
      %v1947 = vpop.f32.mrb[0].mxu0
      %1948 = vmatprep.mubr.f32.mxu0 %v1063
      %1949 = vmatmul.mubr.f32.gmra.mrb[0].mxu0 %v1062
      %v1950 = vpop.f32.mrb[0].mxu0
      %v1951 = vadd.f32 %v1726, %v1950
      %v1952 = vpop.f32.mrb[0].mxu0
      %1953 = vmatprep.mubr.f32.mxu0 %v1072
      %1954 = vmatmul.mubr.f32.gmra.mrb[0].mxu0 %v1071
      %v1955 = vpop.f32.mrb[0].mxu0
      %v1956 = vadd.f32 %v1731, %v1955
      %v1957 = vpop.f32.mrb[0].mxu0
      %1958 = vmatprep.mubr.f32.mxu0 %v1081
      %1959 = vmatmul.mubr.f32.gmra.mrb[0].mxu0 %v1080
      %v1960 = vpop.f32.mrb[0].mxu0
      %v1961 = vadd.f32 %v1736, %v1960
      %v1962 = vpop.f32.mrb[0].mxu0
      %1963 = vmatprep.mubr.f32.mxu0 %v1090
      %1964 = vmatmul.mubr.f32.gmra.mrb[0].mxu0 %v1089
      %v1965 = vpop.f32.mrb[0].mxu0
      %v1966 = vadd.f32 %v1741, %v1965
      %v1967 = vpop.f32.mrb[0].mxu0
      %1968 = vmatprep.mubr.f32.mxu0 %v1099
      %1969 = vmatmul.mubr.f32.gmra.mrb[0].mxu0 %v1098
      %v1970 = vpop.f32.mrb[0].mxu0
      %v1971 = vadd.f32 %v1746, %v1970
      %v1972 = vpop.f32.mrb[0].mxu0
      %1973 = vmatprep.mubr.f32.mxu0 %v1108
      %1974 = vmatmul.mubr.f32.gmra.mrb[0].mxu0 %v1107
      %v1975 = vpop.f32.mrb[0].mxu0
      %v1976 = vadd.f32 %v1751, %v1975
      %v1977 = vpop.f32.mrb[0].mxu0
      %1978 = vmatprep.mubr.f32.mxu0 %v1117
      %1979 = vmatmul.mubr.f32.gmra.mrb[0].mxu0 %v1116
      %v1980 = vpop.f32.mrb[0].mxu0
      %v1981 = vadd.f32 %v1756, %v1980
      %v1982 = vpop.f32.mrb[0].mxu0
      %1983 = vmatprep.mubr.f32.mxu0 %v1126
      %1984 = vmatmul.mubr.f32.gmra.mrb[0].mxu0 %v1125
      %v1985 = vpop.f32.mrb[0].mxu0
      %v1986 = vadd.f32 %v1761, %v1985
      %v1987 = vpop.f32.mrb[0].mxu0
      %1988 = vmatprep.mubr.f32.mxu0 %v1135
      %1989 = vmatmul.mubr.f32.gmra.mrb[0].mxu0 %v1134
      %v1990 = vpop.f32.mrb[0].mxu0
      %v1991 = vadd.f32 %v1766, %v1990
      %v1992 = vpop.f32.mrb[0].mxu0
      %1993 = vmatprep.mubr.f32.mxu0 %v1144
      %1994 = vmatmul.mubr.f32.gmra.mrb[0].mxu0 %v1143
      %v1995 = vpop.f32.mrb[0].mxu0
      %v1996 = vadd.f32 %v1771, %v1995
      %v1997 = vpop.f32.mrb[0].mxu0
      %1998 = vmatprep.mubr.f32.mxu0 %v1153
      %1999 = vmatmul.mubr.f32.gmra.mrb[0].mxu0 %v1152
      %v2000 = vpop.f32.mrb[0].mxu0
      %v2001 = vadd.f32 %v1776, %v2000
      %v2002 = vpop.f32.mrb[0].mxu0
      %2003 = vmatprep.mubr.f32.mxu0 %v1162
      %2004 = vmatmul.mubr.f32.gmra.mrb[0].mxu0 %v1161
      %v2005 = vpop.f32.mrb[0].mxu0
      %v2006 = vadd.f32 %v1781, %v2005
      %v2007 = vpop.f32.mrb[0].mxu0
      %2008 = vmatprep.mubr.f32.mxu0 %v1171
      %2009 = vmatmul.mubr.f32.gmra.mrb[0].mxu0 %v1170
      %v2010 = vpop.f32.mrb[0].mxu0
      %v2011 = vadd.f32 %v1786, %v2010
      %v2012 = vpop.f32.mrb[0].mxu0
      %2013 = vmatprep.mubr.f32.mxu0 %v1180
      %2014 = vmatmul.mubr.f32.gmra.mrb[0].mxu0 %v1179
      %v2015 = vpop.f32.mrb[0].mxu0
      %v2016 = vadd.f32 %v1791, %v2015
      %v2017 = vpop.f32.mrb[0].mxu0
      %2018 = vmatprep.mubr.f32.mxu0 %v1189
      %2019 = vmatmul.mubr.f32.gmra.mrb[0].mxu0 %v1188
      %v2020 = vpop.f32.mrb[0].mxu0
      %v2021 = vadd.f32 %v1796, %v2020
      %v2022 = vpop.f32.mrb[0].mxu0
      %2023 = vmatprep.mubr.f32.mxu0 %v1198
      %2024 = vmatmul.mubr.f32.gmra.mrb[0].mxu0 %v1197
      %v2025 = vpop.f32.mrb[0].mxu0
      %v2026 = vadd.f32 %v1801, %v2025
      %v2027 = vpop.f32.mrb[0].mxu0
      %2028 = vmatprep.mubr.f32.mxu0 %v1207
      %2029 = vmatmul.mubr.f32.gmra.mrb[0].mxu0 %v1206
      %v2030 = vpop.f32.mrb[0].mxu0
      %v2031 = vadd.f32 %v1806, %v2030
      %v2032 = vpop.f32.mrb[0].mxu0
      %2033 = vmatprep.mubr.f32.mxu0 %v1216
      %2034 = vmatmul.mubr.f32.gmra.mrb[0].mxu0 %v1215
      %v2035 = vpop.f32.mrb[0].mxu0
      %v2036 = vadd.f32 %v1811, %v2035
      %v2037 = vpop.f32.mrb[0].mxu0
      %2038 = vdwg.mxu0
      %2039 = vmatprep.subr.mxu0 0.0
      %2040 = vmatpush1.msra.mxu0 %v1316
      %2041 = vmatprep.subr.mxu0 0.0
      %2042 = vmatpush1.msra.mxu0 %v1317
      %2043 = vmatprep.subr.mxu0 0.0
      %2044 = vmatpush1.msra.mxu0 %v1318
      %2045 = vmatprep.subr.mxu0 0.0
      %2046 = vmatpush1.msra.mxu0 %v1319
      %2047 = vmatprep.subr.mxu0 0.0
      %2048 = vmatpush1.msra.mxu0 %v1320
      %2049 = vmatprep.subr.mxu0 0.0
      %2050 = vmatpush1.msra.mxu0 %v1321
      %2051 = vmatprep.subr.mxu0 0.0
      %2052 = vmatpush1.msra.mxu0 %v1322
      %2053 = vmatprep.subr.mxu0 0.0
      %2054 = vmatpush1.msra.mxu0 %v1323
      %2055 = vmatprep.subr.mxu0 0.0
      %2056 = vmatpush1.msra.mxu0 %v1324
      %2057 = vmatprep.subr.mxu0 0.0
      %2058 = vmatpush1.msra.mxu0 %v1325
      %2059 = vmatprep.subr.mxu0 0.0
      %2060 = vmatpush1.msra.mxu0 %v1326
      %2061 = vmatprep.subr.mxu0 0.0
      %2062 = vmatpush1.msra.mxu0 %v1327
      %2063 = vmatprep.subr.mxu0 0.0
      %2064 = vmatpush1.msra.mxu0 %v1328
      %2065 = vmatprep.subr.mxu0 0.0
      %2066 = vmatpush1.msra.mxu0 %v1329
      %2067 = vmatprep.subr.mxu0 0.0
      %2068 = vmatpush1.msra.mxu0 %v1330
      %2069 = vmatprep.subr.mxu0 0.0
      %2070 = vmatpush1.msra.mxu0 %v1331
      %2071 = vmatprep.subr.mxu0 0.0
      %2072 = vmatpush1.msra.mxu0 %v1332
      %2073 = vmatprep.subr.mxu0 0.0
      %2074 = vmatpush1.msra.mxu0 %v1333
      %2075 = vmatprep.subr.mxu0 0.0
      %2076 = vmatpush1.msra.mxu0 %v1334
      %2077 = vmatprep.subr.mxu0 0.0
      %2078 = vmatpush1.msra.mxu0 %v1335
      %2079 = vmatprep.subr.mxu0 0.0
      %2080 = vmatpush1.msra.mxu0 %v1336
      %2081 = vmatprep.subr.mxu0 0.0
      %2082 = vmatpush1.msra.mxu0 %v1337
      %2083 = vmatprep.subr.mxu0 0.0
      %2084 = vmatpush1.msra.mxu0 %v1338
      %2085 = vmatprep.subr.mxu0 0.0
      %2086 = vmatpush1.msra.mxu0 %v1339
      %2087 = vmatprep.subr.mxu0 0.0
      %2088 = vmatpush1.msra.mxu0 %v1340
      %2089 = vmatprep.subr.mxu0 0.0
      %2090 = vmatpush1.msra.mxu0 %v1341
      %2091 = vmatprep.subr.mxu0 0.0
      %2092 = vmatpush1.msra.mxu0 %v1342
      %2093 = vmatprep.subr.mxu0 0.0
      %2094 = vmatpush1.msra.mxu0 %v1343
      %2095 = vmatprep.subr.mxu0 0.0
      %2096 = vmatpush1.msra.mxu0 %v1344
      %2097 = vmatprep.subr.mxu0 0.0
      %2098 = vmatpush1.msra.mxu0 %v1345
      %2099 = vmatprep.subr.mxu0 0.0
      %2100 = vmatpush1.msra.mxu0 %v1346
      %2101 = vmatprep.subr.mxu0 0.0
      %2102 = vmatpush1.msra.mxu0 %v1347
      %2103 = vmatprep.mubr.f32.mxu0 %v939
      %2104 = vmatmul.mubr.f32.gmra.mrb[0].mxu0 %v938
      %v2105 = vpop.f32.mrb[0].mxu0
      %v2106 = vadd.f32 %v1881, %v2105
      %v2107 = vpop.f32.mrb[0].mxu0
      %2108 = vmatprep.mubr.f32.mxu0 %v948
      %2109 = vmatmul.mubr.f32.gmra.mrb[0].mxu0 %v947
      %v2110 = vpop.f32.mrb[0].mxu0
      %v2111 = vadd.f32 %v1886, %v2110
      %v2112 = vpop.f32.mrb[0].mxu0
      %2113 = vmatprep.mubr.f32.mxu0 %v957
      %2114 = vmatmul.mubr.f32.gmra.mrb[0].mxu0 %v956
      %v2115 = vpop.f32.mrb[0].mxu0
      %v2116 = vadd.f32 %v1891, %v2115
      %v2117 = vpop.f32.mrb[0].mxu0
      %2118 = vmatprep.mubr.f32.mxu0 %v966
      %2119 = vmatmul.mubr.f32.gmra.mrb[0].mxu0 %v965
      %v2120 = vpop.f32.mrb[0].mxu0
      %v2121 = vadd.f32 %v1896, %v2120
      %v2122 = vpop.f32.mrb[0].mxu0
      %2123 = vmatprep.mubr.f32.mxu0 %v975
      %2124 = vmatmul.mubr.f32.gmra.mrb[0].mxu0 %v974
      %v2125 = vpop.f32.mrb[0].mxu0
      %v2126 = vadd.f32 %v1901, %v2125
      %v2127 = vpop.f32.mrb[0].mxu0
      %2128 = vmatprep.mubr.f32.mxu0 %v984
      %2129 = vmatmul.mubr.f32.gmra.mrb[0].mxu0 %v983
      %v2130 = vpop.f32.mrb[0].mxu0
      %v2131 = vadd.f32 %v1906, %v2130
      %v2132 = vpop.f32.mrb[0].mxu0
      %2133 = vmatprep.mubr.f32.mxu0 %v993
      %2134 = vmatmul.mubr.f32.gmra.mrb[0].mxu0 %v992
      %v2135 = vpop.f32.mrb[0].mxu0
      %v2136 = vadd.f32 %v1911, %v2135
      %v2137 = vpop.f32.mrb[0].mxu0
      %2138 = vmatprep.mubr.f32.mxu0 %v1002
      %2139 = vmatmul.mubr.f32.gmra.mrb[0].mxu0 %v1001
      %v2140 = vpop.f32.mrb[0].mxu0
      %v2141 = vadd.f32 %v1916, %v2140
      %v2142 = vpop.f32.mrb[0].mxu0
      %2143 = vmatprep.mubr.f32.mxu0 %v1011
      %2144 = vmatmul.mubr.f32.gmra.mrb[0].mxu0 %v1010
      %v2145 = vpop.f32.mrb[0].mxu0
      %v2146 = vadd.f32 %v1921, %v2145
      %v2147 = vpop.f32.mrb[0].mxu0
      %2148 = vmatprep.mubr.f32.mxu0 %v1020
      %2149 = vmatmul.mubr.f32.gmra.mrb[0].mxu0 %v1019
      %v2150 = vpop.f32.mrb[0].mxu0
      %v2151 = vadd.f32 %v1926, %v2150
      %v2152 = vpop.f32.mrb[0].mxu0
      %2153 = vmatprep.mubr.f32.mxu0 %v1029
      %2154 = vmatmul.mubr.f32.gmra.mrb[0].mxu0 %v1028
      %v2155 = vpop.f32.mrb[0].mxu0
      %v2156 = vadd.f32 %v1931, %v2155
      %v2157 = vpop.f32.mrb[0].mxu0
      %2158 = vmatprep.mubr.f32.mxu0 %v1038
      %2159 = vmatmul.mubr.f32.gmra.mrb[0].mxu0 %v1037
      %v2160 = vpop.f32.mrb[0].mxu0
      %v2161 = vadd.f32 %v1936, %v2160
      %v2162 = vpop.f32.mrb[0].mxu0
      %2163 = vmatprep.mubr.f32.mxu0 %v1047
      %2164 = vmatmul.mubr.f32.gmra.mrb[0].mxu0 %v1046
      %v2165 = vpop.f32.mrb[0].mxu0
      %v2166 = vadd.f32 %v1941, %v2165
      %v2167 = vpop.f32.mrb[0].mxu0
      %2168 = vmatprep.mubr.f32.mxu0 %v1056
      %2169 = vmatmul.mubr.f32.gmra.mrb[0].mxu0 %v1055
      %v2170 = vpop.f32.mrb[0].mxu0
      %v2171 = vadd.f32 %v1946, %v2170
      %v2172 = vpop.f32.mrb[0].mxu0
      %2173 = vmatprep.mubr.f32.mxu0 %v1065
      %2174 = vmatmul.mubr.f32.gmra.mrb[0].mxu0 %v1064
      %v2175 = vpop.f32.mrb[0].mxu0
      %v2176 = vadd.f32 %v1951, %v2175
      %v2177 = vpop.f32.mrb[0].mxu0
      %2178 = vmatprep.mubr.f32.mxu0 %v1074
      %2179 = vmatmul.mubr.f32.gmra.mrb[0].mxu0 %v1073
      %v2180 = vpop.f32.mrb[0].mxu0
      %v2181 = vadd.f32 %v1956, %v2180
      %v2182 = vpop.f32.mrb[0].mxu0
      %2183 = vmatprep.mubr.f32.mxu0 %v1083
      %2184 = vmatmul.mubr.f32.gmra.mrb[0].mxu0 %v1082
      %v2185 = vpop.f32.mrb[0].mxu0
      %v2186 = vadd.f32 %v1961, %v2185
      %v2187 = vpop.f32.mrb[0].mxu0
      %2188 = vmatprep.mubr.f32.mxu0 %v1092
      %2189 = vmatmul.mubr.f32.gmra.mrb[0].mxu0 %v1091
      %v2190 = vpop.f32.mrb[0].mxu0
      %v2191 = vadd.f32 %v1966, %v2190
      %v2192 = vpop.f32.mrb[0].mxu0
      %2193 = vmatprep.mubr.f32.mxu0 %v1101
      %2194 = vmatmul.mubr.f32.gmra.mrb[0].mxu0 %v1100
      %v2195 = vpop.f32.mrb[0].mxu0
      %v2196 = vadd.f32 %v1971, %v2195
      %v2197 = vpop.f32.mrb[0].mxu0
      %2198 = vmatprep.mubr.f32.mxu0 %v1110
      %2199 = vmatmul.mubr.f32.gmra.mrb[0].mxu0 %v1109
      %v2200 = vpop.f32.mrb[0].mxu0
      %v2201 = vadd.f32 %v1976, %v2200
      %v2202 = vpop.f32.mrb[0].mxu0
      %2203 = vmatprep.mubr.f32.mxu0 %v1119
      %2204 = vmatmul.mubr.f32.gmra.mrb[0].mxu0 %v1118
      %v2205 = vpop.f32.mrb[0].mxu0
      %v2206 = vadd.f32 %v1981, %v2205
      %v2207 = vpop.f32.mrb[0].mxu0
      %2208 = vmatprep.mubr.f32.mxu0 %v1128
      %2209 = vmatmul.mubr.f32.gmra.mrb[0].mxu0 %v1127
      %v2210 = vpop.f32.mrb[0].mxu0
      %v2211 = vadd.f32 %v1986, %v2210
      %v2212 = vpop.f32.mrb[0].mxu0
      %2213 = vmatprep.mubr.f32.mxu0 %v1137
      %2214 = vmatmul.mubr.f32.gmra.mrb[0].mxu0 %v1136
      %v2215 = vpop.f32.mrb[0].mxu0
      %v2216 = vadd.f32 %v1991, %v2215
      %v2217 = vpop.f32.mrb[0].mxu0
      %2218 = vmatprep.mubr.f32.mxu0 %v1146
      %2219 = vmatmul.mubr.f32.gmra.mrb[0].mxu0 %v1145
      %v2220 = vpop.f32.mrb[0].mxu0
      %v2221 = vadd.f32 %v1996, %v2220
      %v2222 = vpop.f32.mrb[0].mxu0
      %2223 = vmatprep.mubr.f32.mxu0 %v1155
      %2224 = vmatmul.mubr.f32.gmra.mrb[0].mxu0 %v1154
      %v2225 = vpop.f32.mrb[0].mxu0
      %v2226 = vadd.f32 %v2001, %v2225
      %v2227 = vpop.f32.mrb[0].mxu0
      %2228 = vmatprep.mubr.f32.mxu0 %v1164
      %2229 = vmatmul.mubr.f32.gmra.mrb[0].mxu0 %v1163
      %v2230 = vpop.f32.mrb[0].mxu0
      %v2231 = vadd.f32 %v2006, %v2230
      %v2232 = vpop.f32.mrb[0].mxu0
      %2233 = vmatprep.mubr.f32.mxu0 %v1173
      %2234 = vmatmul.mubr.f32.gmra.mrb[0].mxu0 %v1172
      %v2235 = vpop.f32.mrb[0].mxu0
      %v2236 = vadd.f32 %v2011, %v2235
      %v2237 = vpop.f32.mrb[0].mxu0
      %2238 = vmatprep.mubr.f32.mxu0 %v1182
      %2239 = vmatmul.mubr.f32.gmra.mrb[0].mxu0 %v1181
      %v2240 = vpop.f32.mrb[0].mxu0
      %v2241 = vadd.f32 %v2016, %v2240
      %v2242 = vpop.f32.mrb[0].mxu0
      %2243 = vmatprep.mubr.f32.mxu0 %v1191
      %2244 = vmatmul.mubr.f32.gmra.mrb[0].mxu0 %v1190
      %v2245 = vpop.f32.mrb[0].mxu0
      %v2246 = vadd.f32 %v2021, %v2245
      %v2247 = vpop.f32.mrb[0].mxu0
      %2248 = vmatprep.mubr.f32.mxu0 %v1200
      %2249 = vmatmul.mubr.f32.gmra.mrb[0].mxu0 %v1199
      %v2250 = vpop.f32.mrb[0].mxu0
      %v2251 = vadd.f32 %v2026, %v2250
      %v2252 = vpop.f32.mrb[0].mxu0
      %2253 = vmatprep.mubr.f32.mxu0 %v1209
      %2254 = vmatmul.mubr.f32.gmra.mrb[0].mxu0 %v1208
      %v2255 = vpop.f32.mrb[0].mxu0
      %v2256 = vadd.f32 %v2031, %v2255
      %v2257 = vpop.f32.mrb[0].mxu0
      %2258 = vmatprep.mubr.f32.mxu0 %v1218
      %2259 = vmatmul.mubr.f32.gmra.mrb[0].mxu0 %v1217
      %v2260 = vpop.f32.mrb[0].mxu0
      %v2261 = vadd.f32 %v2036, %v2260
      %v2262 = vpop.f32.mrb[0].mxu0
      %2263 = vdwg.mxu0
      %2264 = vmatprep.subr.mxu0 0.0
      %2265 = vmatpush1.msra.mxu0 %v1348
      %2266 = vmatprep.subr.mxu0 0.0
      %2267 = vmatpush1.msra.mxu0 %v1349
      %2268 = vmatprep.subr.mxu0 0.0
      %2269 = vmatpush1.msra.mxu0 %v1350
      %2270 = vmatprep.subr.mxu0 0.0
      %2271 = vmatpush1.msra.mxu0 %v1351
      %2272 = vmatprep.subr.mxu0 0.0
      %2273 = vmatpush1.msra.mxu0 %v1352
      %2274 = vmatprep.subr.mxu0 0.0
      %2275 = vmatpush1.msra.mxu0 %v1353
      %2276 = vmatprep.subr.mxu0 0.0
      %2277 = vmatpush1.msra.mxu0 %v1354
      %2278 = vmatprep.subr.mxu0 0.0
      %2279 = vmatpush1.msra.mxu0 %v1355
      %2280 = vmatprep.subr.mxu0 0.0
      %2281 = vmatpush1.msra.mxu0 %v1356
      %2282 = vmatprep.subr.mxu0 0.0
      %2283 = vmatpush1.msra.mxu0 %v1357
      %2284 = vmatprep.subr.mxu0 0.0
      %2285 = vmatpush1.msra.mxu0 %v1358
      %2286 = vmatprep.subr.mxu0 0.0
      %2287 = vmatpush1.msra.mxu0 %v1359
      %2288 = vmatprep.subr.mxu0 0.0
      %2289 = vmatpush1.msra.mxu0 %v1360
      %2290 = vmatprep.subr.mxu0 0.0
      %2291 = vmatpush1.msra.mxu0 %v1361
      %2292 = vmatprep.subr.mxu0 0.0
      %2293 = vmatpush1.msra.mxu0 %v1362
      %2294 = vmatprep.subr.mxu0 0.0
      %2295 = vmatpush1.msra.mxu0 %v1363
      %2296 = vmatprep.subr.mxu0 0.0
      %2297 = vmatpush1.msra.mxu0 0.0
      %2298 = vmatprep.subr.mxu0 0.0
      %2299 = vmatpush1.msra.mxu0 0.0
      %2300 = vmatprep.subr.mxu0 0.0
      %2301 = vmatpush1.msra.mxu0 0.0
      %2302 = vmatprep.subr.mxu0 0.0
      %2303 = vmatpush1.msra.mxu0 0.0
      %2304 = vmatprep.subr.mxu0 0.0
      %2305 = vmatpush1.msra.mxu0 0.0
      %2306 = vmatprep.subr.mxu0 0.0
      %2307 = vmatpush1.msra.mxu0 0.0
      %2308 = vmatprep.subr.mxu0 0.0
      %2309 = vmatpush1.msra.mxu0 0.0
      %2310 = vmatprep.subr.mxu0 0.0
      %2311 = vmatpush1.msra.mxu0 0.0
      %2312 = vmatprep.subr.mxu0 0.0
      %2313 = vmatpush1.msra.mxu0 0.0
      %2314 = vmatprep.subr.mxu0 0.0
      %2315 = vmatpush1.msra.mxu0 0.0
      %2316 = vmatprep.subr.mxu0 0.0
      %2317 = vmatpush1.msra.mxu0 0.0
      %2318 = vmatprep.subr.mxu0 0.0
      %2319 = vmatpush1.msra.mxu0 0.0
      %2320 = vmatprep.subr.mxu0 0.0
      %2321 = vmatpush1.msra.mxu0 0.0
      %2322 = vmatprep.subr.mxu0 0.0
      %2323 = vmatpush1.msra.mxu0 0.0
      %2324 = vmatprep.subr.mxu0 0.0
      %2325 = vmatpush1.msra.mxu0 0.0
      %2326 = vmatprep.subr.mxu0 0.0
      %2327 = vmatpush1.msra.mxu0 0.0
      %2328 = vmatprep.mubr.f32.mxu0 0.0
      %2329 = vmatmul.mubr.f32.gmra.mrb[0].mxu0 %v940
      %v2330 = vpop.f32.mrb[0].mxu0
      %v2331 = vadd.f32 %v2106, %v2330
      %v2332 = vpop.f32.mrb[0].mxu0
      %2333 = vmatprep.mubr.f32.mxu0 0.0
      %2334 = vmatmul.mubr.f32.gmra.mrb[0].mxu0 %v949
      %v2335 = vpop.f32.mrb[0].mxu0
      %v2336 = vadd.f32 %v2111, %v2335
      %v2337 = vpop.f32.mrb[0].mxu0
      %2338 = vmatprep.mubr.f32.mxu0 0.0
      %2339 = vmatmul.mubr.f32.gmra.mrb[0].mxu0 %v958
      %v2340 = vpop.f32.mrb[0].mxu0
      %v2341 = vadd.f32 %v2116, %v2340
      %v2342 = vpop.f32.mrb[0].mxu0
      %2343 = vmatprep.mubr.f32.mxu0 0.0
      %2344 = vmatmul.mubr.f32.gmra.mrb[0].mxu0 %v967
      %v2345 = vpop.f32.mrb[0].mxu0
      %v2346 = vadd.f32 %v2121, %v2345
      %v2347 = vpop.f32.mrb[0].mxu0
      %2348 = vmatprep.mubr.f32.mxu0 0.0
      %2349 = vmatmul.mubr.f32.gmra.mrb[0].mxu0 %v976
      %v2350 = vpop.f32.mrb[0].mxu0
      %v2351 = vadd.f32 %v2126, %v2350
      %v2352 = vpop.f32.mrb[0].mxu0
      %2353 = vmatprep.mubr.f32.mxu0 0.0
      %2354 = vmatmul.mubr.f32.gmra.mrb[0].mxu0 %v985
      %v2355 = vpop.f32.mrb[0].mxu0
      %v2356 = vadd.f32 %v2131, %v2355
      %v2357 = vpop.f32.mrb[0].mxu0
      %2358 = vmatprep.mubr.f32.mxu0 0.0
      %2359 = vmatmul.mubr.f32.gmra.mrb[0].mxu0 %v994
      %v2360 = vpop.f32.mrb[0].mxu0
      %v2361 = vadd.f32 %v2136, %v2360
      %v2362 = vpop.f32.mrb[0].mxu0
      %2363 = vmatprep.mubr.f32.mxu0 0.0
      %2364 = vmatmul.mubr.f32.gmra.mrb[0].mxu0 %v1003
      %v2365 = vpop.f32.mrb[0].mxu0
      %v2366 = vadd.f32 %v2141, %v2365
      %v2367 = vpop.f32.mrb[0].mxu0
      %2368 = vmatprep.mubr.f32.mxu0 0.0
      %2369 = vmatmul.mubr.f32.gmra.mrb[0].mxu0 %v1012
      %v2370 = vpop.f32.mrb[0].mxu0
      %v2371 = vadd.f32 %v2146, %v2370
      %v2372 = vpop.f32.mrb[0].mxu0
      %2373 = vmatprep.mubr.f32.mxu0 0.0
      %2374 = vmatmul.mubr.f32.gmra.mrb[0].mxu0 %v1021
      %v2375 = vpop.f32.mrb[0].mxu0
      %v2376 = vadd.f32 %v2151, %v2375
      %v2377 = vpop.f32.mrb[0].mxu0
      %2378 = vmatprep.mubr.f32.mxu0 0.0
      %2379 = vmatmul.mubr.f32.gmra.mrb[0].mxu0 %v1030
      %v2380 = vpop.f32.mrb[0].mxu0
      %v2381 = vadd.f32 %v2156, %v2380
      %v2382 = vpop.f32.mrb[0].mxu0
      %2383 = vmatprep.mubr.f32.mxu0 0.0
      %2384 = vmatmul.mubr.f32.gmra.mrb[0].mxu0 %v1039
      %v2385 = vpop.f32.mrb[0].mxu0
      %v2386 = vadd.f32 %v2161, %v2385
      %v2387 = vpop.f32.mrb[0].mxu0
      %2388 = vmatprep.mubr.f32.mxu0 0.0
      %2389 = vmatmul.mubr.f32.gmra.mrb[0].mxu0 %v1048
      %v2390 = vpop.f32.mrb[0].mxu0
      %v2391 = vadd.f32 %v2166, %v2390
      %v2392 = vpop.f32.mrb[0].mxu0
      %2393 = vmatprep.mubr.f32.mxu0 0.0
      %2394 = vmatmul.mubr.f32.gmra.mrb[0].mxu0 %v1057
      %v2395 = vpop.f32.mrb[0].mxu0
      %v2396 = vadd.f32 %v2171, %v2395
      %v2397 = vpop.f32.mrb[0].mxu0
      %2398 = vmatprep.mubr.f32.mxu0 0.0
      %2399 = vmatmul.mubr.f32.gmra.mrb[0].mxu0 %v1066
      %v2400 = vpop.f32.mrb[0].mxu0
      %v2401 = vadd.f32 %v2176, %v2400
      %v2402 = vpop.f32.mrb[0].mxu0
      %2403 = vmatprep.mubr.f32.mxu0 0.0
      %2404 = vmatmul.mubr.f32.gmra.mrb[0].mxu0 %v1075
      %v2405 = vpop.f32.mrb[0].mxu0
      %v2406 = vadd.f32 %v2181, %v2405
      %v2407 = vpop.f32.mrb[0].mxu0
      %2408 = vmatprep.mubr.f32.mxu0 0.0
      %2409 = vmatmul.mubr.f32.gmra.mrb[0].mxu0 %v1084
      %v2410 = vpop.f32.mrb[0].mxu0
      %v2411 = vadd.f32 %v2186, %v2410
      %v2412 = vpop.f32.mrb[0].mxu0
      %2413 = vmatprep.mubr.f32.mxu0 0.0
      %2414 = vmatmul.mubr.f32.gmra.mrb[0].mxu0 %v1093
      %v2415 = vpop.f32.mrb[0].mxu0
      %v2416 = vadd.f32 %v2191, %v2415
      %v2417 = vpop.f32.mrb[0].mxu0
      %2418 = vmatprep.mubr.f32.mxu0 0.0
      %2419 = vmatmul.mubr.f32.gmra.mrb[0].mxu0 %v1102
      %v2420 = vpop.f32.mrb[0].mxu0
      %v2421 = vadd.f32 %v2196, %v2420
      %v2422 = vpop.f32.mrb[0].mxu0
      %2423 = vmatprep.mubr.f32.mxu0 0.0
      %2424 = vmatmul.mubr.f32.gmra.mrb[0].mxu0 %v1111
      %v2425 = vpop.f32.mrb[0].mxu0
      %v2426 = vadd.f32 %v2201, %v2425
      %v2427 = vpop.f32.mrb[0].mxu0
      %2428 = vmatprep.mubr.f32.mxu0 0.0
      %2429 = vmatmul.mubr.f32.gmra.mrb[0].mxu0 %v1120
      %v2430 = vpop.f32.mrb[0].mxu0
      %v2431 = vadd.f32 %v2206, %v2430
      %v2432 = vpop.f32.mrb[0].mxu0
      %2433 = vmatprep.mubr.f32.mxu0 0.0
      %2434 = vmatmul.mubr.f32.gmra.mrb[0].mxu0 %v1129
      %v2435 = vpop.f32.mrb[0].mxu0
      %v2436 = vadd.f32 %v2211, %v2435
      %v2437 = vpop.f32.mrb[0].mxu0
      %2438 = vmatprep.mubr.f32.mxu0 0.0
      %2439 = vmatmul.mubr.f32.gmra.mrb[0].mxu0 %v1138
      %v2440 = vpop.f32.mrb[0].mxu0
      %v2441 = vadd.f32 %v2216, %v2440
      %v2442 = vpop.f32.mrb[0].mxu0
      %2443 = vmatprep.mubr.f32.mxu0 0.0
      %2444 = vmatmul.mubr.f32.gmra.mrb[0].mxu0 %v1147
      %v2445 = vpop.f32.mrb[0].mxu0
      %v2446 = vadd.f32 %v2221, %v2445
      %v2447 = vpop.f32.mrb[0].mxu0
      %2448 = vmatprep.mubr.f32.mxu0 0.0
      %2449 = vmatmul.mubr.f32.gmra.mrb[0].mxu0 %v1156
      %v2450 = vpop.f32.mrb[0].mxu0
      %v2451 = vadd.f32 %v2226, %v2450
      %v2452 = vpop.f32.mrb[0].mxu0
      %2453 = vmatprep.mubr.f32.mxu0 0.0
      %2454 = vmatmul.mubr.f32.gmra.mrb[0].mxu0 %v1165
      %v2455 = vpop.f32.mrb[0].mxu0
      %v2456 = vadd.f32 %v2231, %v2455
      %v2457 = vpop.f32.mrb[0].mxu0
      %2458 = vmatprep.mubr.f32.mxu0 0.0
      %2459 = vmatmul.mubr.f32.gmra.mrb[0].mxu0 %v1174
      %v2460 = vpop.f32.mrb[0].mxu0
      %v2461 = vadd.f32 %v2236, %v2460
      %v2462 = vpop.f32.mrb[0].mxu0
      %2463 = vmatprep.mubr.f32.mxu0 0.0
      %2464 = vmatmul.mubr.f32.gmra.mrb[0].mxu0 %v1183
      %v2465 = vpop.f32.mrb[0].mxu0
      %v2466 = vadd.f32 %v2241, %v2465
      %v2467 = vpop.f32.mrb[0].mxu0
      %2468 = vmatprep.mubr.f32.mxu0 0.0
      %2469 = vmatmul.mubr.f32.gmra.mrb[0].mxu0 %v1192
      %v2470 = vpop.f32.mrb[0].mxu0
      %v2471 = vadd.f32 %v2246, %v2470
      %v2472 = vpop.f32.mrb[0].mxu0
      %2473 = vmatprep.mubr.f32.mxu0 0.0
      %2474 = vmatmul.mubr.f32.gmra.mrb[0].mxu0 %v1201
      %v2475 = vpop.f32.mrb[0].mxu0
      %v2476 = vadd.f32 %v2251, %v2475
      %v2477 = vpop.f32.mrb[0].mxu0
      %2478 = vmatprep.mubr.f32.mxu0 0.0
      %2479 = vmatmul.mubr.f32.gmra.mrb[0].mxu0 %v1210
      %v2480 = vpop.f32.mrb[0].mxu0
      %v2481 = vadd.f32 %v2256, %v2480
      %v2482 = vpop.f32.mrb[0].mxu0
      %2483 = vmatprep.mubr.f32.mxu0 0.0
      %2484 = vmatmul.mubr.f32.gmra.mrb[0].mxu0 %v1219
      %v2485 = vpop.f32.mrb[0].mxu0
      %v2486 = vadd.f32 %v2261, %v2485
      %v2487 = vpop.f32.mrb[0].mxu0
      %2488 = vdwg.mxu0
      %2489 = vst [vmem:[%s231] sm:$0xff] %v2331
      %2490 = vst [vmem:[%s231 + $0x8] sm:$0xff] %v2336
      %2491 = vst [vmem:[%s231 + $0x10] sm:$0xff] %v2341
      %2492 = vst [vmem:[%s231 + $0x18] sm:$0xff] %v2346
      %2493 = vst [vmem:[%s231 + $0x20] sm:$0xff] %v2351
      %2494 = vst [vmem:[%s231 + $0x28] sm:$0xff] %v2356
      %2495 = vst [vmem:[%s231 + $0x30] sm:$0xff] %v2361
      %2496 = vst [vmem:[%s231 + $0x38] sm:$0xff] %v2366
      %2497 = vst [vmem:[%s231 + $0x40] sm:$0xff] %v2371
      %2498 = vst [vmem:[%s231 + $0x48] sm:$0xff] %v2376
      %2499 = vst [vmem:[%s231 + $0x50] sm:$0xff] %v2381
      %2500 = vst [vmem:[%s231 + $0x58] sm:$0xff] %v2386
      %2501 = vst [vmem:[%s231 + $0x60] sm:$0xff] %v2391
      %2502 = vst [vmem:[%s231 + $0x68] sm:$0xff] %v2396
      %2503 = vst [vmem:[%s231 + $0x70] sm:$0xff] %v2401
      %2504 = vst [vmem:[%s231 + $0x78] sm:$0xff] %v2406
      %2505 = vst [vmem:[%s231 + $0x80] sm:$0xff] %v2411
      %2506 = vst [vmem:[%s231 + $0x88] sm:$0xff] %v2416
      %2507 = vst [vmem:[%s231 + $0x90] sm:$0xff] %v2421
      %2508 = vst [vmem:[%s231 + $0x98] sm:$0xff] %v2426
      %2509 = vst [vmem:[%s231 + $0xa0] sm:$0xff] %v2431
      %2510 = vst [vmem:[%s231 + $0xa8] sm:$0xff] %v2436
      %2511 = vst [vmem:[%s231 + $0xb0] sm:$0xff] %v2441
      %2512 = vst [vmem:[%s231 + $0xb8] sm:$0xff] %v2446
      %2513 = vst [vmem:[%s231 + $0xc0] sm:$0xff] %v2451
      %2514 = vst [vmem:[%s231 + $0xc8] sm:$0xff] %v2456
      %2515 = vst [vmem:[%s231 + $0xd0] sm:$0xff] %v2461
      %2516 = vst [vmem:[%s231 + $0xd8] sm:$0xff] %v2466
      %2517 = vst [vmem:[%s231 + $0xe0] sm:$0xff] %v2471
      %2518 = vst [vmem:[%s231 + $0xe8] sm:$0xff] %v2476
      %2519 = vst [vmem:[%s231 + $0xf0] sm:$0xff] %v2481
      %2520 = vst [vmem:[%s231 + $0xf8] sm:$0xff] %v2486
      %v2521 = vadd.f32 %v2331, %v2336
      %v2522 = vadd.f32 %v2521, %v2341
      %v2523 = vadd.f32 %v2522, %v2346
      %v2524 = vadd.f32 %v2523, %v2351
      %v2525 = vadd.f32 %v2524, %v2356
      %v2526 = vadd.f32 %v2525, %v2361
      %v2527 = vadd.f32 %v2526, %v2366
      %v2528 = vadd.f32 %v2527, %v2371
      %v2529 = vadd.f32 %v2528, %v2376
      %v2530 = vadd.f32 %v2529, %v2381
      %v2531 = vadd.f32 %v2530, %v2386
      %v2532 = vadd.f32 %v2531, %v2391
      %v2533 = vadd.f32 %v2532, %v2396
      %v2534 = vadd.f32 %v2533, %v2401
      %v2535 = vadd.f32 %v2534, %v2406
      %v2536 = vadd.f32 %v2535, %v2411
      %v2537 = vadd.f32 %v2536, %v2416
      %v2538 = vadd.f32 %v2537, %v2421
      %v2539 = vadd.f32 %v2538, %v2426
      %v2540 = vadd.f32 %v2539, %v2431
      %v2541 = vadd.f32 %v2540, %v2436
      %v2542 = vadd.f32 %v2541, %v2441
      %v2543 = vadd.f32 %v2542, %v2446
      %v2544 = vadd.f32 %v2543, %v2451
      %v2545 = vadd.f32 %v2544, %v2456
      %v2546 = vadd.f32 %v2545, %v2461
      %v2547 = vadd.f32 %v2546, %v2466
      %v2548 = vadd.f32 %v2547, %v2471
      %v2549 = vadd.f32 %v2548, %v2476
      %v2550 = vadd.f32 %v2549, %v2481
      %v2551 = vadd.f32 %v2550, %v2486
      %v2552 = vrot.slane %v2551, 4
      %v2553 = vadd.f32 %v2551, %v2552
      %v2554 = vrot.slane %v2553, 2
      %v2555 = vadd.f32 %v2553, %v2554
      %v2556 = vrot.slane %v2555, 1
      %v2557 = vadd.f32 %v2555, %v2556
      %v2558 = vmul.f32 %v2331, %v2331
      %v2559 = vmul.f32 %v2336, %v2336
      %v2560 = vmul.f32 %v2341, %v2341
      %v2561 = vmul.f32 %v2346, %v2346
      %v2562 = vmul.f32 %v2351, %v2351
      %v2563 = vmul.f32 %v2356, %v2356
      %v2564 = vmul.f32 %v2361, %v2361
      %v2565 = vmul.f32 %v2366, %v2366
      %v2566 = vmul.f32 %v2371, %v2371
      %v2567 = vmul.f32 %v2376, %v2376
      %v2568 = vmul.f32 %v2381, %v2381
      %v2569 = vmul.f32 %v2386, %v2386
      %v2570 = vmul.f32 %v2391, %v2391
      %v2571 = vmul.f32 %v2396, %v2396
      %v2572 = vmul.f32 %v2401, %v2401
      %v2573 = vmul.f32 %v2406, %v2406
      %v2574 = vmul.f32 %v2411, %v2411
      %v2575 = vmul.f32 %v2416, %v2416
      %v2576 = vmul.f32 %v2421, %v2421
      %v2577 = vmul.f32 %v2426, %v2426
      %v2578 = vmul.f32 %v2431, %v2431
      %v2579 = vmul.f32 %v2436, %v2436
      %v2580 = vmul.f32 %v2441, %v2441
      %v2581 = vmul.f32 %v2446, %v2446
      %v2582 = vmul.f32 %v2451, %v2451
      %v2583 = vmul.f32 %v2456, %v2456
      %v2584 = vmul.f32 %v2461, %v2461
      %v2585 = vmul.f32 %v2466, %v2466
      %v2586 = vmul.f32 %v2471, %v2471
      %v2587 = vmul.f32 %v2476, %v2476
      %v2588 = vmul.f32 %v2481, %v2481
      %v2589 = vmul.f32 %v2486, %v2486
      %v2590 = vadd.f32 %v2558, %v2559
      %v2591 = vadd.f32 %v2590, %v2560
      %v2592 = vadd.f32 %v2591, %v2561
      %v2593 = vadd.f32 %v2592, %v2562
      %v2594 = vadd.f32 %v2593, %v2563
      %v2595 = vadd.f32 %v2594, %v2564
      %v2596 = vadd.f32 %v2595, %v2565
      %v2597 = vadd.f32 %v2596, %v2566
      %v2598 = vadd.f32 %v2597, %v2567
      %v2599 = vadd.f32 %v2598, %v2568
      %v2600 = vadd.f32 %v2599, %v2569
      %v2601 = vadd.f32 %v2600, %v2570
      %v2602 = vadd.f32 %v2601, %v2571
      %v2603 = vadd.f32 %v2602, %v2572
      %v2604 = vadd.f32 %v2603, %v2573
      %v2605 = vadd.f32 %v2604, %v2574
      %v2606 = vadd.f32 %v2605, %v2575
      %v2607 = vadd.f32 %v2606, %v2576
      %v2608 = vadd.f32 %v2607, %v2577
      %v2609 = vadd.f32 %v2608, %v2578
      %v2610 = vadd.f32 %v2609, %v2579
      %v2611 = vadd.f32 %v2610, %v2580
      %v2612 = vadd.f32 %v2611, %v2581
      %v2613 = vadd.f32 %v2612, %v2582
      %v2614 = vadd.f32 %v2613, %v2583
      %v2615 = vadd.f32 %v2614, %v2584
      %v2616 = vadd.f32 %v2615, %v2585
      %v2617 = vadd.f32 %v2616, %v2586
      %v2618 = vadd.f32 %v2617, %v2587
      %v2619 = vadd.f32 %v2618, %v2588
      %v2620 = vadd.f32 %v2619, %v2589
      %v2621 = vrot.slane %v2620, 4
      %v2622 = vadd.f32 %v2620, %v2621
      %v2623 = vrot.slane %v2622, 2
      %v2624 = vadd.f32 %v2622, %v2623
      %v2625 = vrot.slane %v2624, 1
      %v2626 = vadd.f32 %v2624, %v2625
      %v2627 = vlaneseq
      %v2628 = vshrl.u32 %v2627, 7
      %vm2629 = vcmp.eq.s32.totalorder %v2628, 0
      %v2630 = vsel %vm2629, %v2557, 0.0
      %vm2631 = vcmp.eq.s32.totalorder %v2628, 1
      %v2632 = vsel %vm2631, %v2626, 0.0
      %v2633 = vadd.f32 %v2630, %v2632
      %2634 = vst [vmem:[%s235] sm:$0xff] %v2633
      %p2635 = scmp.lt.s32.totalorder %s17, 1
      %s2636 = scalar_select %p2635, %s17, 1
      %s2637 = smul.addr %s2636, 32
      %s2638 = smul.addr %s2637, 8
      %s2639 = scalar_lea.vmem %s4, %s2638
      %p2640 = scmp.lt.s32.totalorder %s17, 1
      %s2641 = scalar_select %p2640, %s17, 1
      %s2642 = smul.addr %s2641, 8
      %s2643 = scalar_lea.vmem %s5, %s2642
      // Predicated region
      $region37: #{basic_conv_block.3} parent=35 // pred_check
        %p2644 = pneg %p124
      $region38: #{basic_conv_block.3} parent=35 // pred_check_branch
        %2646 = sbr.rel (%p2644) target = $region40
      $region39: #{basic_conv_block.3} parent=35 // pred_region
        _
      $region40: #{basic_conv_block.3} parent=35 // pred_fallthru
        _
      // Predicated region
      $region41: #{basic_conv_block.3} parent=35 // pred_check
        %p2647 = pneg %p150
      $region42: #{basic_conv_block.3} parent=35 // pred_check_branch
        %2649 = sbr.rel (%p2647) target = $region44
      $region43: #{basic_conv_block.3} parent=35 // pred_region
        _
      $region44: #{basic_conv_block.3} parent=35 // pred_fallthru
        _
    $region36: #{basic_conv_block.3} parent=5 // pred_fallthru
      _
    %p2650 = scmp.le.s32.totalorder 2, %s12
    // Predicated region
    $region45: #{basic_conv_block.3} parent=5 // pred_check
      %p2651 = pneg %p2650
    $region46: #{basic_conv_block.3} parent=5 // pred_check_branch
      %2653 = sbr.rel (%p2651) target = $region48
    $region47: #{basic_conv_block.3} parent=5 // pred_region
      %s2654 = ssub.s32 %s12, 2
      // Predicated region
      $region49: #{basic_conv_block.3} parent=47 // pred_check
        %p2655 = pneg %p130
      $region50: #{basic_conv_block.3} parent=47 // pred_check_branch
        %2657 = sbr.rel (%p2655) target = $region52
      $region51: #{basic_conv_block.3} parent=47 // pred_region
        %p2658 = scmp.lt.s32.totalorder %s18, 1
        %s2659 = scalar_select %p2658, %s18, 1
        %s2660 = smul.addr %s2659, 32
        %s2661 = smul.addr %s2660, 8
        %s2662 = scalar_lea.vmem %s4, %s2661
      $region52: #{basic_conv_block.3} parent=47 // pred_fallthru
        _
      // Predicated region
      $region53: #{basic_conv_block.3} parent=47 // pred_check
        %p2663 = pneg %p156
      $region54: #{basic_conv_block.3} parent=47 // pred_check_branch
        %2665 = sbr.rel (%p2663) target = $region56
      $region55: #{basic_conv_block.3} parent=47 // pred_region
        %p2666 = scmp.lt.s32.totalorder %s18, 1
        %s2667 = scalar_select %p2666, %s18, 1
        %s2668 = smul.addr %s2667, 8
        %s2669 = scalar_lea.vmem %s5, %s2668
      $region56: #{basic_conv_block.3} parent=47 // pred_fallthru
        _
    $region48: #{basic_conv_block.3} parent=5 // pred_fallthru
      _
  $region6: #{basic_conv_block.3} parent=0 // loop_footer
    %s16 = sadd.s32 1, %s12
  $region7: #{basic_conv_block.3} parent=0 // loop_footer_branch
    %11 = sbr.rel target = $region3
  $region8: #{basic_conv_block.3} parent=0 // loop_exit
    _

// kernel: basic_conv_block.4
$region0: #{basic_conv_block.4}
  #allocation0 [shape = 'u32[]', space=smem, size = 0x4, offset = 0x4, fixed_abs, tag = 'smem constant byte address 0x4 - core index']
  #allocation1 [shape = 'u32[144,128]{1,0:T(1,128)}', space=vmem, size = 0x12000, scoped, tag = 'internal scratch']
  #allocation2 [shape = 'f32[18,18,128]{2,1,0:T(8,128)}', space=vmem, size = 0x36000, scoped, tag = 'scratch operand']
  #allocation3 [shape = 'f32[256,1152]{1,0:T(8,128)}', space=vmem, size = 0x120000, scoped, tag = 'scratch operand']
  %s0 = inlined_call_operand.vmem [shape: f32[2,16,16,128], index: 0, kind: input, shape index: {}]
  %s1 = inlined_call_operand.vmem [shape: f32[1152,128], index: 1, kind: input, shape index: {}]
  %s2 = inlined_call_operand.vmem [shape: f32[1,128], index: 2, kind: input, shape index: {}]
  %s3 = inlined_call_operand.vmem [shape: f32[1,128], index: 3, kind: input, shape index: {}]
  %s4 = inlined_call_operand.vmem [shape: f32[2,16,16,128], index: 4, kind: output, shape index: {0}]
  %s5 = inlined_call_operand.vmem [shape: f32[2,8,128], index: 5, kind: output, shape index: {1}]
  %6 = xla_tuple %s4, %s5
  %s7 = sld [smem:[#allocation0]]
  $region57: #{basic_conv_block.4} parent=0
    _
  %s9 = ssub.s32 1, %s7
  %s10 = scalar_select 0, %s9, %s7
  loop: start=0, step=1, limit=4
  $region2: #{basic_conv_block.4} parent=0 // loop_pre_header
    _
  $region3: #{basic_conv_block.4} parent=0 // loop_header
    %s12 = sphi 0, %s16
    %p13 = scmp.ge.s32.totalorder %s12, 4
    %s22 = sphi 0, %s24
    %s25 = sphi 0, %s22
    %s26 = sphi 0, %s25
    %s42 = sphi 0, %s26
    %s46 = sphi 0, %s46
    %s48 = sphi 0, %s46
    %s49 = sphi 0, %s48
    %s63 = sphi 0, %s49
    %s67 = sphi 0, %s67
    %s69 = sphi 0, %s67
    %s70 = sphi 0, %s69
    %s84 = sphi 0, %s70
    %s88 = sphi 0, %s88
    %s90 = sphi 0, %s88
    %s91 = sphi 0, %s90
    %s105 = sphi 0, %s91
    %s111 = sphi 0, %s113
    %s114 = sphi 0, %s111
    %s115 = sphi 0, %s114
    %s131 = sphi 0, %s115
    %s137 = sphi 0, %s139
    %s140 = sphi 0, %s137
    %s141 = sphi 0, %s140
    %s157 = sphi 0, %s141
  $region4: #{basic_conv_block.4} parent=0 // loop_header_branch
    %15 = sbr.rel (%p13) target = $region8
  $region5: #{basic_conv_block.4} parent=0 // loop_body
    %s17 = ssub.s32 %s12, 1
    %s18 = ssub.s32 %s12, 2
    %s19 = sadd.s32 %s12, 1
    %s20 = ssub.s32 %s12, %s19
    %p21 = scmp.eq.s32.totalorder %s20, 0
    %s23 = sadd.s32 %s22, 1
    %s24 = scalar_select %p21, %s22, %s23
    %p27 = pneg %p21
    %p28 = scmp.eq.s32.totalorder %s12, 1
    %p29 = por %p27, %p28
    %p30 = scmp.ne.s32.totalorder %s22, %s25
    %p31 = scmp.eq.s32.totalorder %s12, 0
    %p32 = por %p30, %p31
    %p33 = scmp.ne.s32.totalorder %s22, %s25
    %p34 = scmp.eq.s32.totalorder %s17, 1
    %p35 = por %p33, %p34
    %p36 = scmp.ne.s32.totalorder %s25, %s26
    %p37 = scmp.eq.s32.totalorder %s17, 0
    %p38 = por %p36, %p37
    %p39 = scmp.ne.s32.totalorder %s25, %s26
    %p40 = scmp.eq.s32.totalorder %s18, 1
    %p41 = por %p39, %p40
    %p43 = scmp.ne.s32.totalorder %s26, %s42
    %p44 = scmp.eq.s32.totalorder %s18, 0
    %p45 = por %p43, %p44
    %s47 = sadd.s32 %s46, 1
    %p50 = scmp.eq.s32.totalorder %s12, 1
    %p51 = scmp.ne.s32.totalorder %s46, %s48
    %p52 = scmp.eq.s32.totalorder %s12, 0
    %p53 = por %p51, %p52
    %p54 = scmp.ne.s32.totalorder %s46, %s48
    %p55 = scmp.eq.s32.totalorder %s17, 1
    %p56 = por %p54, %p55
    %p57 = scmp.ne.s32.totalorder %s48, %s49
    %p58 = scmp.eq.s32.totalorder %s17, 0
    %p59 = por %p57, %p58
    %p60 = scmp.ne.s32.totalorder %s48, %s49
    %p61 = scmp.eq.s32.totalorder %s18, 1
    %p62 = por %p60, %p61
    %p64 = scmp.ne.s32.totalorder %s49, %s63
    %p65 = scmp.eq.s32.totalorder %s18, 0
    %p66 = por %p64, %p65
    %s68 = sadd.s32 %s67, 1
    %p71 = scmp.eq.s32.totalorder %s12, 1
    %p72 = scmp.ne.s32.totalorder %s67, %s69
    %p73 = scmp.eq.s32.totalorder %s12, 0
    %p74 = por %p72, %p73
    %p75 = scmp.ne.s32.totalorder %s67, %s69
    %p76 = scmp.eq.s32.totalorder %s17, 1
    %p77 = por %p75, %p76
    %p78 = scmp.ne.s32.totalorder %s69, %s70
    %p79 = scmp.eq.s32.totalorder %s17, 0
    %p80 = por %p78, %p79
    %p81 = scmp.ne.s32.totalorder %s69, %s70
    %p82 = scmp.eq.s32.totalorder %s18, 1
    %p83 = por %p81, %p82
    %p85 = scmp.ne.s32.totalorder %s70, %s84
    %p86 = scmp.eq.s32.totalorder %s18, 0
    %p87 = por %p85, %p86
    %s89 = sadd.s32 %s88, 1
    %p92 = scmp.eq.s32.totalorder %s12, 1
    %p93 = scmp.ne.s32.totalorder %s88, %s90
    %p94 = scmp.eq.s32.totalorder %s12, 0
    %p95 = por %p93, %p94
    %p96 = scmp.ne.s32.totalorder %s88, %s90
    %p97 = scmp.eq.s32.totalorder %s17, 1
    %p98 = por %p96, %p97
    %p99 = scmp.ne.s32.totalorder %s90, %s91
    %p100 = scmp.eq.s32.totalorder %s17, 0
    %p101 = por %p99, %p100
    %p102 = scmp.ne.s32.totalorder %s90, %s91
    %p103 = scmp.eq.s32.totalorder %s18, 1
    %p104 = por %p102, %p103
    %p106 = scmp.ne.s32.totalorder %s91, %s105
    %p107 = scmp.eq.s32.totalorder %s18, 0
    %p108 = por %p106, %p107
    %s109 = ssub.s32 %s12, %s19
    %p110 = scmp.eq.s32.totalorder %s109, 0
    %s112 = sadd.s32 %s111, 1
    %s113 = scalar_select %p110, %s111, %s112
    %p116 = pneg %p110
    %p117 = scmp.eq.s32.totalorder %s12, 1
    %p118 = por %p116, %p117
    %p119 = scmp.ne.s32.totalorder %s111, %s114
    %p120 = scmp.eq.s32.totalorder %s12, 0
    %p121 = por %p119, %p120
    %p122 = scmp.ne.s32.totalorder %s111, %s114
    %p123 = scmp.eq.s32.totalorder %s17, 1
    %p124 = por %p122, %p123
    %p125 = scmp.ne.s32.totalorder %s114, %s115
    %p126 = scmp.eq.s32.totalorder %s17, 0
    %p127 = por %p125, %p126
    %p128 = scmp.ne.s32.totalorder %s114, %s115
    %p129 = scmp.eq.s32.totalorder %s18, 1
    %p130 = por %p128, %p129
    %p132 = scmp.ne.s32.totalorder %s115, %s131
    %p133 = scmp.eq.s32.totalorder %s18, 0
    %p134 = por %p132, %p133
    %s135 = ssub.s32 %s12, %s19
    %p136 = scmp.eq.s32.totalorder %s135, 0
    %s138 = sadd.s32 %s137, 1
    %s139 = scalar_select %p136, %s137, %s138
    %p142 = pneg %p136
    %p143 = scmp.eq.s32.totalorder %s12, 1
    %p144 = por %p142, %p143
    %p145 = scmp.ne.s32.totalorder %s137, %s140
    %p146 = scmp.eq.s32.totalorder %s12, 0
    %p147 = por %p145, %p146
    %p148 = scmp.ne.s32.totalorder %s137, %s140
    %p149 = scmp.eq.s32.totalorder %s17, 1
    %p150 = por %p148, %p149
    %p151 = scmp.ne.s32.totalorder %s140, %s141
    %p152 = scmp.eq.s32.totalorder %s17, 0
    %p153 = por %p151, %p152
    %p154 = scmp.ne.s32.totalorder %s140, %s141
    %p155 = scmp.eq.s32.totalorder %s18, 1
    %p156 = por %p154, %p155
    %p158 = scmp.ne.s32.totalorder %s141, %s157
    %p159 = scmp.eq.s32.totalorder %s18, 0
    %p160 = por %p158, %p159
    %p161 = scmp.le.s32.totalorder 1, %s12
    %p162 = scmp.lt.s32.totalorder %s12, 3
    %p163 = pnand %p161, %p162
    %p164 = pneg %p163
    // Predicated region
    $region9: #{basic_conv_block.4} parent=5 // pred_check
      _
    $region10: #{basic_conv_block.4} parent=5 // pred_check_branch
      %166 = sbr.rel (%p163) target = $region12
    $region11: #{basic_conv_block.4} parent=5 // pred_region
      %s167 = ssub.s32 %s12, 1
      // Predicated region
      $region13: #{basic_conv_block.4} parent=11 // pred_check
        %p168 = pneg %p59
      $region14: #{basic_conv_block.4} parent=11 // pred_check_branch
        %170 = sbr.rel (%p168) target = $region16
      $region15: #{basic_conv_block.4} parent=11 // pred_region
        _
      $region16: #{basic_conv_block.4} parent=11 // pred_fallthru
        _
      // Predicated region
      $region17: #{basic_conv_block.4} parent=11 // pred_check
        %p171 = pneg %p80
      $region18: #{basic_conv_block.4} parent=11 // pred_check_branch
        %173 = sbr.rel (%p171) target = $region20
      $region19: #{basic_conv_block.4} parent=11 // pred_region
        _
      $region20: #{basic_conv_block.4} parent=11 // pred_fallthru
        _
      // Predicated region
      $region21: #{basic_conv_block.4} parent=11 // pred_check
        %p174 = pneg %p101
      $region22: #{basic_conv_block.4} parent=11 // pred_check_branch
        %176 = sbr.rel (%p174) target = $region24
      $region23: #{basic_conv_block.4} parent=11 // pred_region
        _
      $region24: #{basic_conv_block.4} parent=11 // pred_fallthru
        _
    $region12: #{basic_conv_block.4} parent=5 // pred_fallthru
      _
    %p177 = scmp.lt.s32.totalorder %s12, 2
    // Predicated region
    $region25: #{basic_conv_block.4} parent=5 // pred_check
      %p178 = pneg %p177
    $region26: #{basic_conv_block.4} parent=5 // pred_check_branch
      %180 = sbr.rel (%p178) target = $region28
    $region27: #{basic_conv_block.4} parent=5 // pred_region
      // Predicated region
      $region29: #{basic_conv_block.4} parent=27 // pred_check
        %p181 = pneg %p32
      $region30: #{basic_conv_block.4} parent=27 // pred_check_branch
        %183 = sbr.rel (%p181) target = $region32
      $region31: #{basic_conv_block.4} parent=27 // pred_region
        %p184 = scmp.lt.s32.totalorder %s12, 1
        %s185 = scalar_select %p184, %s12, 1
        %s186 = smul.addr %s185, 32
        %s187 = smul.addr %s186, 8
        %s188 = scalar_lea.vmem %s0, %s187
      $region32: #{basic_conv_block.4} parent=27 // pred_fallthru
        _
    $region28: #{basic_conv_block.4} parent=5 // pred_fallthru
      _
    %p189 = scmp.le.s32.totalorder 1, %s12
    %p190 = scmp.lt.s32.totalorder %s12, 3
    %p191 = pnand %p189, %p190
    %p192 = pneg %p191
    // Predicated region
    $region33: #{basic_conv_block.4} parent=5 // pred_check
      _
    $region34: #{basic_conv_block.4} parent=5 // pred_check_branch
      %194 = sbr.rel (%p191) target = $region36
    $region35: #{basic_conv_block.4} parent=5 // pred_region
      %s195 = ssub.s32 %s12, 1
      %p196 = scmp.lt.s32.totalorder %s17, 1
      %s197 = scalar_select %p196, %s17, 1
      %s198 = smul.addr %s197, 32
      %s199 = smul.addr %s198, 8
      %s200 = scalar_lea.vmem %s0, %s199
      %p201 = pneg %p38
      %p202 = pneg %p35
      %p203 = pneg %p59
      %p204 = pneg %p56
      %p205 = pneg %p80
      %p206 = pneg %p77
      %p207 = pneg %p101
      %p208 = pneg %p98
      %p209 = pneg %p127
      %p210 = pneg %p124
      %p211 = scmp.lt.s32.totalorder %s17, 1
      %s212 = scalar_select %p211, %s17, 1
      %s213 = smul.addr %s212, 32
      %s214 = smul.addr %s213, 8
      %s215 = scalar_lea.vmem %s4, %s214
      %p216 = pneg %p153
      %p217 = pneg %p150
      %p218 = scmp.lt.s32.totalorder %s17, 1
      %s219 = scalar_select %p218, %s17, 1
      %s220 = smul.addr %s219, 8
      %s221 = scalar_lea.vmem %s5, %s220
      %p222 = scmp.lt.s32.totalorder %s17, 1
      %s223 = scalar_select %p222, %s17, 1
      %s224 = smul.addr %s223, 32
      %s225 = smul.addr %s224, 8
      %s226 = scalar_lea.vmem %s0, %s225
      %p227 = scmp.lt.s32.totalorder %s17, 1
      %s228 = scalar_select %p227, %s17, 1
      %s229 = smul.addr %s228, 32
      %s230 = smul.addr %s229, 8
      %s231 = scalar_lea.vmem %s4, %s230
      %p232 = scmp.lt.s32.totalorder %s17, 1
      %s233 = scalar_select %p232, %s17, 1
      %s234 = smul.addr %s233, 8
      %s235 = scalar_lea.vmem %s5, %s234
      %v236 = vld [vmem:[%s226] sm:$0xff]
      %v237 = vld [vmem:[%s226 + $0x8] sm:$0xff]
      %v238 = vld [vmem:[%s226 + $0x10] sm:$0xff]
      %v239 = vld [vmem:[%s226 + $0x18] sm:$0xff]
      %v240 = vld [vmem:[%s226 + $0x20] sm:$0xff]
      %v241 = vld [vmem:[%s226 + $0x28] sm:$0xff]
      %v242 = vld [vmem:[%s226 + $0x30] sm:$0xff]
      %v243 = vld [vmem:[%s226 + $0x38] sm:$0xff]
      %v244 = vld [vmem:[%s226 + $0x40] sm:$0xff]
      %v245 = vld [vmem:[%s226 + $0x48] sm:$0xff]
      %v246 = vld [vmem:[%s226 + $0x50] sm:$0xff]
      %v247 = vld [vmem:[%s226 + $0x58] sm:$0xff]
      %v248 = vld [vmem:[%s226 + $0x60] sm:$0xff]
      %v249 = vld [vmem:[%s226 + $0x68] sm:$0xff]
      %v250 = vld [vmem:[%s226 + $0x70] sm:$0xff]
      %v251 = vld [vmem:[%s226 + $0x78] sm:$0xff]
      %v252 = vld [vmem:[%s226 + $0x80] sm:$0xff]
      %v253 = vld [vmem:[%s226 + $0x88] sm:$0xff]
      %v254 = vld [vmem:[%s226 + $0x90] sm:$0xff]
      %v255 = vld [vmem:[%s226 + $0x98] sm:$0xff]
      %v256 = vld [vmem:[%s226 + $0xa0] sm:$0xff]
      %v257 = vld [vmem:[%s226 + $0xa8] sm:$0xff]
      %v258 = vld [vmem:[%s226 + $0xb0] sm:$0xff]
      %v259 = vld [vmem:[%s226 + $0xb8] sm:$0xff]
      %v260 = vld [vmem:[%s226 + $0xc0] sm:$0xff]
      %v261 = vld [vmem:[%s226 + $0xc8] sm:$0xff]
      %v262 = vld [vmem:[%s226 + $0xd0] sm:$0xff]
      %v263 = vld [vmem:[%s226 + $0xd8] sm:$0xff]
      %v264 = vld [vmem:[%s226 + $0xe0] sm:$0xff]
      %v265 = vld [vmem:[%s226 + $0xe8] sm:$0xff]
      %v266 = vld [vmem:[%s226 + $0xf0] sm:$0xff]
      %v267 = vld [vmem:[%s226 + $0xf8] sm:$0xff]
      %v268 = vld [vmem:[%s2] sm:$0x1]
      %v269 = vld [vmem:[%s3] sm:$0x1]
      %v271 = vlaneseq
      %v272 = vshrl.u32 %v271, 7
      %v273 = vsub.s32 0, %v272
      %v274 = vrot.slane %v268, %v273
      %v276 = vmul.f32 %v236, %v274
      %v277 = vmul.f32 %v237, %v274
      %v278 = vmul.f32 %v238, %v274
      %v279 = vmul.f32 %v239, %v274
      %v280 = vmul.f32 %v240, %v274
      %v281 = vmul.f32 %v241, %v274
      %v282 = vmul.f32 %v242, %v274
      %v283 = vmul.f32 %v243, %v274
      %v284 = vmul.f32 %v244, %v274
      %v285 = vmul.f32 %v245, %v274
      %v286 = vmul.f32 %v246, %v274
      %v287 = vmul.f32 %v247, %v274
      %v288 = vmul.f32 %v248, %v274
      %v289 = vmul.f32 %v249, %v274
      %v290 = vmul.f32 %v250, %v274
      %v291 = vmul.f32 %v251, %v274
      %v292 = vmul.f32 %v252, %v274
      %v293 = vmul.f32 %v253, %v274
      %v294 = vmul.f32 %v254, %v274
      %v295 = vmul.f32 %v255, %v274
      %v296 = vmul.f32 %v256, %v274
      %v297 = vmul.f32 %v257, %v274
      %v298 = vmul.f32 %v258, %v274
      %v299 = vmul.f32 %v259, %v274
      %v300 = vmul.f32 %v260, %v274
      %v301 = vmul.f32 %v261, %v274
      %v302 = vmul.f32 %v262, %v274
      %v303 = vmul.f32 %v263, %v274
      %v304 = vmul.f32 %v264, %v274
      %v305 = vmul.f32 %v265, %v274
      %v306 = vmul.f32 %v266, %v274
      %v307 = vmul.f32 %v267, %v274
      %v309 = vlaneseq
      %v310 = vshrl.u32 %v309, 7
      %v311 = vsub.s32 0, %v310
      %v312 = vrot.slane %v269, %v311
      %v314 = vadd.f32 %v276, %v312
      %v315 = vadd.f32 %v277, %v312
      %v316 = vadd.f32 %v278, %v312
      %v317 = vadd.f32 %v279, %v312
      %v318 = vadd.f32 %v280, %v312
      %v319 = vadd.f32 %v281, %v312
      %v320 = vadd.f32 %v282, %v312
      %v321 = vadd.f32 %v283, %v312
      %v322 = vadd.f32 %v284, %v312
      %v323 = vadd.f32 %v285, %v312
      %v324 = vadd.f32 %v286, %v312
      %v325 = vadd.f32 %v287, %v312
      %v326 = vadd.f32 %v288, %v312
      %v327 = vadd.f32 %v289, %v312
      %v328 = vadd.f32 %v290, %v312
      %v329 = vadd.f32 %v291, %v312
      %v330 = vadd.f32 %v292, %v312
      %v331 = vadd.f32 %v293, %v312
      %v332 = vadd.f32 %v294, %v312
      %v333 = vadd.f32 %v295, %v312
      %v334 = vadd.f32 %v296, %v312
      %v335 = vadd.f32 %v297, %v312
      %v336 = vadd.f32 %v298, %v312
      %v337 = vadd.f32 %v299, %v312
      %v338 = vadd.f32 %v300, %v312
      %v339 = vadd.f32 %v301, %v312
      %v340 = vadd.f32 %v302, %v312
      %v341 = vadd.f32 %v303, %v312
      %v342 = vadd.f32 %v304, %v312
      %v343 = vadd.f32 %v305, %v312
      %v344 = vadd.f32 %v306, %v312
      %v345 = vadd.f32 %v307, %v312
      %v346 = vmax.f32 %v314, 0.0
      %v347 = vmax.f32 %v315, 0.0
      %v348 = vmax.f32 %v316, 0.0
      %v349 = vmax.f32 %v317, 0.0
      %v350 = vmax.f32 %v318, 0.0
      %v351 = vmax.f32 %v319, 0.0
      %v352 = vmax.f32 %v320, 0.0
      %v353 = vmax.f32 %v321, 0.0
      %v354 = vmax.f32 %v322, 0.0
      %v355 = vmax.f32 %v323, 0.0
      %v356 = vmax.f32 %v324, 0.0
      %v357 = vmax.f32 %v325, 0.0
      %v358 = vmax.f32 %v326, 0.0
      %v359 = vmax.f32 %v327, 0.0
      %v360 = vmax.f32 %v328, 0.0
      %v361 = vmax.f32 %v329, 0.0
      %v362 = vmax.f32 %v330, 0.0
      %v363 = vmax.f32 %v331, 0.0
      %v364 = vmax.f32 %v332, 0.0
      %v365 = vmax.f32 %v333, 0.0
      %v366 = vmax.f32 %v334, 0.0
      %v367 = vmax.f32 %v335, 0.0
      %v368 = vmax.f32 %v336, 0.0
      %v369 = vmax.f32 %v337, 0.0
      %v370 = vmax.f32 %v338, 0.0
      %v371 = vmax.f32 %v339, 0.0
      %v372 = vmax.f32 %v340, 0.0
      %v373 = vmax.f32 %v341, 0.0
      %v374 = vmax.f32 %v342, 0.0
      %v375 = vmax.f32 %v343, 0.0
      %v376 = vmax.f32 %v344, 0.0
      %v377 = vmax.f32 %v345, 0.0
      %378 = vst [vmem:[#allocation2] sm:$0xff] 0.0
      %379 = vst [vmem:[#allocation2 + $0x8] sm:$0xff] 0.0
      %380 = vst [vmem:[#allocation2 + $0x10] sm:$0x3] 0.0
      %381 = vst [vmem:[#allocation2 + $0x18] sm:$0xff] 0.0
      %382 = vst [vmem:[#allocation2 + $0x20] sm:$0xff] 0.0
      %383 = vst [vmem:[#allocation2 + $0x28] sm:$0x3] 0.0
      %384 = vst [vmem:[#allocation2 + $0x30] sm:$0xff] 0.0
      %385 = vst [vmem:[#allocation2 + $0x38] sm:$0xff] 0.0
      %386 = vst [vmem:[#allocation2 + $0x40] sm:$0x3] 0.0
      %387 = vst [vmem:[#allocation2 + $0x48] sm:$0xff] 0.0
      %388 = vst [vmem:[#allocation2 + $0x50] sm:$0xff] 0.0
      %389 = vst [vmem:[#allocation2 + $0x58] sm:$0x3] 0.0
      %390 = vst [vmem:[#allocation2 + $0x60] sm:$0xff] 0.0
      %391 = vst [vmem:[#allocation2 + $0x68] sm:$0xff] 0.0
      %392 = vst [vmem:[#allocation2 + $0x70] sm:$0x3] 0.0
      %393 = vst [vmem:[#allocation2 + $0x78] sm:$0xff] 0.0
      %394 = vst [vmem:[#allocation2 + $0x80] sm:$0xff] 0.0
      %395 = vst [vmem:[#allocation2 + $0x88] sm:$0x3] 0.0
      %396 = vst [vmem:[#allocation2 + $0x90] sm:$0xff] 0.0
      %397 = vst [vmem:[#allocation2 + $0x98] sm:$0xff] 0.0
      %398 = vst [vmem:[#allocation2 + $0xa0] sm:$0x3] 0.0
      %399 = vst [vmem:[#allocation2 + $0xa8] sm:$0xff] 0.0
      %400 = vst [vmem:[#allocation2 + $0xb0] sm:$0xff] 0.0
      %401 = vst [vmem:[#allocation2 + $0xb8] sm:$0x3] 0.0
      %402 = vst [vmem:[#allocation2 + $0xc0] sm:$0xff] 0.0
      %403 = vst [vmem:[#allocation2 + $0xc8] sm:$0xff] 0.0
      %404 = vst [vmem:[#allocation2 + $0xd0] sm:$0x3] 0.0
      %405 = vst [vmem:[#allocation2 + $0xd8] sm:$0xff] 0.0
      %406 = vst [vmem:[#allocation2 + $0xe0] sm:$0xff] 0.0
      %407 = vst [vmem:[#allocation2 + $0xe8] sm:$0x3] 0.0
      %408 = vst [vmem:[#allocation2 + $0xf0] sm:$0xff] 0.0
      %409 = vst [vmem:[#allocation2 + $0xf8] sm:$0xff] 0.0
      %410 = vst [vmem:[#allocation2 + $0x100] sm:$0x3] 0.0
      %411 = vst [vmem:[#allocation2 + $0x108] sm:$0xff] 0.0
      %412 = vst [vmem:[#allocation2 + $0x110] sm:$0xff] 0.0
      %413 = vst [vmem:[#allocation2 + $0x118] sm:$0x3] 0.0
      %414 = vst [vmem:[#allocation2 + $0x120] sm:$0xff] 0.0
      %415 = vst [vmem:[#allocation2 + $0x128] sm:$0xff] 0.0
      %416 = vst [vmem:[#allocation2 + $0x130] sm:$0x3] 0.0
      %417 = vst [vmem:[#allocation2 + $0x138] sm:$0xff] 0.0
      %418 = vst [vmem:[#allocation2 + $0x140] sm:$0xff] 0.0
      %419 = vst [vmem:[#allocation2 + $0x148] sm:$0x3] 0.0
      %420 = vst [vmem:[#allocation2 + $0x150] sm:$0xff] 0.0
      %421 = vst [vmem:[#allocation2 + $0x158] sm:$0xff] 0.0
      %422 = vst [vmem:[#allocation2 + $0x160] sm:$0x3] 0.0
      %423 = vst [vmem:[#allocation2 + $0x168] sm:$0xff] 0.0
      %424 = vst [vmem:[#allocation2 + $0x170] sm:$0xff] 0.0
      %425 = vst [vmem:[#allocation2 + $0x178] sm:$0x3] 0.0
      %426 = vst [vmem:[#allocation2 + $0x180] sm:$0xff] 0.0
      %427 = vst [vmem:[#allocation2 + $0x188] sm:$0xff] 0.0
      %428 = vst [vmem:[#allocation2 + $0x190] sm:$0x3] 0.0
      %429 = vst [vmem:[#allocation2 + $0x198] sm:$0xff] 0.0
      %430 = vst [vmem:[#allocation2 + $0x1a0] sm:$0xff] 0.0
      %431 = vst [vmem:[#allocation2 + $0x1a8] sm:$0x3] 0.0
      %s432 = scalar_lea.vmem [#allocation2], 24
      %433 = vst [vmem:[%s432 + $0x1] sm:$0xff] %v346
      %434 = vst [vmem:[%s432 + $0x9] sm:$0xff] %v347
      %435 = vst [vmem:[%s432 + $0x19] sm:$0xff] %v348
      %436 = vst [vmem:[%s432 + $0x21] sm:$0xff] %v349
      %437 = vst [vmem:[%s432 + $0x31] sm:$0xff] %v350
      %438 = vst [vmem:[%s432 + $0x39] sm:$0xff] %v351
      %439 = vst [vmem:[%s432 + $0x49] sm:$0xff] %v352
      %440 = vst [vmem:[%s432 + $0x51] sm:$0xff] %v353
      %441 = vst [vmem:[%s432 + $0x61] sm:$0xff] %v354
      %442 = vst [vmem:[%s432 + $0x69] sm:$0xff] %v355
      %443 = vst [vmem:[%s432 + $0x79] sm:$0xff] %v356
      %444 = vst [vmem:[%s432 + $0x81] sm:$0xff] %v357
      %445 = vst [vmem:[%s432 + $0x91] sm:$0xff] %v358
      %446 = vst [vmem:[%s432 + $0x99] sm:$0xff] %v359
      %447 = vst [vmem:[%s432 + $0xa9] sm:$0xff] %v360
      %448 = vst [vmem:[%s432 + $0xb1] sm:$0xff] %v361
      %449 = vst [vmem:[%s432 + $0xc1] sm:$0xff] %v362
      %450 = vst [vmem:[%s432 + $0xc9] sm:$0xff] %v363
      %451 = vst [vmem:[%s432 + $0xd9] sm:$0xff] %v364
      %452 = vst [vmem:[%s432 + $0xe1] sm:$0xff] %v365
      %453 = vst [vmem:[%s432 + $0xf1] sm:$0xff] %v366
      %454 = vst [vmem:[%s432 + $0xf9] sm:$0xff] %v367
      %455 = vst [vmem:[%s432 + $0x109] sm:$0xff] %v368
      %456 = vst [vmem:[%s432 + $0x111] sm:$0xff] %v369
      %457 = vst [vmem:[%s432 + $0x121] sm:$0xff] %v370
      %458 = vst [vmem:[%s432 + $0x129] sm:$0xff] %v371
      %459 = vst [vmem:[%s432 + $0x139] sm:$0xff] %v372
      %460 = vst [vmem:[%s432 + $0x141] sm:$0xff] %v373
      %461 = vst [vmem:[%s432 + $0x151] sm:$0xff] %v374
      %462 = vst [vmem:[%s432 + $0x159] sm:$0xff] %v375
      %463 = vst [vmem:[%s432 + $0x169] sm:$0xff] %v376
      %464 = vst [vmem:[%s432 + $0x171] sm:$0xff] %v377
      %v465 = vld [vmem:[#allocation2] sm:$0xff]
      %v466 = vld [vmem:[#allocation2 + $0x8] sm:$0xff]
      %v467 = vld [vmem:[#allocation2 + $0x18] sm:$0xff]
      %v468 = vld [vmem:[#allocation2 + $0x20] sm:$0xff]
      %v469 = vld [vmem:[#allocation2 + $0x30] sm:$0xff]
      %v470 = vld [vmem:[#allocation2 + $0x38] sm:$0xff]
      %v471 = vld [vmem:[#allocation2 + $0x48] sm:$0xff]
      %v472 = vld [vmem:[#allocation2 + $0x50] sm:$0xff]
      %v473 = vld [vmem:[#allocation2 + $0x60] sm:$0xff]
      %v474 = vld [vmem:[#allocation2 + $0x68] sm:$0xff]
      %v475 = vld [vmem:[#allocation2 + $0x78] sm:$0xff]
      %v476 = vld [vmem:[#allocation2 + $0x80] sm:$0xff]
      %v477 = vld [vmem:[#allocation2 + $0x90] sm:$0xff]
      %v478 = vld [vmem:[#allocation2 + $0x98] sm:$0xff]
      %v479 = vld [vmem:[#allocation2 + $0xa8] sm:$0xff]
      %v480 = vld [vmem:[#allocation2 + $0xb0] sm:$0xff]
      %v481 = vld [vmem:[#allocation2 + $0xc0] sm:$0xff]
      %v482 = vld [vmem:[#allocation2 + $0xc8] sm:$0xff]
      %v483 = vld [vmem:[#allocation2 + $0xd8] sm:$0xff]
      %v484 = vld [vmem:[#allocation2 + $0xe0] sm:$0xff]
      %v485 = vld [vmem:[#allocation2 + $0xf0] sm:$0xff]
      %v486 = vld [vmem:[#allocation2 + $0xf8] sm:$0xff]
      %v487 = vld [vmem:[#allocation2 + $0x108] sm:$0xff]
      %v488 = vld [vmem:[#allocation2 + $0x110] sm:$0xff]
      %v489 = vld [vmem:[#allocation2 + $0x120] sm:$0xff]
      %v490 = vld [vmem:[#allocation2 + $0x128] sm:$0xff]
      %v491 = vld [vmem:[#allocation2 + $0x138] sm:$0xff]
      %v492 = vld [vmem:[#allocation2 + $0x140] sm:$0xff]
      %v493 = vld [vmem:[#allocation2 + $0x150] sm:$0xff]
      %v494 = vld [vmem:[#allocation2 + $0x158] sm:$0xff]
      %v495 = vld [vmem:[#allocation2 + $0x168] sm:$0xff]
      %v496 = vld [vmem:[#allocation2 + $0x170] sm:$0xff]
      %497 = vst [vmem:[#allocation3] sm:$0xff] %v465
      %498 = vst [vmem:[#allocation3 + $0x48] sm:$0xff] %v466
      %499 = vst [vmem:[#allocation3 + $0x90] sm:$0xff] %v467
      %500 = vst [vmem:[#allocation3 + $0xd8] sm:$0xff] %v468
      %501 = vst [vmem:[#allocation3 + $0x120] sm:$0xff] %v469
      %502 = vst [vmem:[#allocation3 + $0x168] sm:$0xff] %v470
      %503 = vst [vmem:[#allocation3 + $0x1b0] sm:$0xff] %v471
      %504 = vst [vmem:[#allocation3 + $0x1f8] sm:$0xff] %v472
      %505 = vst [vmem:[#allocation3 + $0x240] sm:$0xff] %v473
      %506 = vst [vmem:[#allocation3 + $0x288] sm:$0xff] %v474
      %507 = vst [vmem:[#allocation3 + $0x2d0] sm:$0xff] %v475
      %508 = vst [vmem:[#allocation3 + $0x318] sm:$0xff] %v476
      %509 = vst [vmem:[#allocation3 + $0x360] sm:$0xff] %v477
      %510 = vst [vmem:[#allocation3 + $0x3a8] sm:$0xff] %v478
      %511 = vst [vmem:[#allocation3 + $0x3f0] sm:$0xff] %v479
      %512 = vst [vmem:[#allocation3 + $0x438] sm:$0xff] %v480
      %513 = vst [vmem:[#allocation3 + $0x480] sm:$0xff] %v481
      %514 = vst [vmem:[#allocation3 + $0x4c8] sm:$0xff] %v482
      %515 = vst [vmem:[#allocation3 + $0x510] sm:$0xff] %v483
      %516 = vst [vmem:[#allocation3 + $0x558] sm:$0xff] %v484
      %517 = vst [vmem:[#allocation3 + $0x5a0] sm:$0xff] %v485
      %518 = vst [vmem:[#allocation3 + $0x5e8] sm:$0xff] %v486
      %519 = vst [vmem:[#allocation3 + $0x630] sm:$0xff] %v487
      %520 = vst [vmem:[#allocation3 + $0x678] sm:$0xff] %v488
      %521 = vst [vmem:[#allocation3 + $0x6c0] sm:$0xff] %v489
      %522 = vst [vmem:[#allocation3 + $0x708] sm:$0xff] %v490
      %523 = vst [vmem:[#allocation3 + $0x750] sm:$0xff] %v491
      %524 = vst [vmem:[#allocation3 + $0x798] sm:$0xff] %v492
      %525 = vst [vmem:[#allocation3 + $0x7e0] sm:$0xff] %v493
      %526 = vst [vmem:[#allocation3 + $0x828] sm:$0xff] %v494
      %527 = vst [vmem:[#allocation3 + $0x870] sm:$0xff] %v495
      %528 = vst [vmem:[#allocation3 + $0x8b8] sm:$0xff] %v496
      %v529 = vld [vmem:[#allocation2 + $0x1] sm:$0xff]
      %v530 = vld [vmem:[#allocation2 + $0x9] sm:$0xff]
      %v531 = vld [vmem:[#allocation2 + $0x19] sm:$0xff]
      %v532 = vld [vmem:[#allocation2 + $0x21] sm:$0xff]
      %v533 = vld [vmem:[#allocation2 + $0x31] sm:$0xff]
      %v534 = vld [vmem:[#allocation2 + $0x39] sm:$0xff]
      %v535 = vld [vmem:[#allocation2 + $0x49] sm:$0xff]
      %v536 = vld [vmem:[#allocation2 + $0x51] sm:$0xff]
      %v537 = vld [vmem:[#allocation2 + $0x61] sm:$0xff]
      %v538 = vld [vmem:[#allocation2 + $0x69] sm:$0xff]
      %v539 = vld [vmem:[#allocation2 + $0x79] sm:$0xff]
      %v540 = vld [vmem:[#allocation2 + $0x81] sm:$0xff]
      %v541 = vld [vmem:[#allocation2 + $0x91] sm:$0xff]
      %v542 = vld [vmem:[#allocation2 + $0x99] sm:$0xff]
      %v543 = vld [vmem:[#allocation2 + $0xa9] sm:$0xff]
      %v544 = vld [vmem:[#allocation2 + $0xb1] sm:$0xff]
      %v545 = vld [vmem:[#allocation2 + $0xc1] sm:$0xff]
      %v546 = vld [vmem:[#allocation2 + $0xc9] sm:$0xff]
      %v547 = vld [vmem:[#allocation2 + $0xd9] sm:$0xff]
      %v548 = vld [vmem:[#allocation2 + $0xe1] sm:$0xff]
      %v549 = vld [vmem:[#allocation2 + $0xf1] sm:$0xff]
      %v550 = vld [vmem:[#allocation2 + $0xf9] sm:$0xff]
      %v551 = vld [vmem:[#allocation2 + $0x109] sm:$0xff]
      %v552 = vld [vmem:[#allocation2 + $0x111] sm:$0xff]
      %v553 = vld [vmem:[#allocation2 + $0x121] sm:$0xff]
      %v554 = vld [vmem:[#allocation2 + $0x129] sm:$0xff]
      %v555 = vld [vmem:[#allocation2 + $0x139] sm:$0xff]
      %v556 = vld [vmem:[#allocation2 + $0x141] sm:$0xff]
      %v557 = vld [vmem:[#allocation2 + $0x151] sm:$0xff]
      %v558 = vld [vmem:[#allocation2 + $0x159] sm:$0xff]
      %v559 = vld [vmem:[#allocation2 + $0x169] sm:$0xff]
      %v560 = vld [vmem:[#allocation2 + $0x171] sm:$0xff]
      %561 = vst [vmem:[#allocation3 + $0x8] sm:$0xff] %v529
      %562 = vst [vmem:[#allocation3 + $0x50] sm:$0xff] %v530
      %563 = vst [vmem:[#allocation3 + $0x98] sm:$0xff] %v531
      %564 = vst [vmem:[#allocation3 + $0xe0] sm:$0xff] %v532
      %565 = vst [vmem:[#allocation3 + $0x128] sm:$0xff] %v533
      %566 = vst [vmem:[#allocation3 + $0x170] sm:$0xff] %v534
      %567 = vst [vmem:[#allocation3 + $0x1b8] sm:$0xff] %v535
      %568 = vst [vmem:[#allocation3 + $0x200] sm:$0xff] %v536
      %569 = vst [vmem:[#allocation3 + $0x248] sm:$0xff] %v537
      %570 = vst [vmem:[#allocation3 + $0x290] sm:$0xff] %v538
      %571 = vst [vmem:[#allocation3 + $0x2d8] sm:$0xff] %v539
      %572 = vst [vmem:[#allocation3 + $0x320] sm:$0xff] %v540
      %573 = vst [vmem:[#allocation3 + $0x368] sm:$0xff] %v541
      %574 = vst [vmem:[#allocation3 + $0x3b0] sm:$0xff] %v542
      %575 = vst [vmem:[#allocation3 + $0x3f8] sm:$0xff] %v543
      %576 = vst [vmem:[#allocation3 + $0x440] sm:$0xff] %v544
      %577 = vst [vmem:[#allocation3 + $0x488] sm:$0xff] %v545
      %578 = vst [vmem:[#allocation3 + $0x4d0] sm:$0xff] %v546
      %579 = vst [vmem:[#allocation3 + $0x518] sm:$0xff] %v547
      %580 = vst [vmem:[#allocation3 + $0x560] sm:$0xff] %v548
      %581 = vst [vmem:[#allocation3 + $0x5a8] sm:$0xff] %v549
      %582 = vst [vmem:[#allocation3 + $0x5f0] sm:$0xff] %v550
      %583 = vst [vmem:[#allocation3 + $0x638] sm:$0xff] %v551
      %584 = vst [vmem:[#allocation3 + $0x680] sm:$0xff] %v552
      %585 = vst [vmem:[#allocation3 + $0x6c8] sm:$0xff] %v553
      %586 = vst [vmem:[#allocation3 + $0x710] sm:$0xff] %v554
      %587 = vst [vmem:[#allocation3 + $0x758] sm:$0xff] %v555
      %588 = vst [vmem:[#allocation3 + $0x7a0] sm:$0xff] %v556
      %589 = vst [vmem:[#allocation3 + $0x7e8] sm:$0xff] %v557
      %590 = vst [vmem:[#allocation3 + $0x830] sm:$0xff] %v558
      %591 = vst [vmem:[#allocation3 + $0x878] sm:$0xff] %v559
      %592 = vst [vmem:[#allocation3 + $0x8c0] sm:$0xff] %v560
      %v593 = vld [vmem:[#allocation2 + $0x2] sm:$0xff]
      %v594 = vld [vmem:[#allocation2 + $0xa] sm:$0xff]
      %v595 = vld [vmem:[#allocation2 + $0x1a] sm:$0xff]
      %v596 = vld [vmem:[#allocation2 + $0x22] sm:$0xff]
      %v597 = vld [vmem:[#allocation2 + $0x32] sm:$0xff]
      %v598 = vld [vmem:[#allocation2 + $0x3a] sm:$0xff]
      %v599 = vld [vmem:[#allocation2 + $0x4a] sm:$0xff]
      %v600 = vld [vmem:[#allocation2 + $0x52] sm:$0xff]
      %v601 = vld [vmem:[#allocation2 + $0x62] sm:$0xff]
      %v602 = vld [vmem:[#allocation2 + $0x6a] sm:$0xff]
      %v603 = vld [vmem:[#allocation2 + $0x7a] sm:$0xff]
      %v604 = vld [vmem:[#allocation2 + $0x82] sm:$0xff]
      %v605 = vld [vmem:[#allocation2 + $0x92] sm:$0xff]
      %v606 = vld [vmem:[#allocation2 + $0x9a] sm:$0xff]
      %v607 = vld [vmem:[#allocation2 + $0xaa] sm:$0xff]
      %v608 = vld [vmem:[#allocation2 + $0xb2] sm:$0xff]
      %v609 = vld [vmem:[#allocation2 + $0xc2] sm:$0xff]
      %v610 = vld [vmem:[#allocation2 + $0xca] sm:$0xff]
      %v611 = vld [vmem:[#allocation2 + $0xda] sm:$0xff]
      %v612 = vld [vmem:[#allocation2 + $0xe2] sm:$0xff]
      %v613 = vld [vmem:[#allocation2 + $0xf2] sm:$0xff]
      %v614 = vld [vmem:[#allocation2 + $0xfa] sm:$0xff]
      %v615 = vld [vmem:[#allocation2 + $0x10a] sm:$0xff]
      %v616 = vld [vmem:[#allocation2 + $0x112] sm:$0xff]
      %v617 = vld [vmem:[#allocation2 + $0x122] sm:$0xff]
      %v618 = vld [vmem:[#allocation2 + $0x12a] sm:$0xff]
      %v619 = vld [vmem:[#allocation2 + $0x13a] sm:$0xff]
      %v620 = vld [vmem:[#allocation2 + $0x142] sm:$0xff]
      %v621 = vld [vmem:[#allocation2 + $0x152] sm:$0xff]
      %v622 = vld [vmem:[#allocation2 + $0x15a] sm:$0xff]
      %v623 = vld [vmem:[#allocation2 + $0x16a] sm:$0xff]
      %v624 = vld [vmem:[#allocation2 + $0x172] sm:$0xff]
      %625 = vst [vmem:[#allocation3 + $0x10] sm:$0xff] %v593
      %626 = vst [vmem:[#allocation3 + $0x58] sm:$0xff] %v594
      %627 = vst [vmem:[#allocation3 + $0xa0] sm:$0xff] %v595
      %628 = vst [vmem:[#allocation3 + $0xe8] sm:$0xff] %v596
      %629 = vst [vmem:[#allocation3 + $0x130] sm:$0xff] %v597
      %630 = vst [vmem:[#allocation3 + $0x178] sm:$0xff] %v598
      %631 = vst [vmem:[#allocation3 + $0x1c0] sm:$0xff] %v599
      %632 = vst [vmem:[#allocation3 + $0x208] sm:$0xff] %v600
      %633 = vst [vmem:[#allocation3 + $0x250] sm:$0xff] %v601
      %634 = vst [vmem:[#allocation3 + $0x298] sm:$0xff] %v602
      %635 = vst [vmem:[#allocation3 + $0x2e0] sm:$0xff] %v603
      %636 = vst [vmem:[#allocation3 + $0x328] sm:$0xff] %v604
      %637 = vst [vmem:[#allocation3 + $0x370] sm:$0xff] %v605
      %638 = vst [vmem:[#allocation3 + $0x3b8] sm:$0xff] %v606
      %639 = vst [vmem:[#allocation3 + $0x400] sm:$0xff] %v607
      %640 = vst [vmem:[#allocation3 + $0x448] sm:$0xff] %v608
      %641 = vst [vmem:[#allocation3 + $0x490] sm:$0xff] %v609
      %642 = vst [vmem:[#allocation3 + $0x4d8] sm:$0xff] %v610
      %643 = vst [vmem:[#allocation3 + $0x520] sm:$0xff] %v611
      %644 = vst [vmem:[#allocation3 + $0x568] sm:$0xff] %v612
      %645 = vst [vmem:[#allocation3 + $0x5b0] sm:$0xff] %v613
      %646 = vst [vmem:[#allocation3 + $0x5f8] sm:$0xff] %v614
      %647 = vst [vmem:[#allocation3 + $0x640] sm:$0xff] %v615
      %648 = vst [vmem:[#allocation3 + $0x688] sm:$0xff] %v616
      %649 = vst [vmem:[#allocation3 + $0x6d0] sm:$0xff] %v617
      %650 = vst [vmem:[#allocation3 + $0x718] sm:$0xff] %v618
      %651 = vst [vmem:[#allocation3 + $0x760] sm:$0xff] %v619
      %652 = vst [vmem:[#allocation3 + $0x7a8] sm:$0xff] %v620
      %653 = vst [vmem:[#allocation3 + $0x7f0] sm:$0xff] %v621
      %654 = vst [vmem:[#allocation3 + $0x838] sm:$0xff] %v622
      %655 = vst [vmem:[#allocation3 + $0x880] sm:$0xff] %v623
      %656 = vst [vmem:[#allocation3 + $0x8c8] sm:$0xff] %v624
      %v657 = vld [vmem:[%s432] sm:$0xff]
      %v658 = vld [vmem:[%s432 + $0x8] sm:$0xff]
      %v659 = vld [vmem:[%s432 + $0x18] sm:$0xff]
      %v660 = vld [vmem:[%s432 + $0x20] sm:$0xff]
      %v661 = vld [vmem:[%s432 + $0x30] sm:$0xff]
      %v662 = vld [vmem:[%s432 + $0x38] sm:$0xff]
      %v663 = vld [vmem:[%s432 + $0x48] sm:$0xff]
      %v664 = vld [vmem:[%s432 + $0x50] sm:$0xff]
      %v665 = vld [vmem:[%s432 + $0x60] sm:$0xff]
      %v666 = vld [vmem:[%s432 + $0x68] sm:$0xff]
      %v667 = vld [vmem:[%s432 + $0x78] sm:$0xff]
      %v668 = vld [vmem:[%s432 + $0x80] sm:$0xff]
      %v669 = vld [vmem:[%s432 + $0x90] sm:$0xff]
      %v670 = vld [vmem:[%s432 + $0x98] sm:$0xff]
      %v671 = vld [vmem:[%s432 + $0xa8] sm:$0xff]
      %v672 = vld [vmem:[%s432 + $0xb0] sm:$0xff]
      %v673 = vld [vmem:[%s432 + $0xc0] sm:$0xff]
      %v674 = vld [vmem:[%s432 + $0xc8] sm:$0xff]
      %v675 = vld [vmem:[%s432 + $0xd8] sm:$0xff]
      %v676 = vld [vmem:[%s432 + $0xe0] sm:$0xff]
      %v677 = vld [vmem:[%s432 + $0xf0] sm:$0xff]
      %v678 = vld [vmem:[%s432 + $0xf8] sm:$0xff]
      %v679 = vld [vmem:[%s432 + $0x108] sm:$0xff]
      %v680 = vld [vmem:[%s432 + $0x110] sm:$0xff]
      %v681 = vld [vmem:[%s432 + $0x120] sm:$0xff]
      %v682 = vld [vmem:[%s432 + $0x128] sm:$0xff]
      %v683 = vld [vmem:[%s432 + $0x138] sm:$0xff]
      %v684 = vld [vmem:[%s432 + $0x140] sm:$0xff]
      %v685 = vld [vmem:[%s432 + $0x150] sm:$0xff]
      %v686 = vld [vmem:[%s432 + $0x158] sm:$0xff]
      %v687 = vld [vmem:[%s432 + $0x168] sm:$0xff]
      %v688 = vld [vmem:[%s432 + $0x170] sm:$0xff]
      %689 = vst [vmem:[#allocation3 + $0x18] sm:$0xff] %v657
      %690 = vst [vmem:[#allocation3 + $0x60] sm:$0xff] %v658
      %691 = vst [vmem:[#allocation3 + $0xa8] sm:$0xff] %v659
      %692 = vst [vmem:[#allocation3 + $0xf0] sm:$0xff] %v660
      %693 = vst [vmem:[#allocation3 + $0x138] sm:$0xff] %v661
      %694 = vst [vmem:[#allocation3 + $0x180] sm:$0xff] %v662
      %695 = vst [vmem:[#allocation3 + $0x1c8] sm:$0xff] %v663
      %696 = vst [vmem:[#allocation3 + $0x210] sm:$0xff] %v664
      %697 = vst [vmem:[#allocation3 + $0x258] sm:$0xff] %v665
      %698 = vst [vmem:[#allocation3 + $0x2a0] sm:$0xff] %v666
      %699 = vst [vmem:[#allocation3 + $0x2e8] sm:$0xff] %v667
      %700 = vst [vmem:[#allocation3 + $0x330] sm:$0xff] %v668
      %701 = vst [vmem:[#allocation3 + $0x378] sm:$0xff] %v669
      %702 = vst [vmem:[#allocation3 + $0x3c0] sm:$0xff] %v670
      %703 = vst [vmem:[#allocation3 + $0x408] sm:$0xff] %v671
      %704 = vst [vmem:[#allocation3 + $0x450] sm:$0xff] %v672
      %705 = vst [vmem:[#allocation3 + $0x498] sm:$0xff] %v673
      %706 = vst [vmem:[#allocation3 + $0x4e0] sm:$0xff] %v674
      %707 = vst [vmem:[#allocation3 + $0x528] sm:$0xff] %v675
      %708 = vst [vmem:[#allocation3 + $0x570] sm:$0xff] %v676
      %709 = vst [vmem:[#allocation3 + $0x5b8] sm:$0xff] %v677
      %710 = vst [vmem:[#allocation3 + $0x600] sm:$0xff] %v678
      %711 = vst [vmem:[#allocation3 + $0x648] sm:$0xff] %v679
      %712 = vst [vmem:[#allocation3 + $0x690] sm:$0xff] %v680
      %713 = vst [vmem:[#allocation3 + $0x6d8] sm:$0xff] %v681
      %714 = vst [vmem:[#allocation3 + $0x720] sm:$0xff] %v682
      %715 = vst [vmem:[#allocation3 + $0x768] sm:$0xff] %v683
      %716 = vst [vmem:[#allocation3 + $0x7b0] sm:$0xff] %v684
      %717 = vst [vmem:[#allocation3 + $0x7f8] sm:$0xff] %v685
      %718 = vst [vmem:[#allocation3 + $0x840] sm:$0xff] %v686
      %719 = vst [vmem:[#allocation3 + $0x888] sm:$0xff] %v687
      %720 = vst [vmem:[#allocation3 + $0x8d0] sm:$0xff] %v688
      %v721 = vld [vmem:[%s432 + $0x1] sm:$0xff]
      %v722 = vld [vmem:[%s432 + $0x9] sm:$0xff]
      %v723 = vld [vmem:[%s432 + $0x19] sm:$0xff]
      %v724 = vld [vmem:[%s432 + $0x21] sm:$0xff]
      %v725 = vld [vmem:[%s432 + $0x31] sm:$0xff]
      %v726 = vld [vmem:[%s432 + $0x39] sm:$0xff]
      %v727 = vld [vmem:[%s432 + $0x49] sm:$0xff]
      %v728 = vld [vmem:[%s432 + $0x51] sm:$0xff]
      %v729 = vld [vmem:[%s432 + $0x61] sm:$0xff]
      %v730 = vld [vmem:[%s432 + $0x69] sm:$0xff]
      %v731 = vld [vmem:[%s432 + $0x79] sm:$0xff]
      %v732 = vld [vmem:[%s432 + $0x81] sm:$0xff]
      %v733 = vld [vmem:[%s432 + $0x91] sm:$0xff]
      %v734 = vld [vmem:[%s432 + $0x99] sm:$0xff]
      %v735 = vld [vmem:[%s432 + $0xa9] sm:$0xff]
      %v736 = vld [vmem:[%s432 + $0xb1] sm:$0xff]
      %v737 = vld [vmem:[%s432 + $0xc1] sm:$0xff]
      %v738 = vld [vmem:[%s432 + $0xc9] sm:$0xff]
      %v739 = vld [vmem:[%s432 + $0xd9] sm:$0xff]
      %v740 = vld [vmem:[%s432 + $0xe1] sm:$0xff]
      %v741 = vld [vmem:[%s432 + $0xf1] sm:$0xff]
      %v742 = vld [vmem:[%s432 + $0xf9] sm:$0xff]
      %v743 = vld [vmem:[%s432 + $0x109] sm:$0xff]
      %v744 = vld [vmem:[%s432 + $0x111] sm:$0xff]
      %v745 = vld [vmem:[%s432 + $0x121] sm:$0xff]
      %v746 = vld [vmem:[%s432 + $0x129] sm:$0xff]
      %v747 = vld [vmem:[%s432 + $0x139] sm:$0xff]
      %v748 = vld [vmem:[%s432 + $0x141] sm:$0xff]
      %v749 = vld [vmem:[%s432 + $0x151] sm:$0xff]
      %v750 = vld [vmem:[%s432 + $0x159] sm:$0xff]
      %v751 = vld [vmem:[%s432 + $0x169] sm:$0xff]
      %v752 = vld [vmem:[%s432 + $0x171] sm:$0xff]
      %753 = vst [vmem:[#allocation3 + $0x20] sm:$0xff] %v721
      %754 = vst [vmem:[#allocation3 + $0x68] sm:$0xff] %v722
      %755 = vst [vmem:[#allocation3 + $0xb0] sm:$0xff] %v723
      %756 = vst [vmem:[#allocation3 + $0xf8] sm:$0xff] %v724
      %757 = vst [vmem:[#allocation3 + $0x140] sm:$0xff] %v725
      %758 = vst [vmem:[#allocation3 + $0x188] sm:$0xff] %v726
      %759 = vst [vmem:[#allocation3 + $0x1d0] sm:$0xff] %v727
      %760 = vst [vmem:[#allocation3 + $0x218] sm:$0xff] %v728
      %761 = vst [vmem:[#allocation3 + $0x260] sm:$0xff] %v729
      %762 = vst [vmem:[#allocation3 + $0x2a8] sm:$0xff] %v730
      %763 = vst [vmem:[#allocation3 + $0x2f0] sm:$0xff] %v731
      %764 = vst [vmem:[#allocation3 + $0x338] sm:$0xff] %v732
      %765 = vst [vmem:[#allocation3 + $0x380] sm:$0xff] %v733
      %766 = vst [vmem:[#allocation3 + $0x3c8] sm:$0xff] %v734
      %767 = vst [vmem:[#allocation3 + $0x410] sm:$0xff] %v735
      %768 = vst [vmem:[#allocation3 + $0x458] sm:$0xff] %v736
      %769 = vst [vmem:[#allocation3 + $0x4a0] sm:$0xff] %v737
      %770 = vst [vmem:[#allocation3 + $0x4e8] sm:$0xff] %v738
      %771 = vst [vmem:[#allocation3 + $0x530] sm:$0xff] %v739
      %772 = vst [vmem:[#allocation3 + $0x578] sm:$0xff] %v740
      %773 = vst [vmem:[#allocation3 + $0x5c0] sm:$0xff] %v741
      %774 = vst [vmem:[#allocation3 + $0x608] sm:$0xff] %v742
      %775 = vst [vmem:[#allocation3 + $0x650] sm:$0xff] %v743
      %776 = vst [vmem:[#allocation3 + $0x698] sm:$0xff] %v744
      %777 = vst [vmem:[#allocation3 + $0x6e0] sm:$0xff] %v745
      %778 = vst [vmem:[#allocation3 + $0x728] sm:$0xff] %v746
      %779 = vst [vmem:[#allocation3 + $0x770] sm:$0xff] %v747
      %780 = vst [vmem:[#allocation3 + $0x7b8] sm:$0xff] %v748
      %781 = vst [vmem:[#allocation3 + $0x800] sm:$0xff] %v749
      %782 = vst [vmem:[#allocation3 + $0x848] sm:$0xff] %v750
      %783 = vst [vmem:[#allocation3 + $0x890] sm:$0xff] %v751
      %784 = vst [vmem:[#allocation3 + $0x8d8] sm:$0xff] %v752
      %v785 = vld [vmem:[%s432 + $0x2] sm:$0xff]
      %v786 = vld [vmem:[%s432 + $0xa] sm:$0xff]
      %v787 = vld [vmem:[%s432 + $0x1a] sm:$0xff]
      %v788 = vld [vmem:[%s432 + $0x22] sm:$0xff]
      %v789 = vld [vmem:[%s432 + $0x32] sm:$0xff]
      %v790 = vld [vmem:[%s432 + $0x3a] sm:$0xff]
      %v791 = vld [vmem:[%s432 + $0x4a] sm:$0xff]
      %v792 = vld [vmem:[%s432 + $0x52] sm:$0xff]
      %v793 = vld [vmem:[%s432 + $0x62] sm:$0xff]
      %v794 = vld [vmem:[%s432 + $0x6a] sm:$0xff]
      %v795 = vld [vmem:[%s432 + $0x7a] sm:$0xff]
      %v796 = vld [vmem:[%s432 + $0x82] sm:$0xff]
      %v797 = vld [vmem:[%s432 + $0x92] sm:$0xff]
      %v798 = vld [vmem:[%s432 + $0x9a] sm:$0xff]
      %v799 = vld [vmem:[%s432 + $0xaa] sm:$0xff]
      %v800 = vld [vmem:[%s432 + $0xb2] sm:$0xff]
      %v801 = vld [vmem:[%s432 + $0xc2] sm:$0xff]
      %v802 = vld [vmem:[%s432 + $0xca] sm:$0xff]
      %v803 = vld [vmem:[%s432 + $0xda] sm:$0xff]
      %v804 = vld [vmem:[%s432 + $0xe2] sm:$0xff]
      %v805 = vld [vmem:[%s432 + $0xf2] sm:$0xff]
      %v806 = vld [vmem:[%s432 + $0xfa] sm:$0xff]
      %v807 = vld [vmem:[%s432 + $0x10a] sm:$0xff]
      %v808 = vld [vmem:[%s432 + $0x112] sm:$0xff]
      %v809 = vld [vmem:[%s432 + $0x122] sm:$0xff]
      %v810 = vld [vmem:[%s432 + $0x12a] sm:$0xff]
      %v811 = vld [vmem:[%s432 + $0x13a] sm:$0xff]
      %v812 = vld [vmem:[%s432 + $0x142] sm:$0xff]
      %v813 = vld [vmem:[%s432 + $0x152] sm:$0xff]
      %v814 = vld [vmem:[%s432 + $0x15a] sm:$0xff]
      %v815 = vld [vmem:[%s432 + $0x16a] sm:$0xff]
      %v816 = vld [vmem:[%s432 + $0x172] sm:$0xff]
      %817 = vst [vmem:[#allocation3 + $0x28] sm:$0xff] %v785
      %818 = vst [vmem:[#allocation3 + $0x70] sm:$0xff] %v786
      %819 = vst [vmem:[#allocation3 + $0xb8] sm:$0xff] %v787
      %820 = vst [vmem:[#allocation3 + $0x100] sm:$0xff] %v788
      %821 = vst [vmem:[#allocation3 + $0x148] sm:$0xff] %v789
      %822 = vst [vmem:[#allocation3 + $0x190] sm:$0xff] %v790
      %823 = vst [vmem:[#allocation3 + $0x1d8] sm:$0xff] %v791
      %824 = vst [vmem:[#allocation3 + $0x220] sm:$0xff] %v792
      %825 = vst [vmem:[#allocation3 + $0x268] sm:$0xff] %v793
      %826 = vst [vmem:[#allocation3 + $0x2b0] sm:$0xff] %v794
      %827 = vst [vmem:[#allocation3 + $0x2f8] sm:$0xff] %v795
      %828 = vst [vmem:[#allocation3 + $0x340] sm:$0xff] %v796
      %829 = vst [vmem:[#allocation3 + $0x388] sm:$0xff] %v797
      %830 = vst [vmem:[#allocation3 + $0x3d0] sm:$0xff] %v798
      %831 = vst [vmem:[#allocation3 + $0x418] sm:$0xff] %v799
      %832 = vst [vmem:[#allocation3 + $0x460] sm:$0xff] %v800
      %833 = vst [vmem:[#allocation3 + $0x4a8] sm:$0xff] %v801
      %834 = vst [vmem:[#allocation3 + $0x4f0] sm:$0xff] %v802
      %835 = vst [vmem:[#allocation3 + $0x538] sm:$0xff] %v803
      %836 = vst [vmem:[#allocation3 + $0x580] sm:$0xff] %v804
      %837 = vst [vmem:[#allocation3 + $0x5c8] sm:$0xff] %v805
      %838 = vst [vmem:[#allocation3 + $0x610] sm:$0xff] %v806
      %839 = vst [vmem:[#allocation3 + $0x658] sm:$0xff] %v807
      %840 = vst [vmem:[#allocation3 + $0x6a0] sm:$0xff] %v808
      %841 = vst [vmem:[#allocation3 + $0x6e8] sm:$0xff] %v809
      %842 = vst [vmem:[#allocation3 + $0x730] sm:$0xff] %v810
      %843 = vst [vmem:[#allocation3 + $0x778] sm:$0xff] %v811
      %844 = vst [vmem:[#allocation3 + $0x7c0] sm:$0xff] %v812
      %845 = vst [vmem:[#allocation3 + $0x808] sm:$0xff] %v813
      %846 = vst [vmem:[#allocation3 + $0x850] sm:$0xff] %v814
      %847 = vst [vmem:[#allocation3 + $0x898] sm:$0xff] %v815
      %848 = vst [vmem:[#allocation3 + $0x8e0] sm:$0xff] %v816
      %s849 = scalar_lea.vmem [#allocation2], 48
      %v850 = vld [vmem:[%s849] sm:$0xff]
      %v851 = vld [vmem:[%s849 + $0x8] sm:$0xff]
      %v852 = vld [vmem:[%s849 + $0x18] sm:$0xff]
      %v853 = vld [vmem:[%s849 + $0x20] sm:$0xff]
      %v854 = vld [vmem:[%s849 + $0x30] sm:$0xff]
      %v855 = vld [vmem:[%s849 + $0x38] sm:$0xff]
      %v856 = vld [vmem:[%s849 + $0x48] sm:$0xff]
      %v857 = vld [vmem:[%s849 + $0x50] sm:$0xff]
      %v858 = vld [vmem:[%s849 + $0x60] sm:$0xff]
      %v859 = vld [vmem:[%s849 + $0x68] sm:$0xff]
      %v860 = vld [vmem:[%s849 + $0x78] sm:$0xff]
      %v861 = vld [vmem:[%s849 + $0x80] sm:$0xff]
      %v862 = vld [vmem:[%s849 + $0x90] sm:$0xff]
      %v863 = vld [vmem:[%s849 + $0x98] sm:$0xff]
      %v864 = vld [vmem:[%s849 + $0xa8] sm:$0xff]
      %v865 = vld [vmem:[%s849 + $0xb0] sm:$0xff]
      %v866 = vld [vmem:[%s849 + $0xc0] sm:$0xff]
      %v867 = vld [vmem:[%s849 + $0xc8] sm:$0xff]
      %v868 = vld [vmem:[%s849 + $0xd8] sm:$0xff]
      %v869 = vld [vmem:[%s849 + $0xe0] sm:$0xff]
      %v870 = vld [vmem:[%s849 + $0xf0] sm:$0xff]
      %v871 = vld [vmem:[%s849 + $0xf8] sm:$0xff]
      %v872 = vld [vmem:[%s849 + $0x108] sm:$0xff]
      %v873 = vld [vmem:[%s849 + $0x110] sm:$0xff]
      %v874 = vld [vmem:[%s849 + $0x120] sm:$0xff]
      %v875 = vld [vmem:[%s849 + $0x128] sm:$0xff]
      %v876 = vld [vmem:[%s849 + $0x138] sm:$0xff]
      %v877 = vld [vmem:[%s849 + $0x140] sm:$0xff]
      %v878 = vld [vmem:[%s849 + $0x150] sm:$0xff]
      %v879 = vld [vmem:[%s849 + $0x158] sm:$0xff]
      %v880 = vld [vmem:[%s849 + $0x168] sm:$0xff]
      %v881 = vld [vmem:[%s849 + $0x170] sm:$0xff]
      %882 = vst [vmem:[#allocation3 + $0x30] sm:$0xff] %v850
      %883 = vst [vmem:[#allocation3 + $0x78] sm:$0xff] %v851
      %884 = vst [vmem:[#allocation3 + $0xc0] sm:$0xff] %v852
      %885 = vst [vmem:[#allocation3 + $0x108] sm:$0xff] %v853
      %886 = vst [vmem:[#allocation3 + $0x150] sm:$0xff] %v854
      %887 = vst [vmem:[#allocation3 + $0x198] sm:$0xff] %v855
      %888 = vst [vmem:[#allocation3 + $0x1e0] sm:$0xff] %v856
      %889 = vst [vmem:[#allocation3 + $0x228] sm:$0xff] %v857
      %890 = vst [vmem:[#allocation3 + $0x270] sm:$0xff] %v858
      %891 = vst [vmem:[#allocation3 + $0x2b8] sm:$0xff] %v859
      %892 = vst [vmem:[#allocation3 + $0x300] sm:$0xff] %v860
      %893 = vst [vmem:[#allocation3 + $0x348] sm:$0xff] %v861
      %894 = vst [vmem:[#allocation3 + $0x390] sm:$0xff] %v862
      %895 = vst [vmem:[#allocation3 + $0x3d8] sm:$0xff] %v863
      %896 = vst [vmem:[#allocation3 + $0x420] sm:$0xff] %v864
      %897 = vst [vmem:[#allocation3 + $0x468] sm:$0xff] %v865
      %898 = vst [vmem:[#allocation3 + $0x4b0] sm:$0xff] %v866
      %899 = vst [vmem:[#allocation3 + $0x4f8] sm:$0xff] %v867
      %900 = vst [vmem:[#allocation3 + $0x540] sm:$0xff] %v868
      %901 = vst [vmem:[#allocation3 + $0x588] sm:$0xff] %v869
      %902 = vst [vmem:[#allocation3 + $0x5d0] sm:$0xff] %v870
      %903 = vst [vmem:[#allocation3 + $0x618] sm:$0xff] %v871
      %904 = vst [vmem:[#allocation3 + $0x660] sm:$0xff] %v872
      %905 = vst [vmem:[#allocation3 + $0x6a8] sm:$0xff] %v873
      %906 = vst [vmem:[#allocation3 + $0x6f0] sm:$0xff] %v874
      %907 = vst [vmem:[#allocation3 + $0x738] sm:$0xff] %v875
      %908 = vst [vmem:[#allocation3 + $0x780] sm:$0xff] %v876
      %909 = vst [vmem:[#allocation3 + $0x7c8] sm:$0xff] %v877
      %910 = vst [vmem:[#allocation3 + $0x810] sm:$0xff] %v878
      %911 = vst [vmem:[#allocation3 + $0x858] sm:$0xff] %v879
      %912 = vst [vmem:[#allocation3 + $0x8a0] sm:$0xff] %v880
      %913 = vst [vmem:[#allocation3 + $0x8e8] sm:$0xff] %v881
      %v914 = vld [vmem:[%s849 + $0x1] sm:$0xff]
      %v915 = vld [vmem:[%s849 + $0x9] sm:$0xff]
      %v916 = vld [vmem:[%s849 + $0x19] sm:$0xff]
      %v917 = vld [vmem:[%s849 + $0x21] sm:$0xff]
      %v918 = vld [vmem:[%s849 + $0x31] sm:$0xff]
      %v919 = vld [vmem:[%s849 + $0x39] sm:$0xff]
      %v920 = vld [vmem:[%s849 + $0x49] sm:$0xff]
      %v921 = vld [vmem:[%s849 + $0x51] sm:$0xff]
      %v922 = vld [vmem:[%s849 + $0x61] sm:$0xff]
      %v923 = vld [vmem:[%s849 + $0x69] sm:$0xff]
      %v924 = vld [vmem:[%s849 + $0x79] sm:$0xff]
      %v925 = vld [vmem:[%s849 + $0x81] sm:$0xff]
      %v926 = vld [vmem:[%s849 + $0x91] sm:$0xff]
      %v927 = vld [vmem:[%s849 + $0x99] sm:$0xff]
      %v928 = vld [vmem:[%s849 + $0xa9] sm:$0xff]
      %v929 = vld [vmem:[%s849 + $0xb1] sm:$0xff]
      %v930 = vld [vmem:[%s849 + $0xc1] sm:$0xff]
      %v931 = vld [vmem:[%s849 + $0xc9] sm:$0xff]
      %v932 = vld [vmem:[%s849 + $0xd9] sm:$0xff]
      %v933 = vld [vmem:[%s849 + $0xe1] sm:$0xff]
      %v934 = vld [vmem:[%s849 + $0xf1] sm:$0xff]
      %v935 = vld [vmem:[%s849 + $0xf9] sm:$0xff]
      %v936 = vld [vmem:[%s849 + $0x109] sm:$0xff]
      %v937 = vld [vmem:[%s849 + $0x111] sm:$0xff]
      %v938 = vld [vmem:[%s849 + $0x121] sm:$0xff]
      %v939 = vld [vmem:[%s849 + $0x129] sm:$0xff]
      %v940 = vld [vmem:[%s849 + $0x139] sm:$0xff]
      %v941 = vld [vmem:[%s849 + $0x141] sm:$0xff]
      %v942 = vld [vmem:[%s849 + $0x151] sm:$0xff]
      %v943 = vld [vmem:[%s849 + $0x159] sm:$0xff]
      %v944 = vld [vmem:[%s849 + $0x169] sm:$0xff]
      %v945 = vld [vmem:[%s849 + $0x171] sm:$0xff]
      %946 = vst [vmem:[#allocation3 + $0x38] sm:$0xff] %v914
      %947 = vst [vmem:[#allocation3 + $0x80] sm:$0xff] %v915
      %948 = vst [vmem:[#allocation3 + $0xc8] sm:$0xff] %v916
      %949 = vst [vmem:[#allocation3 + $0x110] sm:$0xff] %v917
      %950 = vst [vmem:[#allocation3 + $0x158] sm:$0xff] %v918
      %951 = vst [vmem:[#allocation3 + $0x1a0] sm:$0xff] %v919
      %952 = vst [vmem:[#allocation3 + $0x1e8] sm:$0xff] %v920
      %953 = vst [vmem:[#allocation3 + $0x230] sm:$0xff] %v921
      %954 = vst [vmem:[#allocation3 + $0x278] sm:$0xff] %v922
      %955 = vst [vmem:[#allocation3 + $0x2c0] sm:$0xff] %v923
      %956 = vst [vmem:[#allocation3 + $0x308] sm:$0xff] %v924
      %957 = vst [vmem:[#allocation3 + $0x350] sm:$0xff] %v925
      %958 = vst [vmem:[#allocation3 + $0x398] sm:$0xff] %v926
      %959 = vst [vmem:[#allocation3 + $0x3e0] sm:$0xff] %v927
      %960 = vst [vmem:[#allocation3 + $0x428] sm:$0xff] %v928
      %961 = vst [vmem:[#allocation3 + $0x470] sm:$0xff] %v929
      %962 = vst [vmem:[#allocation3 + $0x4b8] sm:$0xff] %v930
      %963 = vst [vmem:[#allocation3 + $0x500] sm:$0xff] %v931
      %964 = vst [vmem:[#allocation3 + $0x548] sm:$0xff] %v932
      %965 = vst [vmem:[#allocation3 + $0x590] sm:$0xff] %v933
      %966 = vst [vmem:[#allocation3 + $0x5d8] sm:$0xff] %v934
      %967 = vst [vmem:[#allocation3 + $0x620] sm:$0xff] %v935
      %968 = vst [vmem:[#allocation3 + $0x668] sm:$0xff] %v936
      %969 = vst [vmem:[#allocation3 + $0x6b0] sm:$0xff] %v937
      %970 = vst [vmem:[#allocation3 + $0x6f8] sm:$0xff] %v938
      %971 = vst [vmem:[#allocation3 + $0x740] sm:$0xff] %v939
      %972 = vst [vmem:[#allocation3 + $0x788] sm:$0xff] %v940
      %973 = vst [vmem:[#allocation3 + $0x7d0] sm:$0xff] %v941
      %974 = vst [vmem:[#allocation3 + $0x818] sm:$0xff] %v942
      %975 = vst [vmem:[#allocation3 + $0x860] sm:$0xff] %v943
      %976 = vst [vmem:[#allocation3 + $0x8a8] sm:$0xff] %v944
      %977 = vst [vmem:[#allocation3 + $0x8f0] sm:$0xff] %v945
      %v978 = vld [vmem:[%s849 + $0x2] sm:$0xff]
      %v979 = vld [vmem:[%s849 + $0xa] sm:$0xff]
      %v980 = vld [vmem:[%s849 + $0x1a] sm:$0xff]
      %v981 = vld [vmem:[%s849 + $0x22] sm:$0xff]
      %v982 = vld [vmem:[%s849 + $0x32] sm:$0xff]
      %v983 = vld [vmem:[%s849 + $0x3a] sm:$0xff]
      %v984 = vld [vmem:[%s849 + $0x4a] sm:$0xff]
      %v985 = vld [vmem:[%s849 + $0x52] sm:$0xff]
      %v986 = vld [vmem:[%s849 + $0x62] sm:$0xff]
      %v987 = vld [vmem:[%s849 + $0x6a] sm:$0xff]
      %v988 = vld [vmem:[%s849 + $0x7a] sm:$0xff]
      %v989 = vld [vmem:[%s849 + $0x82] sm:$0xff]
      %v990 = vld [vmem:[%s849 + $0x92] sm:$0xff]
      %v991 = vld [vmem:[%s849 + $0x9a] sm:$0xff]
      %v992 = vld [vmem:[%s849 + $0xaa] sm:$0xff]
      %v993 = vld [vmem:[%s849 + $0xb2] sm:$0xff]
      %v994 = vld [vmem:[%s849 + $0xc2] sm:$0xff]
      %v995 = vld [vmem:[%s849 + $0xca] sm:$0xff]
      %v996 = vld [vmem:[%s849 + $0xda] sm:$0xff]
      %v997 = vld [vmem:[%s849 + $0xe2] sm:$0xff]
      %v998 = vld [vmem:[%s849 + $0xf2] sm:$0xff]
      %v999 = vld [vmem:[%s849 + $0xfa] sm:$0xff]
      %v1000 = vld [vmem:[%s849 + $0x10a] sm:$0xff]
      %v1001 = vld [vmem:[%s849 + $0x112] sm:$0xff]
      %v1002 = vld [vmem:[%s849 + $0x122] sm:$0xff]
      %v1003 = vld [vmem:[%s849 + $0x12a] sm:$0xff]
      %v1004 = vld [vmem:[%s849 + $0x13a] sm:$0xff]
      %v1005 = vld [vmem:[%s849 + $0x142] sm:$0xff]
      %v1006 = vld [vmem:[%s849 + $0x152] sm:$0xff]
      %v1007 = vld [vmem:[%s849 + $0x15a] sm:$0xff]
      %v1008 = vld [vmem:[%s849 + $0x16a] sm:$0xff]
      %v1009 = vld [vmem:[%s849 + $0x172] sm:$0xff]
      %1010 = vst [vmem:[#allocation3 + $0x40] sm:$0xff] %v978
      %1011 = vst [vmem:[#allocation3 + $0x88] sm:$0xff] %v979
      %1012 = vst [vmem:[#allocation3 + $0xd0] sm:$0xff] %v980
      %1013 = vst [vmem:[#allocation3 + $0x118] sm:$0xff] %v981
      %1014 = vst [vmem:[#allocation3 + $0x160] sm:$0xff] %v982
      %1015 = vst [vmem:[#allocation3 + $0x1a8] sm:$0xff] %v983
      %1016 = vst [vmem:[#allocation3 + $0x1f0] sm:$0xff] %v984
      %1017 = vst [vmem:[#allocation3 + $0x238] sm:$0xff] %v985
      %1018 = vst [vmem:[#allocation3 + $0x280] sm:$0xff] %v986
      %1019 = vst [vmem:[#allocation3 + $0x2c8] sm:$0xff] %v987
      %1020 = vst [vmem:[#allocation3 + $0x310] sm:$0xff] %v988
      %1021 = vst [vmem:[#allocation3 + $0x358] sm:$0xff] %v989
      %1022 = vst [vmem:[#allocation3 + $0x3a0] sm:$0xff] %v990
      %1023 = vst [vmem:[#allocation3 + $0x3e8] sm:$0xff] %v991
      %1024 = vst [vmem:[#allocation3 + $0x430] sm:$0xff] %v992
      %1025 = vst [vmem:[#allocation3 + $0x478] sm:$0xff] %v993
      %1026 = vst [vmem:[#allocation3 + $0x4c0] sm:$0xff] %v994
      %1027 = vst [vmem:[#allocation3 + $0x508] sm:$0xff] %v995
      %1028 = vst [vmem:[#allocation3 + $0x550] sm:$0xff] %v996
      %1029 = vst [vmem:[#allocation3 + $0x598] sm:$0xff] %v997
      %1030 = vst [vmem:[#allocation3 + $0x5e0] sm:$0xff] %v998
      %1031 = vst [vmem:[#allocation3 + $0x628] sm:$0xff] %v999
      %1032 = vst [vmem:[#allocation3 + $0x670] sm:$0xff] %v1000
      %1033 = vst [vmem:[#allocation3 + $0x6b8] sm:$0xff] %v1001
      %1034 = vst [vmem:[#allocation3 + $0x700] sm:$0xff] %v1002
      %1035 = vst [vmem:[#allocation3 + $0x748] sm:$0xff] %v1003
      %1036 = vst [vmem:[#allocation3 + $0x790] sm:$0xff] %v1004
      %1037 = vst [vmem:[#allocation3 + $0x7d8] sm:$0xff] %v1005
      %1038 = vst [vmem:[#allocation3 + $0x820] sm:$0xff] %v1006
      %1039 = vst [vmem:[#allocation3 + $0x868] sm:$0xff] %v1007
      %1040 = vst [vmem:[#allocation3 + $0x8b0] sm:$0xff] %v1008
      %1041 = vst [vmem:[#allocation3 + $0x8f8] sm:$0xff] %v1009
      %v1042 = vld [vmem:[#allocation3] sm:$0xff]
      %v1043 = vld [vmem:[#allocation3 + $0x8] sm:$0xff]
      %v1044 = vld [vmem:[#allocation3 + $0x10] sm:$0xff]
      %v1045 = vld [vmem:[#allocation3 + $0x18] sm:$0xff]
      %v1046 = vld [vmem:[#allocation3 + $0x20] sm:$0xff]
      %v1047 = vld [vmem:[#allocation3 + $0x28] sm:$0xff]
      %v1048 = vld [vmem:[#allocation3 + $0x30] sm:$0xff]
      %v1049 = vld [vmem:[#allocation3 + $0x38] sm:$0xff]
      %v1050 = vld [vmem:[#allocation3 + $0x40] sm:$0xff]
      %v1051 = vld [vmem:[#allocation3 + $0x48] sm:$0xff]
      %v1052 = vld [vmem:[#allocation3 + $0x50] sm:$0xff]
      %v1053 = vld [vmem:[#allocation3 + $0x58] sm:$0xff]
      %v1054 = vld [vmem:[#allocation3 + $0x60] sm:$0xff]
      %v1055 = vld [vmem:[#allocation3 + $0x68] sm:$0xff]
      %v1056 = vld [vmem:[#allocation3 + $0x70] sm:$0xff]
      %v1057 = vld [vmem:[#allocation3 + $0x78] sm:$0xff]
      %v1058 = vld [vmem:[#allocation3 + $0x80] sm:$0xff]
      %v1059 = vld [vmem:[#allocation3 + $0x88] sm:$0xff]
      %v1060 = vld [vmem:[#allocation3 + $0x90] sm:$0xff]
      %v1061 = vld [vmem:[#allocation3 + $0x98] sm:$0xff]
      %v1062 = vld [vmem:[#allocation3 + $0xa0] sm:$0xff]
      %v1063 = vld [vmem:[#allocation3 + $0xa8] sm:$0xff]
      %v1064 = vld [vmem:[#allocation3 + $0xb0] sm:$0xff]
      %v1065 = vld [vmem:[#allocation3 + $0xb8] sm:$0xff]
      %v1066 = vld [vmem:[#allocation3 + $0xc0] sm:$0xff]
      %v1067 = vld [vmem:[#allocation3 + $0xc8] sm:$0xff]
      %v1068 = vld [vmem:[#allocation3 + $0xd0] sm:$0xff]
      %v1069 = vld [vmem:[#allocation3 + $0xd8] sm:$0xff]
      %v1070 = vld [vmem:[#allocation3 + $0xe0] sm:$0xff]
      %v1071 = vld [vmem:[#allocation3 + $0xe8] sm:$0xff]
      %v1072 = vld [vmem:[#allocation3 + $0xf0] sm:$0xff]
      %v1073 = vld [vmem:[#allocation3 + $0xf8] sm:$0xff]
      %v1074 = vld [vmem:[#allocation3 + $0x100] sm:$0xff]
      %v1075 = vld [vmem:[#allocation3 + $0x108] sm:$0xff]
      %v1076 = vld [vmem:[#allocation3 + $0x110] sm:$0xff]
      %v1077 = vld [vmem:[#allocation3 + $0x118] sm:$0xff]
      %v1078 = vld [vmem:[#allocation3 + $0x120] sm:$0xff]
      %v1079 = vld [vmem:[#allocation3 + $0x128] sm:$0xff]
      %v1080 = vld [vmem:[#allocation3 + $0x130] sm:$0xff]
      %v1081 = vld [vmem:[#allocation3 + $0x138] sm:$0xff]
      %v1082 = vld [vmem:[#allocation3 + $0x140] sm:$0xff]
      %v1083 = vld [vmem:[#allocation3 + $0x148] sm:$0xff]
      %v1084 = vld [vmem:[#allocation3 + $0x150] sm:$0xff]
      %v1085 = vld [vmem:[#allocation3 + $0x158] sm:$0xff]
      %v1086 = vld [vmem:[#allocation3 + $0x160] sm:$0xff]
      %v1087 = vld [vmem:[#allocation3 + $0x168] sm:$0xff]
      %v1088 = vld [vmem:[#allocation3 + $0x170] sm:$0xff]
      %v1089 = vld [vmem:[#allocation3 + $0x178] sm:$0xff]
      %v1090 = vld [vmem:[#allocation3 + $0x180] sm:$0xff]
      %v1091 = vld [vmem:[#allocation3 + $0x188] sm:$0xff]
      %v1092 = vld [vmem:[#allocation3 + $0x190] sm:$0xff]
      %v1093 = vld [vmem:[#allocation3 + $0x198] sm:$0xff]
      %v1094 = vld [vmem:[#allocation3 + $0x1a0] sm:$0xff]
      %v1095 = vld [vmem:[#allocation3 + $0x1a8] sm:$0xff]
      %v1096 = vld [vmem:[#allocation3 + $0x1b0] sm:$0xff]
      %v1097 = vld [vmem:[#allocation3 + $0x1b8] sm:$0xff]
      %v1098 = vld [vmem:[#allocation3 + $0x1c0] sm:$0xff]
      %v1099 = vld [vmem:[#allocation3 + $0x1c8] sm:$0xff]
      %v1100 = vld [vmem:[#allocation3 + $0x1d0] sm:$0xff]
      %v1101 = vld [vmem:[#allocation3 + $0x1d8] sm:$0xff]
      %v1102 = vld [vmem:[#allocation3 + $0x1e0] sm:$0xff]
      %v1103 = vld [vmem:[#allocation3 + $0x1e8] sm:$0xff]
      %v1104 = vld [vmem:[#allocation3 + $0x1f0] sm:$0xff]
      %v1105 = vld [vmem:[#allocation3 + $0x1f8] sm:$0xff]
      %v1106 = vld [vmem:[#allocation3 + $0x200] sm:$0xff]
      %v1107 = vld [vmem:[#allocation3 + $0x208] sm:$0xff]
      %v1108 = vld [vmem:[#allocation3 + $0x210] sm:$0xff]
      %v1109 = vld [vmem:[#allocation3 + $0x218] sm:$0xff]
      %v1110 = vld [vmem:[#allocation3 + $0x220] sm:$0xff]
      %v1111 = vld [vmem:[#allocation3 + $0x228] sm:$0xff]
      %v1112 = vld [vmem:[#allocation3 + $0x230] sm:$0xff]
      %v1113 = vld [vmem:[#allocation3 + $0x238] sm:$0xff]
      %v1114 = vld [vmem:[#allocation3 + $0x240] sm:$0xff]
      %v1115 = vld [vmem:[#allocation3 + $0x248] sm:$0xff]
      %v1116 = vld [vmem:[#allocation3 + $0x250] sm:$0xff]
      %v1117 = vld [vmem:[#allocation3 + $0x258] sm:$0xff]
      %v1118 = vld [vmem:[#allocation3 + $0x260] sm:$0xff]
      %v1119 = vld [vmem:[#allocation3 + $0x268] sm:$0xff]
      %v1120 = vld [vmem:[#allocation3 + $0x270] sm:$0xff]
      %v1121 = vld [vmem:[#allocation3 + $0x278] sm:$0xff]
      %v1122 = vld [vmem:[#allocation3 + $0x280] sm:$0xff]
      %v1123 = vld [vmem:[#allocation3 + $0x288] sm:$0xff]
      %v1124 = vld [vmem:[#allocation3 + $0x290] sm:$0xff]
      %v1125 = vld [vmem:[#allocation3 + $0x298] sm:$0xff]
      %v1126 = vld [vmem:[#allocation3 + $0x2a0] sm:$0xff]
      %v1127 = vld [vmem:[#allocation3 + $0x2a8] sm:$0xff]
      %v1128 = vld [vmem:[#allocation3 + $0x2b0] sm:$0xff]
      %v1129 = vld [vmem:[#allocation3 + $0x2b8] sm:$0xff]
      %v1130 = vld [vmem:[#allocation3 + $0x2c0] sm:$0xff]
      %v1131 = vld [vmem:[#allocation3 + $0x2c8] sm:$0xff]
      %v1132 = vld [vmem:[#allocation3 + $0x2d0] sm:$0xff]
      %v1133 = vld [vmem:[#allocation3 + $0x2d8] sm:$0xff]
      %v1134 = vld [vmem:[#allocation3 + $0x2e0] sm:$0xff]
      %v1135 = vld [vmem:[#allocation3 + $0x2e8] sm:$0xff]
      %v1136 = vld [vmem:[#allocation3 + $0x2f0] sm:$0xff]
      %v1137 = vld [vmem:[#allocation3 + $0x2f8] sm:$0xff]
      %v1138 = vld [vmem:[#allocation3 + $0x300] sm:$0xff]
      %v1139 = vld [vmem:[#allocation3 + $0x308] sm:$0xff]
      %v1140 = vld [vmem:[#allocation3 + $0x310] sm:$0xff]
      %v1141 = vld [vmem:[#allocation3 + $0x318] sm:$0xff]
      %v1142 = vld [vmem:[#allocation3 + $0x320] sm:$0xff]
      %v1143 = vld [vmem:[#allocation3 + $0x328] sm:$0xff]
      %v1144 = vld [vmem:[#allocation3 + $0x330] sm:$0xff]
      %v1145 = vld [vmem:[#allocation3 + $0x338] sm:$0xff]
      %v1146 = vld [vmem:[#allocation3 + $0x340] sm:$0xff]
      %v1147 = vld [vmem:[#allocation3 + $0x348] sm:$0xff]
      %v1148 = vld [vmem:[#allocation3 + $0x350] sm:$0xff]
      %v1149 = vld [vmem:[#allocation3 + $0x358] sm:$0xff]
      %v1150 = vld [vmem:[#allocation3 + $0x360] sm:$0xff]
      %v1151 = vld [vmem:[#allocation3 + $0x368] sm:$0xff]
      %v1152 = vld [vmem:[#allocation3 + $0x370] sm:$0xff]
      %v1153 = vld [vmem:[#allocation3 + $0x378] sm:$0xff]
      %v1154 = vld [vmem:[#allocation3 + $0x380] sm:$0xff]
      %v1155 = vld [vmem:[#allocation3 + $0x388] sm:$0xff]
      %v1156 = vld [vmem:[#allocation3 + $0x390] sm:$0xff]
      %v1157 = vld [vmem:[#allocation3 + $0x398] sm:$0xff]
      %v1158 = vld [vmem:[#allocation3 + $0x3a0] sm:$0xff]
      %v1159 = vld [vmem:[#allocation3 + $0x3a8] sm:$0xff]
      %v1160 = vld [vmem:[#allocation3 + $0x3b0] sm:$0xff]
      %v1161 = vld [vmem:[#allocation3 + $0x3b8] sm:$0xff]
      %v1162 = vld [vmem:[#allocation3 + $0x3c0] sm:$0xff]
      %v1163 = vld [vmem:[#allocation3 + $0x3c8] sm:$0xff]
      %v1164 = vld [vmem:[#allocation3 + $0x3d0] sm:$0xff]
      %v1165 = vld [vmem:[#allocation3 + $0x3d8] sm:$0xff]
      %v1166 = vld [vmem:[#allocation3 + $0x3e0] sm:$0xff]
      %v1167 = vld [vmem:[#allocation3 + $0x3e8] sm:$0xff]
      %v1168 = vld [vmem:[#allocation3 + $0x3f0] sm:$0xff]
      %v1169 = vld [vmem:[#allocation3 + $0x3f8] sm:$0xff]
      %v1170 = vld [vmem:[#allocation3 + $0x400] sm:$0xff]
      %v1171 = vld [vmem:[#allocation3 + $0x408] sm:$0xff]
      %v1172 = vld [vmem:[#allocation3 + $0x410] sm:$0xff]
      %v1173 = vld [vmem:[#allocation3 + $0x418] sm:$0xff]
      %v1174 = vld [vmem:[#allocation3 + $0x420] sm:$0xff]
      %v1175 = vld [vmem:[#allocation3 + $0x428] sm:$0xff]
      %v1176 = vld [vmem:[#allocation3 + $0x430] sm:$0xff]
      %v1177 = vld [vmem:[#allocation3 + $0x438] sm:$0xff]
      %v1178 = vld [vmem:[#allocation3 + $0x440] sm:$0xff]
      %v1179 = vld [vmem:[#allocation3 + $0x448] sm:$0xff]
      %v1180 = vld [vmem:[#allocation3 + $0x450] sm:$0xff]
      %v1181 = vld [vmem:[#allocation3 + $0x458] sm:$0xff]
      %v1182 = vld [vmem:[#allocation3 + $0x460] sm:$0xff]
      %v1183 = vld [vmem:[#allocation3 + $0x468] sm:$0xff]
      %v1184 = vld [vmem:[#allocation3 + $0x470] sm:$0xff]
      %v1185 = vld [vmem:[#allocation3 + $0x478] sm:$0xff]
      %v1186 = vld [vmem:[#allocation3 + $0x480] sm:$0xff]
      %v1187 = vld [vmem:[#allocation3 + $0x488] sm:$0xff]
      %v1188 = vld [vmem:[#allocation3 + $0x490] sm:$0xff]
      %v1189 = vld [vmem:[#allocation3 + $0x498] sm:$0xff]
      %v1190 = vld [vmem:[#allocation3 + $0x4a0] sm:$0xff]
      %v1191 = vld [vmem:[#allocation3 + $0x4a8] sm:$0xff]
      %v1192 = vld [vmem:[#allocation3 + $0x4b0] sm:$0xff]
      %v1193 = vld [vmem:[#allocation3 + $0x4b8] sm:$0xff]
      %v1194 = vld [vmem:[#allocation3 + $0x4c0] sm:$0xff]
      %v1195 = vld [vmem:[#allocation3 + $0x4c8] sm:$0xff]
      %v1196 = vld [vmem:[#allocation3 + $0x4d0] sm:$0xff]
      %v1197 = vld [vmem:[#allocation3 + $0x4d8] sm:$0xff]
      %v1198 = vld [vmem:[#allocation3 + $0x4e0] sm:$0xff]
      %v1199 = vld [vmem:[#allocation3 + $0x4e8] sm:$0xff]
      %v1200 = vld [vmem:[#allocation3 + $0x4f0] sm:$0xff]
      %v1201 = vld [vmem:[#allocation3 + $0x4f8] sm:$0xff]
      %v1202 = vld [vmem:[#allocation3 + $0x500] sm:$0xff]
      %v1203 = vld [vmem:[#allocation3 + $0x508] sm:$0xff]
      %v1204 = vld [vmem:[#allocation3 + $0x510] sm:$0xff]
      %v1205 = vld [vmem:[#allocation3 + $0x518] sm:$0xff]
      %v1206 = vld [vmem:[#allocation3 + $0x520] sm:$0xff]
      %v1207 = vld [vmem:[#allocation3 + $0x528] sm:$0xff]
      %v1208 = vld [vmem:[#allocation3 + $0x530] sm:$0xff]
      %v1209 = vld [vmem:[#allocation3 + $0x538] sm:$0xff]
      %v1210 = vld [vmem:[#allocation3 + $0x540] sm:$0xff]
      %v1211 = vld [vmem:[#allocation3 + $0x548] sm:$0xff]
      %v1212 = vld [vmem:[#allocation3 + $0x550] sm:$0xff]
      %v1213 = vld [vmem:[#allocation3 + $0x558] sm:$0xff]
      %v1214 = vld [vmem:[#allocation3 + $0x560] sm:$0xff]
      %v1215 = vld [vmem:[#allocation3 + $0x568] sm:$0xff]
      %v1216 = vld [vmem:[#allocation3 + $0x570] sm:$0xff]
      %v1217 = vld [vmem:[#allocation3 + $0x578] sm:$0xff]
      %v1218 = vld [vmem:[#allocation3 + $0x580] sm:$0xff]
      %v1219 = vld [vmem:[#allocation3 + $0x588] sm:$0xff]
      %v1220 = vld [vmem:[#allocation3 + $0x590] sm:$0xff]
      %v1221 = vld [vmem:[#allocation3 + $0x598] sm:$0xff]
      %v1222 = vld [vmem:[#allocation3 + $0x5a0] sm:$0xff]
      %v1223 = vld [vmem:[#allocation3 + $0x5a8] sm:$0xff]
      %v1224 = vld [vmem:[#allocation3 + $0x5b0] sm:$0xff]
      %v1225 = vld [vmem:[#allocation3 + $0x5b8] sm:$0xff]
      %v1226 = vld [vmem:[#allocation3 + $0x5c0] sm:$0xff]
      %v1227 = vld [vmem:[#allocation3 + $0x5c8] sm:$0xff]
      %v1228 = vld [vmem:[#allocation3 + $0x5d0] sm:$0xff]
      %v1229 = vld [vmem:[#allocation3 + $0x5d8] sm:$0xff]
      %v1230 = vld [vmem:[#allocation3 + $0x5e0] sm:$0xff]
      %v1231 = vld [vmem:[#allocation3 + $0x5e8] sm:$0xff]
      %v1232 = vld [vmem:[#allocation3 + $0x5f0] sm:$0xff]
      %v1233 = vld [vmem:[#allocation3 + $0x5f8] sm:$0xff]
      %v1234 = vld [vmem:[#allocation3 + $0x600] sm:$0xff]
      %v1235 = vld [vmem:[#allocation3 + $0x608] sm:$0xff]
      %v1236 = vld [vmem:[#allocation3 + $0x610] sm:$0xff]
      %v1237 = vld [vmem:[#allocation3 + $0x618] sm:$0xff]
      %v1238 = vld [vmem:[#allocation3 + $0x620] sm:$0xff]
      %v1239 = vld [vmem:[#allocation3 + $0x628] sm:$0xff]
      %v1240 = vld [vmem:[#allocation3 + $0x630] sm:$0xff]
      %v1241 = vld [vmem:[#allocation3 + $0x638] sm:$0xff]
      %v1242 = vld [vmem:[#allocation3 + $0x640] sm:$0xff]
      %v1243 = vld [vmem:[#allocation3 + $0x648] sm:$0xff]
      %v1244 = vld [vmem:[#allocation3 + $0x650] sm:$0xff]
      %v1245 = vld [vmem:[#allocation3 + $0x658] sm:$0xff]
      %v1246 = vld [vmem:[#allocation3 + $0x660] sm:$0xff]
      %v1247 = vld [vmem:[#allocation3 + $0x668] sm:$0xff]
      %v1248 = vld [vmem:[#allocation3 + $0x670] sm:$0xff]
      %v1249 = vld [vmem:[#allocation3 + $0x678] sm:$0xff]
      %v1250 = vld [vmem:[#allocation3 + $0x680] sm:$0xff]
      %v1251 = vld [vmem:[#allocation3 + $0x688] sm:$0xff]
      %v1252 = vld [vmem:[#allocation3 + $0x690] sm:$0xff]
      %v1253 = vld [vmem:[#allocation3 + $0x698] sm:$0xff]
      %v1254 = vld [vmem:[#allocation3 + $0x6a0] sm:$0xff]
      %v1255 = vld [vmem:[#allocation3 + $0x6a8] sm:$0xff]
      %v1256 = vld [vmem:[#allocation3 + $0x6b0] sm:$0xff]
      %v1257 = vld [vmem:[#allocation3 + $0x6b8] sm:$0xff]
      %v1258 = vld [vmem:[#allocation3 + $0x6c0] sm:$0xff]
      %v1259 = vld [vmem:[#allocation3 + $0x6c8] sm:$0xff]
      %v1260 = vld [vmem:[#allocation3 + $0x6d0] sm:$0xff]
      %v1261 = vld [vmem:[#allocation3 + $0x6d8] sm:$0xff]
      %v1262 = vld [vmem:[#allocation3 + $0x6e0] sm:$0xff]
      %v1263 = vld [vmem:[#allocation3 + $0x6e8] sm:$0xff]
      %v1264 = vld [vmem:[#allocation3 + $0x6f0] sm:$0xff]
      %v1265 = vld [vmem:[#allocation3 + $0x6f8] sm:$0xff]
      %v1266 = vld [vmem:[#allocation3 + $0x700] sm:$0xff]
      %v1267 = vld [vmem:[#allocation3 + $0x708] sm:$0xff]
      %v1268 = vld [vmem:[#allocation3 + $0x710] sm:$0xff]
      %v1269 = vld [vmem:[#allocation3 + $0x718] sm:$0xff]
      %v1270 = vld [vmem:[#allocation3 + $0x720] sm:$0xff]
      %v1271 = vld [vmem:[#allocation3 + $0x728] sm:$0xff]
      %v1272 = vld [vmem:[#allocation3 + $0x730] sm:$0xff]
      %v1273 = vld [vmem:[#allocation3 + $0x738] sm:$0xff]
      %v1274 = vld [vmem:[#allocation3 + $0x740] sm:$0xff]
      %v1275 = vld [vmem:[#allocation3 + $0x748] sm:$0xff]
      %v1276 = vld [vmem:[#allocation3 + $0x750] sm:$0xff]
      %v1277 = vld [vmem:[#allocation3 + $0x758] sm:$0xff]
      %v1278 = vld [vmem:[#allocation3 + $0x760] sm:$0xff]
      %v1279 = vld [vmem:[#allocation3 + $0x768] sm:$0xff]
      %v1280 = vld [vmem:[#allocation3 + $0x770] sm:$0xff]
      %v1281 = vld [vmem:[#allocation3 + $0x778] sm:$0xff]
      %v1282 = vld [vmem:[#allocation3 + $0x780] sm:$0xff]
      %v1283 = vld [vmem:[#allocation3 + $0x788] sm:$0xff]
      %v1284 = vld [vmem:[#allocation3 + $0x790] sm:$0xff]
      %v1285 = vld [vmem:[#allocation3 + $0x798] sm:$0xff]
      %v1286 = vld [vmem:[#allocation3 + $0x7a0] sm:$0xff]
      %v1287 = vld [vmem:[#allocation3 + $0x7a8] sm:$0xff]
      %v1288 = vld [vmem:[#allocation3 + $0x7b0] sm:$0xff]
      %v1289 = vld [vmem:[#allocation3 + $0x7b8] sm:$0xff]
      %v1290 = vld [vmem:[#allocation3 + $0x7c0] sm:$0xff]
      %v1291 = vld [vmem:[#allocation3 + $0x7c8] sm:$0xff]
      %v1292 = vld [vmem:[#allocation3 + $0x7d0] sm:$0xff]
      %v1293 = vld [vmem:[#allocation3 + $0x7d8] sm:$0xff]
      %v1294 = vld [vmem:[#allocation3 + $0x7e0] sm:$0xff]
      %v1295 = vld [vmem:[#allocation3 + $0x7e8] sm:$0xff]
      %v1296 = vld [vmem:[#allocation3 + $0x7f0] sm:$0xff]
      %v1297 = vld [vmem:[#allocation3 + $0x7f8] sm:$0xff]
      %v1298 = vld [vmem:[#allocation3 + $0x800] sm:$0xff]
      %v1299 = vld [vmem:[#allocation3 + $0x808] sm:$0xff]
      %v1300 = vld [vmem:[#allocation3 + $0x810] sm:$0xff]
      %v1301 = vld [vmem:[#allocation3 + $0x818] sm:$0xff]
      %v1302 = vld [vmem:[#allocation3 + $0x820] sm:$0xff]
      %v1303 = vld [vmem:[#allocation3 + $0x828] sm:$0xff]
      %v1304 = vld [vmem:[#allocation3 + $0x830] sm:$0xff]
      %v1305 = vld [vmem:[#allocation3 + $0x838] sm:$0xff]
      %v1306 = vld [vmem:[#allocation3 + $0x840] sm:$0xff]
      %v1307 = vld [vmem:[#allocation3 + $0x848] sm:$0xff]
      %v1308 = vld [vmem:[#allocation3 + $0x850] sm:$0xff]
      %v1309 = vld [vmem:[#allocation3 + $0x858] sm:$0xff]
      %v1310 = vld [vmem:[#allocation3 + $0x860] sm:$0xff]
      %v1311 = vld [vmem:[#allocation3 + $0x868] sm:$0xff]
      %v1312 = vld [vmem:[#allocation3 + $0x870] sm:$0xff]
      %v1313 = vld [vmem:[#allocation3 + $0x878] sm:$0xff]
      %v1314 = vld [vmem:[#allocation3 + $0x880] sm:$0xff]
      %v1315 = vld [vmem:[#allocation3 + $0x888] sm:$0xff]
      %v1316 = vld [vmem:[#allocation3 + $0x890] sm:$0xff]
      %v1317 = vld [vmem:[#allocation3 + $0x898] sm:$0xff]
      %v1318 = vld [vmem:[#allocation3 + $0x8a0] sm:$0xff]
      %v1319 = vld [vmem:[#allocation3 + $0x8a8] sm:$0xff]
      %v1320 = vld [vmem:[#allocation3 + $0x8b0] sm:$0xff]
      %v1321 = vld [vmem:[#allocation3 + $0x8b8] sm:$0xff]
      %v1322 = vld [vmem:[#allocation3 + $0x8c0] sm:$0xff]
      %v1323 = vld [vmem:[#allocation3 + $0x8c8] sm:$0xff]
      %v1324 = vld [vmem:[#allocation3 + $0x8d0] sm:$0xff]
      %v1325 = vld [vmem:[#allocation3 + $0x8d8] sm:$0xff]
      %v1326 = vld [vmem:[#allocation3 + $0x8e0] sm:$0xff]
      %v1327 = vld [vmem:[#allocation3 + $0x8e8] sm:$0xff]
      %v1328 = vld [vmem:[#allocation3 + $0x8f0] sm:$0xff]
      %v1329 = vld [vmem:[#allocation3 + $0x8f8] sm:$0xff]
      %v1330 = vld [vmem:[%s1] sm:$0xff]
      %v1331 = vld [vmem:[%s1 + $0x8] sm:$0xff]
      %v1332 = vld [vmem:[%s1 + $0x10] sm:$0xff]
      %v1333 = vld [vmem:[%s1 + $0x18] sm:$0xff]
      %v1334 = vld [vmem:[%s1 + $0x20] sm:$0xff]
      %v1335 = vld [vmem:[%s1 + $0x28] sm:$0xff]
      %v1336 = vld [vmem:[%s1 + $0x30] sm:$0xff]
      %v1337 = vld [vmem:[%s1 + $0x38] sm:$0xff]
      %v1338 = vld [vmem:[%s1 + $0x40] sm:$0xff]
      %v1339 = vld [vmem:[%s1 + $0x48] sm:$0xff]
      %v1340 = vld [vmem:[%s1 + $0x50] sm:$0xff]
      %v1341 = vld [vmem:[%s1 + $0x58] sm:$0xff]
      %v1342 = vld [vmem:[%s1 + $0x60] sm:$0xff]
      %v1343 = vld [vmem:[%s1 + $0x68] sm:$0xff]
      %v1344 = vld [vmem:[%s1 + $0x70] sm:$0xff]
      %v1345 = vld [vmem:[%s1 + $0x78] sm:$0xff]
      %v1346 = vld [vmem:[%s1 + $0x80] sm:$0xff]
      %v1347 = vld [vmem:[%s1 + $0x88] sm:$0xff]
      %v1348 = vld [vmem:[%s1 + $0x90] sm:$0xff]
      %v1349 = vld [vmem:[%s1 + $0x98] sm:$0xff]
      %v1350 = vld [vmem:[%s1 + $0xa0] sm:$0xff]
      %v1351 = vld [vmem:[%s1 + $0xa8] sm:$0xff]
      %v1352 = vld [vmem:[%s1 + $0xb0] sm:$0xff]
      %v1353 = vld [vmem:[%s1 + $0xb8] sm:$0xff]
      %v1354 = vld [vmem:[%s1 + $0xc0] sm:$0xff]
      %v1355 = vld [vmem:[%s1 + $0xc8] sm:$0xff]
      %v1356 = vld [vmem:[%s1 + $0xd0] sm:$0xff]
      %v1357 = vld [vmem:[%s1 + $0xd8] sm:$0xff]
      %v1358 = vld [vmem:[%s1 + $0xe0] sm:$0xff]
      %v1359 = vld [vmem:[%s1 + $0xe8] sm:$0xff]
      %v1360 = vld [vmem:[%s1 + $0xf0] sm:$0xff]
      %v1361 = vld [vmem:[%s1 + $0xf8] sm:$0xff]
      %v1362 = vld [vmem:[%s1 + $0x100] sm:$0xff]
      %v1363 = vld [vmem:[%s1 + $0x108] sm:$0xff]
      %v1364 = vld [vmem:[%s1 + $0x110] sm:$0xff]
      %v1365 = vld [vmem:[%s1 + $0x118] sm:$0xff]
      %v1366 = vld [vmem:[%s1 + $0x120] sm:$0xff]
      %v1367 = vld [vmem:[%s1 + $0x128] sm:$0xff]
      %v1368 = vld [vmem:[%s1 + $0x130] sm:$0xff]
      %v1369 = vld [vmem:[%s1 + $0x138] sm:$0xff]
      %v1370 = vld [vmem:[%s1 + $0x140] sm:$0xff]
      %v1371 = vld [vmem:[%s1 + $0x148] sm:$0xff]
      %v1372 = vld [vmem:[%s1 + $0x150] sm:$0xff]
      %v1373 = vld [vmem:[%s1 + $0x158] sm:$0xff]
      %v1374 = vld [vmem:[%s1 + $0x160] sm:$0xff]
      %v1375 = vld [vmem:[%s1 + $0x168] sm:$0xff]
      %v1376 = vld [vmem:[%s1 + $0x170] sm:$0xff]
      %v1377 = vld [vmem:[%s1 + $0x178] sm:$0xff]
      %v1378 = vld [vmem:[%s1 + $0x180] sm:$0xff]
      %v1379 = vld [vmem:[%s1 + $0x188] sm:$0xff]
      %v1380 = vld [vmem:[%s1 + $0x190] sm:$0xff]
      %v1381 = vld [vmem:[%s1 + $0x198] sm:$0xff]
      %v1382 = vld [vmem:[%s1 + $0x1a0] sm:$0xff]
      %v1383 = vld [vmem:[%s1 + $0x1a8] sm:$0xff]
      %v1384 = vld [vmem:[%s1 + $0x1b0] sm:$0xff]
      %v1385 = vld [vmem:[%s1 + $0x1b8] sm:$0xff]
      %v1386 = vld [vmem:[%s1 + $0x1c0] sm:$0xff]
      %v1387 = vld [vmem:[%s1 + $0x1c8] sm:$0xff]
      %v1388 = vld [vmem:[%s1 + $0x1d0] sm:$0xff]
      %v1389 = vld [vmem:[%s1 + $0x1d8] sm:$0xff]
      %v1390 = vld [vmem:[%s1 + $0x1e0] sm:$0xff]
      %v1391 = vld [vmem:[%s1 + $0x1e8] sm:$0xff]
      %v1392 = vld [vmem:[%s1 + $0x1f0] sm:$0xff]
      %v1393 = vld [vmem:[%s1 + $0x1f8] sm:$0xff]
      %v1394 = vld [vmem:[%s1 + $0x200] sm:$0xff]
      %v1395 = vld [vmem:[%s1 + $0x208] sm:$0xff]
      %v1396 = vld [vmem:[%s1 + $0x210] sm:$0xff]
      %v1397 = vld [vmem:[%s1 + $0x218] sm:$0xff]
      %v1398 = vld [vmem:[%s1 + $0x220] sm:$0xff]
      %v1399 = vld [vmem:[%s1 + $0x228] sm:$0xff]
      %v1400 = vld [vmem:[%s1 + $0x230] sm:$0xff]
      %v1401 = vld [vmem:[%s1 + $0x238] sm:$0xff]
      %v1402 = vld [vmem:[%s1 + $0x240] sm:$0xff]
      %v1403 = vld [vmem:[%s1 + $0x248] sm:$0xff]
      %v1404 = vld [vmem:[%s1 + $0x250] sm:$0xff]
      %v1405 = vld [vmem:[%s1 + $0x258] sm:$0xff]
      %v1406 = vld [vmem:[%s1 + $0x260] sm:$0xff]
      %v1407 = vld [vmem:[%s1 + $0x268] sm:$0xff]
      %v1408 = vld [vmem:[%s1 + $0x270] sm:$0xff]
      %v1409 = vld [vmem:[%s1 + $0x278] sm:$0xff]
      %v1410 = vld [vmem:[%s1 + $0x280] sm:$0xff]
      %v1411 = vld [vmem:[%s1 + $0x288] sm:$0xff]
      %v1412 = vld [vmem:[%s1 + $0x290] sm:$0xff]
      %v1413 = vld [vmem:[%s1 + $0x298] sm:$0xff]
      %v1414 = vld [vmem:[%s1 + $0x2a0] sm:$0xff]
      %v1415 = vld [vmem:[%s1 + $0x2a8] sm:$0xff]
      %v1416 = vld [vmem:[%s1 + $0x2b0] sm:$0xff]
      %v1417 = vld [vmem:[%s1 + $0x2b8] sm:$0xff]
      %v1418 = vld [vmem:[%s1 + $0x2c0] sm:$0xff]
      %v1419 = vld [vmem:[%s1 + $0x2c8] sm:$0xff]
      %v1420 = vld [vmem:[%s1 + $0x2d0] sm:$0xff]
      %v1421 = vld [vmem:[%s1 + $0x2d8] sm:$0xff]
      %v1422 = vld [vmem:[%s1 + $0x2e0] sm:$0xff]
      %v1423 = vld [vmem:[%s1 + $0x2e8] sm:$0xff]
      %v1424 = vld [vmem:[%s1 + $0x2f0] sm:$0xff]
      %v1425 = vld [vmem:[%s1 + $0x2f8] sm:$0xff]
      %v1426 = vld [vmem:[%s1 + $0x300] sm:$0xff]
      %v1427 = vld [vmem:[%s1 + $0x308] sm:$0xff]
      %v1428 = vld [vmem:[%s1 + $0x310] sm:$0xff]
      %v1429 = vld [vmem:[%s1 + $0x318] sm:$0xff]
      %v1430 = vld [vmem:[%s1 + $0x320] sm:$0xff]
      %v1431 = vld [vmem:[%s1 + $0x328] sm:$0xff]
      %v1432 = vld [vmem:[%s1 + $0x330] sm:$0xff]
      %v1433 = vld [vmem:[%s1 + $0x338] sm:$0xff]
      %v1434 = vld [vmem:[%s1 + $0x340] sm:$0xff]
      %v1435 = vld [vmem:[%s1 + $0x348] sm:$0xff]
      %v1436 = vld [vmem:[%s1 + $0x350] sm:$0xff]
      %v1437 = vld [vmem:[%s1 + $0x358] sm:$0xff]
      %v1438 = vld [vmem:[%s1 + $0x360] sm:$0xff]
      %v1439 = vld [vmem:[%s1 + $0x368] sm:$0xff]
      %v1440 = vld [vmem:[%s1 + $0x370] sm:$0xff]
      %v1441 = vld [vmem:[%s1 + $0x378] sm:$0xff]
      %v1442 = vld [vmem:[%s1 + $0x380] sm:$0xff]
      %v1443 = vld [vmem:[%s1 + $0x388] sm:$0xff]
      %v1444 = vld [vmem:[%s1 + $0x390] sm:$0xff]
      %v1445 = vld [vmem:[%s1 + $0x398] sm:$0xff]
      %v1446 = vld [vmem:[%s1 + $0x3a0] sm:$0xff]
      %v1447 = vld [vmem:[%s1 + $0x3a8] sm:$0xff]
      %v1448 = vld [vmem:[%s1 + $0x3b0] sm:$0xff]
      %v1449 = vld [vmem:[%s1 + $0x3b8] sm:$0xff]
      %v1450 = vld [vmem:[%s1 + $0x3c0] sm:$0xff]
      %v1451 = vld [vmem:[%s1 + $0x3c8] sm:$0xff]
      %v1452 = vld [vmem:[%s1 + $0x3d0] sm:$0xff]
      %v1453 = vld [vmem:[%s1 + $0x3d8] sm:$0xff]
      %v1454 = vld [vmem:[%s1 + $0x3e0] sm:$0xff]
      %v1455 = vld [vmem:[%s1 + $0x3e8] sm:$0xff]
      %v1456 = vld [vmem:[%s1 + $0x3f0] sm:$0xff]
      %v1457 = vld [vmem:[%s1 + $0x3f8] sm:$0xff]
      %v1458 = vld [vmem:[%s1 + $0x400] sm:$0xff]
      %v1459 = vld [vmem:[%s1 + $0x408] sm:$0xff]
      %v1460 = vld [vmem:[%s1 + $0x410] sm:$0xff]
      %v1461 = vld [vmem:[%s1 + $0x418] sm:$0xff]
      %v1462 = vld [vmem:[%s1 + $0x420] sm:$0xff]
      %v1463 = vld [vmem:[%s1 + $0x428] sm:$0xff]
      %v1464 = vld [vmem:[%s1 + $0x430] sm:$0xff]
      %v1465 = vld [vmem:[%s1 + $0x438] sm:$0xff]
      %v1466 = vld [vmem:[%s1 + $0x440] sm:$0xff]
      %v1467 = vld [vmem:[%s1 + $0x448] sm:$0xff]
      %v1468 = vld [vmem:[%s1 + $0x450] sm:$0xff]
      %v1469 = vld [vmem:[%s1 + $0x458] sm:$0xff]
      %v1470 = vld [vmem:[%s1 + $0x460] sm:$0xff]
      %v1471 = vld [vmem:[%s1 + $0x468] sm:$0xff]
      %v1472 = vld [vmem:[%s1 + $0x470] sm:$0xff]
      %v1473 = vld [vmem:[%s1 + $0x478] sm:$0xff]
      %1474 = vmatprep.subr.mxu0 0.0
      %1475 = vmatpush1.msra.mxu0 %v1330
      %1476 = vmatprep.subr.mxu0 0.0
      %1477 = vmatpush1.msra.mxu0 %v1331
      %1478 = vmatprep.subr.mxu0 0.0
      %1479 = vmatpush1.msra.mxu0 %v1332
      %1480 = vmatprep.subr.mxu0 0.0
      %1481 = vmatpush1.msra.mxu0 %v1333
      %1482 = vmatprep.subr.mxu0 0.0
      %1483 = vmatpush1.msra.mxu0 %v1334
      %1484 = vmatprep.subr.mxu0 0.0
      %1485 = vmatpush1.msra.mxu0 %v1335
      %1486 = vmatprep.subr.mxu0 0.0
      %1487 = vmatpush1.msra.mxu0 %v1336
      %1488 = vmatprep.subr.mxu0 0.0
      %1489 = vmatpush1.msra.mxu0 %v1337
      %1490 = vmatprep.subr.mxu0 0.0
      %1491 = vmatpush1.msra.mxu0 %v1338
      %1492 = vmatprep.subr.mxu0 0.0
      %1493 = vmatpush1.msra.mxu0 %v1339
      %1494 = vmatprep.subr.mxu0 0.0
      %1495 = vmatpush1.msra.mxu0 %v1340
      %1496 = vmatprep.subr.mxu0 0.0
      %1497 = vmatpush1.msra.mxu0 %v1341
      %1498 = vmatprep.subr.mxu0 0.0
      %1499 = vmatpush1.msra.mxu0 %v1342
      %1500 = vmatprep.subr.mxu0 0.0
      %1501 = vmatpush1.msra.mxu0 %v1343
      %1502 = vmatprep.subr.mxu0 0.0
      %1503 = vmatpush1.msra.mxu0 %v1344
      %1504 = vmatprep.subr.mxu0 0.0
      %1505 = vmatpush1.msra.mxu0 %v1345
      %1506 = vmatprep.subr.mxu0 0.0
      %1507 = vmatpush1.msra.mxu0 %v1346
      %1508 = vmatprep.subr.mxu0 0.0
      %1509 = vmatpush1.msra.mxu0 %v1347
      %1510 = vmatprep.subr.mxu0 0.0
      %1511 = vmatpush1.msra.mxu0 %v1348
      %1512 = vmatprep.subr.mxu0 0.0
      %1513 = vmatpush1.msra.mxu0 %v1349
      %1514 = vmatprep.subr.mxu0 0.0
      %1515 = vmatpush1.msra.mxu0 %v1350
      %1516 = vmatprep.subr.mxu0 0.0
      %1517 = vmatpush1.msra.mxu0 %v1351
      %1518 = vmatprep.subr.mxu0 0.0
      %1519 = vmatpush1.msra.mxu0 %v1352
      %1520 = vmatprep.subr.mxu0 0.0
      %1521 = vmatpush1.msra.mxu0 %v1353
      %1522 = vmatprep.subr.mxu0 0.0
      %1523 = vmatpush1.msra.mxu0 %v1354
      %1524 = vmatprep.subr.mxu0 0.0
      %1525 = vmatpush1.msra.mxu0 %v1355
      %1526 = vmatprep.subr.mxu0 0.0
      %1527 = vmatpush1.msra.mxu0 %v1356
      %1528 = vmatprep.subr.mxu0 0.0
      %1529 = vmatpush1.msra.mxu0 %v1357
      %1530 = vmatprep.subr.mxu0 0.0
      %1531 = vmatpush1.msra.mxu0 %v1358
      %1532 = vmatprep.subr.mxu0 0.0
      %1533 = vmatpush1.msra.mxu0 %v1359
      %1534 = vmatprep.subr.mxu0 0.0
      %1535 = vmatpush1.msra.mxu0 %v1360
      %1536 = vmatprep.subr.mxu0 0.0
      %1537 = vmatpush1.msra.mxu0 %v1361
      %1538 = vmatprep.mubr.f32.mxu0 %v1043
      %1539 = vmatmul.mubr.f32.gmra.mrb[0].mxu0 %v1042
      %v1540 = vpop.f32.mrb[0].mxu0
      %v1541 = vadd.f32 0.0, %v1540
      %v1542 = vpop.f32.mrb[0].mxu0
      %1543 = vmatprep.mubr.f32.mxu0 %v1052
      %1544 = vmatmul.mubr.f32.gmra.mrb[0].mxu0 %v1051
      %v1545 = vpop.f32.mrb[0].mxu0
      %v1546 = vadd.f32 0.0, %v1545
      %v1547 = vpop.f32.mrb[0].mxu0
      %1548 = vmatprep.mubr.f32.mxu0 %v1061
      %1549 = vmatmul.mubr.f32.gmra.mrb[0].mxu0 %v1060
      %v1550 = vpop.f32.mrb[0].mxu0
      %v1551 = vadd.f32 0.0, %v1550
      %v1552 = vpop.f32.mrb[0].mxu0
      %1553 = vmatprep.mubr.f32.mxu0 %v1070
      %1554 = vmatmul.mubr.f32.gmra.mrb[0].mxu0 %v1069
      %v1555 = vpop.f32.mrb[0].mxu0
      %v1556 = vadd.f32 0.0, %v1555
      %v1557 = vpop.f32.mrb[0].mxu0
      %1558 = vmatprep.mubr.f32.mxu0 %v1079
      %1559 = vmatmul.mubr.f32.gmra.mrb[0].mxu0 %v1078
      %v1560 = vpop.f32.mrb[0].mxu0
      %v1561 = vadd.f32 0.0, %v1560
      %v1562 = vpop.f32.mrb[0].mxu0
      %1563 = vmatprep.mubr.f32.mxu0 %v1088
      %1564 = vmatmul.mubr.f32.gmra.mrb[0].mxu0 %v1087
      %v1565 = vpop.f32.mrb[0].mxu0
      %v1566 = vadd.f32 0.0, %v1565
      %v1567 = vpop.f32.mrb[0].mxu0
      %1568 = vmatprep.mubr.f32.mxu0 %v1097
      %1569 = vmatmul.mubr.f32.gmra.mrb[0].mxu0 %v1096
      %v1570 = vpop.f32.mrb[0].mxu0
      %v1571 = vadd.f32 0.0, %v1570
      %v1572 = vpop.f32.mrb[0].mxu0
      %1573 = vmatprep.mubr.f32.mxu0 %v1106
      %1574 = vmatmul.mubr.f32.gmra.mrb[0].mxu0 %v1105
      %v1575 = vpop.f32.mrb[0].mxu0
      %v1576 = vadd.f32 0.0, %v1575
      %v1577 = vpop.f32.mrb[0].mxu0
      %1578 = vmatprep.mubr.f32.mxu0 %v1115
      %1579 = vmatmul.mubr.f32.gmra.mrb[0].mxu0 %v1114
      %v1580 = vpop.f32.mrb[0].mxu0
      %v1581 = vadd.f32 0.0, %v1580
      %v1582 = vpop.f32.mrb[0].mxu0
      %1583 = vmatprep.mubr.f32.mxu0 %v1124
      %1584 = vmatmul.mubr.f32.gmra.mrb[0].mxu0 %v1123
      %v1585 = vpop.f32.mrb[0].mxu0
      %v1586 = vadd.f32 0.0, %v1585
      %v1587 = vpop.f32.mrb[0].mxu0
      %1588 = vmatprep.mubr.f32.mxu0 %v1133
      %1589 = vmatmul.mubr.f32.gmra.mrb[0].mxu0 %v1132
      %v1590 = vpop.f32.mrb[0].mxu0
      %v1591 = vadd.f32 0.0, %v1590
      %v1592 = vpop.f32.mrb[0].mxu0
      %1593 = vmatprep.mubr.f32.mxu0 %v1142
      %1594 = vmatmul.mubr.f32.gmra.mrb[0].mxu0 %v1141
      %v1595 = vpop.f32.mrb[0].mxu0
      %v1596 = vadd.f32 0.0, %v1595
      %v1597 = vpop.f32.mrb[0].mxu0
      %1598 = vmatprep.mubr.f32.mxu0 %v1151
      %1599 = vmatmul.mubr.f32.gmra.mrb[0].mxu0 %v1150
      %v1600 = vpop.f32.mrb[0].mxu0
      %v1601 = vadd.f32 0.0, %v1600
      %v1602 = vpop.f32.mrb[0].mxu0
      %1603 = vmatprep.mubr.f32.mxu0 %v1160
      %1604 = vmatmul.mubr.f32.gmra.mrb[0].mxu0 %v1159
      %v1605 = vpop.f32.mrb[0].mxu0
      %v1606 = vadd.f32 0.0, %v1605
      %v1607 = vpop.f32.mrb[0].mxu0
      %1608 = vmatprep.mubr.f32.mxu0 %v1169
      %1609 = vmatmul.mubr.f32.gmra.mrb[0].mxu0 %v1168
      %v1610 = vpop.f32.mrb[0].mxu0
      %v1611 = vadd.f32 0.0, %v1610
      %v1612 = vpop.f32.mrb[0].mxu0
      %1613 = vmatprep.mubr.f32.mxu0 %v1178
      %1614 = vmatmul.mubr.f32.gmra.mrb[0].mxu0 %v1177
      %v1615 = vpop.f32.mrb[0].mxu0
      %v1616 = vadd.f32 0.0, %v1615
      %v1617 = vpop.f32.mrb[0].mxu0
      %1618 = vmatprep.mubr.f32.mxu0 %v1187
      %1619 = vmatmul.mubr.f32.gmra.mrb[0].mxu0 %v1186
      %v1620 = vpop.f32.mrb[0].mxu0
      %v1621 = vadd.f32 0.0, %v1620
      %v1622 = vpop.f32.mrb[0].mxu0
      %1623 = vmatprep.mubr.f32.mxu0 %v1196
      %1624 = vmatmul.mubr.f32.gmra.mrb[0].mxu0 %v1195
      %v1625 = vpop.f32.mrb[0].mxu0
      %v1626 = vadd.f32 0.0, %v1625
      %v1627 = vpop.f32.mrb[0].mxu0
      %1628 = vmatprep.mubr.f32.mxu0 %v1205
      %1629 = vmatmul.mubr.f32.gmra.mrb[0].mxu0 %v1204
      %v1630 = vpop.f32.mrb[0].mxu0
      %v1631 = vadd.f32 0.0, %v1630
      %v1632 = vpop.f32.mrb[0].mxu0
      %1633 = vmatprep.mubr.f32.mxu0 %v1214
      %1634 = vmatmul.mubr.f32.gmra.mrb[0].mxu0 %v1213
      %v1635 = vpop.f32.mrb[0].mxu0
      %v1636 = vadd.f32 0.0, %v1635
      %v1637 = vpop.f32.mrb[0].mxu0
      %1638 = vmatprep.mubr.f32.mxu0 %v1223
      %1639 = vmatmul.mubr.f32.gmra.mrb[0].mxu0 %v1222
      %v1640 = vpop.f32.mrb[0].mxu0
      %v1641 = vadd.f32 0.0, %v1640
      %v1642 = vpop.f32.mrb[0].mxu0
      %1643 = vmatprep.mubr.f32.mxu0 %v1232
      %1644 = vmatmul.mubr.f32.gmra.mrb[0].mxu0 %v1231
      %v1645 = vpop.f32.mrb[0].mxu0
      %v1646 = vadd.f32 0.0, %v1645
      %v1647 = vpop.f32.mrb[0].mxu0
      %1648 = vmatprep.mubr.f32.mxu0 %v1241
      %1649 = vmatmul.mubr.f32.gmra.mrb[0].mxu0 %v1240
      %v1650 = vpop.f32.mrb[0].mxu0
      %v1651 = vadd.f32 0.0, %v1650
      %v1652 = vpop.f32.mrb[0].mxu0
      %1653 = vmatprep.mubr.f32.mxu0 %v1250
      %1654 = vmatmul.mubr.f32.gmra.mrb[0].mxu0 %v1249
      %v1655 = vpop.f32.mrb[0].mxu0
      %v1656 = vadd.f32 0.0, %v1655
      %v1657 = vpop.f32.mrb[0].mxu0
      %1658 = vmatprep.mubr.f32.mxu0 %v1259
      %1659 = vmatmul.mubr.f32.gmra.mrb[0].mxu0 %v1258
      %v1660 = vpop.f32.mrb[0].mxu0
      %v1661 = vadd.f32 0.0, %v1660
      %v1662 = vpop.f32.mrb[0].mxu0
      %1663 = vmatprep.mubr.f32.mxu0 %v1268
      %1664 = vmatmul.mubr.f32.gmra.mrb[0].mxu0 %v1267
      %v1665 = vpop.f32.mrb[0].mxu0
      %v1666 = vadd.f32 0.0, %v1665
      %v1667 = vpop.f32.mrb[0].mxu0
      %1668 = vmatprep.mubr.f32.mxu0 %v1277
      %1669 = vmatmul.mubr.f32.gmra.mrb[0].mxu0 %v1276
      %v1670 = vpop.f32.mrb[0].mxu0
      %v1671 = vadd.f32 0.0, %v1670
      %v1672 = vpop.f32.mrb[0].mxu0
      %1673 = vmatprep.mubr.f32.mxu0 %v1286
      %1674 = vmatmul.mubr.f32.gmra.mrb[0].mxu0 %v1285
      %v1675 = vpop.f32.mrb[0].mxu0
      %v1676 = vadd.f32 0.0, %v1675
      %v1677 = vpop.f32.mrb[0].mxu0
      %1678 = vmatprep.mubr.f32.mxu0 %v1295
      %1679 = vmatmul.mubr.f32.gmra.mrb[0].mxu0 %v1294
      %v1680 = vpop.f32.mrb[0].mxu0
      %v1681 = vadd.f32 0.0, %v1680
      %v1682 = vpop.f32.mrb[0].mxu0
      %1683 = vmatprep.mubr.f32.mxu0 %v1304
      %1684 = vmatmul.mubr.f32.gmra.mrb[0].mxu0 %v1303
      %v1685 = vpop.f32.mrb[0].mxu0
      %v1686 = vadd.f32 0.0, %v1685
      %v1687 = vpop.f32.mrb[0].mxu0
      %1688 = vmatprep.mubr.f32.mxu0 %v1313
      %1689 = vmatmul.mubr.f32.gmra.mrb[0].mxu0 %v1312
      %v1690 = vpop.f32.mrb[0].mxu0
      %v1691 = vadd.f32 0.0, %v1690
      %v1692 = vpop.f32.mrb[0].mxu0
      %1693 = vmatprep.mubr.f32.mxu0 %v1322
      %1694 = vmatmul.mubr.f32.gmra.mrb[0].mxu0 %v1321
      %v1695 = vpop.f32.mrb[0].mxu0
      %v1696 = vadd.f32 0.0, %v1695
      %v1697 = vpop.f32.mrb[0].mxu0
      %1698 = vdwg.mxu0
      %1699 = vmatprep.subr.mxu0 0.0
      %1700 = vmatpush1.msra.mxu0 %v1362
      %1701 = vmatprep.subr.mxu0 0.0
      %1702 = vmatpush1.msra.mxu0 %v1363
      %1703 = vmatprep.subr.mxu0 0.0
      %1704 = vmatpush1.msra.mxu0 %v1364
      %1705 = vmatprep.subr.mxu0 0.0
      %1706 = vmatpush1.msra.mxu0 %v1365
      %1707 = vmatprep.subr.mxu0 0.0
      %1708 = vmatpush1.msra.mxu0 %v1366
      %1709 = vmatprep.subr.mxu0 0.0
      %1710 = vmatpush1.msra.mxu0 %v1367
      %1711 = vmatprep.subr.mxu0 0.0
      %1712 = vmatpush1.msra.mxu0 %v1368
      %1713 = vmatprep.subr.mxu0 0.0
      %1714 = vmatpush1.msra.mxu0 %v1369
      %1715 = vmatprep.subr.mxu0 0.0
      %1716 = vmatpush1.msra.mxu0 %v1370
      %1717 = vmatprep.subr.mxu0 0.0
      %1718 = vmatpush1.msra.mxu0 %v1371
      %1719 = vmatprep.subr.mxu0 0.0
      %1720 = vmatpush1.msra.mxu0 %v1372
      %1721 = vmatprep.subr.mxu0 0.0
      %1722 = vmatpush1.msra.mxu0 %v1373
      %1723 = vmatprep.subr.mxu0 0.0
      %1724 = vmatpush1.msra.mxu0 %v1374
      %1725 = vmatprep.subr.mxu0 0.0
      %1726 = vmatpush1.msra.mxu0 %v1375
      %1727 = vmatprep.subr.mxu0 0.0
      %1728 = vmatpush1.msra.mxu0 %v1376
      %1729 = vmatprep.subr.mxu0 0.0
      %1730 = vmatpush1.msra.mxu0 %v1377
      %1731 = vmatprep.subr.mxu0 0.0
      %1732 = vmatpush1.msra.mxu0 %v1378
      %1733 = vmatprep.subr.mxu0 0.0
      %1734 = vmatpush1.msra.mxu0 %v1379
      %1735 = vmatprep.subr.mxu0 0.0
      %1736 = vmatpush1.msra.mxu0 %v1380
      %1737 = vmatprep.subr.mxu0 0.0
      %1738 = vmatpush1.msra.mxu0 %v1381
      %1739 = vmatprep.subr.mxu0 0.0
      %1740 = vmatpush1.msra.mxu0 %v1382
      %1741 = vmatprep.subr.mxu0 0.0
      %1742 = vmatpush1.msra.mxu0 %v1383
      %1743 = vmatprep.subr.mxu0 0.0
      %1744 = vmatpush1.msra.mxu0 %v1384
      %1745 = vmatprep.subr.mxu0 0.0
      %1746 = vmatpush1.msra.mxu0 %v1385
      %1747 = vmatprep.subr.mxu0 0.0
      %1748 = vmatpush1.msra.mxu0 %v1386
      %1749 = vmatprep.subr.mxu0 0.0
      %1750 = vmatpush1.msra.mxu0 %v1387
      %1751 = vmatprep.subr.mxu0 0.0
      %1752 = vmatpush1.msra.mxu0 %v1388
      %1753 = vmatprep.subr.mxu0 0.0
      %1754 = vmatpush1.msra.mxu0 %v1389
      %1755 = vmatprep.subr.mxu0 0.0
      %1756 = vmatpush1.msra.mxu0 %v1390
      %1757 = vmatprep.subr.mxu0 0.0
      %1758 = vmatpush1.msra.mxu0 %v1391
      %1759 = vmatprep.subr.mxu0 0.0
      %1760 = vmatpush1.msra.mxu0 %v1392
      %1761 = vmatprep.subr.mxu0 0.0
      %1762 = vmatpush1.msra.mxu0 %v1393
      %1763 = vmatprep.mubr.f32.mxu0 %v1045
      %1764 = vmatmul.mubr.f32.gmra.mrb[0].mxu0 %v1044
      %v1765 = vpop.f32.mrb[0].mxu0
      %v1766 = vadd.f32 %v1541, %v1765
      %v1767 = vpop.f32.mrb[0].mxu0
      %1768 = vmatprep.mubr.f32.mxu0 %v1054
      %1769 = vmatmul.mubr.f32.gmra.mrb[0].mxu0 %v1053
      %v1770 = vpop.f32.mrb[0].mxu0
      %v1771 = vadd.f32 %v1546, %v1770
      %v1772 = vpop.f32.mrb[0].mxu0
      %1773 = vmatprep.mubr.f32.mxu0 %v1063
      %1774 = vmatmul.mubr.f32.gmra.mrb[0].mxu0 %v1062
      %v1775 = vpop.f32.mrb[0].mxu0
      %v1776 = vadd.f32 %v1551, %v1775
      %v1777 = vpop.f32.mrb[0].mxu0
      %1778 = vmatprep.mubr.f32.mxu0 %v1072
      %1779 = vmatmul.mubr.f32.gmra.mrb[0].mxu0 %v1071
      %v1780 = vpop.f32.mrb[0].mxu0
      %v1781 = vadd.f32 %v1556, %v1780
      %v1782 = vpop.f32.mrb[0].mxu0
      %1783 = vmatprep.mubr.f32.mxu0 %v1081
      %1784 = vmatmul.mubr.f32.gmra.mrb[0].mxu0 %v1080
      %v1785 = vpop.f32.mrb[0].mxu0
      %v1786 = vadd.f32 %v1561, %v1785
      %v1787 = vpop.f32.mrb[0].mxu0
      %1788 = vmatprep.mubr.f32.mxu0 %v1090
      %1789 = vmatmul.mubr.f32.gmra.mrb[0].mxu0 %v1089
      %v1790 = vpop.f32.mrb[0].mxu0
      %v1791 = vadd.f32 %v1566, %v1790
      %v1792 = vpop.f32.mrb[0].mxu0
      %1793 = vmatprep.mubr.f32.mxu0 %v1099
      %1794 = vmatmul.mubr.f32.gmra.mrb[0].mxu0 %v1098
      %v1795 = vpop.f32.mrb[0].mxu0
      %v1796 = vadd.f32 %v1571, %v1795
      %v1797 = vpop.f32.mrb[0].mxu0
      %1798 = vmatprep.mubr.f32.mxu0 %v1108
      %1799 = vmatmul.mubr.f32.gmra.mrb[0].mxu0 %v1107
      %v1800 = vpop.f32.mrb[0].mxu0
      %v1801 = vadd.f32 %v1576, %v1800
      %v1802 = vpop.f32.mrb[0].mxu0
      %1803 = vmatprep.mubr.f32.mxu0 %v1117
      %1804 = vmatmul.mubr.f32.gmra.mrb[0].mxu0 %v1116
      %v1805 = vpop.f32.mrb[0].mxu0
      %v1806 = vadd.f32 %v1581, %v1805
      %v1807 = vpop.f32.mrb[0].mxu0
      %1808 = vmatprep.mubr.f32.mxu0 %v1126
      %1809 = vmatmul.mubr.f32.gmra.mrb[0].mxu0 %v1125
      %v1810 = vpop.f32.mrb[0].mxu0
      %v1811 = vadd.f32 %v1586, %v1810
      %v1812 = vpop.f32.mrb[0].mxu0
      %1813 = vmatprep.mubr.f32.mxu0 %v1135
      %1814 = vmatmul.mubr.f32.gmra.mrb[0].mxu0 %v1134
      %v1815 = vpop.f32.mrb[0].mxu0
      %v1816 = vadd.f32 %v1591, %v1815
      %v1817 = vpop.f32.mrb[0].mxu0
      %1818 = vmatprep.mubr.f32.mxu0 %v1144
      %1819 = vmatmul.mubr.f32.gmra.mrb[0].mxu0 %v1143
      %v1820 = vpop.f32.mrb[0].mxu0
      %v1821 = vadd.f32 %v1596, %v1820
      %v1822 = vpop.f32.mrb[0].mxu0
      %1823 = vmatprep.mubr.f32.mxu0 %v1153
      %1824 = vmatmul.mubr.f32.gmra.mrb[0].mxu0 %v1152
      %v1825 = vpop.f32.mrb[0].mxu0
      %v1826 = vadd.f32 %v1601, %v1825
      %v1827 = vpop.f32.mrb[0].mxu0
      %1828 = vmatprep.mubr.f32.mxu0 %v1162
      %1829 = vmatmul.mubr.f32.gmra.mrb[0].mxu0 %v1161
      %v1830 = vpop.f32.mrb[0].mxu0
      %v1831 = vadd.f32 %v1606, %v1830
      %v1832 = vpop.f32.mrb[0].mxu0
      %1833 = vmatprep.mubr.f32.mxu0 %v1171
      %1834 = vmatmul.mubr.f32.gmra.mrb[0].mxu0 %v1170
      %v1835 = vpop.f32.mrb[0].mxu0
      %v1836 = vadd.f32 %v1611, %v1835
      %v1837 = vpop.f32.mrb[0].mxu0
      %1838 = vmatprep.mubr.f32.mxu0 %v1180
      %1839 = vmatmul.mubr.f32.gmra.mrb[0].mxu0 %v1179
      %v1840 = vpop.f32.mrb[0].mxu0
      %v1841 = vadd.f32 %v1616, %v1840
      %v1842 = vpop.f32.mrb[0].mxu0
      %1843 = vmatprep.mubr.f32.mxu0 %v1189
      %1844 = vmatmul.mubr.f32.gmra.mrb[0].mxu0 %v1188
      %v1845 = vpop.f32.mrb[0].mxu0
      %v1846 = vadd.f32 %v1621, %v1845
      %v1847 = vpop.f32.mrb[0].mxu0
      %1848 = vmatprep.mubr.f32.mxu0 %v1198
      %1849 = vmatmul.mubr.f32.gmra.mrb[0].mxu0 %v1197
      %v1850 = vpop.f32.mrb[0].mxu0
      %v1851 = vadd.f32 %v1626, %v1850
      %v1852 = vpop.f32.mrb[0].mxu0
      %1853 = vmatprep.mubr.f32.mxu0 %v1207
      %1854 = vmatmul.mubr.f32.gmra.mrb[0].mxu0 %v1206
      %v1855 = vpop.f32.mrb[0].mxu0
      %v1856 = vadd.f32 %v1631, %v1855
      %v1857 = vpop.f32.mrb[0].mxu0
      %1858 = vmatprep.mubr.f32.mxu0 %v1216
      %1859 = vmatmul.mubr.f32.gmra.mrb[0].mxu0 %v1215
      %v1860 = vpop.f32.mrb[0].mxu0
      %v1861 = vadd.f32 %v1636, %v1860
      %v1862 = vpop.f32.mrb[0].mxu0
      %1863 = vmatprep.mubr.f32.mxu0 %v1225
      %1864 = vmatmul.mubr.f32.gmra.mrb[0].mxu0 %v1224
      %v1865 = vpop.f32.mrb[0].mxu0
      %v1866 = vadd.f32 %v1641, %v1865
      %v1867 = vpop.f32.mrb[0].mxu0
      %1868 = vmatprep.mubr.f32.mxu0 %v1234
      %1869 = vmatmul.mubr.f32.gmra.mrb[0].mxu0 %v1233
      %v1870 = vpop.f32.mrb[0].mxu0
      %v1871 = vadd.f32 %v1646, %v1870
      %v1872 = vpop.f32.mrb[0].mxu0
      %1873 = vmatprep.mubr.f32.mxu0 %v1243
      %1874 = vmatmul.mubr.f32.gmra.mrb[0].mxu0 %v1242
      %v1875 = vpop.f32.mrb[0].mxu0
      %v1876 = vadd.f32 %v1651, %v1875
      %v1877 = vpop.f32.mrb[0].mxu0
      %1878 = vmatprep.mubr.f32.mxu0 %v1252
      %1879 = vmatmul.mubr.f32.gmra.mrb[0].mxu0 %v1251
      %v1880 = vpop.f32.mrb[0].mxu0
      %v1881 = vadd.f32 %v1656, %v1880
      %v1882 = vpop.f32.mrb[0].mxu0
      %1883 = vmatprep.mubr.f32.mxu0 %v1261
      %1884 = vmatmul.mubr.f32.gmra.mrb[0].mxu0 %v1260
      %v1885 = vpop.f32.mrb[0].mxu0
      %v1886 = vadd.f32 %v1661, %v1885
      %v1887 = vpop.f32.mrb[0].mxu0
      %1888 = vmatprep.mubr.f32.mxu0 %v1270
      %1889 = vmatmul.mubr.f32.gmra.mrb[0].mxu0 %v1269
      %v1890 = vpop.f32.mrb[0].mxu0
      %v1891 = vadd.f32 %v1666, %v1890
      %v1892 = vpop.f32.mrb[0].mxu0
      %1893 = vmatprep.mubr.f32.mxu0 %v1279
      %1894 = vmatmul.mubr.f32.gmra.mrb[0].mxu0 %v1278
      %v1895 = vpop.f32.mrb[0].mxu0
      %v1896 = vadd.f32 %v1671, %v1895
      %v1897 = vpop.f32.mrb[0].mxu0
      %1898 = vmatprep.mubr.f32.mxu0 %v1288
      %1899 = vmatmul.mubr.f32.gmra.mrb[0].mxu0 %v1287
      %v1900 = vpop.f32.mrb[0].mxu0
      %v1901 = vadd.f32 %v1676, %v1900
      %v1902 = vpop.f32.mrb[0].mxu0
      %1903 = vmatprep.mubr.f32.mxu0 %v1297
      %1904 = vmatmul.mubr.f32.gmra.mrb[0].mxu0 %v1296
      %v1905 = vpop.f32.mrb[0].mxu0
      %v1906 = vadd.f32 %v1681, %v1905
      %v1907 = vpop.f32.mrb[0].mxu0
      %1908 = vmatprep.mubr.f32.mxu0 %v1306
      %1909 = vmatmul.mubr.f32.gmra.mrb[0].mxu0 %v1305
      %v1910 = vpop.f32.mrb[0].mxu0
      %v1911 = vadd.f32 %v1686, %v1910
      %v1912 = vpop.f32.mrb[0].mxu0
      %1913 = vmatprep.mubr.f32.mxu0 %v1315
      %1914 = vmatmul.mubr.f32.gmra.mrb[0].mxu0 %v1314
      %v1915 = vpop.f32.mrb[0].mxu0
      %v1916 = vadd.f32 %v1691, %v1915
      %v1917 = vpop.f32.mrb[0].mxu0
      %1918 = vmatprep.mubr.f32.mxu0 %v1324
      %1919 = vmatmul.mubr.f32.gmra.mrb[0].mxu0 %v1323
      %v1920 = vpop.f32.mrb[0].mxu0
      %v1921 = vadd.f32 %v1696, %v1920
      %v1922 = vpop.f32.mrb[0].mxu0
      %1923 = vdwg.mxu0
      %1924 = vmatprep.subr.mxu0 0.0
      %1925 = vmatpush1.msra.mxu0 %v1394
      %1926 = vmatprep.subr.mxu0 0.0
      %1927 = vmatpush1.msra.mxu0 %v1395
      %1928 = vmatprep.subr.mxu0 0.0
      %1929 = vmatpush1.msra.mxu0 %v1396
      %1930 = vmatprep.subr.mxu0 0.0
      %1931 = vmatpush1.msra.mxu0 %v1397
      %1932 = vmatprep.subr.mxu0 0.0
      %1933 = vmatpush1.msra.mxu0 %v1398
      %1934 = vmatprep.subr.mxu0 0.0
      %1935 = vmatpush1.msra.mxu0 %v1399
      %1936 = vmatprep.subr.mxu0 0.0
      %1937 = vmatpush1.msra.mxu0 %v1400
      %1938 = vmatprep.subr.mxu0 0.0
      %1939 = vmatpush1.msra.mxu0 %v1401
      %1940 = vmatprep.subr.mxu0 0.0
      %1941 = vmatpush1.msra.mxu0 %v1402
      %1942 = vmatprep.subr.mxu0 0.0
      %1943 = vmatpush1.msra.mxu0 %v1403
      %1944 = vmatprep.subr.mxu0 0.0
      %1945 = vmatpush1.msra.mxu0 %v1404
      %1946 = vmatprep.subr.mxu0 0.0
      %1947 = vmatpush1.msra.mxu0 %v1405
      %1948 = vmatprep.subr.mxu0 0.0
      %1949 = vmatpush1.msra.mxu0 %v1406
      %1950 = vmatprep.subr.mxu0 0.0
      %1951 = vmatpush1.msra.mxu0 %v1407
      %1952 = vmatprep.subr.mxu0 0.0
      %1953 = vmatpush1.msra.mxu0 %v1408
      %1954 = vmatprep.subr.mxu0 0.0
      %1955 = vmatpush1.msra.mxu0 %v1409
      %1956 = vmatprep.subr.mxu0 0.0
      %1957 = vmatpush1.msra.mxu0 %v1410
      %1958 = vmatprep.subr.mxu0 0.0
      %1959 = vmatpush1.msra.mxu0 %v1411
      %1960 = vmatprep.subr.mxu0 0.0
      %1961 = vmatpush1.msra.mxu0 %v1412
      %1962 = vmatprep.subr.mxu0 0.0
      %1963 = vmatpush1.msra.mxu0 %v1413
      %1964 = vmatprep.subr.mxu0 0.0
      %1965 = vmatpush1.msra.mxu0 %v1414
      %1966 = vmatprep.subr.mxu0 0.0
      %1967 = vmatpush1.msra.mxu0 %v1415
      %1968 = vmatprep.subr.mxu0 0.0
      %1969 = vmatpush1.msra.mxu0 %v1416
      %1970 = vmatprep.subr.mxu0 0.0
      %1971 = vmatpush1.msra.mxu0 %v1417
      %1972 = vmatprep.subr.mxu0 0.0
      %1973 = vmatpush1.msra.mxu0 %v1418
      %1974 = vmatprep.subr.mxu0 0.0
      %1975 = vmatpush1.msra.mxu0 %v1419
      %1976 = vmatprep.subr.mxu0 0.0
      %1977 = vmatpush1.msra.mxu0 %v1420
      %1978 = vmatprep.subr.mxu0 0.0
      %1979 = vmatpush1.msra.mxu0 %v1421
      %1980 = vmatprep.subr.mxu0 0.0
      %1981 = vmatpush1.msra.mxu0 %v1422
      %1982 = vmatprep.subr.mxu0 0.0
      %1983 = vmatpush1.msra.mxu0 %v1423
      %1984 = vmatprep.subr.mxu0 0.0
      %1985 = vmatpush1.msra.mxu0 %v1424
      %1986 = vmatprep.subr.mxu0 0.0
      %1987 = vmatpush1.msra.mxu0 %v1425
      %1988 = vmatprep.mubr.f32.mxu0 %v1047
      %1989 = vmatmul.mubr.f32.gmra.mrb[0].mxu0 %v1046
      %v1990 = vpop.f32.mrb[0].mxu0
      %v1991 = vadd.f32 %v1766, %v1990
      %v1992 = vpop.f32.mrb[0].mxu0
      %1993 = vmatprep.mubr.f32.mxu0 %v1056
      %1994 = vmatmul.mubr.f32.gmra.mrb[0].mxu0 %v1055
      %v1995 = vpop.f32.mrb[0].mxu0
      %v1996 = vadd.f32 %v1771, %v1995
      %v1997 = vpop.f32.mrb[0].mxu0
      %1998 = vmatprep.mubr.f32.mxu0 %v1065
      %1999 = vmatmul.mubr.f32.gmra.mrb[0].mxu0 %v1064
      %v2000 = vpop.f32.mrb[0].mxu0
      %v2001 = vadd.f32 %v1776, %v2000
      %v2002 = vpop.f32.mrb[0].mxu0
      %2003 = vmatprep.mubr.f32.mxu0 %v1074
      %2004 = vmatmul.mubr.f32.gmra.mrb[0].mxu0 %v1073
      %v2005 = vpop.f32.mrb[0].mxu0
      %v2006 = vadd.f32 %v1781, %v2005
      %v2007 = vpop.f32.mrb[0].mxu0
      %2008 = vmatprep.mubr.f32.mxu0 %v1083
      %2009 = vmatmul.mubr.f32.gmra.mrb[0].mxu0 %v1082
      %v2010 = vpop.f32.mrb[0].mxu0
      %v2011 = vadd.f32 %v1786, %v2010
      %v2012 = vpop.f32.mrb[0].mxu0
      %2013 = vmatprep.mubr.f32.mxu0 %v1092
      %2014 = vmatmul.mubr.f32.gmra.mrb[0].mxu0 %v1091
      %v2015 = vpop.f32.mrb[0].mxu0
      %v2016 = vadd.f32 %v1791, %v2015
      %v2017 = vpop.f32.mrb[0].mxu0
      %2018 = vmatprep.mubr.f32.mxu0 %v1101
      %2019 = vmatmul.mubr.f32.gmra.mrb[0].mxu0 %v1100
      %v2020 = vpop.f32.mrb[0].mxu0
      %v2021 = vadd.f32 %v1796, %v2020
      %v2022 = vpop.f32.mrb[0].mxu0
      %2023 = vmatprep.mubr.f32.mxu0 %v1110
      %2024 = vmatmul.mubr.f32.gmra.mrb[0].mxu0 %v1109
      %v2025 = vpop.f32.mrb[0].mxu0
      %v2026 = vadd.f32 %v1801, %v2025
      %v2027 = vpop.f32.mrb[0].mxu0
      %2028 = vmatprep.mubr.f32.mxu0 %v1119
      %2029 = vmatmul.mubr.f32.gmra.mrb[0].mxu0 %v1118
      %v2030 = vpop.f32.mrb[0].mxu0
      %v2031 = vadd.f32 %v1806, %v2030
      %v2032 = vpop.f32.mrb[0].mxu0
      %2033 = vmatprep.mubr.f32.mxu0 %v1128
      %2034 = vmatmul.mubr.f32.gmra.mrb[0].mxu0 %v1127
      %v2035 = vpop.f32.mrb[0].mxu0
      %v2036 = vadd.f32 %v1811, %v2035
      %v2037 = vpop.f32.mrb[0].mxu0
      %2038 = vmatprep.mubr.f32.mxu0 %v1137
      %2039 = vmatmul.mubr.f32.gmra.mrb[0].mxu0 %v1136
      %v2040 = vpop.f32.mrb[0].mxu0
      %v2041 = vadd.f32 %v1816, %v2040
      %v2042 = vpop.f32.mrb[0].mxu0
      %2043 = vmatprep.mubr.f32.mxu0 %v1146
      %2044 = vmatmul.mubr.f32.gmra.mrb[0].mxu0 %v1145
      %v2045 = vpop.f32.mrb[0].mxu0
      %v2046 = vadd.f32 %v1821, %v2045
      %v2047 = vpop.f32.mrb[0].mxu0
      %2048 = vmatprep.mubr.f32.mxu0 %v1155
      %2049 = vmatmul.mubr.f32.gmra.mrb[0].mxu0 %v1154
      %v2050 = vpop.f32.mrb[0].mxu0
      %v2051 = vadd.f32 %v1826, %v2050
      %v2052 = vpop.f32.mrb[0].mxu0
      %2053 = vmatprep.mubr.f32.mxu0 %v1164
      %2054 = vmatmul.mubr.f32.gmra.mrb[0].mxu0 %v1163
      %v2055 = vpop.f32.mrb[0].mxu0
      %v2056 = vadd.f32 %v1831, %v2055
      %v2057 = vpop.f32.mrb[0].mxu0
      %2058 = vmatprep.mubr.f32.mxu0 %v1173
      %2059 = vmatmul.mubr.f32.gmra.mrb[0].mxu0 %v1172
      %v2060 = vpop.f32.mrb[0].mxu0
      %v2061 = vadd.f32 %v1836, %v2060
      %v2062 = vpop.f32.mrb[0].mxu0
      %2063 = vmatprep.mubr.f32.mxu0 %v1182
      %2064 = vmatmul.mubr.f32.gmra.mrb[0].mxu0 %v1181
      %v2065 = vpop.f32.mrb[0].mxu0
      %v2066 = vadd.f32 %v1841, %v2065
      %v2067 = vpop.f32.mrb[0].mxu0
      %2068 = vmatprep.mubr.f32.mxu0 %v1191
      %2069 = vmatmul.mubr.f32.gmra.mrb[0].mxu0 %v1190
      %v2070 = vpop.f32.mrb[0].mxu0
      %v2071 = vadd.f32 %v1846, %v2070
      %v2072 = vpop.f32.mrb[0].mxu0
      %2073 = vmatprep.mubr.f32.mxu0 %v1200
      %2074 = vmatmul.mubr.f32.gmra.mrb[0].mxu0 %v1199
      %v2075 = vpop.f32.mrb[0].mxu0
      %v2076 = vadd.f32 %v1851, %v2075
      %v2077 = vpop.f32.mrb[0].mxu0
      %2078 = vmatprep.mubr.f32.mxu0 %v1209
      %2079 = vmatmul.mubr.f32.gmra.mrb[0].mxu0 %v1208
      %v2080 = vpop.f32.mrb[0].mxu0
      %v2081 = vadd.f32 %v1856, %v2080
      %v2082 = vpop.f32.mrb[0].mxu0
      %2083 = vmatprep.mubr.f32.mxu0 %v1218
      %2084 = vmatmul.mubr.f32.gmra.mrb[0].mxu0 %v1217
      %v2085 = vpop.f32.mrb[0].mxu0
      %v2086 = vadd.f32 %v1861, %v2085
      %v2087 = vpop.f32.mrb[0].mxu0
      %2088 = vmatprep.mubr.f32.mxu0 %v1227
      %2089 = vmatmul.mubr.f32.gmra.mrb[0].mxu0 %v1226
      %v2090 = vpop.f32.mrb[0].mxu0
      %v2091 = vadd.f32 %v1866, %v2090
      %v2092 = vpop.f32.mrb[0].mxu0
      %2093 = vmatprep.mubr.f32.mxu0 %v1236
      %2094 = vmatmul.mubr.f32.gmra.mrb[0].mxu0 %v1235
      %v2095 = vpop.f32.mrb[0].mxu0
      %v2096 = vadd.f32 %v1871, %v2095
      %v2097 = vpop.f32.mrb[0].mxu0
      %2098 = vmatprep.mubr.f32.mxu0 %v1245
      %2099 = vmatmul.mubr.f32.gmra.mrb[0].mxu0 %v1244
      %v2100 = vpop.f32.mrb[0].mxu0
      %v2101 = vadd.f32 %v1876, %v2100
      %v2102 = vpop.f32.mrb[0].mxu0
      %2103 = vmatprep.mubr.f32.mxu0 %v1254
      %2104 = vmatmul.mubr.f32.gmra.mrb[0].mxu0 %v1253
      %v2105 = vpop.f32.mrb[0].mxu0
      %v2106 = vadd.f32 %v1881, %v2105
      %v2107 = vpop.f32.mrb[0].mxu0
      %2108 = vmatprep.mubr.f32.mxu0 %v1263
      %2109 = vmatmul.mubr.f32.gmra.mrb[0].mxu0 %v1262
      %v2110 = vpop.f32.mrb[0].mxu0
      %v2111 = vadd.f32 %v1886, %v2110
      %v2112 = vpop.f32.mrb[0].mxu0
      %2113 = vmatprep.mubr.f32.mxu0 %v1272
      %2114 = vmatmul.mubr.f32.gmra.mrb[0].mxu0 %v1271
      %v2115 = vpop.f32.mrb[0].mxu0
      %v2116 = vadd.f32 %v1891, %v2115
      %v2117 = vpop.f32.mrb[0].mxu0
      %2118 = vmatprep.mubr.f32.mxu0 %v1281
      %2119 = vmatmul.mubr.f32.gmra.mrb[0].mxu0 %v1280
      %v2120 = vpop.f32.mrb[0].mxu0
      %v2121 = vadd.f32 %v1896, %v2120
      %v2122 = vpop.f32.mrb[0].mxu0
      %2123 = vmatprep.mubr.f32.mxu0 %v1290
      %2124 = vmatmul.mubr.f32.gmra.mrb[0].mxu0 %v1289
      %v2125 = vpop.f32.mrb[0].mxu0
      %v2126 = vadd.f32 %v1901, %v2125
      %v2127 = vpop.f32.mrb[0].mxu0
      %2128 = vmatprep.mubr.f32.mxu0 %v1299
      %2129 = vmatmul.mubr.f32.gmra.mrb[0].mxu0 %v1298
      %v2130 = vpop.f32.mrb[0].mxu0
      %v2131 = vadd.f32 %v1906, %v2130
      %v2132 = vpop.f32.mrb[0].mxu0
      %2133 = vmatprep.mubr.f32.mxu0 %v1308
      %2134 = vmatmul.mubr.f32.gmra.mrb[0].mxu0 %v1307
      %v2135 = vpop.f32.mrb[0].mxu0
      %v2136 = vadd.f32 %v1911, %v2135
      %v2137 = vpop.f32.mrb[0].mxu0
      %2138 = vmatprep.mubr.f32.mxu0 %v1317
      %2139 = vmatmul.mubr.f32.gmra.mrb[0].mxu0 %v1316
      %v2140 = vpop.f32.mrb[0].mxu0
      %v2141 = vadd.f32 %v1916, %v2140
      %v2142 = vpop.f32.mrb[0].mxu0
      %2143 = vmatprep.mubr.f32.mxu0 %v1326
      %2144 = vmatmul.mubr.f32.gmra.mrb[0].mxu0 %v1325
      %v2145 = vpop.f32.mrb[0].mxu0
      %v2146 = vadd.f32 %v1921, %v2145
      %v2147 = vpop.f32.mrb[0].mxu0
      %2148 = vdwg.mxu0
      %2149 = vmatprep.subr.mxu0 0.0
      %2150 = vmatpush1.msra.mxu0 %v1426
      %2151 = vmatprep.subr.mxu0 0.0
      %2152 = vmatpush1.msra.mxu0 %v1427
      %2153 = vmatprep.subr.mxu0 0.0
      %2154 = vmatpush1.msra.mxu0 %v1428
      %2155 = vmatprep.subr.mxu0 0.0
      %2156 = vmatpush1.msra.mxu0 %v1429
      %2157 = vmatprep.subr.mxu0 0.0
      %2158 = vmatpush1.msra.mxu0 %v1430
      %2159 = vmatprep.subr.mxu0 0.0
      %2160 = vmatpush1.msra.mxu0 %v1431
      %2161 = vmatprep.subr.mxu0 0.0
      %2162 = vmatpush1.msra.mxu0 %v1432
      %2163 = vmatprep.subr.mxu0 0.0
      %2164 = vmatpush1.msra.mxu0 %v1433
      %2165 = vmatprep.subr.mxu0 0.0
      %2166 = vmatpush1.msra.mxu0 %v1434
      %2167 = vmatprep.subr.mxu0 0.0
      %2168 = vmatpush1.msra.mxu0 %v1435
      %2169 = vmatprep.subr.mxu0 0.0
      %2170 = vmatpush1.msra.mxu0 %v1436
      %2171 = vmatprep.subr.mxu0 0.0
      %2172 = vmatpush1.msra.mxu0 %v1437
      %2173 = vmatprep.subr.mxu0 0.0
      %2174 = vmatpush1.msra.mxu0 %v1438
      %2175 = vmatprep.subr.mxu0 0.0
      %2176 = vmatpush1.msra.mxu0 %v1439
      %2177 = vmatprep.subr.mxu0 0.0
      %2178 = vmatpush1.msra.mxu0 %v1440
      %2179 = vmatprep.subr.mxu0 0.0
      %2180 = vmatpush1.msra.mxu0 %v1441
      %2181 = vmatprep.subr.mxu0 0.0
      %2182 = vmatpush1.msra.mxu0 %v1442
      %2183 = vmatprep.subr.mxu0 0.0
      %2184 = vmatpush1.msra.mxu0 %v1443
      %2185 = vmatprep.subr.mxu0 0.0
      %2186 = vmatpush1.msra.mxu0 %v1444
      %2187 = vmatprep.subr.mxu0 0.0
      %2188 = vmatpush1.msra.mxu0 %v1445
      %2189 = vmatprep.subr.mxu0 0.0
      %2190 = vmatpush1.msra.mxu0 %v1446
      %2191 = vmatprep.subr.mxu0 0.0
      %2192 = vmatpush1.msra.mxu0 %v1447
      %2193 = vmatprep.subr.mxu0 0.0
      %2194 = vmatpush1.msra.mxu0 %v1448
      %2195 = vmatprep.subr.mxu0 0.0
      %2196 = vmatpush1.msra.mxu0 %v1449
      %2197 = vmatprep.subr.mxu0 0.0
      %2198 = vmatpush1.msra.mxu0 %v1450
      %2199 = vmatprep.subr.mxu0 0.0
      %2200 = vmatpush1.msra.mxu0 %v1451
      %2201 = vmatprep.subr.mxu0 0.0
      %2202 = vmatpush1.msra.mxu0 %v1452
      %2203 = vmatprep.subr.mxu0 0.0
      %2204 = vmatpush1.msra.mxu0 %v1453
      %2205 = vmatprep.subr.mxu0 0.0
      %2206 = vmatpush1.msra.mxu0 %v1454
      %2207 = vmatprep.subr.mxu0 0.0
      %2208 = vmatpush1.msra.mxu0 %v1455
      %2209 = vmatprep.subr.mxu0 0.0
      %2210 = vmatpush1.msra.mxu0 %v1456
      %2211 = vmatprep.subr.mxu0 0.0
      %2212 = vmatpush1.msra.mxu0 %v1457
      %2213 = vmatprep.mubr.f32.mxu0 %v1049
      %2214 = vmatmul.mubr.f32.gmra.mrb[0].mxu0 %v1048
      %v2215 = vpop.f32.mrb[0].mxu0
      %v2216 = vadd.f32 %v1991, %v2215
      %v2217 = vpop.f32.mrb[0].mxu0
      %2218 = vmatprep.mubr.f32.mxu0 %v1058
      %2219 = vmatmul.mubr.f32.gmra.mrb[0].mxu0 %v1057
      %v2220 = vpop.f32.mrb[0].mxu0
      %v2221 = vadd.f32 %v1996, %v2220
      %v2222 = vpop.f32.mrb[0].mxu0
      %2223 = vmatprep.mubr.f32.mxu0 %v1067
      %2224 = vmatmul.mubr.f32.gmra.mrb[0].mxu0 %v1066
      %v2225 = vpop.f32.mrb[0].mxu0
      %v2226 = vadd.f32 %v2001, %v2225
      %v2227 = vpop.f32.mrb[0].mxu0
      %2228 = vmatprep.mubr.f32.mxu0 %v1076
      %2229 = vmatmul.mubr.f32.gmra.mrb[0].mxu0 %v1075
      %v2230 = vpop.f32.mrb[0].mxu0
      %v2231 = vadd.f32 %v2006, %v2230
      %v2232 = vpop.f32.mrb[0].mxu0
      %2233 = vmatprep.mubr.f32.mxu0 %v1085
      %2234 = vmatmul.mubr.f32.gmra.mrb[0].mxu0 %v1084
      %v2235 = vpop.f32.mrb[0].mxu0
      %v2236 = vadd.f32 %v2011, %v2235
      %v2237 = vpop.f32.mrb[0].mxu0
      %2238 = vmatprep.mubr.f32.mxu0 %v1094
      %2239 = vmatmul.mubr.f32.gmra.mrb[0].mxu0 %v1093
      %v2240 = vpop.f32.mrb[0].mxu0
      %v2241 = vadd.f32 %v2016, %v2240
      %v2242 = vpop.f32.mrb[0].mxu0
      %2243 = vmatprep.mubr.f32.mxu0 %v1103
      %2244 = vmatmul.mubr.f32.gmra.mrb[0].mxu0 %v1102
      %v2245 = vpop.f32.mrb[0].mxu0
      %v2246 = vadd.f32 %v2021, %v2245
      %v2247 = vpop.f32.mrb[0].mxu0
      %2248 = vmatprep.mubr.f32.mxu0 %v1112
      %2249 = vmatmul.mubr.f32.gmra.mrb[0].mxu0 %v1111
      %v2250 = vpop.f32.mrb[0].mxu0
      %v2251 = vadd.f32 %v2026, %v2250
      %v2252 = vpop.f32.mrb[0].mxu0
      %2253 = vmatprep.mubr.f32.mxu0 %v1121
      %2254 = vmatmul.mubr.f32.gmra.mrb[0].mxu0 %v1120
      %v2255 = vpop.f32.mrb[0].mxu0
      %v2256 = vadd.f32 %v2031, %v2255
      %v2257 = vpop.f32.mrb[0].mxu0
      %2258 = vmatprep.mubr.f32.mxu0 %v1130
      %2259 = vmatmul.mubr.f32.gmra.mrb[0].mxu0 %v1129
      %v2260 = vpop.f32.mrb[0].mxu0
      %v2261 = vadd.f32 %v2036, %v2260
      %v2262 = vpop.f32.mrb[0].mxu0
      %2263 = vmatprep.mubr.f32.mxu0 %v1139
      %2264 = vmatmul.mubr.f32.gmra.mrb[0].mxu0 %v1138
      %v2265 = vpop.f32.mrb[0].mxu0
      %v2266 = vadd.f32 %v2041, %v2265
      %v2267 = vpop.f32.mrb[0].mxu0
      %2268 = vmatprep.mubr.f32.mxu0 %v1148
      %2269 = vmatmul.mubr.f32.gmra.mrb[0].mxu0 %v1147
      %v2270 = vpop.f32.mrb[0].mxu0
      %v2271 = vadd.f32 %v2046, %v2270
      %v2272 = vpop.f32.mrb[0].mxu0
      %2273 = vmatprep.mubr.f32.mxu0 %v1157
      %2274 = vmatmul.mubr.f32.gmra.mrb[0].mxu0 %v1156
      %v2275 = vpop.f32.mrb[0].mxu0
      %v2276 = vadd.f32 %v2051, %v2275
      %v2277 = vpop.f32.mrb[0].mxu0
      %2278 = vmatprep.mubr.f32.mxu0 %v1166
      %2279 = vmatmul.mubr.f32.gmra.mrb[0].mxu0 %v1165
      %v2280 = vpop.f32.mrb[0].mxu0
      %v2281 = vadd.f32 %v2056, %v2280
      %v2282 = vpop.f32.mrb[0].mxu0
      %2283 = vmatprep.mubr.f32.mxu0 %v1175
      %2284 = vmatmul.mubr.f32.gmra.mrb[0].mxu0 %v1174
      %v2285 = vpop.f32.mrb[0].mxu0
      %v2286 = vadd.f32 %v2061, %v2285
      %v2287 = vpop.f32.mrb[0].mxu0
      %2288 = vmatprep.mubr.f32.mxu0 %v1184
      %2289 = vmatmul.mubr.f32.gmra.mrb[0].mxu0 %v1183
      %v2290 = vpop.f32.mrb[0].mxu0
      %v2291 = vadd.f32 %v2066, %v2290
      %v2292 = vpop.f32.mrb[0].mxu0
      %2293 = vmatprep.mubr.f32.mxu0 %v1193
      %2294 = vmatmul.mubr.f32.gmra.mrb[0].mxu0 %v1192
      %v2295 = vpop.f32.mrb[0].mxu0
      %v2296 = vadd.f32 %v2071, %v2295
      %v2297 = vpop.f32.mrb[0].mxu0
      %2298 = vmatprep.mubr.f32.mxu0 %v1202
      %2299 = vmatmul.mubr.f32.gmra.mrb[0].mxu0 %v1201
      %v2300 = vpop.f32.mrb[0].mxu0
      %v2301 = vadd.f32 %v2076, %v2300
      %v2302 = vpop.f32.mrb[0].mxu0
      %2303 = vmatprep.mubr.f32.mxu0 %v1211
      %2304 = vmatmul.mubr.f32.gmra.mrb[0].mxu0 %v1210
      %v2305 = vpop.f32.mrb[0].mxu0
      %v2306 = vadd.f32 %v2081, %v2305
      %v2307 = vpop.f32.mrb[0].mxu0
      %2308 = vmatprep.mubr.f32.mxu0 %v1220
      %2309 = vmatmul.mubr.f32.gmra.mrb[0].mxu0 %v1219
      %v2310 = vpop.f32.mrb[0].mxu0
      %v2311 = vadd.f32 %v2086, %v2310
      %v2312 = vpop.f32.mrb[0].mxu0
      %2313 = vmatprep.mubr.f32.mxu0 %v1229
      %2314 = vmatmul.mubr.f32.gmra.mrb[0].mxu0 %v1228
      %v2315 = vpop.f32.mrb[0].mxu0
      %v2316 = vadd.f32 %v2091, %v2315
      %v2317 = vpop.f32.mrb[0].mxu0
      %2318 = vmatprep.mubr.f32.mxu0 %v1238
      %2319 = vmatmul.mubr.f32.gmra.mrb[0].mxu0 %v1237
      %v2320 = vpop.f32.mrb[0].mxu0
      %v2321 = vadd.f32 %v2096, %v2320
      %v2322 = vpop.f32.mrb[0].mxu0
      %2323 = vmatprep.mubr.f32.mxu0 %v1247
      %2324 = vmatmul.mubr.f32.gmra.mrb[0].mxu0 %v1246
      %v2325 = vpop.f32.mrb[0].mxu0
      %v2326 = vadd.f32 %v2101, %v2325
      %v2327 = vpop.f32.mrb[0].mxu0
      %2328 = vmatprep.mubr.f32.mxu0 %v1256
      %2329 = vmatmul.mubr.f32.gmra.mrb[0].mxu0 %v1255
      %v2330 = vpop.f32.mrb[0].mxu0
      %v2331 = vadd.f32 %v2106, %v2330
      %v2332 = vpop.f32.mrb[0].mxu0
      %2333 = vmatprep.mubr.f32.mxu0 %v1265
      %2334 = vmatmul.mubr.f32.gmra.mrb[0].mxu0 %v1264
      %v2335 = vpop.f32.mrb[0].mxu0
      %v2336 = vadd.f32 %v2111, %v2335
      %v2337 = vpop.f32.mrb[0].mxu0
      %2338 = vmatprep.mubr.f32.mxu0 %v1274
      %2339 = vmatmul.mubr.f32.gmra.mrb[0].mxu0 %v1273
      %v2340 = vpop.f32.mrb[0].mxu0
      %v2341 = vadd.f32 %v2116, %v2340
      %v2342 = vpop.f32.mrb[0].mxu0
      %2343 = vmatprep.mubr.f32.mxu0 %v1283
      %2344 = vmatmul.mubr.f32.gmra.mrb[0].mxu0 %v1282
      %v2345 = vpop.f32.mrb[0].mxu0
      %v2346 = vadd.f32 %v2121, %v2345
      %v2347 = vpop.f32.mrb[0].mxu0
      %2348 = vmatprep.mubr.f32.mxu0 %v1292
      %2349 = vmatmul.mubr.f32.gmra.mrb[0].mxu0 %v1291
      %v2350 = vpop.f32.mrb[0].mxu0
      %v2351 = vadd.f32 %v2126, %v2350
      %v2352 = vpop.f32.mrb[0].mxu0
      %2353 = vmatprep.mubr.f32.mxu0 %v1301
      %2354 = vmatmul.mubr.f32.gmra.mrb[0].mxu0 %v1300
      %v2355 = vpop.f32.mrb[0].mxu0
      %v2356 = vadd.f32 %v2131, %v2355
      %v2357 = vpop.f32.mrb[0].mxu0
      %2358 = vmatprep.mubr.f32.mxu0 %v1310
      %2359 = vmatmul.mubr.f32.gmra.mrb[0].mxu0 %v1309
      %v2360 = vpop.f32.mrb[0].mxu0
      %v2361 = vadd.f32 %v2136, %v2360
      %v2362 = vpop.f32.mrb[0].mxu0
      %2363 = vmatprep.mubr.f32.mxu0 %v1319
      %2364 = vmatmul.mubr.f32.gmra.mrb[0].mxu0 %v1318
      %v2365 = vpop.f32.mrb[0].mxu0
      %v2366 = vadd.f32 %v2141, %v2365
      %v2367 = vpop.f32.mrb[0].mxu0
      %2368 = vmatprep.mubr.f32.mxu0 %v1328
      %2369 = vmatmul.mubr.f32.gmra.mrb[0].mxu0 %v1327
      %v2370 = vpop.f32.mrb[0].mxu0
      %v2371 = vadd.f32 %v2146, %v2370
      %v2372 = vpop.f32.mrb[0].mxu0
      %2373 = vdwg.mxu0
      %2374 = vmatprep.subr.mxu0 0.0
      %2375 = vmatpush1.msra.mxu0 %v1458
      %2376 = vmatprep.subr.mxu0 0.0
      %2377 = vmatpush1.msra.mxu0 %v1459
      %2378 = vmatprep.subr.mxu0 0.0
      %2379 = vmatpush1.msra.mxu0 %v1460
      %2380 = vmatprep.subr.mxu0 0.0
      %2381 = vmatpush1.msra.mxu0 %v1461
      %2382 = vmatprep.subr.mxu0 0.0
      %2383 = vmatpush1.msra.mxu0 %v1462
      %2384 = vmatprep.subr.mxu0 0.0
      %2385 = vmatpush1.msra.mxu0 %v1463
      %2386 = vmatprep.subr.mxu0 0.0
      %2387 = vmatpush1.msra.mxu0 %v1464
      %2388 = vmatprep.subr.mxu0 0.0
      %2389 = vmatpush1.msra.mxu0 %v1465
      %2390 = vmatprep.subr.mxu0 0.0
      %2391 = vmatpush1.msra.mxu0 %v1466
      %2392 = vmatprep.subr.mxu0 0.0
      %2393 = vmatpush1.msra.mxu0 %v1467
      %2394 = vmatprep.subr.mxu0 0.0
      %2395 = vmatpush1.msra.mxu0 %v1468
      %2396 = vmatprep.subr.mxu0 0.0
      %2397 = vmatpush1.msra.mxu0 %v1469
      %2398 = vmatprep.subr.mxu0 0.0
      %2399 = vmatpush1.msra.mxu0 %v1470
      %2400 = vmatprep.subr.mxu0 0.0
      %2401 = vmatpush1.msra.mxu0 %v1471
      %2402 = vmatprep.subr.mxu0 0.0
      %2403 = vmatpush1.msra.mxu0 %v1472
      %2404 = vmatprep.subr.mxu0 0.0
      %2405 = vmatpush1.msra.mxu0 %v1473
      %2406 = vmatprep.subr.mxu0 0.0
      %2407 = vmatpush1.msra.mxu0 0.0
      %2408 = vmatprep.subr.mxu0 0.0
      %2409 = vmatpush1.msra.mxu0 0.0
      %2410 = vmatprep.subr.mxu0 0.0
      %2411 = vmatpush1.msra.mxu0 0.0
      %2412 = vmatprep.subr.mxu0 0.0
      %2413 = vmatpush1.msra.mxu0 0.0
      %2414 = vmatprep.subr.mxu0 0.0
      %2415 = vmatpush1.msra.mxu0 0.0
      %2416 = vmatprep.subr.mxu0 0.0
      %2417 = vmatpush1.msra.mxu0 0.0
      %2418 = vmatprep.subr.mxu0 0.0
      %2419 = vmatpush1.msra.mxu0 0.0
      %2420 = vmatprep.subr.mxu0 0.0
      %2421 = vmatpush1.msra.mxu0 0.0
      %2422 = vmatprep.subr.mxu0 0.0
      %2423 = vmatpush1.msra.mxu0 0.0
      %2424 = vmatprep.subr.mxu0 0.0
      %2425 = vmatpush1.msra.mxu0 0.0
      %2426 = vmatprep.subr.mxu0 0.0
      %2427 = vmatpush1.msra.mxu0 0.0
      %2428 = vmatprep.subr.mxu0 0.0
      %2429 = vmatpush1.msra.mxu0 0.0
      %2430 = vmatprep.subr.mxu0 0.0
      %2431 = vmatpush1.msra.mxu0 0.0
      %2432 = vmatprep.subr.mxu0 0.0
      %2433 = vmatpush1.msra.mxu0 0.0
      %2434 = vmatprep.subr.mxu0 0.0
      %2435 = vmatpush1.msra.mxu0 0.0
      %2436 = vmatprep.subr.mxu0 0.0
      %2437 = vmatpush1.msra.mxu0 0.0
      %2438 = vmatprep.mubr.f32.mxu0 0.0
      %2439 = vmatmul.mubr.f32.gmra.mrb[0].mxu0 %v1050
      %v2440 = vpop.f32.mrb[0].mxu0
      %v2441 = vadd.f32 %v2216, %v2440
      %v2442 = vpop.f32.mrb[0].mxu0
      %2443 = vmatprep.mubr.f32.mxu0 0.0
      %2444 = vmatmul.mubr.f32.gmra.mrb[0].mxu0 %v1059
      %v2445 = vpop.f32.mrb[0].mxu0
      %v2446 = vadd.f32 %v2221, %v2445
      %v2447 = vpop.f32.mrb[0].mxu0
      %2448 = vmatprep.mubr.f32.mxu0 0.0
      %2449 = vmatmul.mubr.f32.gmra.mrb[0].mxu0 %v1068
      %v2450 = vpop.f32.mrb[0].mxu0
      %v2451 = vadd.f32 %v2226, %v2450
      %v2452 = vpop.f32.mrb[0].mxu0
      %2453 = vmatprep.mubr.f32.mxu0 0.0
      %2454 = vmatmul.mubr.f32.gmra.mrb[0].mxu0 %v1077
      %v2455 = vpop.f32.mrb[0].mxu0
      %v2456 = vadd.f32 %v2231, %v2455
      %v2457 = vpop.f32.mrb[0].mxu0
      %2458 = vmatprep.mubr.f32.mxu0 0.0
      %2459 = vmatmul.mubr.f32.gmra.mrb[0].mxu0 %v1086
      %v2460 = vpop.f32.mrb[0].mxu0
      %v2461 = vadd.f32 %v2236, %v2460
      %v2462 = vpop.f32.mrb[0].mxu0
      %2463 = vmatprep.mubr.f32.mxu0 0.0
      %2464 = vmatmul.mubr.f32.gmra.mrb[0].mxu0 %v1095
      %v2465 = vpop.f32.mrb[0].mxu0
      %v2466 = vadd.f32 %v2241, %v2465
      %v2467 = vpop.f32.mrb[0].mxu0
      %2468 = vmatprep.mubr.f32.mxu0 0.0
      %2469 = vmatmul.mubr.f32.gmra.mrb[0].mxu0 %v1104
      %v2470 = vpop.f32.mrb[0].mxu0
      %v2471 = vadd.f32 %v2246, %v2470
      %v2472 = vpop.f32.mrb[0].mxu0
      %2473 = vmatprep.mubr.f32.mxu0 0.0
      %2474 = vmatmul.mubr.f32.gmra.mrb[0].mxu0 %v1113
      %v2475 = vpop.f32.mrb[0].mxu0
      %v2476 = vadd.f32 %v2251, %v2475
      %v2477 = vpop.f32.mrb[0].mxu0
      %2478 = vmatprep.mubr.f32.mxu0 0.0
      %2479 = vmatmul.mubr.f32.gmra.mrb[0].mxu0 %v1122
      %v2480 = vpop.f32.mrb[0].mxu0
      %v2481 = vadd.f32 %v2256, %v2480
      %v2482 = vpop.f32.mrb[0].mxu0
      %2483 = vmatprep.mubr.f32.mxu0 0.0
      %2484 = vmatmul.mubr.f32.gmra.mrb[0].mxu0 %v1131
      %v2485 = vpop.f32.mrb[0].mxu0
      %v2486 = vadd.f32 %v2261, %v2485
      %v2487 = vpop.f32.mrb[0].mxu0
      %2488 = vmatprep.mubr.f32.mxu0 0.0
      %2489 = vmatmul.mubr.f32.gmra.mrb[0].mxu0 %v1140
      %v2490 = vpop.f32.mrb[0].mxu0
      %v2491 = vadd.f32 %v2266, %v2490
      %v2492 = vpop.f32.mrb[0].mxu0
      %2493 = vmatprep.mubr.f32.mxu0 0.0
      %2494 = vmatmul.mubr.f32.gmra.mrb[0].mxu0 %v1149
      %v2495 = vpop.f32.mrb[0].mxu0
      %v2496 = vadd.f32 %v2271, %v2495
      %v2497 = vpop.f32.mrb[0].mxu0
      %2498 = vmatprep.mubr.f32.mxu0 0.0
      %2499 = vmatmul.mubr.f32.gmra.mrb[0].mxu0 %v1158
      %v2500 = vpop.f32.mrb[0].mxu0
      %v2501 = vadd.f32 %v2276, %v2500
      %v2502 = vpop.f32.mrb[0].mxu0
      %2503 = vmatprep.mubr.f32.mxu0 0.0
      %2504 = vmatmul.mubr.f32.gmra.mrb[0].mxu0 %v1167
      %v2505 = vpop.f32.mrb[0].mxu0
      %v2506 = vadd.f32 %v2281, %v2505
      %v2507 = vpop.f32.mrb[0].mxu0
      %2508 = vmatprep.mubr.f32.mxu0 0.0
      %2509 = vmatmul.mubr.f32.gmra.mrb[0].mxu0 %v1176
      %v2510 = vpop.f32.mrb[0].mxu0
      %v2511 = vadd.f32 %v2286, %v2510
      %v2512 = vpop.f32.mrb[0].mxu0
      %2513 = vmatprep.mubr.f32.mxu0 0.0
      %2514 = vmatmul.mubr.f32.gmra.mrb[0].mxu0 %v1185
      %v2515 = vpop.f32.mrb[0].mxu0
      %v2516 = vadd.f32 %v2291, %v2515
      %v2517 = vpop.f32.mrb[0].mxu0
      %2518 = vmatprep.mubr.f32.mxu0 0.0
      %2519 = vmatmul.mubr.f32.gmra.mrb[0].mxu0 %v1194
      %v2520 = vpop.f32.mrb[0].mxu0
      %v2521 = vadd.f32 %v2296, %v2520
      %v2522 = vpop.f32.mrb[0].mxu0
      %2523 = vmatprep.mubr.f32.mxu0 0.0
      %2524 = vmatmul.mubr.f32.gmra.mrb[0].mxu0 %v1203
      %v2525 = vpop.f32.mrb[0].mxu0
      %v2526 = vadd.f32 %v2301, %v2525
      %v2527 = vpop.f32.mrb[0].mxu0
      %2528 = vmatprep.mubr.f32.mxu0 0.0
      %2529 = vmatmul.mubr.f32.gmra.mrb[0].mxu0 %v1212
      %v2530 = vpop.f32.mrb[0].mxu0
      %v2531 = vadd.f32 %v2306, %v2530
      %v2532 = vpop.f32.mrb[0].mxu0
      %2533 = vmatprep.mubr.f32.mxu0 0.0
      %2534 = vmatmul.mubr.f32.gmra.mrb[0].mxu0 %v1221
      %v2535 = vpop.f32.mrb[0].mxu0
      %v2536 = vadd.f32 %v2311, %v2535
      %v2537 = vpop.f32.mrb[0].mxu0
      %2538 = vmatprep.mubr.f32.mxu0 0.0
      %2539 = vmatmul.mubr.f32.gmra.mrb[0].mxu0 %v1230
      %v2540 = vpop.f32.mrb[0].mxu0
      %v2541 = vadd.f32 %v2316, %v2540
      %v2542 = vpop.f32.mrb[0].mxu0
      %2543 = vmatprep.mubr.f32.mxu0 0.0
      %2544 = vmatmul.mubr.f32.gmra.mrb[0].mxu0 %v1239
      %v2545 = vpop.f32.mrb[0].mxu0
      %v2546 = vadd.f32 %v2321, %v2545
      %v2547 = vpop.f32.mrb[0].mxu0
      %2548 = vmatprep.mubr.f32.mxu0 0.0
      %2549 = vmatmul.mubr.f32.gmra.mrb[0].mxu0 %v1248
      %v2550 = vpop.f32.mrb[0].mxu0
      %v2551 = vadd.f32 %v2326, %v2550
      %v2552 = vpop.f32.mrb[0].mxu0
      %2553 = vmatprep.mubr.f32.mxu0 0.0
      %2554 = vmatmul.mubr.f32.gmra.mrb[0].mxu0 %v1257
      %v2555 = vpop.f32.mrb[0].mxu0
      %v2556 = vadd.f32 %v2331, %v2555
      %v2557 = vpop.f32.mrb[0].mxu0
      %2558 = vmatprep.mubr.f32.mxu0 0.0
      %2559 = vmatmul.mubr.f32.gmra.mrb[0].mxu0 %v1266
      %v2560 = vpop.f32.mrb[0].mxu0
      %v2561 = vadd.f32 %v2336, %v2560
      %v2562 = vpop.f32.mrb[0].mxu0
      %2563 = vmatprep.mubr.f32.mxu0 0.0
      %2564 = vmatmul.mubr.f32.gmra.mrb[0].mxu0 %v1275
      %v2565 = vpop.f32.mrb[0].mxu0
      %v2566 = vadd.f32 %v2341, %v2565
      %v2567 = vpop.f32.mrb[0].mxu0
      %2568 = vmatprep.mubr.f32.mxu0 0.0
      %2569 = vmatmul.mubr.f32.gmra.mrb[0].mxu0 %v1284
      %v2570 = vpop.f32.mrb[0].mxu0
      %v2571 = vadd.f32 %v2346, %v2570
      %v2572 = vpop.f32.mrb[0].mxu0
      %2573 = vmatprep.mubr.f32.mxu0 0.0
      %2574 = vmatmul.mubr.f32.gmra.mrb[0].mxu0 %v1293
      %v2575 = vpop.f32.mrb[0].mxu0
      %v2576 = vadd.f32 %v2351, %v2575
      %v2577 = vpop.f32.mrb[0].mxu0
      %2578 = vmatprep.mubr.f32.mxu0 0.0
      %2579 = vmatmul.mubr.f32.gmra.mrb[0].mxu0 %v1302
      %v2580 = vpop.f32.mrb[0].mxu0
      %v2581 = vadd.f32 %v2356, %v2580
      %v2582 = vpop.f32.mrb[0].mxu0
      %2583 = vmatprep.mubr.f32.mxu0 0.0
      %2584 = vmatmul.mubr.f32.gmra.mrb[0].mxu0 %v1311
      %v2585 = vpop.f32.mrb[0].mxu0
      %v2586 = vadd.f32 %v2361, %v2585
      %v2587 = vpop.f32.mrb[0].mxu0
      %2588 = vmatprep.mubr.f32.mxu0 0.0
      %2589 = vmatmul.mubr.f32.gmra.mrb[0].mxu0 %v1320
      %v2590 = vpop.f32.mrb[0].mxu0
      %v2591 = vadd.f32 %v2366, %v2590
      %v2592 = vpop.f32.mrb[0].mxu0
      %2593 = vmatprep.mubr.f32.mxu0 0.0
      %2594 = vmatmul.mubr.f32.gmra.mrb[0].mxu0 %v1329
      %v2595 = vpop.f32.mrb[0].mxu0
      %v2596 = vadd.f32 %v2371, %v2595
      %v2597 = vpop.f32.mrb[0].mxu0
      %2598 = vdwg.mxu0
      %2599 = vst [vmem:[%s231] sm:$0xff] %v2441
      %2600 = vst [vmem:[%s231 + $0x8] sm:$0xff] %v2446
      %2601 = vst [vmem:[%s231 + $0x10] sm:$0xff] %v2451
      %2602 = vst [vmem:[%s231 + $0x18] sm:$0xff] %v2456
      %2603 = vst [vmem:[%s231 + $0x20] sm:$0xff] %v2461
      %2604 = vst [vmem:[%s231 + $0x28] sm:$0xff] %v2466
      %2605 = vst [vmem:[%s231 + $0x30] sm:$0xff] %v2471
      %2606 = vst [vmem:[%s231 + $0x38] sm:$0xff] %v2476
      %2607 = vst [vmem:[%s231 + $0x40] sm:$0xff] %v2481
      %2608 = vst [vmem:[%s231 + $0x48] sm:$0xff] %v2486
      %2609 = vst [vmem:[%s231 + $0x50] sm:$0xff] %v2491
      %2610 = vst [vmem:[%s231 + $0x58] sm:$0xff] %v2496
      %2611 = vst [vmem:[%s231 + $0x60] sm:$0xff] %v2501
      %2612 = vst [vmem:[%s231 + $0x68] sm:$0xff] %v2506
      %2613 = vst [vmem:[%s231 + $0x70] sm:$0xff] %v2511
      %2614 = vst [vmem:[%s231 + $0x78] sm:$0xff] %v2516
      %2615 = vst [vmem:[%s231 + $0x80] sm:$0xff] %v2521
      %2616 = vst [vmem:[%s231 + $0x88] sm:$0xff] %v2526
      %2617 = vst [vmem:[%s231 + $0x90] sm:$0xff] %v2531
      %2618 = vst [vmem:[%s231 + $0x98] sm:$0xff] %v2536
      %2619 = vst [vmem:[%s231 + $0xa0] sm:$0xff] %v2541
      %2620 = vst [vmem:[%s231 + $0xa8] sm:$0xff] %v2546
      %2621 = vst [vmem:[%s231 + $0xb0] sm:$0xff] %v2551
      %2622 = vst [vmem:[%s231 + $0xb8] sm:$0xff] %v2556
      %2623 = vst [vmem:[%s231 + $0xc0] sm:$0xff] %v2561
      %2624 = vst [vmem:[%s231 + $0xc8] sm:$0xff] %v2566
      %2625 = vst [vmem:[%s231 + $0xd0] sm:$0xff] %v2571
      %2626 = vst [vmem:[%s231 + $0xd8] sm:$0xff] %v2576
      %2627 = vst [vmem:[%s231 + $0xe0] sm:$0xff] %v2581
      %2628 = vst [vmem:[%s231 + $0xe8] sm:$0xff] %v2586
      %2629 = vst [vmem:[%s231 + $0xf0] sm:$0xff] %v2591
      %2630 = vst [vmem:[%s231 + $0xf8] sm:$0xff] %v2596
      %v2631 = vadd.f32 %v2441, %v2446
      %v2632 = vadd.f32 %v2631, %v2451
      %v2633 = vadd.f32 %v2632, %v2456
      %v2634 = vadd.f32 %v2633, %v2461
      %v2635 = vadd.f32 %v2634, %v2466
      %v2636 = vadd.f32 %v2635, %v2471
      %v2637 = vadd.f32 %v2636, %v2476
      %v2638 = vadd.f32 %v2637, %v2481
      %v2639 = vadd.f32 %v2638, %v2486
      %v2640 = vadd.f32 %v2639, %v2491
      %v2641 = vadd.f32 %v2640, %v2496
      %v2642 = vadd.f32 %v2641, %v2501
      %v2643 = vadd.f32 %v2642, %v2506
      %v2644 = vadd.f32 %v2643, %v2511
      %v2645 = vadd.f32 %v2644, %v2516
      %v2646 = vadd.f32 %v2645, %v2521
      %v2647 = vadd.f32 %v2646, %v2526
      %v2648 = vadd.f32 %v2647, %v2531
      %v2649 = vadd.f32 %v2648, %v2536
      %v2650 = vadd.f32 %v2649, %v2541
      %v2651 = vadd.f32 %v2650, %v2546
      %v2652 = vadd.f32 %v2651, %v2551
      %v2653 = vadd.f32 %v2652, %v2556
      %v2654 = vadd.f32 %v2653, %v2561
      %v2655 = vadd.f32 %v2654, %v2566
      %v2656 = vadd.f32 %v2655, %v2571
      %v2657 = vadd.f32 %v2656, %v2576
      %v2658 = vadd.f32 %v2657, %v2581
      %v2659 = vadd.f32 %v2658, %v2586
      %v2660 = vadd.f32 %v2659, %v2591
      %v2661 = vadd.f32 %v2660, %v2596
      %v2662 = vrot.slane %v2661, 4
      %v2663 = vadd.f32 %v2661, %v2662
      %v2664 = vrot.slane %v2663, 2
      %v2665 = vadd.f32 %v2663, %v2664
      %v2666 = vrot.slane %v2665, 1
      %v2667 = vadd.f32 %v2665, %v2666
      %v2668 = vmul.f32 %v2441, %v2441
      %v2669 = vmul.f32 %v2446, %v2446
      %v2670 = vmul.f32 %v2451, %v2451
      %v2671 = vmul.f32 %v2456, %v2456
      %v2672 = vmul.f32 %v2461, %v2461
      %v2673 = vmul.f32 %v2466, %v2466
      %v2674 = vmul.f32 %v2471, %v2471
      %v2675 = vmul.f32 %v2476, %v2476
      %v2676 = vmul.f32 %v2481, %v2481
      %v2677 = vmul.f32 %v2486, %v2486
      %v2678 = vmul.f32 %v2491, %v2491
      %v2679 = vmul.f32 %v2496, %v2496
      %v2680 = vmul.f32 %v2501, %v2501
      %v2681 = vmul.f32 %v2506, %v2506
      %v2682 = vmul.f32 %v2511, %v2511
      %v2683 = vmul.f32 %v2516, %v2516
      %v2684 = vmul.f32 %v2521, %v2521
      %v2685 = vmul.f32 %v2526, %v2526
      %v2686 = vmul.f32 %v2531, %v2531
      %v2687 = vmul.f32 %v2536, %v2536
      %v2688 = vmul.f32 %v2541, %v2541
      %v2689 = vmul.f32 %v2546, %v2546
      %v2690 = vmul.f32 %v2551, %v2551
      %v2691 = vmul.f32 %v2556, %v2556
      %v2692 = vmul.f32 %v2561, %v2561
      %v2693 = vmul.f32 %v2566, %v2566
      %v2694 = vmul.f32 %v2571, %v2571
      %v2695 = vmul.f32 %v2576, %v2576
      %v2696 = vmul.f32 %v2581, %v2581
      %v2697 = vmul.f32 %v2586, %v2586
      %v2698 = vmul.f32 %v2591, %v2591
      %v2699 = vmul.f32 %v2596, %v2596
      %v2700 = vadd.f32 %v2668, %v2669
      %v2701 = vadd.f32 %v2700, %v2670
      %v2702 = vadd.f32 %v2701, %v2671
      %v2703 = vadd.f32 %v2702, %v2672
      %v2704 = vadd.f32 %v2703, %v2673
      %v2705 = vadd.f32 %v2704, %v2674
      %v2706 = vadd.f32 %v2705, %v2675
      %v2707 = vadd.f32 %v2706, %v2676
      %v2708 = vadd.f32 %v2707, %v2677
      %v2709 = vadd.f32 %v2708, %v2678
      %v2710 = vadd.f32 %v2709, %v2679
      %v2711 = vadd.f32 %v2710, %v2680
      %v2712 = vadd.f32 %v2711, %v2681
      %v2713 = vadd.f32 %v2712, %v2682
      %v2714 = vadd.f32 %v2713, %v2683
      %v2715 = vadd.f32 %v2714, %v2684
      %v2716 = vadd.f32 %v2715, %v2685
      %v2717 = vadd.f32 %v2716, %v2686
      %v2718 = vadd.f32 %v2717, %v2687
      %v2719 = vadd.f32 %v2718, %v2688
      %v2720 = vadd.f32 %v2719, %v2689
      %v2721 = vadd.f32 %v2720, %v2690
      %v2722 = vadd.f32 %v2721, %v2691
      %v2723 = vadd.f32 %v2722, %v2692
      %v2724 = vadd.f32 %v2723, %v2693
      %v2725 = vadd.f32 %v2724, %v2694
      %v2726 = vadd.f32 %v2725, %v2695
      %v2727 = vadd.f32 %v2726, %v2696
      %v2728 = vadd.f32 %v2727, %v2697
      %v2729 = vadd.f32 %v2728, %v2698
      %v2730 = vadd.f32 %v2729, %v2699
      %v2731 = vrot.slane %v2730, 4
      %v2732 = vadd.f32 %v2730, %v2731
      %v2733 = vrot.slane %v2732, 2
      %v2734 = vadd.f32 %v2732, %v2733
      %v2735 = vrot.slane %v2734, 1
      %v2736 = vadd.f32 %v2734, %v2735
      %v2737 = vlaneseq
      %v2738 = vshrl.u32 %v2737, 7
      %vm2739 = vcmp.eq.s32.totalorder %v2738, 0
      %v2740 = vsel %vm2739, %v2667, 0.0
      %vm2741 = vcmp.eq.s32.totalorder %v2738, 1
      %v2742 = vsel %vm2741, %v2736, 0.0
      %v2743 = vadd.f32 %v2740, %v2742
      %2744 = vst [vmem:[%s235] sm:$0xff] %v2743
      %p2745 = scmp.lt.s32.totalorder %s17, 1
      %s2746 = scalar_select %p2745, %s17, 1
      %s2747 = smul.addr %s2746, 32
      %s2748 = smul.addr %s2747, 8
      %s2749 = scalar_lea.vmem %s4, %s2748
      %p2750 = scmp.lt.s32.totalorder %s17, 1
      %s2751 = scalar_select %p2750, %s17, 1
      %s2752 = smul.addr %s2751, 8
      %s2753 = scalar_lea.vmem %s5, %s2752
      // Predicated region
      $region37: #{basic_conv_block.4} parent=35 // pred_check
        %p2754 = pneg %p124
      $region38: #{basic_conv_block.4} parent=35 // pred_check_branch
        %2756 = sbr.rel (%p2754) target = $region40
      $region39: #{basic_conv_block.4} parent=35 // pred_region
        _
      $region40: #{basic_conv_block.4} parent=35 // pred_fallthru
        _
      // Predicated region
      $region41: #{basic_conv_block.4} parent=35 // pred_check
        %p2757 = pneg %p150
      $region42: #{basic_conv_block.4} parent=35 // pred_check_branch
        %2759 = sbr.rel (%p2757) target = $region44
      $region43: #{basic_conv_block.4} parent=35 // pred_region
        _
      $region44: #{basic_conv_block.4} parent=35 // pred_fallthru
        _
    $region36: #{basic_conv_block.4} parent=5 // pred_fallthru
      _
    %p2760 = scmp.le.s32.totalorder 2, %s12
    // Predicated region
    $region45: #{basic_conv_block.4} parent=5 // pred_check
      %p2761 = pneg %p2760
    $region46: #{basic_conv_block.4} parent=5 // pred_check_branch
      %2763 = sbr.rel (%p2761) target = $region48
    $region47: #{basic_conv_block.4} parent=5 // pred_region
      %s2764 = ssub.s32 %s12, 2
      // Predicated region
      $region49: #{basic_conv_block.4} parent=47 // pred_check
        %p2765 = pneg %p130
      $region50: #{basic_conv_block.4} parent=47 // pred_check_branch
        %2767 = sbr.rel (%p2765) target = $region52
      $region51: #{basic_conv_block.4} parent=47 // pred_region
        %p2768 = scmp.lt.s32.totalorder %s18, 1
        %s2769 = scalar_select %p2768, %s18, 1
        %s2770 = smul.addr %s2769, 32
        %s2771 = smul.addr %s2770, 8
        %s2772 = scalar_lea.vmem %s4, %s2771
      $region52: #{basic_conv_block.4} parent=47 // pred_fallthru
        _
      // Predicated region
      $region53: #{basic_conv_block.4} parent=47 // pred_check
        %p2773 = pneg %p156
      $region54: #{basic_conv_block.4} parent=47 // pred_check_branch
        %2775 = sbr.rel (%p2773) target = $region56
      $region55: #{basic_conv_block.4} parent=47 // pred_region
        %p2776 = scmp.lt.s32.totalorder %s18, 1
        %s2777 = scalar_select %p2776, %s18, 1
        %s2778 = smul.addr %s2777, 8
        %s2779 = scalar_lea.vmem %s5, %s2778
      $region56: #{basic_conv_block.4} parent=47 // pred_fallthru
        _
    $region48: #{basic_conv_block.4} parent=5 // pred_fallthru
      _
  $region6: #{basic_conv_block.4} parent=0 // loop_footer
    %s16 = sadd.s32 1, %s12
  $region7: #{basic_conv_block.4} parent=0 // loop_footer_branch
    %11 = sbr.rel target = $region3
  $region8: #{basic_conv_block.4} parent=0 // loop_exit
    _

</llo_original>
